<compile_context>
chip_gen: v5e
topology: v5e:2x2
jax: 0.10.0
libtpu: 0.0.40
codegen_flags: <defaults>
</compile_context>

<pallas_src>
import functools
import math

import jax
import jax.numpy as jnp
from jax.experimental import pallas as pl
from jax.experimental.pallas import tpu as pltpu

LANE = 128        # channel padding granularity (TPU lane width)
_FLAT_PAD = 8     # zero rows at both ends of the flattened spatial axis


# ------------------------------ small helpers ------------------------------

def _ceil_to(x, m):
    return ((x + m - 1) // m) * m


def _pick_row_tile(h, cap):
    """Largest divisor of `h` that is <= cap (output rows per grid block)."""
    for th in range(min(h, cap), 0, -1):
        if h % th == 0:
            return th
    return 1


def _nbytes(shape, dtype):
    return math.prod(shape) * jnp.dtype(dtype).itemsize


def _tap_shift(dy, dx, width):
    # Flattened-block index of the input sample feeding output position `o`
    # for tap (dy, dx):  in_flat = o + _FLAT_PAD + dy*width + (dx - 1).
    return _FLAT_PAD + dy * width + (dx - 1)


# ----------------------------- Pallas kernels ------------------------------

def _accum_3x3(xf_ref, w_ref, npos, width, cout):
    """3x3 conv for one row block = sum of 9 shifted-slice MXU matmuls."""
    cin = xf_ref.shape[-1]
    col = jax.lax.broadcasted_iota(jnp.int32, (npos, cin), 0) % width
    left_ok = col != 0              # dx == 0 taps invalid at w == 0
    right_ok = col != (width - 1)   # dx == 2 taps invalid at w == W-1
    acc = jnp.zeros((npos, cout), dtype=jnp.float32)
    for dy in range(3):
        for dx in range(3):
            xs = xf_ref[pl.ds(_tap_shift(dy, dx, width), npos), :]
            if dx == 0:
                xs = jnp.where(left_ok, xs, 0.0)
            elif dx == 2:
                xs = jnp.where(right_ok, xs, 0.0)
            acc = acc + jnp.dot(xs.astype(jnp.bfloat16), w_ref[dy * 3 + dx],
                                preferred_element_type=jnp.float32)
    return acc


def _conv3x3_kernel(x_ref, w_ref, b_ref, *rest, npos, width,
                    inner_relu, outer_relu, has_residual):
    # x_ref: (Lb, Cin) bf16  w_ref: (9, Cin, tco) bf16  b_ref: (1, tco) f32
    # [r_ref: (npos, tco)]   o_ref: (npos, tco)         xf_ref: (Lb, Cin) f32
    if has_residual:
        r_ref, o_ref, xf_ref = rest
    else:
        o_ref, xf_ref = rest
    xf_ref[...] = x_ref[...].astype(jnp.float32)
    acc = _accum_3x3(xf_ref, w_ref, npos, width, o_ref.shape[-1]) + b_ref[...]
    if inner_relu:
        acc = jnp.maximum(acc, 0.0)
    if has_residual:
        acc = acc + r_ref[...].astype(jnp.float32)
    if outer_relu:
        acc = jnp.maximum(acc, 0.0)
    o_ref[...] = acc.astype(o_ref.dtype)


def _conv3x3_dual_kernel(x_ref, w3_ref, b3_ref, w1_ref, b1_ref,
                         om_ref, os_ref, xf_ref, *, npos, width):
    # Fused resBlock front end: om = relu(conv3x3(x)+b3), os = conv1x1(x)+b1.
    xf_ref[...] = x_ref[...].astype(jnp.float32)
    acc = _accum_3x3(xf_ref, w3_ref, npos, width,
                     om_ref.shape[-1]) + b3_ref[...]
    om_ref[...] = jnp.maximum(acc, 0.0).astype(om_ref.dtype)
    xc = xf_ref[pl.ds(_tap_shift(1, 1, width), npos), :]   # centre samples
    sc = jnp.dot(xc.astype(jnp.bfloat16), w1_ref[...],
                 preferred_element_type=jnp.float32) + b1_ref[...]
    os_ref[...] = sc.astype(os_ref.dtype)


# ------------------------------- JAX wrappers -------------------------------

def block_rows_with_halo(x, row_tile):
    """[B, H, W, C] -> [B, H//row_tile, (row_tile+2)*W + 2*_FLAT_PAD, C].

    Each row block carries a 1-row zero/neighbour halo and is flattened
    row-major; _FLAT_PAD zero rows at both flat ends keep the in-kernel
    +-1 column shifts inside the block.
    """
    B, H, W, C = x.shape
    nb = H // row_tile
    xp = jnp.pad(x, ((0, 0), (1, 1), (0, 0), (0, 0)))
    blocks = [xp[:, i * row_tile:i * row_tile + row_tile + 2]
              for i in range(nb)]
    xb = jnp.stack(blocks, axis=1).reshape(B, nb, (row_tile + 2) * W, C)
    return jnp.pad(xb, ((0, 0), (0, 0), (_FLAT_PAD, _FLAT_PAD), (0, 0)))


def _common_specs(Lb, Cin, npos, tco):
    x_spec = pl.BlockSpec((None, None, Lb, Cin), lambda b, r, c: (b, r, 0, 0))
    w_spec = pl.BlockSpec((9, Cin, tco), lambda b, r, c: (0, 0, c))
    b_spec = pl.BlockSpec((1, tco), lambda b, r, c: (0, c))
    o_spec = pl.BlockSpec((None, None, npos, tco),
                          lambda b, r, c: (b, r, 0, c))
    return x_spec, w_spec, b_spec, o_spec


def conv3x3(xb, w9, b, residual=None, *, width, inner_relu, outer_relu,
            out_dtype=jnp.bfloat16):
    """Fused 3x3 conv + bias [+inner ReLU] [+residual] [+outer ReLU]."""
    B, nb, Lb, Cin = xb.shape
    Cout = w9.shape[-1]
    npos = Lb - 2 * _FLAT_PAD - 2 * width
    tco = 256 if Cout % 256 == 0 else LANE
    x_spec, w_spec, b_spec, o_spec = _common_specs(Lb, Cin, npos, tco)

    in_specs = [x_spec, w_spec, b_spec]
    args = [xb, w9, b]
    if residual is not None:
        in_specs.append(o_spec)
        args.append(residual)

    kernel = functools.partial(
        _conv3x3_kernel, npos=npos, width=width, inner_relu=inner_relu,
        outer_relu=outer_relu, has_residual=residual is not None)

    out_shape = jax.ShapeDtypeStruct((B, nb, npos, Cout), out_dtype)
    flops = 2 * B * nb * npos * 9 * Cin * Cout
    nbytes = (_nbytes(xb.shape, xb.dtype) + _nbytes(w9.shape, w9.dtype)
              + _nbytes(b.shape, b.dtype) + _nbytes(out_shape.shape, out_dtype))
    if residual is not None:
        nbytes += _nbytes(residual.shape, residual.dtype)

    return pl.pallas_call(
        kernel,
        out_shape=out_shape,
        grid=(B, nb, Cout // tco),
        in_specs=in_specs,
        out_specs=o_spec,
        scratch_shapes=[pltpu.VMEM((Lb, Cin), jnp.float32)],
        compiler_params=pltpu.CompilerParams(
            dimension_semantics=("parallel", "parallel", "parallel")),
        cost_estimate=pl.CostEstimate(flops=int(flops), transcendentals=0,
                                      bytes_accessed=int(nbytes)),
    )(*args)


def conv3x3_with_1x1_shortcut(xb, w9, b9, w1, b1, *, width,
                              out_dtype=jnp.bfloat16):
    """Fused resBlock front end: (relu(conv3x3(x)+b9), conv1x1(x)+b1)."""
    B, nb, Lb, Cin = xb.shape
    Cout = w9.shape[-1]
    npos = Lb - 2 * _FLAT_PAD - 2 * width
    tco = 256 if Cout % 256 == 0 else LANE
    x_spec, w_spec, b_spec, o_spec = _common_specs(Lb, Cin, npos, tco)
    w1_spec = pl.BlockSpec((Cin, tco), lambda b, r, c: (0, c))

    kernel = functools.partial(_conv3x3_dual_kernel, npos=npos, width=width)
    out_shape = (jax.ShapeDtypeStruct((B, nb, npos, Cout), out_dtype),
                 jax.ShapeDtypeStruct((B, nb, npos, Cout), out_dtype))
    flops = 2 * B * nb * npos * 10 * Cin * Cout
    nbytes = (_nbytes(xb.shape, xb.dtype) + _nbytes(w9.shape, w9.dtype)
              + _nbytes(w1.shape, w1.dtype) + 2 * _nbytes(b9.shape, b9.dtype)
              + 2 * _nbytes((B, nb, npos, Cout), out_dtype))

    return pl.pallas_call(
        kernel,
        out_shape=out_shape,
        grid=(B, nb, Cout // tco),
        in_specs=[x_spec, w_spec, b_spec, w1_spec, b_spec],
        out_specs=(o_spec, o_spec),
        scratch_shapes=[pltpu.VMEM((Lb, Cin), jnp.float32)],
        compiler_params=pltpu.CompilerParams(
            dimension_semantics=("parallel", "parallel", "parallel")),
        cost_estimate=pl.CostEstimate(flops=int(flops), transcendentals=0,
                                      bytes_accessed=int(nbytes)),
    )(xb, w9, b9, w1, b1)


# ----------------------------- parameter prep -------------------------------

def prep_w3x3(w_oihw):
    """PyTorch [Co,Ci,3,3] -> [9, Cip, Cop] bf16 (tap-major t = kh*3+kw)."""
    Co, Ci = w_oihw.shape[:2]
    w9 = jnp.transpose(w_oihw, (2, 3, 1, 0)).reshape(9, Ci, Co)
    w9 = jnp.pad(w9, ((0, 0), (0, _ceil_to(Ci, LANE) - Ci),
                      (0, _ceil_to(Co, LANE) - Co)))
    return w9.astype(jnp.bfloat16)


def prep_w1x1(w_oihw):
    """PyTorch [Co,Ci,1,1] -> [Cip, Cop] bf16."""
    Co, Ci = w_oihw.shape[:2]
    w = jnp.transpose(w_oihw[:, :, 0, 0], (1, 0))
    w = jnp.pad(w, ((0, _ceil_to(Ci, LANE) - Ci),
                    (0, _ceil_to(Co, LANE) - Co)))
    return w.astype(jnp.bfloat16)


def prep_b(b):
    Co = b.shape[0]
    return jnp.pad(b, (0, _ceil_to(Co, LANE) - Co)).reshape(1, -1).astype(
        jnp.float32)


def init_raw_params(key, in_channels=3, num_filters=64):
    """Deterministic synthetic params in PyTorch layout (OIHW weights)."""
    shapes = {"conv1": (in_channels, in_channels, 3),
              "conv2": (in_channels, num_filters, 3)}
    for i in range(1, 5):
        ip = in_channels if i == 1 else num_filters
        shapes[f"rb{i}_conv1"] = (num_filters, ip, 3)
        shapes[f"rb{i}_conv2"] = (num_filters, num_filters, 3)
        shapes[f"rb{i}_conv3"] = (num_filters, ip, 1)

    raw = {}
    for name, (co, ci, k) in sorted(shapes.items()):
        key, kw, kb = jax.random.split(key, 3)
        w = 0.1 * jax.random.normal(kw, (co, ci, k, k), dtype=jnp.float32)
        b = 0.05 * jax.random.normal(kb, (co,), dtype=jnp.float32)
        raw[name] = (w, b)
    return raw


def prep_params(raw):
    p = {}
    for name, (w, b) in raw.items():
        if w.shape[-1] == 3:
            p[name] = (prep_w3x3(w), prep_b(b))
        else:
            p[name] = (prep_w1x1(w), prep_b(b))
    return p


# ------------------------------ forward pass --------------------------------

def resnet_forward(x_nchw, params, *, row_tile_cap=8):
    """Pallas implementation of ResNet.forward. Input/output are NCHW."""
    B, C, H, W = x_nchw.shape
    assert W % 8 == 0, "W must be a multiple of 8"
    # TODO(synk): support W % 8 != 0 by padding the flattened spatial axis.
    th = _pick_row_tile(H, row_tile_cap)
    nb = H // th
    Cp = _ceil_to(C, LANE)

    x_nhwc = jnp.transpose(x_nchw, (0, 2, 3, 1)).astype(jnp.float32)
    x_pad = jnp.pad(x_nhwc, ((0, 0), (0, 0), (0, 0), (0, Cp - C)))  # f32
    x_bf = x_pad.astype(jnp.bfloat16)

    # top conv1 (C -> C) + ReLU
    w, b = params["conv1"]
    y = conv3x3(block_rows_with_halo(x_bf, th), w, b, width=W,
                inner_relu=True, outer_relu=False)
    y_img = y.reshape(B, H, W, y.shape[-1])

    # 4 residual blocks, 2 fused pallas_calls each
    for i in range(1, 5):
        w1, b1 = params[f"rb{i}_conv1"]
        w2, b2 = params[f"rb{i}_conv2"]
        w3, b3 = params[f"rb{i}_conv3"]
        yb = block_rows_with_halo(y_img, th)
        a, short = conv3x3_with_1x1_shortcut(yb, w1, b1, w3, b3, width=W)
        ab = block_rows_with_halo(a.reshape(B, H, W, a.shape[-1]), th)
        y = conv3x3(ab, w2, b2, residual=short, width=W,
                    inner_relu=True, outer_relu=True)
        y_img = y.reshape(B, H, W, y.shape[-1])

    # final conv2 (nf -> C), fused residual add with the network input (f32)
    w, b = params["conv2"]
    x_res = x_pad.reshape(B, nb, th * W, Cp)
    out = conv3x3(block_rows_with_halo(y_img, th), w, b, residual=x_res,
                  width=W, inner_relu=False, outer_relu=False,
                  out_dtype=jnp.float32)
    out = out.reshape(B, H, W, Cp)[:, :, :, :C]
    return jnp.transpose(out, (0, 3, 1, 2))


# --------------------------- pure-JAX reference -----------------------------

def _conv_ref(x, w, b, pad):
    out = jax.lax.conv_general_dilated(
        x, w, window_strides=(1, 1), padding=[(pad, pad), (pad, pad)],
        dimension_numbers=("NCHW", "OIHW", "NCHW"),
        precision=jax.lax.Precision.HIGHEST)
    return out + b.reshape(1, -1, 1, 1)


def resnet_ref(x, raw):
    relu = lambda t: jnp.maximum(t, 0.0)

    def resblock(xx, pfx):
        y = relu(_conv_ref(xx, *raw[pfx + "_conv1"], 1))
        y = relu(_conv_ref(y, *raw[pfx + "_conv2"], 1))
        s = _conv_ref(xx, *raw[pfx + "_conv3"], 0)
        return relu(s + y)

    y = relu(_conv_ref(x, *raw["conv1"], 1))
    for i in range(1, 5):
        y = resblock(y, f"rb{i}")
    y = _conv_ref(y, *raw["conv2"], 1)
    return x + y


# ---------------------------------- main ------------------------------------

if __name__ == "__main__":
    B, C, H, W = 2, 3, 16, 16
    num_filters = 32

    key = jax.random.PRNGKey(0)
    key, kx = jax.random.split(key)
    x = jax.random.normal(kx, (B, C, H, W), dtype=jnp.float32)

    raw_params = init_raw_params(key, in_channels=C, num_filters=num_filters)
    params = prep_params(raw_params)

    fwd = jax.jit(resnet_forward)
    out = jax.block_until_ready(fwd(x, params))

    ref = jax.block_until_ready(resnet_ref(x, raw_params))

    assert out.shape == (B, C, H, W), out.shape
    err = float(jnp.max(jnp.abs(out - ref)))
    scale = float(jnp.max(jnp.abs(ref)))
    # bf16 activations/weights with f32 accumulation -> bf16-level tolerance.
    assert err <= 2e-2 * scale + 2e-2, (err, scale)

    print("KERNEL_OK")
</pallas_src>

<mosaic_0001>
module attributes {stable_mosaic.version = 11 : i64} {
  func.func @_conv3x3_kernel(%arg0: i32, %arg1: i32, %arg2: i32, %arg3: memref<1x1x176x128xbf16, #tpu.memory_space<vmem>>, %arg4: memref<9x128x128xbf16, #tpu.memory_space<vmem>>, %arg5: memref<1x128xf32, #tpu.memory_space<vmem>>, %arg6: memref<1x1x128x128xbf16, #tpu.memory_space<vmem>>, %arg7: memref<176x128xf32, #tpu.memory_space<vmem>>) attributes {dimension_semantics = [#tpu.dimension_semantics<parallel>, #tpu.dimension_semantics<parallel>, #tpu.dimension_semantics<parallel>], iteration_bounds = array<i64: 2, 2, 1>, scalar_prefetch = 0 : i64, scratch_operands = 1 : i64, tpu.core_type = #tpu.core_type<tc>, window_params = [{transform_indices = @transform_0, window_bounds = array<i64: 1, 1, 176, 128>}, {transform_indices = @transform_1, window_bounds = array<i64: 9, 128, 128>}, {transform_indices = @transform_2, window_bounds = array<i64: 1, 128>}, {transform_indices = @transform_3, window_bounds = array<i64: 1, 1, 128, 128>}]} {
    %c0 = arith.constant 0 : index
    %c0_0 = arith.constant 0 : index
    %c0_1 = arith.constant 0 : index
    %c0_2 = arith.constant 0 : index
    %0 = vector.load %arg3[%c0, %c0_0, %c0_1, %c0_2] : memref<1x1x176x128xbf16, #tpu.memory_space<vmem>>, vector<1x1x176x128xbf16>
    %1 = vector.shape_cast %0 : vector<1x1x176x128xbf16> to vector<176x128xbf16>
    %2 = arith.extf %1 : vector<176x128xbf16> to vector<176x128xf32>
    %c0_3 = arith.constant 0 : index
    %c0_4 = arith.constant 0 : index
    %3 = vector.load %arg7[%c0_3, %c0_4] : memref<176x128xf32, #tpu.memory_space<vmem>>, vector<176x128xf32>
    tpu.vector_store %arg7[%c0_3, %c0_4], %2 {strides = array<i32>} : memref<176x128xf32, #tpu.memory_space<vmem>>, vector<176x128xf32>,
    %4 = tpu.iota {dimensions = array<i32: 0>} : vector<128x128xi32>
    %c16_i32 = arith.constant 16 : i32
    %c0_i32 = arith.constant 0 : i32
    %5 = arith.cmpi eq, %c16_i32, %c0_i32 : i32
    %c1_i32 = arith.constant 1 : i32
    %6 = arith.select %5, %c1_i32, %c16_i32 : i32
    %7 = vector.broadcast %6 : i32 to vector<128x128xi32>
    %8 = arith.remsi %4, %7 : vector<128x128xi32>
    %c0_i32_5 = arith.constant 0 : i32
    %9 = vector.broadcast %c0_i32_5 : i32 to vector<128x128xi32>
    %10 = arith.cmpi ne, %8, %9 : vector<128x128xi32>
    %c0_i32_6 = arith.constant 0 : i32
    %11 = vector.broadcast %c0_i32_6 : i32 to vector<128x128xi32>
    %12 = arith.cmpi slt, %8, %11 : vector<128x128xi32>
    %c0_i32_7 = arith.constant 0 : i32
    %13 = arith.cmpi slt, %6, %c0_i32_7 : i32
    %14 = vector.broadcast %13 : i1 to vector<128x128xi1>
    %15 = vector.broadcast %14 : vector<128x128xi1> to vector<128x128xi1>
    %16 = arith.xori %12, %15 : vector<128x128xi1>
    %17 = arith.andi %16, %10 : vector<128x128xi1>
    %18 = vector.broadcast %6 : i32 to vector<128x128xi32>
    %19 = arith.addi %8, %18 : vector<128x128xi32>
    %20 = arith.select %17, %19, %8 : vector<128x128xi1>, vector<128x128xi32>
    %c0_i32_8 = arith.constant 0 : i32
    %21 = vector.broadcast %c0_i32_8 : i32 to vector<128x128xi32>
    %22 = arith.cmpi ne, %20, %21 : vector<128x128xi32>
    %c15_i32 = arith.constant 15 : i32
    %23 = vector.broadcast %c15_i32 : i32 to vector<128x128xi32>
    %24 = arith.cmpi ne, %20, %23 : vector<128x128xi32>
    %cst = arith.constant 0.000000e+00 : f32
    %25 = vector.broadcast %cst : f32 to vector<128x128xf32>
    %c7 = arith.constant 7 : index
    %c0_9 = arith.constant 0 : index
    %26 = vector.load %arg7[%c7, %c0_9] : memref<176x128xf32, #tpu.memory_space<vmem>>, vector<128x128xf32>
    %cst_10 = arith.constant 0.000000e+00 : f32
    %27 = vector.broadcast %cst_10 : f32 to vector<128x128xf32>
    %28 = arith.select %22, %26, %27 : vector<128x128xi1>, vector<128x128xf32>
    %29 = arith.truncf %28 : vector<128x128xf32> to vector<128x128xbf16>
    %c0_11 = arith.constant 0 : index
    %c0_12 = arith.constant 0 : index
    %c0_13 = arith.constant 0 : index
    %30 = vector.load %arg4[%c0_11, %c0_12, %c0_13] : memref<9x128x128xbf16, #tpu.memory_space<vmem>>, vector<1x128x128xbf16>
    %31 = vector.shape_cast %30 : vector<1x128x128xbf16> to vector<128x128xbf16>
    %cst_14 = arith.constant dense<0.000000e+00> : vector<128x128xf32>
    %32 = tpu.matmul %29, %31, %cst_14 {dimension_numbers = #tpu.dot_dimension_numbers<[1], [0], [0], [1], [0, 0, 1, 1], [], []>} : vector<128x128xbf16>, vector<128x128xbf16>, vector<128x128xf32> -> vector<128x128xf32>
    %33 = arith.addf %25, %32 : vector<128x128xf32>
    %c8 = arith.constant 8 : index
    %c0_15 = arith.constant 0 : index
    %34 = vector.load %arg7[%c8, %c0_15] : memref<176x128xf32, #tpu.memory_space<vmem>>, vector<128x128xf32>
    %35 = arith.truncf %34 : vector<128x128xf32> to vector<128x128xbf16>
    %c1 = arith.constant 1 : index
    %c0_16 = arith.constant 0 : index
    %c0_17 = arith.constant 0 : index
    %36 = vector.load %arg4[%c1, %c0_16, %c0_17] : memref<9x128x128xbf16, #tpu.memory_space<vmem>>, vector<1x128x128xbf16>
    %37 = vector.shape_cast %36 : vector<1x128x128xbf16> to vector<128x128xbf16>
    %cst_18 = arith.constant dense<0.000000e+00> : vector<128x128xf32>
    %38 = tpu.matmul %35, %37, %cst_18 {dimension_numbers = #tpu.dot_dimension_numbers<[1], [0], [0], [1], [0, 0, 1, 1], [], []>} : vector<128x128xbf16>, vector<128x128xbf16>, vector<128x128xf32> -> vector<128x128xf32>
    %39 = arith.addf %33, %38 : vector<128x128xf32>
    %c9 = arith.constant 9 : index
    %c0_19 = arith.constant 0 : index
    %40 = vector.load %arg7[%c9, %c0_19] : memref<176x128xf32, #tpu.memory_space<vmem>>, vector<128x128xf32>
    %cst_20 = arith.constant 0.000000e+00 : f32
    %41 = vector.broadcast %cst_20 : f32 to vector<128x128xf32>
    %42 = arith.select %24, %40, %41 : vector<128x128xi1>, vector<128x128xf32>
    %43 = arith.truncf %42 : vector<128x128xf32> to vector<128x128xbf16>
    %c2 = arith.constant 2 : index
    %c0_21 = arith.constant 0 : index
    %c0_22 = arith.constant 0 : index
    %44 = vector.load %arg4[%c2, %c0_21, %c0_22] : memref<9x128x128xbf16, #tpu.memory_space<vmem>>, vector<1x128x128xbf16>
    %45 = vector.shape_cast %44 : vector<1x128x128xbf16> to vector<128x128xbf16>
    %cst_23 = arith.constant dense<0.000000e+00> : vector<128x128xf32>
    %46 = tpu.matmul %43, %45, %cst_23 {dimension_numbers = #tpu.dot_dimension_numbers<[1], [0], [0], [1], [0, 0, 1, 1], [], []>} : vector<128x128xbf16>, vector<128x128xbf16>, vector<128x128xf32> -> vector<128x128xf32>
    %47 = arith.addf %39, %46 : vector<128x128xf32>
    %c23 = arith.constant 23 : index
    %c0_24 = arith.constant 0 : index
    %48 = vector.load %arg7[%c23, %c0_24] : memref<176x128xf32, #tpu.memory_space<vmem>>, vector<128x128xf32>
    %cst_25 = arith.constant 0.000000e+00 : f32
    %49 = vector.broadcast %cst_25 : f32 to vector<128x128xf32>
    %50 = arith.select %22, %48, %49 : vector<128x128xi1>, vector<128x128xf32>
    %51 = arith.truncf %50 : vector<128x128xf32> to vector<128x128xbf16>
    %c3 = arith.constant 3 : index
    %c0_26 = arith.constant 0 : index
    %c0_27 = arith.constant 0 : index
    %52 = vector.load %arg4[%c3, %c0_26, %c0_27] : memref<9x128x128xbf16, #tpu.memory_space<vmem>>, vector<1x128x128xbf16>
    %53 = vector.shape_cast %52 : vector<1x128x128xbf16> to vector<128x128xbf16>
    %cst_28 = arith.constant dense<0.000000e+00> : vector<128x128xf32>
    %54 = tpu.matmul %51, %53, %cst_28 {dimension_numbers = #tpu.dot_dimension_numbers<[1], [0], [0], [1], [0, 0, 1, 1], [], []>} : vector<128x128xbf16>, vector<128x128xbf16>, vector<128x128xf32> -> vector<128x128xf32>
    %55 = arith.addf %47, %54 : vector<128x128xf32>
    %c24 = arith.constant 24 : index
    %c0_29 = arith.constant 0 : index
    %56 = vector.load %arg7[%c24, %c0_29] : memref<176x128xf32, #tpu.memory_space<vmem>>, vector<128x128xf32>
    %57 = arith.truncf %56 : vector<128x128xf32> to vector<128x128xbf16>
    %c4 = arith.constant 4 : index
    %c0_30 = arith.constant 0 : index
    %c0_31 = arith.constant 0 : index
    %58 = vector.load %arg4[%c4, %c0_30, %c0_31] : memref<9x128x128xbf16, #tpu.memory_space<vmem>>, vector<1x128x128xbf16>
    %59 = vector.shape_cast %58 : vector<1x128x128xbf16> to vector<128x128xbf16>
    %cst_32 = arith.constant dense<0.000000e+00> : vector<128x128xf32>
    %60 = tpu.matmul %57, %59, %cst_32 {dimension_numbers = #tpu.dot_dimension_numbers<[1], [0], [0], [1], [0, 0, 1, 1], [], []>} : vector<128x128xbf16>, vector<128x128xbf16>, vector<128x128xf32> -> vector<128x128xf32>
    %61 = arith.addf %55, %60 : vector<128x128xf32>
    %c25 = arith.constant 25 : index
    %c0_33 = arith.constant 0 : index
    %62 = vector.load %arg7[%c25, %c0_33] : memref<176x128xf32, #tpu.memory_space<vmem>>, vector<128x128xf32>
    %cst_34 = arith.constant 0.000000e+00 : f32
    %63 = vector.broadcast %cst_34 : f32 to vector<128x128xf32>
    %64 = arith.select %24, %62, %63 : vector<128x128xi1>, vector<128x128xf32>
    %65 = arith.truncf %64 : vector<128x128xf32> to vector<128x128xbf16>
    %c5 = arith.constant 5 : index
    %c0_35 = arith.constant 0 : index
    %c0_36 = arith.constant 0 : index
    %66 = vector.load %arg4[%c5, %c0_35, %c0_36] : memref<9x128x128xbf16, #tpu.memory_space<vmem>>, vector<1x128x128xbf16>
    %67 = vector.shape_cast %66 : vector<1x128x128xbf16> to vector<128x128xbf16>
    %cst_37 = arith.constant dense<0.000000e+00> : vector<128x128xf32>
    %68 = tpu.matmul %65, %67, %cst_37 {dimension_numbers = #tpu.dot_dimension_numbers<[1], [0], [0], [1], [0, 0, 1, 1], [], []>} : vector<128x128xbf16>, vector<128x128xbf16>, vector<128x128xf32> -> vector<128x128xf32>
    %69 = arith.addf %61, %68 : vector<128x128xf32>
    %c39 = arith.constant 39 : index
    %c0_38 = arith.constant 0 : index
    %70 = vector.load %arg7[%c39, %c0_38] : memref<176x128xf32, #tpu.memory_space<vmem>>, vector<128x128xf32>
    %cst_39 = arith.constant 0.000000e+00 : f32
    %71 = vector.broadcast %cst_39 : f32 to vector<128x128xf32>
    %72 = arith.select %22, %70, %71 : vector<128x128xi1>, vector<128x128xf32>
    %73 = arith.truncf %72 : vector<128x128xf32> to vector<128x128xbf16>
    %c6 = arith.constant 6 : index
    %c0_40 = arith.constant 0 : index
    %c0_41 = arith.constant 0 : index
    %74 = vector.load %arg4[%c6, %c0_40, %c0_41] : memref<9x128x128xbf16, #tpu.memory_space<vmem>>, vector<1x128x128xbf16>
    %75 = vector.shape_cast %74 : vector<1x128x128xbf16> to vector<128x128xbf16>
    %cst_42 = arith.constant dense<0.000000e+00> : vector<128x128xf32>
    %76 = tpu.matmul %73, %75, %cst_42 {dimension_numbers = #tpu.dot_dimension_numbers<[1], [0], [0], [1], [0, 0, 1, 1], [], []>} : vector<128x128xbf16>, vector<128x128xbf16>, vector<128x128xf32> -> vector<128x128xf32>
    %77 = arith.addf %69, %76 : vector<128x128xf32>
    %c40 = arith.constant 40 : index
    %c0_43 = arith.constant 0 : index
    %78 = vector.load %arg7[%c40, %c0_43] : memref<176x128xf32, #tpu.memory_space<vmem>>, vector<128x128xf32>
    %79 = arith.truncf %78 : vector<128x128xf32> to vector<128x128xbf16>
    %c7_44 = arith.constant 7 : index
    %c0_45 = arith.constant 0 : index
    %c0_46 = arith.constant 0 : index
    %80 = vector.load %arg4[%c7_44, %c0_45, %c0_46] : memref<9x128x128xbf16, #tpu.memory_space<vmem>>, vector<1x128x128xbf16>
    %81 = vector.shape_cast %80 : vector<1x128x128xbf16> to vector<128x128xbf16>
    %cst_47 = arith.constant dense<0.000000e+00> : vector<128x128xf32>
    %82 = tpu.matmul %79, %81, %cst_47 {dimension_numbers = #tpu.dot_dimension_numbers<[1], [0], [0], [1], [0, 0, 1, 1], [], []>} : vector<128x128xbf16>, vector<128x128xbf16>, vector<128x128xf32> -> vector<128x128xf32>
    %83 = arith.addf %77, %82 : vector<128x128xf32>
    %c41 = arith.constant 41 : index
    %c0_48 = arith.constant 0 : index
    %84 = vector.load %arg7[%c41, %c0_48] : memref<176x128xf32, #tpu.memory_space<vmem>>, vector<128x128xf32>
    %cst_49 = arith.constant 0.000000e+00 : f32
    %85 = vector.broadcast %cst_49 : f32 to vector<128x128xf32>
    %86 = arith.select %24, %84, %85 : vector<128x128xi1>, vector<128x128xf32>
    %87 = arith.truncf %86 : vector<128x128xf32> to vector<128x128xbf16>
    %c8_50 = arith.constant 8 : index
    %c0_51 = arith.constant 0 : index
    %c0_52 = arith.constant 0 : index
    %88 = vector.load %arg4[%c8_50, %c0_51, %c0_52] : memref<9x128x128xbf16, #tpu.memory_space<vmem>>, vector<1x128x128xbf16>
    %89 = vector.shape_cast %88 : vector<1x128x128xbf16> to vector<128x128xbf16>
    %cst_53 = arith.constant dense<0.000000e+00> : vector<128x128xf32>
    %90 = tpu.matmul %87, %89, %cst_53 {dimension_numbers = #tpu.dot_dimension_numbers<[1], [0], [0], [1], [0, 0, 1, 1], [], []>} : vector<128x128xbf16>, vector<128x128xbf16>, vector<128x128xf32> -> vector<128x128xf32>
    %91 = arith.addf %83, %90 : vector<128x128xf32>
    %c0_54 = arith.constant 0 : index
    %c0_55 = arith.constant 0 : index
    %92 = vector.load %arg5[%c0_54, %c0_55] : memref<1x128xf32, #tpu.memory_space<vmem>>, vector<1x128xf32>
    %93 = vector.broadcast %92 : vector<1x128xf32> to vector<128x128xf32>
    %94 = arith.addf %91, %93 : vector<128x128xf32>
    %cst_56 = arith.constant 0.000000e+00 : f32
    %95 = vector.broadcast %cst_56 : f32 to vector<128x128xf32>
    %96 = arith.maximumf %94, %95 : vector<128x128xf32>
    %97 = arith.truncf %96 : vector<128x128xf32> to vector<128x128xbf16>
    %c0_57 = arith.constant 0 : index
    %c0_58 = arith.constant 0 : index
    %c0_59 = arith.constant 0 : index
    %c0_60 = arith.constant 0 : index
    %98 = vector.load %arg6[%c0_57, %c0_58, %c0_59, %c0_60] : memref<1x1x128x128xbf16, #tpu.memory_space<vmem>>, vector<1x1x128x128xbf16>
    %99 = vector.shape_cast %98 : vector<1x1x128x128xbf16> to vector<128x128xbf16>
    %100 = vector.shape_cast %97 : vector<128x128xbf16> to vector<1x1x128x128xbf16>
    tpu.vector_store %arg6[%c0_57, %c0_58, %c0_59, %c0_60], %100 {strides = array<i32>} : memref<1x1x128x128xbf16, #tpu.memory_space<vmem>>, vector<1x1x128x128xbf16>,
    return
  }
  func.func @transform_0(%arg0: i32, %arg1: i32, %arg2: i32) -> (i32, i32, i32, i32) {
    %c0_i32 = arith.constant 0 : i32
    %c0_i32_0 = arith.constant 0 : i32
    %c0_i32_1 = arith.constant 0 : i32
    return %arg0, %arg1, %c0_i32, %c0_i32_0 : i32, i32, i32, i32
  }
  func.func @transform_1(%arg0: i32, %arg1: i32, %arg2: i32) -> (i32, i32, i32) {
    %c0_i32 = arith.constant 0 : i32
    %c0_i32_0 = arith.constant 0 : i32
    %c0_i32_1 = arith.constant 0 : i32
    return %c0_i32, %c0_i32_0, %arg2 : i32, i32, i32
  }
  func.func @transform_2(%arg0: i32, %arg1: i32, %arg2: i32) -> (i32, i32) {
    %c0_i32 = arith.constant 0 : i32
    %c0_i32_0 = arith.constant 0 : i32
    return %c0_i32, %arg2 : i32, i32
  }
  func.func @transform_3(%arg0: i32, %arg1: i32, %arg2: i32) -> (i32, i32, i32, i32) {
    %c0_i32 = arith.constant 0 : i32
    %c0_i32_0 = arith.constant 0 : i32
    return %arg0, %arg1, %c0_i32, %arg2 : i32, i32, i32, i32
  }
}

module attributes {stable_mosaic.version = 11 : i64} {
  func.func @_conv3x3_dual_kernel(%arg0: i32, %arg1: i32, %arg2: i32, %arg3: memref<1x1x176x128xbf16, #tpu.memory_space<vmem>>, %arg4: memref<9x128x128xbf16, #tpu.memory_space<vmem>>, %arg5: memref<1x128xf32, #tpu.memory_space<vmem>>, %arg6: memref<128x128xbf16, #tpu.memory_space<vmem>>, %arg7: memref<1x128xf32, #tpu.memory_space<vmem>>, %arg8: memref<1x1x128x128xbf16, #tpu.memory_space<vmem>>, %arg9: memref<1x1x128x128xbf16, #tpu.memory_space<vmem>>, %arg10: memref<176x128xf32, #tpu.memory_space<vmem>>) attributes {dimension_semantics = [#tpu.dimension_semantics<parallel>, #tpu.dimension_semantics<parallel>, #tpu.dimension_semantics<parallel>], iteration_bounds = array<i64: 2, 2, 1>, scalar_prefetch = 0 : i64, scratch_operands = 1 : i64, tpu.core_type = #tpu.core_type<tc>, window_params = [{transform_indices = @transform_0, window_bounds = array<i64: 1, 1, 176, 128>}, {transform_indices = @transform_1, window_bounds = array<i64: 9, 128, 128>}, {transform_indices = @transform_2, window_bounds = array<i64: 1, 128>}, {transform_indices = @transform_3, window_bounds = array<i64: 128, 128>}, {transform_indices = @transform_4, window_bounds = array<i64: 1, 128>}, {transform_indices = @transform_5, window_bounds = array<i64: 1, 1, 128, 128>}, {transform_indices = @transform_6, window_bounds = array<i64: 1, 1, 128, 128>}]} {
    %c0 = arith.constant 0 : index
    %c0_0 = arith.constant 0 : index
    %c0_1 = arith.constant 0 : index
    %c0_2 = arith.constant 0 : index
    %0 = vector.load %arg3[%c0, %c0_0, %c0_1, %c0_2] : memref<1x1x176x128xbf16, #tpu.memory_space<vmem>>, vector<1x1x176x128xbf16>
    %1 = vector.shape_cast %0 : vector<1x1x176x128xbf16> to vector<176x128xbf16>
    %2 = arith.extf %1 : vector<176x128xbf16> to vector<176x128xf32>
    %c0_3 = arith.constant 0 : index
    %c0_4 = arith.constant 0 : index
    %3 = vector.load %arg10[%c0_3, %c0_4] : memref<176x128xf32, #tpu.memory_space<vmem>>, vector<176x128xf32>
    tpu.vector_store %arg10[%c0_3, %c0_4], %2 {strides = array<i32>} : memref<176x128xf32, #tpu.memory_space<vmem>>, vector<176x128xf32>,
    %4 = tpu.iota {dimensions = array<i32: 0>} : vector<128x128xi32>
    %c16_i32 = arith.constant 16 : i32
    %c0_i32 = arith.constant 0 : i32
    %5 = arith.cmpi eq, %c16_i32, %c0_i32 : i32
    %c1_i32 = arith.constant 1 : i32
    %6 = arith.select %5, %c1_i32, %c16_i32 : i32
    %7 = vector.broadcast %6 : i32 to vector<128x128xi32>
    %8 = arith.remsi %4, %7 : vector<128x128xi32>
    %c0_i32_5 = arith.constant 0 : i32
    %9 = vector.broadcast %c0_i32_5 : i32 to vector<128x128xi32>
    %10 = arith.cmpi ne, %8, %9 : vector<128x128xi32>
    %c0_i32_6 = arith.constant 0 : i32
    %11 = vector.broadcast %c0_i32_6 : i32 to vector<128x128xi32>
    %12 = arith.cmpi slt, %8, %11 : vector<128x128xi32>
    %c0_i32_7 = arith.constant 0 : i32
    %13 = arith.cmpi slt, %6, %c0_i32_7 : i32
    %14 = vector.broadcast %13 : i1 to vector<128x128xi1>
    %15 = vector.broadcast %14 : vector<128x128xi1> to vector<128x128xi1>
    %16 = arith.xori %12, %15 : vector<128x128xi1>
    %17 = arith.andi %16, %10 : vector<128x128xi1>
    %18 = vector.broadcast %6 : i32 to vector<128x128xi32>
    %19 = arith.addi %8, %18 : vector<128x128xi32>
    %20 = arith.select %17, %19, %8 : vector<128x128xi1>, vector<128x128xi32>
    %c0_i32_8 = arith.constant 0 : i32
    %21 = vector.broadcast %c0_i32_8 : i32 to vector<128x128xi32>
    %22 = arith.cmpi ne, %20, %21 : vector<128x128xi32>
    %c15_i32 = arith.constant 15 : i32
    %23 = vector.broadcast %c15_i32 : i32 to vector<128x128xi32>
    %24 = arith.cmpi ne, %20, %23 : vector<128x128xi32>
    %cst = arith.constant 0.000000e+00 : f32
    %25 = vector.broadcast %cst : f32 to vector<128x128xf32>
    %c7 = arith.constant 7 : index
    %c0_9 = arith.constant 0 : index
    %26 = vector.load %arg10[%c7, %c0_9] : memref<176x128xf32, #tpu.memory_space<vmem>>, vector<128x128xf32>
    %cst_10 = arith.constant 0.000000e+00 : f32
    %27 = vector.broadcast %cst_10 : f32 to vector<128x128xf32>
    %28 = arith.select %22, %26, %27 : vector<128x128xi1>, vector<128x128xf32>
    %29 = arith.truncf %28 : vector<128x128xf32> to vector<128x128xbf16>
    %c0_11 = arith.constant 0 : index
    %c0_12 = arith.constant 0 : index
    %c0_13 = arith.constant 0 : index
    %30 = vector.load %arg4[%c0_11, %c0_12, %c0_13] : memref<9x128x128xbf16, #tpu.memory_space<vmem>>, vector<1x128x128xbf16>
    %31 = vector.shape_cast %30 : vector<1x128x128xbf16> to vector<128x128xbf16>
    %cst_14 = arith.constant dense<0.000000e+00> : vector<128x128xf32>
    %32 = tpu.matmul %29, %31, %cst_14 {dimension_numbers = #tpu.dot_dimension_numbers<[1], [0], [0], [1], [0, 0, 1, 1], [], []>} : vector<128x128xbf16>, vector<128x128xbf16>, vector<128x128xf32> -> vector<128x128xf32>
    %33 = arith.addf %25, %32 : vector<128x128xf32>
    %c8 = arith.constant 8 : index
    %c0_15 = arith.constant 0 : index
    %34 = vector.load %arg10[%c8, %c0_15] : memref<176x128xf32, #tpu.memory_space<vmem>>, vector<128x128xf32>
    %35 = arith.truncf %34 : vector<128x128xf32> to vector<128x128xbf16>
    %c1 = arith.constant 1 : index
    %c0_16 = arith.constant 0 : index
    %c0_17 = arith.constant 0 : index
    %36 = vector.load %arg4[%c1, %c0_16, %c0_17] : memref<9x128x128xbf16, #tpu.memory_space<vmem>>, vector<1x128x128xbf16>
    %37 = vector.shape_cast %36 : vector<1x128x128xbf16> to vector<128x128xbf16>
    %cst_18 = arith.constant dense<0.000000e+00> : vector<128x128xf32>
    %38 = tpu.matmul %35, %37, %cst_18 {dimension_numbers = #tpu.dot_dimension_numbers<[1], [0], [0], [1], [0, 0, 1, 1], [], []>} : vector<128x128xbf16>, vector<128x128xbf16>, vector<128x128xf32> -> vector<128x128xf32>
    %39 = arith.addf %33, %38 : vector<128x128xf32>
    %c9 = arith.constant 9 : index
    %c0_19 = arith.constant 0 : index
    %40 = vector.load %arg10[%c9, %c0_19] : memref<176x128xf32, #tpu.memory_space<vmem>>, vector<128x128xf32>
    %cst_20 = arith.constant 0.000000e+00 : f32
    %41 = vector.broadcast %cst_20 : f32 to vector<128x128xf32>
    %42 = arith.select %24, %40, %41 : vector<128x128xi1>, vector<128x128xf32>
    %43 = arith.truncf %42 : vector<128x128xf32> to vector<128x128xbf16>
    %c2 = arith.constant 2 : index
    %c0_21 = arith.constant 0 : index
    %c0_22 = arith.constant 0 : index
    %44 = vector.load %arg4[%c2, %c0_21, %c0_22] : memref<9x128x128xbf16, #tpu.memory_space<vmem>>, vector<1x128x128xbf16>
    %45 = vector.shape_cast %44 : vector<1x128x128xbf16> to vector<128x128xbf16>
    %cst_23 = arith.constant dense<0.000000e+00> : vector<128x128xf32>
    %46 = tpu.matmul %43, %45, %cst_23 {dimension_numbers = #tpu.dot_dimension_numbers<[1], [0], [0], [1], [0, 0, 1, 1], [], []>} : vector<128x128xbf16>, vector<128x128xbf16>, vector<128x128xf32> -> vector<128x128xf32>
    %47 = arith.addf %39, %46 : vector<128x128xf32>
    %c23 = arith.constant 23 : index
    %c0_24 = arith.constant 0 : index
    %48 = vector.load %arg10[%c23, %c0_24] : memref<176x128xf32, #tpu.memory_space<vmem>>, vector<128x128xf32>
    %cst_25 = arith.constant 0.000000e+00 : f32
    %49 = vector.broadcast %cst_25 : f32 to vector<128x128xf32>
    %50 = arith.select %22, %48, %49 : vector<128x128xi1>, vector<128x128xf32>
    %51 = arith.truncf %50 : vector<128x128xf32> to vector<128x128xbf16>
    %c3 = arith.constant 3 : index
    %c0_26 = arith.constant 0 : index
    %c0_27 = arith.constant 0 : index
    %52 = vector.load %arg4[%c3, %c0_26, %c0_27] : memref<9x128x128xbf16, #tpu.memory_space<vmem>>, vector<1x128x128xbf16>
    %53 = vector.shape_cast %52 : vector<1x128x128xbf16> to vector<128x128xbf16>
    %cst_28 = arith.constant dense<0.000000e+00> : vector<128x128xf32>
    %54 = tpu.matmul %51, %53, %cst_28 {dimension_numbers = #tpu.dot_dimension_numbers<[1], [0], [0], [1], [0, 0, 1, 1], [], []>} : vector<128x128xbf16>, vector<128x128xbf16>, vector<128x128xf32> -> vector<128x128xf32>
    %55 = arith.addf %47, %54 : vector<128x128xf32>
    %c24 = arith.constant 24 : index
    %c0_29 = arith.constant 0 : index
    %56 = vector.load %arg10[%c24, %c0_29] : memref<176x128xf32, #tpu.memory_space<vmem>>, vector<128x128xf32>
    %57 = arith.truncf %56 : vector<128x128xf32> to vector<128x128xbf16>
    %c4 = arith.constant 4 : index
    %c0_30 = arith.constant 0 : index
    %c0_31 = arith.constant 0 : index
    %58 = vector.load %arg4[%c4, %c0_30, %c0_31] : memref<9x128x128xbf16, #tpu.memory_space<vmem>>, vector<1x128x128xbf16>
    %59 = vector.shape_cast %58 : vector<1x128x128xbf16> to vector<128x128xbf16>
    %cst_32 = arith.constant dense<0.000000e+00> : vector<128x128xf32>
    %60 = tpu.matmul %57, %59, %cst_32 {dimension_numbers = #tpu.dot_dimension_numbers<[1], [0], [0], [1], [0, 0, 1, 1], [], []>} : vector<128x128xbf16>, vector<128x128xbf16>, vector<128x128xf32> -> vector<128x128xf32>
    %61 = arith.addf %55, %60 : vector<128x128xf32>
    %c25 = arith.constant 25 : index
    %c0_33 = arith.constant 0 : index
    %62 = vector.load %arg10[%c25, %c0_33] : memref<176x128xf32, #tpu.memory_space<vmem>>, vector<128x128xf32>
    %cst_34 = arith.constant 0.000000e+00 : f32
    %63 = vector.broadcast %cst_34 : f32 to vector<128x128xf32>
    %64 = arith.select %24, %62, %63 : vector<128x128xi1>, vector<128x128xf32>
    %65 = arith.truncf %64 : vector<128x128xf32> to vector<128x128xbf16>
    %c5 = arith.constant 5 : index
    %c0_35 = arith.constant 0 : index
    %c0_36 = arith.constant 0 : index
    %66 = vector.load %arg4[%c5, %c0_35, %c0_36] : memref<9x128x128xbf16, #tpu.memory_space<vmem>>, vector<1x128x128xbf16>
    %67 = vector.shape_cast %66 : vector<1x128x128xbf16> to vector<128x128xbf16>
    %cst_37 = arith.constant dense<0.000000e+00> : vector<128x128xf32>
    %68 = tpu.matmul %65, %67, %cst_37 {dimension_numbers = #tpu.dot_dimension_numbers<[1], [0], [0], [1], [0, 0, 1, 1], [], []>} : vector<128x128xbf16>, vector<128x128xbf16>, vector<128x128xf32> -> vector<128x128xf32>
    %69 = arith.addf %61, %68 : vector<128x128xf32>
    %c39 = arith.constant 39 : index
    %c0_38 = arith.constant 0 : index
    %70 = vector.load %arg10[%c39, %c0_38] : memref<176x128xf32, #tpu.memory_space<vmem>>, vector<128x128xf32>
    %cst_39 = arith.constant 0.000000e+00 : f32
    %71 = vector.broadcast %cst_39 : f32 to vector<128x128xf32>
    %72 = arith.select %22, %70, %71 : vector<128x128xi1>, vector<128x128xf32>
    %73 = arith.truncf %72 : vector<128x128xf32> to vector<128x128xbf16>
    %c6 = arith.constant 6 : index
    %c0_40 = arith.constant 0 : index
    %c0_41 = arith.constant 0 : index
    %74 = vector.load %arg4[%c6, %c0_40, %c0_41] : memref<9x128x128xbf16, #tpu.memory_space<vmem>>, vector<1x128x128xbf16>
    %75 = vector.shape_cast %74 : vector<1x128x128xbf16> to vector<128x128xbf16>
    %cst_42 = arith.constant dense<0.000000e+00> : vector<128x128xf32>
    %76 = tpu.matmul %73, %75, %cst_42 {dimension_numbers = #tpu.dot_dimension_numbers<[1], [0], [0], [1], [0, 0, 1, 1], [], []>} : vector<128x128xbf16>, vector<128x128xbf16>, vector<128x128xf32> -> vector<128x128xf32>
    %77 = arith.addf %69, %76 : vector<128x128xf32>
    %c40 = arith.constant 40 : index
    %c0_43 = arith.constant 0 : index
    %78 = vector.load %arg10[%c40, %c0_43] : memref<176x128xf32, #tpu.memory_space<vmem>>, vector<128x128xf32>
    %79 = arith.truncf %78 : vector<128x128xf32> to vector<128x128xbf16>
    %c7_44 = arith.constant 7 : index
    %c0_45 = arith.constant 0 : index
    %c0_46 = arith.constant 0 : index
    %80 = vector.load %arg4[%c7_44, %c0_45, %c0_46] : memref<9x128x128xbf16, #tpu.memory_space<vmem>>, vector<1x128x128xbf16>
    %81 = vector.shape_cast %80 : vector<1x128x128xbf16> to vector<128x128xbf16>
    %cst_47 = arith.constant dense<0.000000e+00> : vector<128x128xf32>
    %82 = tpu.matmul %79, %81, %cst_47 {dimension_numbers = #tpu.dot_dimension_numbers<[1], [0], [0], [1], [0, 0, 1, 1], [], []>} : vector<128x128xbf16>, vector<128x128xbf16>, vector<128x128xf32> -> vector<128x128xf32>
    %83 = arith.addf %77, %82 : vector<128x128xf32>
    %c41 = arith.constant 41 : index
    %c0_48 = arith.constant 0 : index
    %84 = vector.load %arg10[%c41, %c0_48] : memref<176x128xf32, #tpu.memory_space<vmem>>, vector<128x128xf32>
    %cst_49 = arith.constant 0.000000e+00 : f32
    %85 = vector.broadcast %cst_49 : f32 to vector<128x128xf32>
    %86 = arith.select %24, %84, %85 : vector<128x128xi1>, vector<128x128xf32>
    %87 = arith.truncf %86 : vector<128x128xf32> to vector<128x128xbf16>
    %c8_50 = arith.constant 8 : index
    %c0_51 = arith.constant 0 : index
    %c0_52 = arith.constant 0 : index
    %88 = vector.load %arg4[%c8_50, %c0_51, %c0_52] : memref<9x128x128xbf16, #tpu.memory_space<vmem>>, vector<1x128x128xbf16>
    %89 = vector.shape_cast %88 : vector<1x128x128xbf16> to vector<128x128xbf16>
    %cst_53 = arith.constant dense<0.000000e+00> : vector<128x128xf32>
    %90 = tpu.matmul %87, %89, %cst_53 {dimension_numbers = #tpu.dot_dimension_numbers<[1], [0], [0], [1], [0, 0, 1, 1], [], []>} : vector<128x128xbf16>, vector<128x128xbf16>, vector<128x128xf32> -> vector<128x128xf32>
    %91 = arith.addf %83, %90 : vector<128x128xf32>
    %c0_54 = arith.constant 0 : index
    %c0_55 = arith.constant 0 : index
    %92 = vector.load %arg5[%c0_54, %c0_55] : memref<1x128xf32, #tpu.memory_space<vmem>>, vector<1x128xf32>
    %93 = vector.broadcast %92 : vector<1x128xf32> to vector<128x128xf32>
    %94 = arith.addf %91, %93 : vector<128x128xf32>
    %cst_56 = arith.constant 0.000000e+00 : f32
    %95 = vector.broadcast %cst_56 : f32 to vector<128x128xf32>
    %96 = arith.maximumf %94, %95 : vector<128x128xf32>
    %97 = arith.truncf %96 : vector<128x128xf32> to vector<128x128xbf16>
    %c0_57 = arith.constant 0 : index
    %c0_58 = arith.constant 0 : index
    %c0_59 = arith.constant 0 : index
    %c0_60 = arith.constant 0 : index
    %98 = vector.load %arg8[%c0_57, %c0_58, %c0_59, %c0_60] : memref<1x1x128x128xbf16, #tpu.memory_space<vmem>>, vector<1x1x128x128xbf16>
    %99 = vector.shape_cast %98 : vector<1x1x128x128xbf16> to vector<128x128xbf16>
    %100 = vector.shape_cast %97 : vector<128x128xbf16> to vector<1x1x128x128xbf16>
    tpu.vector_store %arg8[%c0_57, %c0_58, %c0_59, %c0_60], %100 {strides = array<i32>} : memref<1x1x128x128xbf16, #tpu.memory_space<vmem>>, vector<1x1x128x128xbf16>,
    %c24_61 = arith.constant 24 : index
    %c0_62 = arith.constant 0 : index
    %101 = vector.load %arg10[%c24_61, %c0_62] : memref<176x128xf32, #tpu.memory_space<vmem>>, vector<128x128xf32>
    %102 = arith.truncf %101 : vector<128x128xf32> to vector<128x128xbf16>
    %c0_63 = arith.constant 0 : index
    %c0_64 = arith.constant 0 : index
    %103 = vector.load %arg6[%c0_63, %c0_64] : memref<128x128xbf16, #tpu.memory_space<vmem>>, vector<128x128xbf16>
    %cst_65 = arith.constant dense<0.000000e+00> : vector<128x128xf32>
    %104 = tpu.matmul %102, %103, %cst_65 {dimension_numbers = #tpu.dot_dimension_numbers<[1], [0], [0], [1], [0, 0, 1, 1], [], []>} : vector<128x128xbf16>, vector<128x128xbf16>, vector<128x128xf32> -> vector<128x128xf32>
    %c0_66 = arith.constant 0 : index
    %c0_67 = arith.constant 0 : index
    %105 = vector.load %arg7[%c0_66, %c0_67] : memref<1x128xf32, #tpu.memory_space<vmem>>, vector<1x128xf32>
    %106 = vector.broadcast %105 : vector<1x128xf32> to vector<128x128xf32>
    %107 = arith.addf %104, %106 : vector<128x128xf32>
    %108 = arith.truncf %107 : vector<128x128xf32> to vector<128x128xbf16>
    %c0_68 = arith.constant 0 : index
    %c0_69 = arith.constant 0 : index
    %c0_70 = arith.constant 0 : index
    %c0_71 = arith.constant 0 : index
    %109 = vector.load %arg9[%c0_68, %c0_69, %c0_70, %c0_71] : memref<1x1x128x128xbf16, #tpu.memory_space<vmem>>, vector<1x1x128x128xbf16>
    %110 = vector.shape_cast %109 : vector<1x1x128x128xbf16> to vector<128x128xbf16>
    %111 = vector.shape_cast %108 : vector<128x128xbf16> to vector<1x1x128x128xbf16>
    tpu.vector_store %arg9[%c0_68, %c0_69, %c0_70, %c0_71], %111 {strides = array<i32>} : memref<1x1x128x128xbf16, #tpu.memory_space<vmem>>, vector<1x1x128x128xbf16>,
    return
  }
  func.func @transform_0(%arg0: i32, %arg1: i32, %arg2: i32) -> (i32, i32, i32, i32) {
    %c0_i32 = arith.constant 0 : i32
    %c0_i32_0 = arith.constant 0 : i32
    %c0_i32_1 = arith.constant 0 : i32
    return %arg0, %arg1, %c0_i32, %c0_i32_0 : i32, i32, i32, i32
  }
  func.func @transform_1(%arg0: i32, %arg1: i32, %arg2: i32) -> (i32, i32, i32) {
    %c0_i32 = arith.constant 0 : i32
    %c0_i32_0 = arith.constant 0 : i32
    %c0_i32_1 = arith.constant 0 : i32
    return %c0_i32, %c0_i32_0, %arg2 : i32, i32, i32
  }
  func.func @transform_2(%arg0: i32, %arg1: i32, %arg2: i32) -> (i32, i32) {
    %c0_i32 = arith.constant 0 : i32
    %c0_i32_0 = arith.constant 0 : i32
    return %c0_i32, %arg2 : i32, i32
  }
  func.func @transform_3(%arg0: i32, %arg1: i32, %arg2: i32) -> (i32, i32) {
    %c0_i32 = arith.constant 0 : i32
    %c0_i32_0 = arith.constant 0 : i32
    return %c0_i32, %arg2 : i32, i32
  }
  func.func @transform_4(%arg0: i32, %arg1: i32, %arg2: i32) -> (i32, i32) {
    %c0_i32 = arith.constant 0 : i32
    %c0_i32_0 = arith.constant 0 : i32
    return %c0_i32, %arg2 : i32, i32
  }
  func.func @transform_5(%arg0: i32, %arg1: i32, %arg2: i32) -> (i32, i32, i32, i32) {
    %c0_i32 = arith.constant 0 : i32
    %c0_i32_0 = arith.constant 0 : i32
    return %arg0, %arg1, %c0_i32, %arg2 : i32, i32, i32, i32
  }
  func.func @transform_6(%arg0: i32, %arg1: i32, %arg2: i32) -> (i32, i32, i32, i32) {
    %c0_i32 = arith.constant 0 : i32
    %c0_i32_0 = arith.constant 0 : i32
    return %arg0, %arg1, %c0_i32, %arg2 : i32, i32, i32, i32
  }
}

module attributes {stable_mosaic.version = 11 : i64} {
  func.func @_conv3x3_kernel(%arg0: i32, %arg1: i32, %arg2: i32, %arg3: memref<1x1x176x128xbf16, #tpu.memory_space<vmem>>, %arg4: memref<9x128x128xbf16, #tpu.memory_space<vmem>>, %arg5: memref<1x128xf32, #tpu.memory_space<vmem>>, %arg6: memref<1x1x128x128xbf16, #tpu.memory_space<vmem>>, %arg7: memref<1x1x128x128xbf16, #tpu.memory_space<vmem>>, %arg8: memref<176x128xf32, #tpu.memory_space<vmem>>) attributes {dimension_semantics = [#tpu.dimension_semantics<parallel>, #tpu.dimension_semantics<parallel>, #tpu.dimension_semantics<parallel>], iteration_bounds = array<i64: 2, 2, 1>, scalar_prefetch = 0 : i64, scratch_operands = 1 : i64, tpu.core_type = #tpu.core_type<tc>, window_params = [{transform_indices = @transform_0, window_bounds = array<i64: 1, 1, 176, 128>}, {transform_indices = @transform_1, window_bounds = array<i64: 9, 128, 128>}, {transform_indices = @transform_2, window_bounds = array<i64: 1, 128>}, {transform_indices = @transform_3, window_bounds = array<i64: 1, 1, 128, 128>}, {transform_indices = @transform_4, window_bounds = array<i64: 1, 1, 128, 128>}]} {
    %c0 = arith.constant 0 : index
    %c0_0 = arith.constant 0 : index
    %c0_1 = arith.constant 0 : index
    %c0_2 = arith.constant 0 : index
    %0 = vector.load %arg3[%c0, %c0_0, %c0_1, %c0_2] : memref<1x1x176x128xbf16, #tpu.memory_space<vmem>>, vector<1x1x176x128xbf16>
    %1 = vector.shape_cast %0 : vector<1x1x176x128xbf16> to vector<176x128xbf16>
    %2 = arith.extf %1 : vector<176x128xbf16> to vector<176x128xf32>
    %c0_3 = arith.constant 0 : index
    %c0_4 = arith.constant 0 : index
    %3 = vector.load %arg8[%c0_3, %c0_4] : memref<176x128xf32, #tpu.memory_space<vmem>>, vector<176x128xf32>
    tpu.vector_store %arg8[%c0_3, %c0_4], %2 {strides = array<i32>} : memref<176x128xf32, #tpu.memory_space<vmem>>, vector<176x128xf32>,
    %4 = tpu.iota {dimensions = array<i32: 0>} : vector<128x128xi32>
    %c16_i32 = arith.constant 16 : i32
    %c0_i32 = arith.constant 0 : i32
    %5 = arith.cmpi eq, %c16_i32, %c0_i32 : i32
    %c1_i32 = arith.constant 1 : i32
    %6 = arith.select %5, %c1_i32, %c16_i32 : i32
    %7 = vector.broadcast %6 : i32 to vector<128x128xi32>
    %8 = arith.remsi %4, %7 : vector<128x128xi32>
    %c0_i32_5 = arith.constant 0 : i32
    %9 = vector.broadcast %c0_i32_5 : i32 to vector<128x128xi32>
    %10 = arith.cmpi ne, %8, %9 : vector<128x128xi32>
    %c0_i32_6 = arith.constant 0 : i32
    %11 = vector.broadcast %c0_i32_6 : i32 to vector<128x128xi32>
    %12 = arith.cmpi slt, %8, %11 : vector<128x128xi32>
    %c0_i32_7 = arith.constant 0 : i32
    %13 = arith.cmpi slt, %6, %c0_i32_7 : i32
    %14 = vector.broadcast %13 : i1 to vector<128x128xi1>
    %15 = vector.broadcast %14 : vector<128x128xi1> to vector<128x128xi1>
    %16 = arith.xori %12, %15 : vector<128x128xi1>
    %17 = arith.andi %16, %10 : vector<128x128xi1>
    %18 = vector.broadcast %6 : i32 to vector<128x128xi32>
    %19 = arith.addi %8, %18 : vector<128x128xi32>
    %20 = arith.select %17, %19, %8 : vector<128x128xi1>, vector<128x128xi32>
    %c0_i32_8 = arith.constant 0 : i32
    %21 = vector.broadcast %c0_i32_8 : i32 to vector<128x128xi32>
    %22 = arith.cmpi ne, %20, %21 : vector<128x128xi32>
    %c15_i32 = arith.constant 15 : i32
    %23 = vector.broadcast %c15_i32 : i32 to vector<128x128xi32>
    %24 = arith.cmpi ne, %20, %23 : vector<128x128xi32>
    %cst = arith.constant 0.000000e+00 : f32
    %25 = vector.broadcast %cst : f32 to vector<128x128xf32>
    %c7 = arith.constant 7 : index
    %c0_9 = arith.constant 0 : index
    %26 = vector.load %arg8[%c7, %c0_9] : memref<176x128xf32, #tpu.memory_space<vmem>>, vector<128x128xf32>
    %cst_10 = arith.constant 0.000000e+00 : f32
    %27 = vector.broadcast %cst_10 : f32 to vector<128x128xf32>
    %28 = arith.select %22, %26, %27 : vector<128x128xi1>, vector<128x128xf32>
    %29 = arith.truncf %28 : vector<128x128xf32> to vector<128x128xbf16>
    %c0_11 = arith.constant 0 : index
    %c0_12 = arith.constant 0 : index
    %c0_13 = arith.constant 0 : index
    %30 = vector.load %arg4[%c0_11, %c0_12, %c0_13] : memref<9x128x128xbf16, #tpu.memory_space<vmem>>, vector<1x128x128xbf16>
    %31 = vector.shape_cast %30 : vector<1x128x128xbf16> to vector<128x128xbf16>
    %cst_14 = arith.constant dense<0.000000e+00> : vector<128x128xf32>
    %32 = tpu.matmul %29, %31, %cst_14 {dimension_numbers = #tpu.dot_dimension_numbers<[1], [0], [0], [1], [0, 0, 1, 1], [], []>} : vector<128x128xbf16>, vector<128x128xbf16>, vector<128x128xf32> -> vector<128x128xf32>
    %33 = arith.addf %25, %32 : vector<128x128xf32>
    %c8 = arith.constant 8 : index
    %c0_15 = arith.constant 0 : index
    %34 = vector.load %arg8[%c8, %c0_15] : memref<176x128xf32, #tpu.memory_space<vmem>>, vector<128x128xf32>
    %35 = arith.truncf %34 : vector<128x128xf32> to vector<128x128xbf16>
    %c1 = arith.constant 1 : index
    %c0_16 = arith.constant 0 : index
    %c0_17 = arith.constant 0 : index
    %36 = vector.load %arg4[%c1, %c0_16, %c0_17] : memref<9x128x128xbf16, #tpu.memory_space<vmem>>, vector<1x128x128xbf16>
    %37 = vector.shape_cast %36 : vector<1x128x128xbf16> to vector<128x128xbf16>
    %cst_18 = arith.constant dense<0.000000e+00> : vector<128x128xf32>
    %38 = tpu.matmul %35, %37, %cst_18 {dimension_numbers = #tpu.dot_dimension_numbers<[1], [0], [0], [1], [0, 0, 1, 1], [], []>} : vector<128x128xbf16>, vector<128x128xbf16>, vector<128x128xf32> -> vector<128x128xf32>
    %39 = arith.addf %33, %38 : vector<128x128xf32>
    %c9 = arith.constant 9 : index
    %c0_19 = arith.constant 0 : index
    %40 = vector.load %arg8[%c9, %c0_19] : memref<176x128xf32, #tpu.memory_space<vmem>>, vector<128x128xf32>
    %cst_20 = arith.constant 0.000000e+00 : f32
    %41 = vector.broadcast %cst_20 : f32 to vector<128x128xf32>
    %42 = arith.select %24, %40, %41 : vector<128x128xi1>, vector<128x128xf32>
    %43 = arith.truncf %42 : vector<128x128xf32> to vector<128x128xbf16>
    %c2 = arith.constant 2 : index
    %c0_21 = arith.constant 0 : index
    %c0_22 = arith.constant 0 : index
    %44 = vector.load %arg4[%c2, %c0_21, %c0_22] : memref<9x128x128xbf16, #tpu.memory_space<vmem>>, vector<1x128x128xbf16>
    %45 = vector.shape_cast %44 : vector<1x128x128xbf16> to vector<128x128xbf16>
    %cst_23 = arith.constant dense<0.000000e+00> : vector<128x128xf32>
    %46 = tpu.matmul %43, %45, %cst_23 {dimension_numbers = #tpu.dot_dimension_numbers<[1], [0], [0], [1], [0, 0, 1, 1], [], []>} : vector<128x128xbf16>, vector<128x128xbf16>, vector<128x128xf32> -> vector<128x128xf32>
    %47 = arith.addf %39, %46 : vector<128x128xf32>
    %c23 = arith.constant 23 : index
    %c0_24 = arith.constant 0 : index
    %48 = vector.load %arg8[%c23, %c0_24] : memref<176x128xf32, #tpu.memory_space<vmem>>, vector<128x128xf32>
    %cst_25 = arith.constant 0.000000e+00 : f32
    %49 = vector.broadcast %cst_25 : f32 to vector<128x128xf32>
    %50 = arith.select %22, %48, %49 : vector<128x128xi1>, vector<128x128xf32>
    %51 = arith.truncf %50 : vector<128x128xf32> to vector<128x128xbf16>
    %c3 = arith.constant 3 : index
    %c0_26 = arith.constant 0 : index
    %c0_27 = arith.constant 0 : index
    %52 = vector.load %arg4[%c3, %c0_26, %c0_27] : memref<9x128x128xbf16, #tpu.memory_space<vmem>>, vector<1x128x128xbf16>
    %53 = vector.shape_cast %52 : vector<1x128x128xbf16> to vector<128x128xbf16>
    %cst_28 = arith.constant dense<0.000000e+00> : vector<128x128xf32>
    %54 = tpu.matmul %51, %53, %cst_28 {dimension_numbers = #tpu.dot_dimension_numbers<[1], [0], [0], [1], [0, 0, 1, 1], [], []>} : vector<128x128xbf16>, vector<128x128xbf16>, vector<128x128xf32> -> vector<128x128xf32>
    %55 = arith.addf %47, %54 : vector<128x128xf32>
    %c24 = arith.constant 24 : index
    %c0_29 = arith.constant 0 : index
    %56 = vector.load %arg8[%c24, %c0_29] : memref<176x128xf32, #tpu.memory_space<vmem>>, vector<128x128xf32>
    %57 = arith.truncf %56 : vector<128x128xf32> to vector<128x128xbf16>
    %c4 = arith.constant 4 : index
    %c0_30 = arith.constant 0 : index
    %c0_31 = arith.constant 0 : index
    %58 = vector.load %arg4[%c4, %c0_30, %c0_31] : memref<9x128x128xbf16, #tpu.memory_space<vmem>>, vector<1x128x128xbf16>
    %59 = vector.shape_cast %58 : vector<1x128x128xbf16> to vector<128x128xbf16>
    %cst_32 = arith.constant dense<0.000000e+00> : vector<128x128xf32>
    %60 = tpu.matmul %57, %59, %cst_32 {dimension_numbers = #tpu.dot_dimension_numbers<[1], [0], [0], [1], [0, 0, 1, 1], [], []>} : vector<128x128xbf16>, vector<128x128xbf16>, vector<128x128xf32> -> vector<128x128xf32>
    %61 = arith.addf %55, %60 : vector<128x128xf32>
    %c25 = arith.constant 25 : index
    %c0_33 = arith.constant 0 : index
    %62 = vector.load %arg8[%c25, %c0_33] : memref<176x128xf32, #tpu.memory_space<vmem>>, vector<128x128xf32>
    %cst_34 = arith.constant 0.000000e+00 : f32
    %63 = vector.broadcast %cst_34 : f32 to vector<128x128xf32>
    %64 = arith.select %24, %62, %63 : vector<128x128xi1>, vector<128x128xf32>
    %65 = arith.truncf %64 : vector<128x128xf32> to vector<128x128xbf16>
    %c5 = arith.constant 5 : index
    %c0_35 = arith.constant 0 : index
    %c0_36 = arith.constant 0 : index
    %66 = vector.load %arg4[%c5, %c0_35, %c0_36] : memref<9x128x128xbf16, #tpu.memory_space<vmem>>, vector<1x128x128xbf16>
    %67 = vector.shape_cast %66 : vector<1x128x128xbf16> to vector<128x128xbf16>
    %cst_37 = arith.constant dense<0.000000e+00> : vector<128x128xf32>
    %68 = tpu.matmul %65, %67, %cst_37 {dimension_numbers = #tpu.dot_dimension_numbers<[1], [0], [0], [1], [0, 0, 1, 1], [], []>} : vector<128x128xbf16>, vector<128x128xbf16>, vector<128x128xf32> -> vector<128x128xf32>
    %69 = arith.addf %61, %68 : vector<128x128xf32>
    %c39 = arith.constant 39 : index
    %c0_38 = arith.constant 0 : index
    %70 = vector.load %arg8[%c39, %c0_38] : memref<176x128xf32, #tpu.memory_space<vmem>>, vector<128x128xf32>
    %cst_39 = arith.constant 0.000000e+00 : f32
    %71 = vector.broadcast %cst_39 : f32 to vector<128x128xf32>
    %72 = arith.select %22, %70, %71 : vector<128x128xi1>, vector<128x128xf32>
    %73 = arith.truncf %72 : vector<128x128xf32> to vector<128x128xbf16>
    %c6 = arith.constant 6 : index
    %c0_40 = arith.constant 0 : index
    %c0_41 = arith.constant 0 : index
    %74 = vector.load %arg4[%c6, %c0_40, %c0_41] : memref<9x128x128xbf16, #tpu.memory_space<vmem>>, vector<1x128x128xbf16>
    %75 = vector.shape_cast %74 : vector<1x128x128xbf16> to vector<128x128xbf16>
    %cst_42 = arith.constant dense<0.000000e+00> : vector<128x128xf32>
    %76 = tpu.matmul %73, %75, %cst_42 {dimension_numbers = #tpu.dot_dimension_numbers<[1], [0], [0], [1], [0, 0, 1, 1], [], []>} : vector<128x128xbf16>, vector<128x128xbf16>, vector<128x128xf32> -> vector<128x128xf32>
    %77 = arith.addf %69, %76 : vector<128x128xf32>
    %c40 = arith.constant 40 : index
    %c0_43 = arith.constant 0 : index
    %78 = vector.load %arg8[%c40, %c0_43] : memref<176x128xf32, #tpu.memory_space<vmem>>, vector<128x128xf32>
    %79 = arith.truncf %78 : vector<128x128xf32> to vector<128x128xbf16>
    %c7_44 = arith.constant 7 : index
    %c0_45 = arith.constant 0 : index
    %c0_46 = arith.constant 0 : index
    %80 = vector.load %arg4[%c7_44, %c0_45, %c0_46] : memref<9x128x128xbf16, #tpu.memory_space<vmem>>, vector<1x128x128xbf16>
    %81 = vector.shape_cast %80 : vector<1x128x128xbf16> to vector<128x128xbf16>
    %cst_47 = arith.constant dense<0.000000e+00> : vector<128x128xf32>
    %82 = tpu.matmul %79, %81, %cst_47 {dimension_numbers = #tpu.dot_dimension_numbers<[1], [0], [0], [1], [0, 0, 1, 1], [], []>} : vector<128x128xbf16>, vector<128x128xbf16>, vector<128x128xf32> -> vector<128x128xf32>
    %83 = arith.addf %77, %82 : vector<128x128xf32>
    %c41 = arith.constant 41 : index
    %c0_48 = arith.constant 0 : index
    %84 = vector.load %arg8[%c41, %c0_48] : memref<176x128xf32, #tpu.memory_space<vmem>>, vector<128x128xf32>
    %cst_49 = arith.constant 0.000000e+00 : f32
    %85 = vector.broadcast %cst_49 : f32 to vector<128x128xf32>
    %86 = arith.select %24, %84, %85 : vector<128x128xi1>, vector<128x128xf32>
    %87 = arith.truncf %86 : vector<128x128xf32> to vector<128x128xbf16>
    %c8_50 = arith.constant 8 : index
    %c0_51 = arith.constant 0 : index
    %c0_52 = arith.constant 0 : index
    %88 = vector.load %arg4[%c8_50, %c0_51, %c0_52] : memref<9x128x128xbf16, #tpu.memory_space<vmem>>, vector<1x128x128xbf16>
    %89 = vector.shape_cast %88 : vector<1x128x128xbf16> to vector<128x128xbf16>
    %cst_53 = arith.constant dense<0.000000e+00> : vector<128x128xf32>
    %90 = tpu.matmul %87, %89, %cst_53 {dimension_numbers = #tpu.dot_dimension_numbers<[1], [0], [0], [1], [0, 0, 1, 1], [], []>} : vector<128x128xbf16>, vector<128x128xbf16>, vector<128x128xf32> -> vector<128x128xf32>
    %91 = arith.addf %83, %90 : vector<128x128xf32>
    %c0_54 = arith.constant 0 : index
    %c0_55 = arith.constant 0 : index
    %92 = vector.load %arg5[%c0_54, %c0_55] : memref<1x128xf32, #tpu.memory_space<vmem>>, vector<1x128xf32>
    %93 = vector.broadcast %92 : vector<1x128xf32> to vector<128x128xf32>
    %94 = arith.addf %91, %93 : vector<128x128xf32>
    %cst_56 = arith.constant 0.000000e+00 : f32
    %95 = vector.broadcast %cst_56 : f32 to vector<128x128xf32>
    %96 = arith.maximumf %94, %95 : vector<128x128xf32>
    %c0_57 = arith.constant 0 : index
    %c0_58 = arith.constant 0 : index
    %c0_59 = arith.constant 0 : index
    %c0_60 = arith.constant 0 : index
    %97 = vector.load %arg6[%c0_57, %c0_58, %c0_59, %c0_60] : memref<1x1x128x128xbf16, #tpu.memory_space<vmem>>, vector<1x1x128x128xbf16>
    %98 = vector.shape_cast %97 : vector<1x1x128x128xbf16> to vector<128x128xbf16>
    %99 = arith.extf %98 : vector<128x128xbf16> to vector<128x128xf32>
    %100 = arith.addf %96, %99 : vector<128x128xf32>
    %cst_61 = arith.constant 0.000000e+00 : f32
    %101 = vector.broadcast %cst_61 : f32 to vector<128x128xf32>
    %102 = arith.maximumf %100, %101 : vector<128x128xf32>
    %103 = arith.truncf %102 : vector<128x128xf32> to vector<128x128xbf16>
    %c0_62 = arith.constant 0 : index
    %c0_63 = arith.constant 0 : index
    %c0_64 = arith.constant 0 : index
    %c0_65 = arith.constant 0 : index
    %104 = vector.load %arg7[%c0_62, %c0_63, %c0_64, %c0_65] : memref<1x1x128x128xbf16, #tpu.memory_space<vmem>>, vector<1x1x128x128xbf16>
    %105 = vector.shape_cast %104 : vector<1x1x128x128xbf16> to vector<128x128xbf16>
    %106 = vector.shape_cast %103 : vector<128x128xbf16> to vector<1x1x128x128xbf16>
    tpu.vector_store %arg7[%c0_62, %c0_63, %c0_64, %c0_65], %106 {strides = array<i32>} : memref<1x1x128x128xbf16, #tpu.memory_space<vmem>>, vector<1x1x128x128xbf16>,
    return
  }
  func.func @transform_0(%arg0: i32, %arg1: i32, %arg2: i32) -> (i32, i32, i32, i32) {
    %c0_i32 = arith.constant 0 : i32
    %c0_i32_0 = arith.constant 0 : i32
    %c0_i32_1 = arith.constant 0 : i32
    return %arg0, %arg1, %c0_i32, %c0_i32_0 : i32, i32, i32, i32
  }
  func.func @transform_1(%arg0: i32, %arg1: i32, %arg2: i32) -> (i32, i32, i32) {
    %c0_i32 = arith.constant 0 : i32
    %c0_i32_0 = arith.constant 0 : i32
    %c0_i32_1 = arith.constant 0 : i32
    return %c0_i32, %c0_i32_0, %arg2 : i32, i32, i32
  }
  func.func @transform_2(%arg0: i32, %arg1: i32, %arg2: i32) -> (i32, i32) {
    %c0_i32 = arith.constant 0 : i32
    %c0_i32_0 = arith.constant 0 : i32
    return %c0_i32, %arg2 : i32, i32
  }
  func.func @transform_3(%arg0: i32, %arg1: i32, %arg2: i32) -> (i32, i32, i32, i32) {
    %c0_i32 = arith.constant 0 : i32
    %c0_i32_0 = arith.constant 0 : i32
    return %arg0, %arg1, %c0_i32, %arg2 : i32, i32, i32, i32
  }
  func.func @transform_4(%arg0: i32, %arg1: i32, %arg2: i32) -> (i32, i32, i32, i32) {
    %c0_i32 = arith.constant 0 : i32
    %c0_i32_0 = arith.constant 0 : i32
    return %arg0, %arg1, %c0_i32, %arg2 : i32, i32, i32, i32
  }
}

module attributes {stable_mosaic.version = 11 : i64} {
  func.func @_conv3x3_kernel(%arg0: i32, %arg1: i32, %arg2: i32, %arg3: memref<1x1x176x128xbf16, #tpu.memory_space<vmem>>, %arg4: memref<9x128x128xbf16, #tpu.memory_space<vmem>>, %arg5: memref<1x128xf32, #tpu.memory_space<vmem>>, %arg6: memref<1x1x128x128xf32, #tpu.memory_space<vmem>>, %arg7: memref<1x1x128x128xf32, #tpu.memory_space<vmem>>, %arg8: memref<176x128xf32, #tpu.memory_space<vmem>>) attributes {dimension_semantics = [#tpu.dimension_semantics<parallel>, #tpu.dimension_semantics<parallel>, #tpu.dimension_semantics<parallel>], iteration_bounds = array<i64: 2, 2, 1>, scalar_prefetch = 0 : i64, scratch_operands = 1 : i64, tpu.core_type = #tpu.core_type<tc>, window_params = [{transform_indices = @transform_0, window_bounds = array<i64: 1, 1, 176, 128>}, {transform_indices = @transform_1, window_bounds = array<i64: 9, 128, 128>}, {transform_indices = @transform_2, window_bounds = array<i64: 1, 128>}, {transform_indices = @transform_3, window_bounds = array<i64: 1, 1, 128, 128>}, {transform_indices = @transform_4, window_bounds = array<i64: 1, 1, 128, 128>}]} {
    %c0 = arith.constant 0 : index
    %c0_0 = arith.constant 0 : index
    %c0_1 = arith.constant 0 : index
    %c0_2 = arith.constant 0 : index
    %0 = vector.load %arg3[%c0, %c0_0, %c0_1, %c0_2] : memref<1x1x176x128xbf16, #tpu.memory_space<vmem>>, vector<1x1x176x128xbf16>
    %1 = vector.shape_cast %0 : vector<1x1x176x128xbf16> to vector<176x128xbf16>
    %2 = arith.extf %1 : vector<176x128xbf16> to vector<176x128xf32>
    %c0_3 = arith.constant 0 : index
    %c0_4 = arith.constant 0 : index
    %3 = vector.load %arg8[%c0_3, %c0_4] : memref<176x128xf32, #tpu.memory_space<vmem>>, vector<176x128xf32>
    tpu.vector_store %arg8[%c0_3, %c0_4], %2 {strides = array<i32>} : memref<176x128xf32, #tpu.memory_space<vmem>>, vector<176x128xf32>,
    %4 = tpu.iota {dimensions = array<i32: 0>} : vector<128x128xi32>
    %c16_i32 = arith.constant 16 : i32
    %c0_i32 = arith.constant 0 : i32
    %5 = arith.cmpi eq, %c16_i32, %c0_i32 : i32
    %c1_i32 = arith.constant 1 : i32
    %6 = arith.select %5, %c1_i32, %c16_i32 : i32
    %7 = vector.broadcast %6 : i32 to vector<128x128xi32>
    %8 = arith.remsi %4, %7 : vector<128x128xi32>
    %c0_i32_5 = arith.constant 0 : i32
    %9 = vector.broadcast %c0_i32_5 : i32 to vector<128x128xi32>
    %10 = arith.cmpi ne, %8, %9 : vector<128x128xi32>
    %c0_i32_6 = arith.constant 0 : i32
    %11 = vector.broadcast %c0_i32_6 : i32 to vector<128x128xi32>
    %12 = arith.cmpi slt, %8, %11 : vector<128x128xi32>
    %c0_i32_7 = arith.constant 0 : i32
    %13 = arith.cmpi slt, %6, %c0_i32_7 : i32
    %14 = vector.broadcast %13 : i1 to vector<128x128xi1>
    %15 = vector.broadcast %14 : vector<128x128xi1> to vector<128x128xi1>
    %16 = arith.xori %12, %15 : vector<128x128xi1>
    %17 = arith.andi %16, %10 : vector<128x128xi1>
    %18 = vector.broadcast %6 : i32 to vector<128x128xi32>
    %19 = arith.addi %8, %18 : vector<128x128xi32>
    %20 = arith.select %17, %19, %8 : vector<128x128xi1>, vector<128x128xi32>
    %c0_i32_8 = arith.constant 0 : i32
    %21 = vector.broadcast %c0_i32_8 : i32 to vector<128x128xi32>
    %22 = arith.cmpi ne, %20, %21 : vector<128x128xi32>
    %c15_i32 = arith.constant 15 : i32
    %23 = vector.broadcast %c15_i32 : i32 to vector<128x128xi32>
    %24 = arith.cmpi ne, %20, %23 : vector<128x128xi32>
    %cst = arith.constant 0.000000e+00 : f32
    %25 = vector.broadcast %cst : f32 to vector<128x128xf32>
    %c7 = arith.constant 7 : index
    %c0_9 = arith.constant 0 : index
    %26 = vector.load %arg8[%c7, %c0_9] : memref<176x128xf32, #tpu.memory_space<vmem>>, vector<128x128xf32>
    %cst_10 = arith.constant 0.000000e+00 : f32
    %27 = vector.broadcast %cst_10 : f32 to vector<128x128xf32>
    %28 = arith.select %22, %26, %27 : vector<128x128xi1>, vector<128x128xf32>
    %29 = arith.truncf %28 : vector<128x128xf32> to vector<128x128xbf16>
    %c0_11 = arith.constant 0 : index
    %c0_12 = arith.constant 0 : index
    %c0_13 = arith.constant 0 : index
    %30 = vector.load %arg4[%c0_11, %c0_12, %c0_13] : memref<9x128x128xbf16, #tpu.memory_space<vmem>>, vector<1x128x128xbf16>
    %31 = vector.shape_cast %30 : vector<1x128x128xbf16> to vector<128x128xbf16>
    %cst_14 = arith.constant dense<0.000000e+00> : vector<128x128xf32>
    %32 = tpu.matmul %29, %31, %cst_14 {dimension_numbers = #tpu.dot_dimension_numbers<[1], [0], [0], [1], [0, 0, 1, 1], [], []>} : vector<128x128xbf16>, vector<128x128xbf16>, vector<128x128xf32> -> vector<128x128xf32>
    %33 = arith.addf %25, %32 : vector<128x128xf32>
    %c8 = arith.constant 8 : index
    %c0_15 = arith.constant 0 : index
    %34 = vector.load %arg8[%c8, %c0_15] : memref<176x128xf32, #tpu.memory_space<vmem>>, vector<128x128xf32>
    %35 = arith.truncf %34 : vector<128x128xf32> to vector<128x128xbf16>
    %c1 = arith.constant 1 : index
    %c0_16 = arith.constant 0 : index
    %c0_17 = arith.constant 0 : index
    %36 = vector.load %arg4[%c1, %c0_16, %c0_17] : memref<9x128x128xbf16, #tpu.memory_space<vmem>>, vector<1x128x128xbf16>
    %37 = vector.shape_cast %36 : vector<1x128x128xbf16> to vector<128x128xbf16>
    %cst_18 = arith.constant dense<0.000000e+00> : vector<128x128xf32>
    %38 = tpu.matmul %35, %37, %cst_18 {dimension_numbers = #tpu.dot_dimension_numbers<[1], [0], [0], [1], [0, 0, 1, 1], [], []>} : vector<128x128xbf16>, vector<128x128xbf16>, vector<128x128xf32> -> vector<128x128xf32>
    %39 = arith.addf %33, %38 : vector<128x128xf32>
    %c9 = arith.constant 9 : index
    %c0_19 = arith.constant 0 : index
    %40 = vector.load %arg8[%c9, %c0_19] : memref<176x128xf32, #tpu.memory_space<vmem>>, vector<128x128xf32>
    %cst_20 = arith.constant 0.000000e+00 : f32
    %41 = vector.broadcast %cst_20 : f32 to vector<128x128xf32>
    %42 = arith.select %24, %40, %41 : vector<128x128xi1>, vector<128x128xf32>
    %43 = arith.truncf %42 : vector<128x128xf32> to vector<128x128xbf16>
    %c2 = arith.constant 2 : index
    %c0_21 = arith.constant 0 : index
    %c0_22 = arith.constant 0 : index
    %44 = vector.load %arg4[%c2, %c0_21, %c0_22] : memref<9x128x128xbf16, #tpu.memory_space<vmem>>, vector<1x128x128xbf16>
    %45 = vector.shape_cast %44 : vector<1x128x128xbf16> to vector<128x128xbf16>
    %cst_23 = arith.constant dense<0.000000e+00> : vector<128x128xf32>
    %46 = tpu.matmul %43, %45, %cst_23 {dimension_numbers = #tpu.dot_dimension_numbers<[1], [0], [0], [1], [0, 0, 1, 1], [], []>} : vector<128x128xbf16>, vector<128x128xbf16>, vector<128x128xf32> -> vector<128x128xf32>
    %47 = arith.addf %39, %46 : vector<128x128xf32>
    %c23 = arith.constant 23 : index
    %c0_24 = arith.constant 0 : index
    %48 = vector.load %arg8[%c23, %c0_24] : memref<176x128xf32, #tpu.memory_space<vmem>>, vector<128x128xf32>
    %cst_25 = arith.constant 0.000000e+00 : f32
    %49 = vector.broadcast %cst_25 : f32 to vector<128x128xf32>
    %50 = arith.select %22, %48, %49 : vector<128x128xi1>, vector<128x128xf32>
    %51 = arith.truncf %50 : vector<128x128xf32> to vector<128x128xbf16>
    %c3 = arith.constant 3 : index
    %c0_26 = arith.constant 0 : index
    %c0_27 = arith.constant 0 : index
    %52 = vector.load %arg4[%c3, %c0_26, %c0_27] : memref<9x128x128xbf16, #tpu.memory_space<vmem>>, vector<1x128x128xbf16>
    %53 = vector.shape_cast %52 : vector<1x128x128xbf16> to vector<128x128xbf16>
    %cst_28 = arith.constant dense<0.000000e+00> : vector<128x128xf32>
    %54 = tpu.matmul %51, %53, %cst_28 {dimension_numbers = #tpu.dot_dimension_numbers<[1], [0], [0], [1], [0, 0, 1, 1], [], []>} : vector<128x128xbf16>, vector<128x128xbf16>, vector<128x128xf32> -> vector<128x128xf32>
    %55 = arith.addf %47, %54 : vector<128x128xf32>
    %c24 = arith.constant 24 : index
    %c0_29 = arith.constant 0 : index
    %56 = vector.load %arg8[%c24, %c0_29] : memref<176x128xf32, #tpu.memory_space<vmem>>, vector<128x128xf32>
    %57 = arith.truncf %56 : vector<128x128xf32> to vector<128x128xbf16>
    %c4 = arith.constant 4 : index
    %c0_30 = arith.constant 0 : index
    %c0_31 = arith.constant 0 : index
    %58 = vector.load %arg4[%c4, %c0_30, %c0_31] : memref<9x128x128xbf16, #tpu.memory_space<vmem>>, vector<1x128x128xbf16>
    %59 = vector.shape_cast %58 : vector<1x128x128xbf16> to vector<128x128xbf16>
    %cst_32 = arith.constant dense<0.000000e+00> : vector<128x128xf32>
    %60 = tpu.matmul %57, %59, %cst_32 {dimension_numbers = #tpu.dot_dimension_numbers<[1], [0], [0], [1], [0, 0, 1, 1], [], []>} : vector<128x128xbf16>, vector<128x128xbf16>, vector<128x128xf32> -> vector<128x128xf32>
    %61 = arith.addf %55, %60 : vector<128x128xf32>
    %c25 = arith.constant 25 : index
    %c0_33 = arith.constant 0 : index
    %62 = vector.load %arg8[%c25, %c0_33] : memref<176x128xf32, #tpu.memory_space<vmem>>, vector<128x128xf32>
    %cst_34 = arith.constant 0.000000e+00 : f32
    %63 = vector.broadcast %cst_34 : f32 to vector<128x128xf32>
    %64 = arith.select %24, %62, %63 : vector<128x128xi1>, vector<128x128xf32>
    %65 = arith.truncf %64 : vector<128x128xf32> to vector<128x128xbf16>
    %c5 = arith.constant 5 : index
    %c0_35 = arith.constant 0 : index
    %c0_36 = arith.constant 0 : index
    %66 = vector.load %arg4[%c5, %c0_35, %c0_36] : memref<9x128x128xbf16, #tpu.memory_space<vmem>>, vector<1x128x128xbf16>
    %67 = vector.shape_cast %66 : vector<1x128x128xbf16> to vector<128x128xbf16>
    %cst_37 = arith.constant dense<0.000000e+00> : vector<128x128xf32>
    %68 = tpu.matmul %65, %67, %cst_37 {dimension_numbers = #tpu.dot_dimension_numbers<[1], [0], [0], [1], [0, 0, 1, 1], [], []>} : vector<128x128xbf16>, vector<128x128xbf16>, vector<128x128xf32> -> vector<128x128xf32>
    %69 = arith.addf %61, %68 : vector<128x128xf32>
    %c39 = arith.constant 39 : index
    %c0_38 = arith.constant 0 : index
    %70 = vector.load %arg8[%c39, %c0_38] : memref<176x128xf32, #tpu.memory_space<vmem>>, vector<128x128xf32>
    %cst_39 = arith.constant 0.000000e+00 : f32
    %71 = vector.broadcast %cst_39 : f32 to vector<128x128xf32>
    %72 = arith.select %22, %70, %71 : vector<128x128xi1>, vector<128x128xf32>
    %73 = arith.truncf %72 : vector<128x128xf32> to vector<128x128xbf16>
    %c6 = arith.constant 6 : index
    %c0_40 = arith.constant 0 : index
    %c0_41 = arith.constant 0 : index
    %74 = vector.load %arg4[%c6, %c0_40, %c0_41] : memref<9x128x128xbf16, #tpu.memory_space<vmem>>, vector<1x128x128xbf16>
    %75 = vector.shape_cast %74 : vector<1x128x128xbf16> to vector<128x128xbf16>
    %cst_42 = arith.constant dense<0.000000e+00> : vector<128x128xf32>
    %76 = tpu.matmul %73, %75, %cst_42 {dimension_numbers = #tpu.dot_dimension_numbers<[1], [0], [0], [1], [0, 0, 1, 1], [], []>} : vector<128x128xbf16>, vector<128x128xbf16>, vector<128x128xf32> -> vector<128x128xf32>
    %77 = arith.addf %69, %76 : vector<128x128xf32>
    %c40 = arith.constant 40 : index
    %c0_43 = arith.constant 0 : index
    %78 = vector.load %arg8[%c40, %c0_43] : memref<176x128xf32, #tpu.memory_space<vmem>>, vector<128x128xf32>
    %79 = arith.truncf %78 : vector<128x128xf32> to vector<128x128xbf16>
    %c7_44 = arith.constant 7 : index
    %c0_45 = arith.constant 0 : index
    %c0_46 = arith.constant 0 : index
    %80 = vector.load %arg4[%c7_44, %c0_45, %c0_46] : memref<9x128x128xbf16, #tpu.memory_space<vmem>>, vector<1x128x128xbf16>
    %81 = vector.shape_cast %80 : vector<1x128x128xbf16> to vector<128x128xbf16>
    %cst_47 = arith.constant dense<0.000000e+00> : vector<128x128xf32>
    %82 = tpu.matmul %79, %81, %cst_47 {dimension_numbers = #tpu.dot_dimension_numbers<[1], [0], [0], [1], [0, 0, 1, 1], [], []>} : vector<128x128xbf16>, vector<128x128xbf16>, vector<128x128xf32> -> vector<128x128xf32>
    %83 = arith.addf %77, %82 : vector<128x128xf32>
    %c41 = arith.constant 41 : index
    %c0_48 = arith.constant 0 : index
    %84 = vector.load %arg8[%c41, %c0_48] : memref<176x128xf32, #tpu.memory_space<vmem>>, vector<128x128xf32>
    %cst_49 = arith.constant 0.000000e+00 : f32
    %85 = vector.broadcast %cst_49 : f32 to vector<128x128xf32>
    %86 = arith.select %24, %84, %85 : vector<128x128xi1>, vector<128x128xf32>
    %87 = arith.truncf %86 : vector<128x128xf32> to vector<128x128xbf16>
    %c8_50 = arith.constant 8 : index
    %c0_51 = arith.constant 0 : index
    %c0_52 = arith.constant 0 : index
    %88 = vector.load %arg4[%c8_50, %c0_51, %c0_52] : memref<9x128x128xbf16, #tpu.memory_space<vmem>>, vector<1x128x128xbf16>
    %89 = vector.shape_cast %88 : vector<1x128x128xbf16> to vector<128x128xbf16>
    %cst_53 = arith.constant dense<0.000000e+00> : vector<128x128xf32>
    %90 = tpu.matmul %87, %89, %cst_53 {dimension_numbers = #tpu.dot_dimension_numbers<[1], [0], [0], [1], [0, 0, 1, 1], [], []>} : vector<128x128xbf16>, vector<128x128xbf16>, vector<128x128xf32> -> vector<128x128xf32>
    %91 = arith.addf %83, %90 : vector<128x128xf32>
    %c0_54 = arith.constant 0 : index
    %c0_55 = arith.constant 0 : index
    %92 = vector.load %arg5[%c0_54, %c0_55] : memref<1x128xf32, #tpu.memory_space<vmem>>, vector<1x128xf32>
    %93 = vector.broadcast %92 : vector<1x128xf32> to vector<128x128xf32>
    %94 = arith.addf %91, %93 : vector<128x128xf32>
    %c0_56 = arith.constant 0 : index
    %c0_57 = arith.constant 0 : index
    %c0_58 = arith.constant 0 : index
    %c0_59 = arith.constant 0 : index
    %95 = vector.load %arg6[%c0_56, %c0_57, %c0_58, %c0_59] : memref<1x1x128x128xf32, #tpu.memory_space<vmem>>, vector<1x1x128x128xf32>
    %96 = vector.shape_cast %95 : vector<1x1x128x128xf32> to vector<128x128xf32>
    %97 = arith.addf %94, %96 : vector<128x128xf32>
    %c0_60 = arith.constant 0 : index
    %c0_61 = arith.constant 0 : index
    %c0_62 = arith.constant 0 : index
    %c0_63 = arith.constant 0 : index
    %98 = vector.load %arg7[%c0_60, %c0_61, %c0_62, %c0_63] : memref<1x1x128x128xf32, #tpu.memory_space<vmem>>, vector<1x1x128x128xf32>
    %99 = vector.shape_cast %98 : vector<1x1x128x128xf32> to vector<128x128xf32>
    %100 = vector.shape_cast %97 : vector<128x128xf32> to vector<1x1x128x128xf32>
    tpu.vector_store %arg7[%c0_60, %c0_61, %c0_62, %c0_63], %100 {strides = array<i32>} : memref<1x1x128x128xf32, #tpu.memory_space<vmem>>, vector<1x1x128x128xf32>,
    return
  }
  func.func @transform_0(%arg0: i32, %arg1: i32, %arg2: i32) -> (i32, i32, i32, i32) {
    %c0_i32 = arith.constant 0 : i32
    %c0_i32_0 = arith.constant 0 : i32
    %c0_i32_1 = arith.constant 0 : i32
    return %arg0, %arg1, %c0_i32, %c0_i32_0 : i32, i32, i32, i32
  }
  func.func @transform_1(%arg0: i32, %arg1: i32, %arg2: i32) -> (i32, i32, i32) {
    %c0_i32 = arith.constant 0 : i32
    %c0_i32_0 = arith.constant 0 : i32
    %c0_i32_1 = arith.constant 0 : i32
    return %c0_i32, %c0_i32_0, %arg2 : i32, i32, i32
  }
  func.func @transform_2(%arg0: i32, %arg1: i32, %arg2: i32) -> (i32, i32) {
    %c0_i32 = arith.constant 0 : i32
    %c0_i32_0 = arith.constant 0 : i32
    return %c0_i32, %arg2 : i32, i32
  }
  func.func @transform_3(%arg0: i32, %arg1: i32, %arg2: i32) -> (i32, i32, i32, i32) {
    %c0_i32 = arith.constant 0 : i32
    %c0_i32_0 = arith.constant 0 : i32
    return %arg0, %arg1, %c0_i32, %arg2 : i32, i32, i32, i32
  }
  func.func @transform_4(%arg0: i32, %arg1: i32, %arg2: i32) -> (i32, i32, i32, i32) {
    %c0_i32 = arith.constant 0 : i32
    %c0_i32_0 = arith.constant 0 : i32
    return %arg0, %arg1, %c0_i32, %arg2 : i32, i32, i32, i32
  }
}

</mosaic_0001>

<llo_original>
// kernel: resnet_forward.10
$region0: #{resnet_forward.10}
  #allocation0 [shape = 'u32[]', space=smem, size = 0x4, offset = 0x4, fixed_abs, tag = 'smem constant byte address 0x4 - core index']
  #allocation1 [shape = 'u32[72,128]{1,0:T(1,128)}', space=vmem, size = 0x9000, scoped, tag = 'internal scratch']
  #allocation2 [shape = 'f32[176,128]{1,0:T(8,128)}', space=vmem, size = 0x16000, scoped, tag = 'scratch operand']
  %s0 = inlined_call_operand.vmem [shape: bf16[2,2,176,128], index: 0, kind: input, shape index: {}]
  %s1 = inlined_call_operand.vmem [shape: bf16[9,128,128], index: 1, kind: input, shape index: {}]
  %s2 = inlined_call_operand.vmem [shape: f32[1,128], index: 2, kind: input, shape index: {}]
  %s3 = inlined_call_operand.vmem [shape: bf16[2,2,128,128], index: 3, kind: output, shape index: {}]
  %s4 = sld [smem:[#allocation0]]
  $region45: #{resnet_forward.10} parent=0
    _
  %s6 = ssub.s32 1, %s4
  %s7 = scalar_select 0, %s6, %s4
  loop: start=0, step=1, limit=6
  $region2: #{resnet_forward.10} parent=0 // loop_pre_header
    _
  $region3: #{resnet_forward.10} parent=0 // loop_header
    %s9 = sphi 0, %s13
    %p10 = scmp.ge.s32.totalorder %s9, 6
    %s16 = sphi 0, %s35
    %s17 = sphi 0, %s31
    %s18 = sphi 0, %s27
    %s19 = sphi 0, %s16
    %s20 = sphi 0, %s17
    %s21 = sphi 0, %s18
    %s22 = sphi 0, %s19
    %s23 = sphi 0, %s20
    %s24 = sphi 0, %s21
    %s40 = sphi 0, %s42
    %s43 = sphi 0, %s40
    %s44 = sphi 0, %s43
    %s60 = sphi 0, %s44
    %s66 = sphi 0, %s68
    %s69 = sphi 0, %s66
    %s70 = sphi 0, %s69
    %s86 = sphi 0, %s70
    %s92 = sphi 0, %s94
    %s95 = sphi 0, %s92
    %s96 = sphi 0, %s95
    %s112 = sphi 0, %s96
    %s122 = sphi 0, %s124
    %s125 = sphi 0, %s122
    %s126 = sphi 0, %s125
    %s142 = sphi 0, %s126
  $region4: #{resnet_forward.10} parent=0 // loop_header_branch
    %12 = sbr.rel (%p10) target = $region8
  $region5: #{resnet_forward.10} parent=0 // loop_body
    %s14 = ssub.s32 %s9, 1
    %s15 = ssub.s32 %s9, 2
    %s25 = sadd.s32 1, %s18
    %p26 = scmp.ge.s32.totalorder %s25, 1
    %s27 = scalar_select %p26, 0, %s25
    %s28 = sadd.s32 1, %s17
    %s29 = scalar_select %p26, %s28, %s17
    %p30 = scmp.ge.s32.totalorder %s29, 2
    %s31 = scalar_select %p30, 0, %s29
    %s32 = sadd.s32 1, %s16
    %s33 = scalar_select %p30, %s32, %s16
    %p34 = scmp.ge.s32.totalorder %s33, 2
    %s35 = scalar_select %p34, 0, %s33
    %s36 = ssub.s32 %s16, %s35
    %s37 = ssub.s32 %s17, %s31
    %s38 = sor.u32 %s36, %s37
    %p39 = scmp.eq.s32.totalorder %s38, 0
    %s41 = sadd.s32 %s40, 1
    %s42 = scalar_select %p39, %s40, %s41
    %p45 = pneg %p39
    %p46 = scmp.eq.s32.totalorder %s9, 3
    %p47 = por %p45, %p46
    %p48 = scmp.ne.s32.totalorder %s40, %s43
    %p49 = scmp.eq.s32.totalorder %s9, 0
    %p50 = por %p48, %p49
    %p51 = scmp.ne.s32.totalorder %s40, %s43
    %p52 = scmp.eq.s32.totalorder %s14, 3
    %p53 = por %p51, %p52
    %p54 = scmp.ne.s32.totalorder %s43, %s44
    %p55 = scmp.eq.s32.totalorder %s14, 0
    %p56 = por %p54, %p55
    %p57 = scmp.ne.s32.totalorder %s43, %s44
    %p58 = scmp.eq.s32.totalorder %s15, 3
    %p59 = por %p57, %p58
    %p61 = scmp.ne.s32.totalorder %s44, %s60
    %p62 = scmp.eq.s32.totalorder %s15, 0
    %p63 = por %p61, %p62
    %s64 = ssub.s32 %s18, %s27
    %p65 = scmp.eq.s32.totalorder %s64, 0
    %s67 = sadd.s32 %s66, 1
    %s68 = scalar_select %p65, %s66, %s67
    %p71 = pneg %p65
    %p72 = scmp.eq.s32.totalorder %s9, 3
    %p73 = por %p71, %p72
    %p74 = scmp.ne.s32.totalorder %s66, %s69
    %p75 = scmp.eq.s32.totalorder %s9, 0
    %p76 = por %p74, %p75
    %p77 = scmp.ne.s32.totalorder %s66, %s69
    %p78 = scmp.eq.s32.totalorder %s14, 3
    %p79 = por %p77, %p78
    %p80 = scmp.ne.s32.totalorder %s69, %s70
    %p81 = scmp.eq.s32.totalorder %s14, 0
    %p82 = por %p80, %p81
    %p83 = scmp.ne.s32.totalorder %s69, %s70
    %p84 = scmp.eq.s32.totalorder %s15, 3
    %p85 = por %p83, %p84
    %p87 = scmp.ne.s32.totalorder %s70, %s86
    %p88 = scmp.eq.s32.totalorder %s15, 0
    %p89 = por %p87, %p88
    %s90 = ssub.s32 %s18, %s27
    %p91 = scmp.eq.s32.totalorder %s90, 0
    %s93 = sadd.s32 %s92, 1
    %s94 = scalar_select %p91, %s92, %s93
    %p97 = pneg %p91
    %p98 = scmp.eq.s32.totalorder %s9, 3
    %p99 = por %p97, %p98
    %p100 = scmp.ne.s32.totalorder %s92, %s95
    %p101 = scmp.eq.s32.totalorder %s9, 0
    %p102 = por %p100, %p101
    %p103 = scmp.ne.s32.totalorder %s92, %s95
    %p104 = scmp.eq.s32.totalorder %s14, 3
    %p105 = por %p103, %p104
    %p106 = scmp.ne.s32.totalorder %s95, %s96
    %p107 = scmp.eq.s32.totalorder %s14, 0
    %p108 = por %p106, %p107
    %p109 = scmp.ne.s32.totalorder %s95, %s96
    %p110 = scmp.eq.s32.totalorder %s15, 3
    %p111 = por %p109, %p110
    %p113 = scmp.ne.s32.totalorder %s96, %s112
    %p114 = scmp.eq.s32.totalorder %s15, 0
    %p115 = por %p113, %p114
    %s116 = ssub.s32 %s16, %s35
    %s117 = ssub.s32 %s17, %s31
    %s118 = sor.u32 %s116, %s117
    %s119 = ssub.s32 %s18, %s27
    %s120 = sor.u32 %s118, %s119
    %p121 = scmp.eq.s32.totalorder %s120, 0
    %s123 = sadd.s32 %s122, 1
    %s124 = scalar_select %p121, %s122, %s123
    %p127 = pneg %p121
    %p128 = scmp.eq.s32.totalorder %s9, 3
    %p129 = por %p127, %p128
    %p130 = scmp.ne.s32.totalorder %s122, %s125
    %p131 = scmp.eq.s32.totalorder %s9, 0
    %p132 = por %p130, %p131
    %p133 = scmp.ne.s32.totalorder %s122, %s125
    %p134 = scmp.eq.s32.totalorder %s14, 3
    %p135 = por %p133, %p134
    %p136 = scmp.ne.s32.totalorder %s125, %s126
    %p137 = scmp.eq.s32.totalorder %s14, 0
    %p138 = por %p136, %p137
    %p139 = scmp.ne.s32.totalorder %s125, %s126
    %p140 = scmp.eq.s32.totalorder %s15, 3
    %p141 = por %p139, %p140
    %p143 = scmp.ne.s32.totalorder %s126, %s142
    %p144 = scmp.eq.s32.totalorder %s15, 0
    %p145 = por %p143, %p144
    %p146 = scmp.le.s32.totalorder 1, %s9
    %p147 = scmp.lt.s32.totalorder %s9, 5
    %p148 = pnand %p146, %p147
    %p149 = pneg %p148
    // Predicated region
    $region9: #{resnet_forward.10} parent=5 // pred_check
      _
    $region10: #{resnet_forward.10} parent=5 // pred_check_branch
      %151 = sbr.rel (%p148) target = $region12
    $region11: #{resnet_forward.10} parent=5 // pred_region
      %s152 = ssub.s32 %s9, 1
      // Predicated region
      $region13: #{resnet_forward.10} parent=11 // pred_check
        %p153 = pneg %p82
      $region14: #{resnet_forward.10} parent=11 // pred_check_branch
        %155 = sbr.rel (%p153) target = $region16
      $region15: #{resnet_forward.10} parent=11 // pred_region
        %p156 = scmp.lt.s32.totalorder %s21, 0
        %s157 = scalar_select %p156, %s21, 0
        %s158 = smul.addr %s157, 4
        %s159 = scalar_lea.vmem %s1, %s158
      $region16: #{resnet_forward.10} parent=11 // pred_fallthru
        _
      // Predicated region
      $region17: #{resnet_forward.10} parent=11 // pred_check
        %p160 = pneg %p108
      $region18: #{resnet_forward.10} parent=11 // pred_check_branch
        %162 = sbr.rel (%p160) target = $region20
      $region19: #{resnet_forward.10} parent=11 // pred_region
        %p163 = scmp.lt.s32.totalorder %s21, 0
        %s164 = scalar_select %p163, %s21, 0
        %s165 = scalar_lea.vmem %s2, %s164
      $region20: #{resnet_forward.10} parent=11 // pred_fallthru
        _
    $region12: #{resnet_forward.10} parent=5 // pred_fallthru
      _
    %p166 = scmp.lt.s32.totalorder %s9, 4
    // Predicated region
    $region21: #{resnet_forward.10} parent=5 // pred_check
      %p167 = pneg %p166
    $region22: #{resnet_forward.10} parent=5 // pred_check_branch
      %169 = sbr.rel (%p167) target = $region24
    $region23: #{resnet_forward.10} parent=5 // pred_region
      // Predicated region
      $region25: #{resnet_forward.10} parent=23 // pred_check
        %p170 = pneg %p50
      $region26: #{resnet_forward.10} parent=23 // pred_check_branch
        %172 = sbr.rel (%p170) target = $region28
      $region27: #{resnet_forward.10} parent=23 // pred_region
        %p173 = scmp.lt.s32.totalorder %s16, 1
        %s174 = scalar_select %p173, %s16, 1
        %p175 = scmp.lt.s32.totalorder %s17, 1
        %s176 = scalar_select %p175, %s17, 1
        %s177 = smul.addr %s176, 22
        %s178 = smul.addr %s174, 44
        %s179 = sadd.s32 %s177, %s178
        %s180 = smul.addr %s179, 4
        %s181 = scalar_lea.vmem %s0, %s180
      $region28: #{resnet_forward.10} parent=23 // pred_fallthru
        _
    $region24: #{resnet_forward.10} parent=5 // pred_fallthru
      _
    %p182 = scmp.le.s32.totalorder 1, %s9
    %p183 = scmp.lt.s32.totalorder %s9, 5
    %p184 = pnand %p182, %p183
    %p185 = pneg %p184
    // Predicated region
    $region29: #{resnet_forward.10} parent=5 // pred_check
      _
    $region30: #{resnet_forward.10} parent=5 // pred_check_branch
      %187 = sbr.rel (%p184) target = $region32
    $region31: #{resnet_forward.10} parent=5 // pred_region
      %s188 = ssub.s32 %s9, 1
      %p189 = scmp.lt.s32.totalorder %s19, 1
      %s190 = scalar_select %p189, %s19, 1
      %p191 = scmp.lt.s32.totalorder %s20, 1
      %s192 = scalar_select %p191, %s20, 1
      %s193 = smul.addr %s192, 22
      %s194 = smul.addr %s190, 44
      %s195 = sadd.s32 %s193, %s194
      %s196 = smul.addr %s195, 4
      %s197 = scalar_lea.vmem %s0, %s196
      %p198 = pneg %p56
      %p199 = pneg %p53
      %p200 = scmp.lt.s32.totalorder %s21, 0
      %s201 = scalar_select %p200, %s21, 0
      %s202 = smul.addr %s201, 4
      %s203 = scalar_lea.vmem %s1, %s202
      %p204 = pneg %p82
      %p205 = pneg %p79
      %p206 = scmp.lt.s32.totalorder %s21, 0
      %s207 = scalar_select %p206, %s21, 0
      %s208 = scalar_lea.vmem %s2, %s207
      %p209 = pneg %p108
      %p210 = pneg %p105
      %p211 = pneg %p138
      %p212 = pneg %p135
      %p213 = scmp.lt.s32.totalorder %s19, 1
      %s214 = scalar_select %p213, %s19, 1
      %p215 = scmp.lt.s32.totalorder %s20, 1
      %s216 = scalar_select %p215, %s20, 1
      %p217 = scmp.lt.s32.totalorder %s21, 0
      %s218 = scalar_select %p217, %s21, 0
      %s219 = smul.addr %s216, 16
      %s220 = sadd.s32 %s218, %s219
      %s221 = smul.addr %s214, 32
      %s222 = sadd.s32 %s220, %s221
      %s223 = smul.addr %s222, 4
      %s224 = scalar_lea.vmem %s3, %s223
      %p225 = scmp.lt.s32.totalorder %s19, 1
      %s226 = scalar_select %p225, %s19, 1
      %p227 = scmp.lt.s32.totalorder %s20, 1
      %s228 = scalar_select %p227, %s20, 1
      %s229 = smul.addr %s228, 22
      %s230 = smul.addr %s226, 44
      %s231 = sadd.s32 %s229, %s230
      %s232 = smul.addr %s231, 4
      %s233 = scalar_lea.vmem %s0, %s232
      %p234 = scmp.lt.s32.totalorder %s21, 0
      %s235 = scalar_select %p234, %s21, 0
      %s236 = smul.addr %s235, 4
      %s237 = scalar_lea.vmem %s1, %s236
      %p238 = scmp.lt.s32.totalorder %s21, 0
      %s239 = scalar_select %p238, %s21, 0
      %s240 = scalar_lea.vmem %s2, %s239
      %p241 = scmp.lt.s32.totalorder %s19, 1
      %s242 = scalar_select %p241, %s19, 1
      %p243 = scmp.lt.s32.totalorder %s20, 1
      %s244 = scalar_select %p243, %s20, 1
      %p245 = scmp.lt.s32.totalorder %s21, 0
      %s246 = scalar_select %p245, %s21, 0
      %s247 = smul.addr %s244, 16
      %s248 = sadd.s32 %s246, %s247
      %s249 = smul.addr %s242, 32
      %s250 = sadd.s32 %s248, %s249
      %s251 = smul.addr %s250, 4
      %s252 = scalar_lea.vmem %s3, %s251
      %v253 = vld [vmem:[%s233] sm:$0xf]
      %v254 = vld [vmem:[%s233 + $0x4] sm:$0xf]
      %v255 = vld [vmem:[%s233 + $0x8] sm:$0xf]
      %v256 = vld [vmem:[%s233 + $0xc] sm:$0xf]
      %v257 = vld [vmem:[%s233 + $0x10] sm:$0xf]
      %v258 = vld [vmem:[%s233 + $0x14] sm:$0xf]
      %v259 = vld [vmem:[%s233 + $0x18] sm:$0xf]
      %v260 = vld [vmem:[%s233 + $0x1c] sm:$0xf]
      %v261 = vld [vmem:[%s233 + $0x20] sm:$0xf]
      %v262 = vld [vmem:[%s233 + $0x24] sm:$0xf]
      %v263 = vld [vmem:[%s233 + $0x28] sm:$0xf]
      %v264 = vld [vmem:[%s233 + $0x2c] sm:$0xf]
      %v265 = vld [vmem:[%s233 + $0x30] sm:$0xf]
      %v266 = vld [vmem:[%s233 + $0x34] sm:$0xf]
      %v267 = vld [vmem:[%s233 + $0x38] sm:$0xf]
      %v268 = vld [vmem:[%s233 + $0x3c] sm:$0xf]
      %v269 = vld [vmem:[%s233 + $0x40] sm:$0xf]
      %v270 = vld [vmem:[%s233 + $0x44] sm:$0xf]
      %v271 = vld [vmem:[%s233 + $0x48] sm:$0xf]
      %v272 = vld [vmem:[%s233 + $0x4c] sm:$0xf]
      %v273 = vld [vmem:[%s233 + $0x50] sm:$0xf]
      %v274 = vld [vmem:[%s233 + $0x54] sm:$0xf]
      %v275 = vunpack.c.l.bf16 %v253
      %v276 = vunpack.c.l.bf16 %v254
      %v277 = vunpack.c.l.bf16 %v255
      %v278 = vunpack.c.l.bf16 %v256
      %v279 = vunpack.c.l.bf16 %v257
      %v280 = vunpack.c.l.bf16 %v258
      %v281 = vunpack.c.l.bf16 %v259
      %v282 = vunpack.c.l.bf16 %v260
      %v283 = vunpack.c.l.bf16 %v261
      %v284 = vunpack.c.l.bf16 %v262
      %v285 = vunpack.c.l.bf16 %v263
      %v286 = vunpack.c.l.bf16 %v264
      %v287 = vunpack.c.l.bf16 %v265
      %v288 = vunpack.c.l.bf16 %v266
      %v289 = vunpack.c.l.bf16 %v267
      %v290 = vunpack.c.l.bf16 %v268
      %v291 = vunpack.c.l.bf16 %v269
      %v292 = vunpack.c.l.bf16 %v270
      %v293 = vunpack.c.l.bf16 %v271
      %v294 = vunpack.c.l.bf16 %v272
      %v295 = vunpack.c.l.bf16 %v273
      %v296 = vunpack.c.l.bf16 %v274
      %297 = vst [vmem:[#allocation2] sm:$0xff] %v275
      %298 = vst [vmem:[#allocation2 + $0x8] sm:$0xff] %v276
      %299 = vst [vmem:[#allocation2 + $0x10] sm:$0xff] %v277
      %300 = vst [vmem:[#allocation2 + $0x18] sm:$0xff] %v278
      %301 = vst [vmem:[#allocation2 + $0x20] sm:$0xff] %v279
      %302 = vst [vmem:[#allocation2 + $0x28] sm:$0xff] %v280
      %303 = vst [vmem:[#allocation2 + $0x30] sm:$0xff] %v281
      %304 = vst [vmem:[#allocation2 + $0x38] sm:$0xff] %v282
      %305 = vst [vmem:[#allocation2 + $0x40] sm:$0xff] %v283
      %306 = vst [vmem:[#allocation2 + $0x48] sm:$0xff] %v284
      %307 = vst [vmem:[#allocation2 + $0x50] sm:$0xff] %v285
      %308 = vst [vmem:[#allocation2 + $0x58] sm:$0xff] %v286
      %309 = vst [vmem:[#allocation2 + $0x60] sm:$0xff] %v287
      %310 = vst [vmem:[#allocation2 + $0x68] sm:$0xff] %v288
      %311 = vst [vmem:[#allocation2 + $0x70] sm:$0xff] %v289
      %312 = vst [vmem:[#allocation2 + $0x78] sm:$0xff] %v290
      %313 = vst [vmem:[#allocation2 + $0x80] sm:$0xff] %v291
      %314 = vst [vmem:[#allocation2 + $0x88] sm:$0xff] %v292
      %315 = vst [vmem:[#allocation2 + $0x90] sm:$0xff] %v293
      %316 = vst [vmem:[#allocation2 + $0x98] sm:$0xff] %v294
      %317 = vst [vmem:[#allocation2 + $0xa0] sm:$0xff] %v295
      %318 = vst [vmem:[#allocation2 + $0xa8] sm:$0xff] %v296
      %v319 = vlaneseq
      %v320 = vshrl.u32 %v319, 7
      %v321 = vadd.s32 %v320, 8
      %v322 = vadd.s32 %v320, 16
      %v323 = vadd.s32 %v320, 24
      %v324 = vadd.s32 %v320, 32
      %v325 = vadd.s32 %v320, 40
      %v326 = vadd.s32 %v320, 48
      %v327 = vadd.s32 %v320, 56
      %v328 = vadd.s32 %v320, 64
      %v329 = vadd.s32 %v320, 72
      %v330 = vadd.s32 %v320, 80
      %v331 = vadd.s32 %v320, 88
      %v332 = vadd.s32 %v320, 96
      %v333 = vadd.s32 %v320, 104
      %v334 = vadd.s32 %v320, 112
      %v335 = vadd.s32 %v320, 120
      %vm336 = vcmp.lt.s32.totalorder %v320, 0
      %v337 = vsub.s32 0, %v320
      %v338 = vsel %vm336, %v337, %v320
      %v339 = vshrl.u32 %v338, 4
      %v340 = vand.u32 %v338, 15
      %v341 = vsub.s32 0, %v340
      %v342 = vsel %vm336, %v341, %v340
      %vm343 = vcmp.lt.s32.totalorder %v321, 0
      %v344 = vsub.s32 0, %v321
      %v345 = vsel %vm343, %v344, %v321
      %v346 = vshrl.u32 %v345, 4
      %v347 = vand.u32 %v345, 15
      %v348 = vsub.s32 0, %v347
      %v349 = vsel %vm343, %v348, %v347
      %vm350 = vcmp.lt.s32.totalorder %v322, 0
      %v351 = vsub.s32 0, %v322
      %v352 = vsel %vm350, %v351, %v322
      %v353 = vshrl.u32 %v352, 4
      %v354 = vand.u32 %v352, 15
      %v355 = vsub.s32 0, %v354
      %v356 = vsel %vm350, %v355, %v354
      %vm357 = vcmp.lt.s32.totalorder %v323, 0
      %v358 = vsub.s32 0, %v323
      %v359 = vsel %vm357, %v358, %v323
      %v360 = vshrl.u32 %v359, 4
      %v361 = vand.u32 %v359, 15
      %v362 = vsub.s32 0, %v361
      %v363 = vsel %vm357, %v362, %v361
      %vm364 = vcmp.lt.s32.totalorder %v324, 0
      %v365 = vsub.s32 0, %v324
      %v366 = vsel %vm364, %v365, %v324
      %v367 = vshrl.u32 %v366, 4
      %v368 = vand.u32 %v366, 15
      %v369 = vsub.s32 0, %v368
      %v370 = vsel %vm364, %v369, %v368
      %vm371 = vcmp.lt.s32.totalorder %v325, 0
      %v372 = vsub.s32 0, %v325
      %v373 = vsel %vm371, %v372, %v325
      %v374 = vshrl.u32 %v373, 4
      %v375 = vand.u32 %v373, 15
      %v376 = vsub.s32 0, %v375
      %v377 = vsel %vm371, %v376, %v375
      %vm378 = vcmp.lt.s32.totalorder %v326, 0
      %v379 = vsub.s32 0, %v326
      %v380 = vsel %vm378, %v379, %v326
      %v381 = vshrl.u32 %v380, 4
      %v382 = vand.u32 %v380, 15
      %v383 = vsub.s32 0, %v382
      %v384 = vsel %vm378, %v383, %v382
      %vm385 = vcmp.lt.s32.totalorder %v327, 0
      %v386 = vsub.s32 0, %v327
      %v387 = vsel %vm385, %v386, %v327
      %v388 = vshrl.u32 %v387, 4
      %v389 = vand.u32 %v387, 15
      %v390 = vsub.s32 0, %v389
      %v391 = vsel %vm385, %v390, %v389
      %vm392 = vcmp.lt.s32.totalorder %v328, 0
      %v393 = vsub.s32 0, %v328
      %v394 = vsel %vm392, %v393, %v328
      %v395 = vshrl.u32 %v394, 4
      %v396 = vand.u32 %v394, 15
      %v397 = vsub.s32 0, %v396
      %v398 = vsel %vm392, %v397, %v396
      %vm399 = vcmp.lt.s32.totalorder %v329, 0
      %v400 = vsub.s32 0, %v329
      %v401 = vsel %vm399, %v400, %v329
      %v402 = vshrl.u32 %v401, 4
      %v403 = vand.u32 %v401, 15
      %v404 = vsub.s32 0, %v403
      %v405 = vsel %vm399, %v404, %v403
      %vm406 = vcmp.lt.s32.totalorder %v330, 0
      %v407 = vsub.s32 0, %v330
      %v408 = vsel %vm406, %v407, %v330
      %v409 = vshrl.u32 %v408, 4
      %v410 = vand.u32 %v408, 15
      %v411 = vsub.s32 0, %v410
      %v412 = vsel %vm406, %v411, %v410
      %vm413 = vcmp.lt.s32.totalorder %v331, 0
      %v414 = vsub.s32 0, %v331
      %v415 = vsel %vm413, %v414, %v331
      %v416 = vshrl.u32 %v415, 4
      %v417 = vand.u32 %v415, 15
      %v418 = vsub.s32 0, %v417
      %v419 = vsel %vm413, %v418, %v417
      %vm420 = vcmp.lt.s32.totalorder %v332, 0
      %v421 = vsub.s32 0, %v332
      %v422 = vsel %vm420, %v421, %v332
      %v423 = vshrl.u32 %v422, 4
      %v424 = vand.u32 %v422, 15
      %v425 = vsub.s32 0, %v424
      %v426 = vsel %vm420, %v425, %v424
      %vm427 = vcmp.lt.s32.totalorder %v333, 0
      %v428 = vsub.s32 0, %v333
      %v429 = vsel %vm427, %v428, %v333
      %v430 = vshrl.u32 %v429, 4
      %v431 = vand.u32 %v429, 15
      %v432 = vsub.s32 0, %v431
      %v433 = vsel %vm427, %v432, %v431
      %vm434 = vcmp.lt.s32.totalorder %v334, 0
      %v435 = vsub.s32 0, %v334
      %v436 = vsel %vm434, %v435, %v334
      %v437 = vshrl.u32 %v436, 4
      %v438 = vand.u32 %v436, 15
      %v439 = vsub.s32 0, %v438
      %v440 = vsel %vm434, %v439, %v438
      %vm441 = vcmp.lt.s32.totalorder %v335, 0
      %v442 = vsub.s32 0, %v335
      %v443 = vsel %vm441, %v442, %v335
      %v444 = vshrl.u32 %v443, 4
      %v445 = vand.u32 %v443, 15
      %v446 = vsub.s32 0, %v445
      %v447 = vsel %vm441, %v446, %v445
      %vm448 = vcmp.ne.s32.totalorder %v342, 0
      %vm449 = vcmp.ne.s32.totalorder %v349, 0
      %vm450 = vcmp.ne.s32.totalorder %v356, 0
      %vm451 = vcmp.ne.s32.totalorder %v363, 0
      %vm452 = vcmp.ne.s32.totalorder %v370, 0
      %vm453 = vcmp.ne.s32.totalorder %v377, 0
      %vm454 = vcmp.ne.s32.totalorder %v384, 0
      %vm455 = vcmp.ne.s32.totalorder %v391, 0
      %vm456 = vcmp.ne.s32.totalorder %v398, 0
      %vm457 = vcmp.ne.s32.totalorder %v405, 0
      %vm458 = vcmp.ne.s32.totalorder %v412, 0
      %vm459 = vcmp.ne.s32.totalorder %v419, 0
      %vm460 = vcmp.ne.s32.totalorder %v426, 0
      %vm461 = vcmp.ne.s32.totalorder %v433, 0
      %vm462 = vcmp.ne.s32.totalorder %v440, 0
      %vm463 = vcmp.ne.s32.totalorder %v447, 0
      %vm464 = vcmp.lt.s32.totalorder %v342, 0
      %vm465 = vcmp.lt.s32.totalorder %v349, 0
      %vm466 = vcmp.lt.s32.totalorder %v356, 0
      %vm467 = vcmp.lt.s32.totalorder %v363, 0
      %vm468 = vcmp.lt.s32.totalorder %v370, 0
      %vm469 = vcmp.lt.s32.totalorder %v377, 0
      %vm470 = vcmp.lt.s32.totalorder %v384, 0
      %vm471 = vcmp.lt.s32.totalorder %v391, 0
      %vm472 = vcmp.lt.s32.totalorder %v398, 0
      %vm473 = vcmp.lt.s32.totalorder %v405, 0
      %vm474 = vcmp.lt.s32.totalorder %v412, 0
      %vm475 = vcmp.lt.s32.totalorder %v419, 0
      %vm476 = vcmp.lt.s32.totalorder %v426, 0
      %vm477 = vcmp.lt.s32.totalorder %v433, 0
      %vm478 = vcmp.lt.s32.totalorder %v440, 0
      %vm479 = vcmp.lt.s32.totalorder %v447, 0
      %vm480 = vmand %vm464, %vm448
      %vm481 = vmand %vm465, %vm449
      %vm482 = vmand %vm466, %vm450
      %vm483 = vmand %vm467, %vm451
      %vm484 = vmand %vm468, %vm452
      %vm485 = vmand %vm469, %vm453
      %vm486 = vmand %vm470, %vm454
      %vm487 = vmand %vm471, %vm455
      %vm488 = vmand %vm472, %vm456
      %vm489 = vmand %vm473, %vm457
      %vm490 = vmand %vm474, %vm458
      %vm491 = vmand %vm475, %vm459
      %vm492 = vmand %vm476, %vm460
      %vm493 = vmand %vm477, %vm461
      %vm494 = vmand %vm478, %vm462
      %vm495 = vmand %vm479, %vm463
      %v496 = vadd.s32 %v342, 16
      %v497 = vadd.s32 %v349, 16
      %v498 = vadd.s32 %v356, 16
      %v499 = vadd.s32 %v363, 16
      %v500 = vadd.s32 %v370, 16
      %v501 = vadd.s32 %v377, 16
      %v502 = vadd.s32 %v384, 16
      %v503 = vadd.s32 %v391, 16
      %v504 = vadd.s32 %v398, 16
      %v505 = vadd.s32 %v405, 16
      %v506 = vadd.s32 %v412, 16
      %v507 = vadd.s32 %v419, 16
      %v508 = vadd.s32 %v426, 16
      %v509 = vadd.s32 %v433, 16
      %v510 = vadd.s32 %v440, 16
      %v511 = vadd.s32 %v447, 16
      %v512 = vsel %vm480, %v496, %v342
      %v513 = vsel %vm481, %v497, %v349
      %v514 = vsel %vm482, %v498, %v356
      %v515 = vsel %vm483, %v499, %v363
      %v516 = vsel %vm484, %v500, %v370
      %v517 = vsel %vm485, %v501, %v377
      %v518 = vsel %vm486, %v502, %v384
      %v519 = vsel %vm487, %v503, %v391
      %v520 = vsel %vm488, %v504, %v398
      %v521 = vsel %vm489, %v505, %v405
      %v522 = vsel %vm490, %v506, %v412
      %v523 = vsel %vm491, %v507, %v419
      %v524 = vsel %vm492, %v508, %v426
      %v525 = vsel %vm493, %v509, %v433
      %v526 = vsel %vm494, %v510, %v440
      %v527 = vsel %vm495, %v511, %v447
      %vm528 = vcmp.ne.s32.totalorder %v512, 0
      %vm529 = vcmp.ne.s32.totalorder %v513, 0
      %vm530 = vcmp.ne.s32.totalorder %v514, 0
      %vm531 = vcmp.ne.s32.totalorder %v515, 0
      %vm532 = vcmp.ne.s32.totalorder %v516, 0
      %vm533 = vcmp.ne.s32.totalorder %v517, 0
      %vm534 = vcmp.ne.s32.totalorder %v518, 0
      %vm535 = vcmp.ne.s32.totalorder %v519, 0
      %vm536 = vcmp.ne.s32.totalorder %v520, 0
      %vm537 = vcmp.ne.s32.totalorder %v521, 0
      %vm538 = vcmp.ne.s32.totalorder %v522, 0
      %vm539 = vcmp.ne.s32.totalorder %v523, 0
      %vm540 = vcmp.ne.s32.totalorder %v524, 0
      %vm541 = vcmp.ne.s32.totalorder %v525, 0
      %vm542 = vcmp.ne.s32.totalorder %v526, 0
      %vm543 = vcmp.ne.s32.totalorder %v527, 0
      %vm544 = vcmp.ne.s32.totalorder %v512, 15
      %vm545 = vcmp.ne.s32.totalorder %v513, 15
      %vm546 = vcmp.ne.s32.totalorder %v514, 15
      %vm547 = vcmp.ne.s32.totalorder %v515, 15
      %vm548 = vcmp.ne.s32.totalorder %v516, 15
      %vm549 = vcmp.ne.s32.totalorder %v517, 15
      %vm550 = vcmp.ne.s32.totalorder %v518, 15
      %vm551 = vcmp.ne.s32.totalorder %v519, 15
      %vm552 = vcmp.ne.s32.totalorder %v520, 15
      %vm553 = vcmp.ne.s32.totalorder %v521, 15
      %vm554 = vcmp.ne.s32.totalorder %v522, 15
      %vm555 = vcmp.ne.s32.totalorder %v523, 15
      %vm556 = vcmp.ne.s32.totalorder %v524, 15
      %vm557 = vcmp.ne.s32.totalorder %v525, 15
      %vm558 = vcmp.ne.s32.totalorder %v526, 15
      %vm559 = vcmp.ne.s32.totalorder %v527, 15
      %v560 = vld [vmem:[#allocation2 + $0x7] sm:$0xff]
      %v561 = vld [vmem:[#allocation2 + $0xf] sm:$0xff]
      %v562 = vld [vmem:[#allocation2 + $0x17] sm:$0xff]
      %v563 = vld [vmem:[#allocation2 + $0x1f] sm:$0xff]
      %v564 = vld [vmem:[#allocation2 + $0x27] sm:$0xff]
      %v565 = vld [vmem:[#allocation2 + $0x2f] sm:$0xff]
      %v566 = vld [vmem:[#allocation2 + $0x37] sm:$0xff]
      %v567 = vld [vmem:[#allocation2 + $0x3f] sm:$0xff]
      %v568 = vld [vmem:[#allocation2 + $0x47] sm:$0xff]
      %v569 = vld [vmem:[#allocation2 + $0x4f] sm:$0xff]
      %v570 = vld [vmem:[#allocation2 + $0x57] sm:$0xff]
      %v571 = vld [vmem:[#allocation2 + $0x5f] sm:$0xff]
      %v572 = vld [vmem:[#allocation2 + $0x67] sm:$0xff]
      %v573 = vld [vmem:[#allocation2 + $0x6f] sm:$0xff]
      %v574 = vld [vmem:[#allocation2 + $0x77] sm:$0xff]
      %v575 = vld [vmem:[#allocation2 + $0x7f] sm:$0xff]
      %v576 = vsel %vm528, %v560, 0.0
      %v577 = vsel %vm529, %v561, 0.0
      %v578 = vsel %vm530, %v562, 0.0
      %v579 = vsel %vm531, %v563, 0.0
      %v580 = vsel %vm532, %v564, 0.0
      %v581 = vsel %vm533, %v565, 0.0
      %v582 = vsel %vm534, %v566, 0.0
      %v583 = vsel %vm535, %v567, 0.0
      %v584 = vsel %vm536, %v568, 0.0
      %v585 = vsel %vm537, %v569, 0.0
      %v586 = vsel %vm538, %v570, 0.0
      %v587 = vsel %vm539, %v571, 0.0
      %v588 = vsel %vm540, %v572, 0.0
      %v589 = vsel %vm541, %v573, 0.0
      %v590 = vsel %vm542, %v574, 0.0
      %v591 = vsel %vm543, %v575, 0.0
      %v592 = vpack.c.bf16 %v577, %v576
      %v593 = vpack.c.bf16 %v579, %v578
      %v594 = vpack.c.bf16 %v581, %v580
      %v595 = vpack.c.bf16 %v583, %v582
      %v596 = vpack.c.bf16 %v585, %v584
      %v597 = vpack.c.bf16 %v587, %v586
      %v598 = vpack.c.bf16 %v589, %v588
      %v599 = vpack.c.bf16 %v591, %v590
      %v600 = vld [vmem:[%s237] sm:$0xf]
      %v601 = vld [vmem:[%s237 + $0x4] sm:$0xf]
      %v602 = vld [vmem:[%s237 + $0x8] sm:$0xf]
      %v603 = vld [vmem:[%s237 + $0xc] sm:$0xf]
      %v604 = vld [vmem:[%s237 + $0x10] sm:$0xf]
      %v605 = vld [vmem:[%s237 + $0x14] sm:$0xf]
      %v606 = vld [vmem:[%s237 + $0x18] sm:$0xf]
      %v607 = vld [vmem:[%s237 + $0x1c] sm:$0xf]
      %v608 = vld [vmem:[%s237 + $0x20] sm:$0xf]
      %v609 = vld [vmem:[%s237 + $0x24] sm:$0xf]
      %v610 = vld [vmem:[%s237 + $0x28] sm:$0xf]
      %v611 = vld [vmem:[%s237 + $0x2c] sm:$0xf]
      %v612 = vld [vmem:[%s237 + $0x30] sm:$0xf]
      %v613 = vld [vmem:[%s237 + $0x34] sm:$0xf]
      %v614 = vld [vmem:[%s237 + $0x38] sm:$0xf]
      %v615 = vld [vmem:[%s237 + $0x3c] sm:$0xf]
      %v616 = vld [vmem:[#allocation2 + $0x8] sm:$0xff]
      %v617 = vld [vmem:[#allocation2 + $0x10] sm:$0xff]
      %v618 = vld [vmem:[#allocation2 + $0x18] sm:$0xff]
      %v619 = vld [vmem:[#allocation2 + $0x20] sm:$0xff]
      %v620 = vld [vmem:[#allocation2 + $0x28] sm:$0xff]
      %v621 = vld [vmem:[#allocation2 + $0x30] sm:$0xff]
      %v622 = vld [vmem:[#allocation2 + $0x38] sm:$0xff]
      %v623 = vld [vmem:[#allocation2 + $0x40] sm:$0xff]
      %v624 = vld [vmem:[#allocation2 + $0x48] sm:$0xff]
      %v625 = vld [vmem:[#allocation2 + $0x50] sm:$0xff]
      %v626 = vld [vmem:[#allocation2 + $0x58] sm:$0xff]
      %v627 = vld [vmem:[#allocation2 + $0x60] sm:$0xff]
      %v628 = vld [vmem:[#allocation2 + $0x68] sm:$0xff]
      %v629 = vld [vmem:[#allocation2 + $0x70] sm:$0xff]
      %v630 = vld [vmem:[#allocation2 + $0x78] sm:$0xff]
      %v631 = vld [vmem:[#allocation2 + $0x80] sm:$0xff]
      %v632 = vpack.c.bf16 %v617, %v616
      %v633 = vpack.c.bf16 %v619, %v618
      %v634 = vpack.c.bf16 %v621, %v620
      %v635 = vpack.c.bf16 %v623, %v622
      %v636 = vpack.c.bf16 %v625, %v624
      %v637 = vpack.c.bf16 %v627, %v626
      %v638 = vpack.c.bf16 %v629, %v628
      %v639 = vpack.c.bf16 %v631, %v630
      %s640 = scalar_lea.vmem %s237, 64
      %v641 = vld [vmem:[%s640] sm:$0xf]
      %v642 = vld [vmem:[%s640 + $0x4] sm:$0xf]
      %v643 = vld [vmem:[%s640 + $0x8] sm:$0xf]
      %v644 = vld [vmem:[%s640 + $0xc] sm:$0xf]
      %v645 = vld [vmem:[%s640 + $0x10] sm:$0xf]
      %v646 = vld [vmem:[%s640 + $0x14] sm:$0xf]
      %v647 = vld [vmem:[%s640 + $0x18] sm:$0xf]
      %v648 = vld [vmem:[%s640 + $0x1c] sm:$0xf]
      %v649 = vld [vmem:[%s640 + $0x20] sm:$0xf]
      %v650 = vld [vmem:[%s640 + $0x24] sm:$0xf]
      %v651 = vld [vmem:[%s640 + $0x28] sm:$0xf]
      %v652 = vld [vmem:[%s640 + $0x2c] sm:$0xf]
      %v653 = vld [vmem:[%s640 + $0x30] sm:$0xf]
      %v654 = vld [vmem:[%s640 + $0x34] sm:$0xf]
      %v655 = vld [vmem:[%s640 + $0x38] sm:$0xf]
      %v656 = vld [vmem:[%s640 + $0x3c] sm:$0xf]
      %v673 = vunpack.c.l.b16 %v641
      %v674 = vunpack.c.l.b16 %v642
      %v675 = vunpack.c.l.b16 %v643
      %v676 = vunpack.c.l.b16 %v644
      %v677 = vunpack.c.l.b16 %v645
      %v678 = vunpack.c.l.b16 %v646
      %v679 = vunpack.c.l.b16 %v647
      %v680 = vunpack.c.l.b16 %v648
      %v681 = vunpack.c.l.b16 %v649
      %v682 = vunpack.c.l.b16 %v650
      %v683 = vunpack.c.l.b16 %v651
      %v684 = vunpack.c.l.b16 %v652
      %v685 = vunpack.c.l.b16 %v653
      %v686 = vunpack.c.l.b16 %v654
      %v687 = vunpack.c.l.b16 %v655
      %v688 = vunpack.c.l.b16 %v656
      %v689 = vpack.c.b16 %v674, %v673
      %v690 = vpack.c.b16 %v676, %v675
      %v691 = vpack.c.b16 %v678, %v677
      %v692 = vpack.c.b16 %v680, %v679
      %v693 = vpack.c.b16 %v682, %v681
      %v694 = vpack.c.b16 %v684, %v683
      %v695 = vpack.c.b16 %v686, %v685
      %v696 = vpack.c.b16 %v688, %v687
      %705 = vmatpush.bf16.msra.mxu0 %v696
      %706 = vmatpush.bf16.msra.mxu0 %v695
      %707 = vmatpush.bf16.msra.mxu0 %v694
      %708 = vmatpush.bf16.msra.mxu0 %v693
      %709 = vmatpush.bf16.msra.mxu0 %v692
      %710 = vmatpush.bf16.msra.mxu0 %v691
      %711 = vmatpush.bf16.msra.mxu0 %v690
      %712 = vmatpush.bf16.msra.mxu0 %v689
      %713 = vmatmul.bf16.gmra.mxu0 %v632
      %v714 = vpop.f32.mrf.mxu0
      %v715 = vadd.f32 0.0, %v714
      %v716 = vpop.f32.mrf.mxu0
      %v717 = vadd.f32 0.0, %v716
      %718 = vmatmul.bf16.gmra.mxu0 %v633
      %v719 = vpop.f32.mrf.mxu0
      %v720 = vadd.f32 0.0, %v719
      %v721 = vpop.f32.mrf.mxu0
      %v722 = vadd.f32 0.0, %v721
      %723 = vmatmul.bf16.gmra.mxu0 %v634
      %v724 = vpop.f32.mrf.mxu0
      %v725 = vadd.f32 0.0, %v724
      %v726 = vpop.f32.mrf.mxu0
      %v727 = vadd.f32 0.0, %v726
      %728 = vmatmul.bf16.gmra.mxu0 %v635
      %v729 = vpop.f32.mrf.mxu0
      %v730 = vadd.f32 0.0, %v729
      %v731 = vpop.f32.mrf.mxu0
      %v732 = vadd.f32 0.0, %v731
      %733 = vmatmul.bf16.gmra.mxu0 %v636
      %v734 = vpop.f32.mrf.mxu0
      %v735 = vadd.f32 0.0, %v734
      %v736 = vpop.f32.mrf.mxu0
      %v737 = vadd.f32 0.0, %v736
      %738 = vmatmul.bf16.gmra.mxu0 %v637
      %v739 = vpop.f32.mrf.mxu0
      %v740 = vadd.f32 0.0, %v739
      %v741 = vpop.f32.mrf.mxu0
      %v742 = vadd.f32 0.0, %v741
      %743 = vmatmul.bf16.gmra.mxu0 %v638
      %v744 = vpop.f32.mrf.mxu0
      %v745 = vadd.f32 0.0, %v744
      %v746 = vpop.f32.mrf.mxu0
      %v747 = vadd.f32 0.0, %v746
      %748 = vmatmul.bf16.gmra.mxu0 %v639
      %v749 = vpop.f32.mrf.mxu0
      %v750 = vadd.f32 0.0, %v749
      %v751 = vpop.f32.mrf.mxu0
      %v752 = vadd.f32 0.0, %v751
      %753 = vdwg.mxu0
      %v770 = vunpack.c.l.b16 %v600
      %v771 = vunpack.c.l.b16 %v601
      %v772 = vunpack.c.l.b16 %v602
      %v773 = vunpack.c.l.b16 %v603
      %v774 = vunpack.c.l.b16 %v604
      %v775 = vunpack.c.l.b16 %v605
      %v776 = vunpack.c.l.b16 %v606
      %v777 = vunpack.c.l.b16 %v607
      %v778 = vunpack.c.l.b16 %v608
      %v779 = vunpack.c.l.b16 %v609
      %v780 = vunpack.c.l.b16 %v610
      %v781 = vunpack.c.l.b16 %v611
      %v782 = vunpack.c.l.b16 %v612
      %v783 = vunpack.c.l.b16 %v613
      %v784 = vunpack.c.l.b16 %v614
      %v785 = vunpack.c.l.b16 %v615
      %v786 = vpack.c.b16 %v771, %v770
      %v787 = vpack.c.b16 %v773, %v772
      %v788 = vpack.c.b16 %v775, %v774
      %v789 = vpack.c.b16 %v777, %v776
      %v790 = vpack.c.b16 %v779, %v778
      %v791 = vpack.c.b16 %v781, %v780
      %v792 = vpack.c.b16 %v783, %v782
      %v793 = vpack.c.b16 %v785, %v784
      %802 = vmatpush.bf16.msra.mxu0 %v793
      %803 = vmatpush.bf16.msra.mxu0 %v792
      %804 = vmatpush.bf16.msra.mxu0 %v791
      %805 = vmatpush.bf16.msra.mxu0 %v790
      %806 = vmatpush.bf16.msra.mxu0 %v789
      %807 = vmatpush.bf16.msra.mxu0 %v788
      %808 = vmatpush.bf16.msra.mxu0 %v787
      %809 = vmatpush.bf16.msra.mxu0 %v786
      %810 = vmatmul.bf16.gmra.mxu0 %v592
      %v811 = vpop.f32.mrf.mxu0
      %v812 = vadd.f32 %v715, %v811
      %v813 = vpop.f32.mrf.mxu0
      %v814 = vadd.f32 %v717, %v813
      %815 = vmatmul.bf16.gmra.mxu0 %v593
      %v816 = vpop.f32.mrf.mxu0
      %v817 = vadd.f32 %v720, %v816
      %v818 = vpop.f32.mrf.mxu0
      %v819 = vadd.f32 %v722, %v818
      %820 = vmatmul.bf16.gmra.mxu0 %v594
      %v821 = vpop.f32.mrf.mxu0
      %v822 = vadd.f32 %v725, %v821
      %v823 = vpop.f32.mrf.mxu0
      %v824 = vadd.f32 %v727, %v823
      %825 = vmatmul.bf16.gmra.mxu0 %v595
      %v826 = vpop.f32.mrf.mxu0
      %v827 = vadd.f32 %v730, %v826
      %v828 = vpop.f32.mrf.mxu0
      %v829 = vadd.f32 %v732, %v828
      %830 = vmatmul.bf16.gmra.mxu0 %v596
      %v831 = vpop.f32.mrf.mxu0
      %v832 = vadd.f32 %v735, %v831
      %v833 = vpop.f32.mrf.mxu0
      %v834 = vadd.f32 %v737, %v833
      %835 = vmatmul.bf16.gmra.mxu0 %v597
      %v836 = vpop.f32.mrf.mxu0
      %v837 = vadd.f32 %v740, %v836
      %v838 = vpop.f32.mrf.mxu0
      %v839 = vadd.f32 %v742, %v838
      %840 = vmatmul.bf16.gmra.mxu0 %v598
      %v841 = vpop.f32.mrf.mxu0
      %v842 = vadd.f32 %v745, %v841
      %v843 = vpop.f32.mrf.mxu0
      %v844 = vadd.f32 %v747, %v843
      %845 = vmatmul.bf16.gmra.mxu0 %v599
      %v846 = vpop.f32.mrf.mxu0
      %v847 = vadd.f32 %v750, %v846
      %v848 = vpop.f32.mrf.mxu0
      %v849 = vadd.f32 %v752, %v848
      %850 = vdwg.mxu0
      %v851 = vld [vmem:[#allocation2 + $0x9] sm:$0xff]
      %v852 = vld [vmem:[#allocation2 + $0x11] sm:$0xff]
      %v853 = vld [vmem:[#allocation2 + $0x19] sm:$0xff]
      %v854 = vld [vmem:[#allocation2 + $0x21] sm:$0xff]
      %v855 = vld [vmem:[#allocation2 + $0x29] sm:$0xff]
      %v856 = vld [vmem:[#allocation2 + $0x31] sm:$0xff]
      %v857 = vld [vmem:[#allocation2 + $0x39] sm:$0xff]
      %v858 = vld [vmem:[#allocation2 + $0x41] sm:$0xff]
      %v859 = vld [vmem:[#allocation2 + $0x49] sm:$0xff]
      %v860 = vld [vmem:[#allocation2 + $0x51] sm:$0xff]
      %v861 = vld [vmem:[#allocation2 + $0x59] sm:$0xff]
      %v862 = vld [vmem:[#allocation2 + $0x61] sm:$0xff]
      %v863 = vld [vmem:[#allocation2 + $0x69] sm:$0xff]
      %v864 = vld [vmem:[#allocation2 + $0x71] sm:$0xff]
      %v865 = vld [vmem:[#allocation2 + $0x79] sm:$0xff]
      %v866 = vld [vmem:[#allocation2 + $0x81] sm:$0xff]
      %v867 = vsel %vm544, %v851, 0.0
      %v868 = vsel %vm545, %v852, 0.0
      %v869 = vsel %vm546, %v853, 0.0
      %v870 = vsel %vm547, %v854, 0.0
      %v871 = vsel %vm548, %v855, 0.0
      %v872 = vsel %vm549, %v856, 0.0
      %v873 = vsel %vm550, %v857, 0.0
      %v874 = vsel %vm551, %v858, 0.0
      %v875 = vsel %vm552, %v859, 0.0
      %v876 = vsel %vm553, %v860, 0.0
      %v877 = vsel %vm554, %v861, 0.0
      %v878 = vsel %vm555, %v862, 0.0
      %v879 = vsel %vm556, %v863, 0.0
      %v880 = vsel %vm557, %v864, 0.0
      %v881 = vsel %vm558, %v865, 0.0
      %v882 = vsel %vm559, %v866, 0.0
      %v883 = vpack.c.bf16 %v868, %v867
      %v884 = vpack.c.bf16 %v870, %v869
      %v885 = vpack.c.bf16 %v872, %v871
      %v886 = vpack.c.bf16 %v874, %v873
      %v887 = vpack.c.bf16 %v876, %v875
      %v888 = vpack.c.bf16 %v878, %v877
      %v889 = vpack.c.bf16 %v880, %v879
      %v890 = vpack.c.bf16 %v882, %v881
      %s891 = scalar_lea.vmem %s237, 128
      %v892 = vld [vmem:[%s891] sm:$0xf]
      %v893 = vld [vmem:[%s891 + $0x4] sm:$0xf]
      %v894 = vld [vmem:[%s891 + $0x8] sm:$0xf]
      %v895 = vld [vmem:[%s891 + $0xc] sm:$0xf]
      %v896 = vld [vmem:[%s891 + $0x10] sm:$0xf]
      %v897 = vld [vmem:[%s891 + $0x14] sm:$0xf]
      %v898 = vld [vmem:[%s891 + $0x18] sm:$0xf]
      %v899 = vld [vmem:[%s891 + $0x1c] sm:$0xf]
      %v900 = vld [vmem:[%s891 + $0x20] sm:$0xf]
      %v901 = vld [vmem:[%s891 + $0x24] sm:$0xf]
      %v902 = vld [vmem:[%s891 + $0x28] sm:$0xf]
      %v903 = vld [vmem:[%s891 + $0x2c] sm:$0xf]
      %v904 = vld [vmem:[%s891 + $0x30] sm:$0xf]
      %v905 = vld [vmem:[%s891 + $0x34] sm:$0xf]
      %v906 = vld [vmem:[%s891 + $0x38] sm:$0xf]
      %v907 = vld [vmem:[%s891 + $0x3c] sm:$0xf]
      %v924 = vunpack.c.l.b16 %v892
      %v925 = vunpack.c.l.b16 %v893
      %v926 = vunpack.c.l.b16 %v894
      %v927 = vunpack.c.l.b16 %v895
      %v928 = vunpack.c.l.b16 %v896
      %v929 = vunpack.c.l.b16 %v897
      %v930 = vunpack.c.l.b16 %v898
      %v931 = vunpack.c.l.b16 %v899
      %v932 = vunpack.c.l.b16 %v900
      %v933 = vunpack.c.l.b16 %v901
      %v934 = vunpack.c.l.b16 %v902
      %v935 = vunpack.c.l.b16 %v903
      %v936 = vunpack.c.l.b16 %v904
      %v937 = vunpack.c.l.b16 %v905
      %v938 = vunpack.c.l.b16 %v906
      %v939 = vunpack.c.l.b16 %v907
      %v940 = vpack.c.b16 %v925, %v924
      %v941 = vpack.c.b16 %v927, %v926
      %v942 = vpack.c.b16 %v929, %v928
      %v943 = vpack.c.b16 %v931, %v930
      %v944 = vpack.c.b16 %v933, %v932
      %v945 = vpack.c.b16 %v935, %v934
      %v946 = vpack.c.b16 %v937, %v936
      %v947 = vpack.c.b16 %v939, %v938
      %956 = vmatpush.bf16.msra.mxu0 %v947
      %957 = vmatpush.bf16.msra.mxu0 %v946
      %958 = vmatpush.bf16.msra.mxu0 %v945
      %959 = vmatpush.bf16.msra.mxu0 %v944
      %960 = vmatpush.bf16.msra.mxu0 %v943
      %961 = vmatpush.bf16.msra.mxu0 %v942
      %962 = vmatpush.bf16.msra.mxu0 %v941
      %963 = vmatpush.bf16.msra.mxu0 %v940
      %964 = vmatmul.bf16.gmra.mxu0 %v883
      %v965 = vpop.f32.mrf.mxu0
      %v966 = vadd.f32 0.0, %v965
      %v967 = vpop.f32.mrf.mxu0
      %v968 = vadd.f32 0.0, %v967
      %969 = vmatmul.bf16.gmra.mxu0 %v884
      %v970 = vpop.f32.mrf.mxu0
      %v971 = vadd.f32 0.0, %v970
      %v972 = vpop.f32.mrf.mxu0
      %v973 = vadd.f32 0.0, %v972
      %974 = vmatmul.bf16.gmra.mxu0 %v885
      %v975 = vpop.f32.mrf.mxu0
      %v976 = vadd.f32 0.0, %v975
      %v977 = vpop.f32.mrf.mxu0
      %v978 = vadd.f32 0.0, %v977
      %979 = vmatmul.bf16.gmra.mxu0 %v886
      %v980 = vpop.f32.mrf.mxu0
      %v981 = vadd.f32 0.0, %v980
      %v982 = vpop.f32.mrf.mxu0
      %v983 = vadd.f32 0.0, %v982
      %984 = vmatmul.bf16.gmra.mxu0 %v887
      %v985 = vpop.f32.mrf.mxu0
      %v986 = vadd.f32 0.0, %v985
      %v987 = vpop.f32.mrf.mxu0
      %v988 = vadd.f32 0.0, %v987
      %989 = vmatmul.bf16.gmra.mxu0 %v888
      %v990 = vpop.f32.mrf.mxu0
      %v991 = vadd.f32 0.0, %v990
      %v992 = vpop.f32.mrf.mxu0
      %v993 = vadd.f32 0.0, %v992
      %994 = vmatmul.bf16.gmra.mxu0 %v889
      %v995 = vpop.f32.mrf.mxu0
      %v996 = vadd.f32 0.0, %v995
      %v997 = vpop.f32.mrf.mxu0
      %v998 = vadd.f32 0.0, %v997
      %999 = vmatmul.bf16.gmra.mxu0 %v890
      %v1000 = vpop.f32.mrf.mxu0
      %v1001 = vadd.f32 0.0, %v1000
      %v1002 = vpop.f32.mrf.mxu0
      %v1003 = vadd.f32 0.0, %v1002
      %1004 = vdwg.mxu0
      %v1005 = vadd.f32 %v812, %v966
      %v1006 = vadd.f32 %v814, %v968
      %v1007 = vadd.f32 %v817, %v971
      %v1008 = vadd.f32 %v819, %v973
      %v1009 = vadd.f32 %v822, %v976
      %v1010 = vadd.f32 %v824, %v978
      %v1011 = vadd.f32 %v827, %v981
      %v1012 = vadd.f32 %v829, %v983
      %v1013 = vadd.f32 %v832, %v986
      %v1014 = vadd.f32 %v834, %v988
      %v1015 = vadd.f32 %v837, %v991
      %v1016 = vadd.f32 %v839, %v993
      %v1017 = vadd.f32 %v842, %v996
      %v1018 = vadd.f32 %v844, %v998
      %v1019 = vadd.f32 %v847, %v1001
      %v1020 = vadd.f32 %v849, %v1003
      %v1021 = vld [vmem:[#allocation2 + $0x17] sm:$0xff]
      %v1022 = vld [vmem:[#allocation2 + $0x1f] sm:$0xff]
      %v1023 = vld [vmem:[#allocation2 + $0x27] sm:$0xff]
      %v1024 = vld [vmem:[#allocation2 + $0x2f] sm:$0xff]
      %v1025 = vld [vmem:[#allocation2 + $0x37] sm:$0xff]
      %v1026 = vld [vmem:[#allocation2 + $0x3f] sm:$0xff]
      %v1027 = vld [vmem:[#allocation2 + $0x47] sm:$0xff]
      %v1028 = vld [vmem:[#allocation2 + $0x4f] sm:$0xff]
      %v1029 = vld [vmem:[#allocation2 + $0x57] sm:$0xff]
      %v1030 = vld [vmem:[#allocation2 + $0x5f] sm:$0xff]
      %v1031 = vld [vmem:[#allocation2 + $0x67] sm:$0xff]
      %v1032 = vld [vmem:[#allocation2 + $0x6f] sm:$0xff]
      %v1033 = vld [vmem:[#allocation2 + $0x77] sm:$0xff]
      %v1034 = vld [vmem:[#allocation2 + $0x7f] sm:$0xff]
      %v1035 = vld [vmem:[#allocation2 + $0x87] sm:$0xff]
      %v1036 = vld [vmem:[#allocation2 + $0x8f] sm:$0xff]
      %v1037 = vsel %vm528, %v1021, 0.0
      %v1038 = vsel %vm529, %v1022, 0.0
      %v1039 = vsel %vm530, %v1023, 0.0
      %v1040 = vsel %vm531, %v1024, 0.0
      %v1041 = vsel %vm532, %v1025, 0.0
      %v1042 = vsel %vm533, %v1026, 0.0
      %v1043 = vsel %vm534, %v1027, 0.0
      %v1044 = vsel %vm535, %v1028, 0.0
      %v1045 = vsel %vm536, %v1029, 0.0
      %v1046 = vsel %vm537, %v1030, 0.0
      %v1047 = vsel %vm538, %v1031, 0.0
      %v1048 = vsel %vm539, %v1032, 0.0
      %v1049 = vsel %vm540, %v1033, 0.0
      %v1050 = vsel %vm541, %v1034, 0.0
      %v1051 = vsel %vm542, %v1035, 0.0
      %v1052 = vsel %vm543, %v1036, 0.0
      %v1053 = vpack.c.bf16 %v1038, %v1037
      %v1054 = vpack.c.bf16 %v1040, %v1039
      %v1055 = vpack.c.bf16 %v1042, %v1041
      %v1056 = vpack.c.bf16 %v1044, %v1043
      %v1057 = vpack.c.bf16 %v1046, %v1045
      %v1058 = vpack.c.bf16 %v1048, %v1047
      %v1059 = vpack.c.bf16 %v1050, %v1049
      %v1060 = vpack.c.bf16 %v1052, %v1051
      %s1061 = scalar_lea.vmem %s237, 192
      %v1062 = vld [vmem:[%s1061] sm:$0xf]
      %v1063 = vld [vmem:[%s1061 + $0x4] sm:$0xf]
      %v1064 = vld [vmem:[%s1061 + $0x8] sm:$0xf]
      %v1065 = vld [vmem:[%s1061 + $0xc] sm:$0xf]
      %v1066 = vld [vmem:[%s1061 + $0x10] sm:$0xf]
      %v1067 = vld [vmem:[%s1061 + $0x14] sm:$0xf]
      %v1068 = vld [vmem:[%s1061 + $0x18] sm:$0xf]
      %v1069 = vld [vmem:[%s1061 + $0x1c] sm:$0xf]
      %v1070 = vld [vmem:[%s1061 + $0x20] sm:$0xf]
      %v1071 = vld [vmem:[%s1061 + $0x24] sm:$0xf]
      %v1072 = vld [vmem:[%s1061 + $0x28] sm:$0xf]
      %v1073 = vld [vmem:[%s1061 + $0x2c] sm:$0xf]
      %v1074 = vld [vmem:[%s1061 + $0x30] sm:$0xf]
      %v1075 = vld [vmem:[%s1061 + $0x34] sm:$0xf]
      %v1076 = vld [vmem:[%s1061 + $0x38] sm:$0xf]
      %v1077 = vld [vmem:[%s1061 + $0x3c] sm:$0xf]
      %v1094 = vunpack.c.l.b16 %v1062
      %v1095 = vunpack.c.l.b16 %v1063
      %v1096 = vunpack.c.l.b16 %v1064
      %v1097 = vunpack.c.l.b16 %v1065
      %v1098 = vunpack.c.l.b16 %v1066
      %v1099 = vunpack.c.l.b16 %v1067
      %v1100 = vunpack.c.l.b16 %v1068
      %v1101 = vunpack.c.l.b16 %v1069
      %v1102 = vunpack.c.l.b16 %v1070
      %v1103 = vunpack.c.l.b16 %v1071
      %v1104 = vunpack.c.l.b16 %v1072
      %v1105 = vunpack.c.l.b16 %v1073
      %v1106 = vunpack.c.l.b16 %v1074
      %v1107 = vunpack.c.l.b16 %v1075
      %v1108 = vunpack.c.l.b16 %v1076
      %v1109 = vunpack.c.l.b16 %v1077
      %v1110 = vpack.c.b16 %v1095, %v1094
      %v1111 = vpack.c.b16 %v1097, %v1096
      %v1112 = vpack.c.b16 %v1099, %v1098
      %v1113 = vpack.c.b16 %v1101, %v1100
      %v1114 = vpack.c.b16 %v1103, %v1102
      %v1115 = vpack.c.b16 %v1105, %v1104
      %v1116 = vpack.c.b16 %v1107, %v1106
      %v1117 = vpack.c.b16 %v1109, %v1108
      %1126 = vmatpush.bf16.msra.mxu0 %v1117
      %1127 = vmatpush.bf16.msra.mxu0 %v1116
      %1128 = vmatpush.bf16.msra.mxu0 %v1115
      %1129 = vmatpush.bf16.msra.mxu0 %v1114
      %1130 = vmatpush.bf16.msra.mxu0 %v1113
      %1131 = vmatpush.bf16.msra.mxu0 %v1112
      %1132 = vmatpush.bf16.msra.mxu0 %v1111
      %1133 = vmatpush.bf16.msra.mxu0 %v1110
      %1134 = vmatmul.bf16.gmra.mxu0 %v1053
      %v1135 = vpop.f32.mrf.mxu0
      %v1136 = vadd.f32 0.0, %v1135
      %v1137 = vpop.f32.mrf.mxu0
      %v1138 = vadd.f32 0.0, %v1137
      %1139 = vmatmul.bf16.gmra.mxu0 %v1054
      %v1140 = vpop.f32.mrf.mxu0
      %v1141 = vadd.f32 0.0, %v1140
      %v1142 = vpop.f32.mrf.mxu0
      %v1143 = vadd.f32 0.0, %v1142
      %1144 = vmatmul.bf16.gmra.mxu0 %v1055
      %v1145 = vpop.f32.mrf.mxu0
      %v1146 = vadd.f32 0.0, %v1145
      %v1147 = vpop.f32.mrf.mxu0
      %v1148 = vadd.f32 0.0, %v1147
      %1149 = vmatmul.bf16.gmra.mxu0 %v1056
      %v1150 = vpop.f32.mrf.mxu0
      %v1151 = vadd.f32 0.0, %v1150
      %v1152 = vpop.f32.mrf.mxu0
      %v1153 = vadd.f32 0.0, %v1152
      %1154 = vmatmul.bf16.gmra.mxu0 %v1057
      %v1155 = vpop.f32.mrf.mxu0
      %v1156 = vadd.f32 0.0, %v1155
      %v1157 = vpop.f32.mrf.mxu0
      %v1158 = vadd.f32 0.0, %v1157
      %1159 = vmatmul.bf16.gmra.mxu0 %v1058
      %v1160 = vpop.f32.mrf.mxu0
      %v1161 = vadd.f32 0.0, %v1160
      %v1162 = vpop.f32.mrf.mxu0
      %v1163 = vadd.f32 0.0, %v1162
      %1164 = vmatmul.bf16.gmra.mxu0 %v1059
      %v1165 = vpop.f32.mrf.mxu0
      %v1166 = vadd.f32 0.0, %v1165
      %v1167 = vpop.f32.mrf.mxu0
      %v1168 = vadd.f32 0.0, %v1167
      %1169 = vmatmul.bf16.gmra.mxu0 %v1060
      %v1170 = vpop.f32.mrf.mxu0
      %v1171 = vadd.f32 0.0, %v1170
      %v1172 = vpop.f32.mrf.mxu0
      %v1173 = vadd.f32 0.0, %v1172
      %1174 = vdwg.mxu0
      %v1175 = vadd.f32 %v1005, %v1136
      %v1176 = vadd.f32 %v1006, %v1138
      %v1177 = vadd.f32 %v1007, %v1141
      %v1178 = vadd.f32 %v1008, %v1143
      %v1179 = vadd.f32 %v1009, %v1146
      %v1180 = vadd.f32 %v1010, %v1148
      %v1181 = vadd.f32 %v1011, %v1151
      %v1182 = vadd.f32 %v1012, %v1153
      %v1183 = vadd.f32 %v1013, %v1156
      %v1184 = vadd.f32 %v1014, %v1158
      %v1185 = vadd.f32 %v1015, %v1161
      %v1186 = vadd.f32 %v1016, %v1163
      %v1187 = vadd.f32 %v1017, %v1166
      %v1188 = vadd.f32 %v1018, %v1168
      %v1189 = vadd.f32 %v1019, %v1171
      %v1190 = vadd.f32 %v1020, %v1173
      %v1191 = vld [vmem:[#allocation2 + $0x18] sm:$0xff]
      %v1192 = vld [vmem:[#allocation2 + $0x20] sm:$0xff]
      %v1193 = vld [vmem:[#allocation2 + $0x28] sm:$0xff]
      %v1194 = vld [vmem:[#allocation2 + $0x30] sm:$0xff]
      %v1195 = vld [vmem:[#allocation2 + $0x38] sm:$0xff]
      %v1196 = vld [vmem:[#allocation2 + $0x40] sm:$0xff]
      %v1197 = vld [vmem:[#allocation2 + $0x48] sm:$0xff]
      %v1198 = vld [vmem:[#allocation2 + $0x50] sm:$0xff]
      %v1199 = vld [vmem:[#allocation2 + $0x58] sm:$0xff]
      %v1200 = vld [vmem:[#allocation2 + $0x60] sm:$0xff]
      %v1201 = vld [vmem:[#allocation2 + $0x68] sm:$0xff]
      %v1202 = vld [vmem:[#allocation2 + $0x70] sm:$0xff]
      %v1203 = vld [vmem:[#allocation2 + $0x78] sm:$0xff]
      %v1204 = vld [vmem:[#allocation2 + $0x80] sm:$0xff]
      %v1205 = vld [vmem:[#allocation2 + $0x88] sm:$0xff]
      %v1206 = vld [vmem:[#allocation2 + $0x90] sm:$0xff]
      %v1207 = vpack.c.bf16 %v1192, %v1191
      %v1208 = vpack.c.bf16 %v1194, %v1193
      %v1209 = vpack.c.bf16 %v1196, %v1195
      %v1210 = vpack.c.bf16 %v1198, %v1197
      %v1211 = vpack.c.bf16 %v1200, %v1199
      %v1212 = vpack.c.bf16 %v1202, %v1201
      %v1213 = vpack.c.bf16 %v1204, %v1203
      %v1214 = vpack.c.bf16 %v1206, %v1205
      %s1215 = scalar_lea.vmem %s237, 256
      %v1216 = vld [vmem:[%s1215] sm:$0xf]
      %v1217 = vld [vmem:[%s1215 + $0x4] sm:$0xf]
      %v1218 = vld [vmem:[%s1215 + $0x8] sm:$0xf]
      %v1219 = vld [vmem:[%s1215 + $0xc] sm:$0xf]
      %v1220 = vld [vmem:[%s1215 + $0x10] sm:$0xf]
      %v1221 = vld [vmem:[%s1215 + $0x14] sm:$0xf]
      %v1222 = vld [vmem:[%s1215 + $0x18] sm:$0xf]
      %v1223 = vld [vmem:[%s1215 + $0x1c] sm:$0xf]
      %v1224 = vld [vmem:[%s1215 + $0x20] sm:$0xf]
      %v1225 = vld [vmem:[%s1215 + $0x24] sm:$0xf]
      %v1226 = vld [vmem:[%s1215 + $0x28] sm:$0xf]
      %v1227 = vld [vmem:[%s1215 + $0x2c] sm:$0xf]
      %v1228 = vld [vmem:[%s1215 + $0x30] sm:$0xf]
      %v1229 = vld [vmem:[%s1215 + $0x34] sm:$0xf]
      %v1230 = vld [vmem:[%s1215 + $0x38] sm:$0xf]
      %v1231 = vld [vmem:[%s1215 + $0x3c] sm:$0xf]
      %v1248 = vunpack.c.l.b16 %v1216
      %v1249 = vunpack.c.l.b16 %v1217
      %v1250 = vunpack.c.l.b16 %v1218
      %v1251 = vunpack.c.l.b16 %v1219
      %v1252 = vunpack.c.l.b16 %v1220
      %v1253 = vunpack.c.l.b16 %v1221
      %v1254 = vunpack.c.l.b16 %v1222
      %v1255 = vunpack.c.l.b16 %v1223
      %v1256 = vunpack.c.l.b16 %v1224
      %v1257 = vunpack.c.l.b16 %v1225
      %v1258 = vunpack.c.l.b16 %v1226
      %v1259 = vunpack.c.l.b16 %v1227
      %v1260 = vunpack.c.l.b16 %v1228
      %v1261 = vunpack.c.l.b16 %v1229
      %v1262 = vunpack.c.l.b16 %v1230
      %v1263 = vunpack.c.l.b16 %v1231
      %v1264 = vpack.c.b16 %v1249, %v1248
      %v1265 = vpack.c.b16 %v1251, %v1250
      %v1266 = vpack.c.b16 %v1253, %v1252
      %v1267 = vpack.c.b16 %v1255, %v1254
      %v1268 = vpack.c.b16 %v1257, %v1256
      %v1269 = vpack.c.b16 %v1259, %v1258
      %v1270 = vpack.c.b16 %v1261, %v1260
      %v1271 = vpack.c.b16 %v1263, %v1262
      %1280 = vmatpush.bf16.msra.mxu0 %v1271
      %1281 = vmatpush.bf16.msra.mxu0 %v1270
      %1282 = vmatpush.bf16.msra.mxu0 %v1269
      %1283 = vmatpush.bf16.msra.mxu0 %v1268
      %1284 = vmatpush.bf16.msra.mxu0 %v1267
      %1285 = vmatpush.bf16.msra.mxu0 %v1266
      %1286 = vmatpush.bf16.msra.mxu0 %v1265
      %1287 = vmatpush.bf16.msra.mxu0 %v1264
      %1288 = vmatmul.bf16.gmra.mxu0 %v1207
      %v1289 = vpop.f32.mrf.mxu0
      %v1290 = vadd.f32 0.0, %v1289
      %v1291 = vpop.f32.mrf.mxu0
      %v1292 = vadd.f32 0.0, %v1291
      %1293 = vmatmul.bf16.gmra.mxu0 %v1208
      %v1294 = vpop.f32.mrf.mxu0
      %v1295 = vadd.f32 0.0, %v1294
      %v1296 = vpop.f32.mrf.mxu0
      %v1297 = vadd.f32 0.0, %v1296
      %1298 = vmatmul.bf16.gmra.mxu0 %v1209
      %v1299 = vpop.f32.mrf.mxu0
      %v1300 = vadd.f32 0.0, %v1299
      %v1301 = vpop.f32.mrf.mxu0
      %v1302 = vadd.f32 0.0, %v1301
      %1303 = vmatmul.bf16.gmra.mxu0 %v1210
      %v1304 = vpop.f32.mrf.mxu0
      %v1305 = vadd.f32 0.0, %v1304
      %v1306 = vpop.f32.mrf.mxu0
      %v1307 = vadd.f32 0.0, %v1306
      %1308 = vmatmul.bf16.gmra.mxu0 %v1211
      %v1309 = vpop.f32.mrf.mxu0
      %v1310 = vadd.f32 0.0, %v1309
      %v1311 = vpop.f32.mrf.mxu0
      %v1312 = vadd.f32 0.0, %v1311
      %1313 = vmatmul.bf16.gmra.mxu0 %v1212
      %v1314 = vpop.f32.mrf.mxu0
      %v1315 = vadd.f32 0.0, %v1314
      %v1316 = vpop.f32.mrf.mxu0
      %v1317 = vadd.f32 0.0, %v1316
      %1318 = vmatmul.bf16.gmra.mxu0 %v1213
      %v1319 = vpop.f32.mrf.mxu0
      %v1320 = vadd.f32 0.0, %v1319
      %v1321 = vpop.f32.mrf.mxu0
      %v1322 = vadd.f32 0.0, %v1321
      %1323 = vmatmul.bf16.gmra.mxu0 %v1214
      %v1324 = vpop.f32.mrf.mxu0
      %v1325 = vadd.f32 0.0, %v1324
      %v1326 = vpop.f32.mrf.mxu0
      %v1327 = vadd.f32 0.0, %v1326
      %1328 = vdwg.mxu0
      %v1329 = vadd.f32 %v1175, %v1290
      %v1330 = vadd.f32 %v1176, %v1292
      %v1331 = vadd.f32 %v1177, %v1295
      %v1332 = vadd.f32 %v1178, %v1297
      %v1333 = vadd.f32 %v1179, %v1300
      %v1334 = vadd.f32 %v1180, %v1302
      %v1335 = vadd.f32 %v1181, %v1305
      %v1336 = vadd.f32 %v1182, %v1307
      %v1337 = vadd.f32 %v1183, %v1310
      %v1338 = vadd.f32 %v1184, %v1312
      %v1339 = vadd.f32 %v1185, %v1315
      %v1340 = vadd.f32 %v1186, %v1317
      %v1341 = vadd.f32 %v1187, %v1320
      %v1342 = vadd.f32 %v1188, %v1322
      %v1343 = vadd.f32 %v1189, %v1325
      %v1344 = vadd.f32 %v1190, %v1327
      %v1345 = vld [vmem:[#allocation2 + $0x19] sm:$0xff]
      %v1346 = vld [vmem:[#allocation2 + $0x21] sm:$0xff]
      %v1347 = vld [vmem:[#allocation2 + $0x29] sm:$0xff]
      %v1348 = vld [vmem:[#allocation2 + $0x31] sm:$0xff]
      %v1349 = vld [vmem:[#allocation2 + $0x39] sm:$0xff]
      %v1350 = vld [vmem:[#allocation2 + $0x41] sm:$0xff]
      %v1351 = vld [vmem:[#allocation2 + $0x49] sm:$0xff]
      %v1352 = vld [vmem:[#allocation2 + $0x51] sm:$0xff]
      %v1353 = vld [vmem:[#allocation2 + $0x59] sm:$0xff]
      %v1354 = vld [vmem:[#allocation2 + $0x61] sm:$0xff]
      %v1355 = vld [vmem:[#allocation2 + $0x69] sm:$0xff]
      %v1356 = vld [vmem:[#allocation2 + $0x71] sm:$0xff]
      %v1357 = vld [vmem:[#allocation2 + $0x79] sm:$0xff]
      %v1358 = vld [vmem:[#allocation2 + $0x81] sm:$0xff]
      %v1359 = vld [vmem:[#allocation2 + $0x89] sm:$0xff]
      %v1360 = vld [vmem:[#allocation2 + $0x91] sm:$0xff]
      %v1361 = vsel %vm544, %v1345, 0.0
      %v1362 = vsel %vm545, %v1346, 0.0
      %v1363 = vsel %vm546, %v1347, 0.0
      %v1364 = vsel %vm547, %v1348, 0.0
      %v1365 = vsel %vm548, %v1349, 0.0
      %v1366 = vsel %vm549, %v1350, 0.0
      %v1367 = vsel %vm550, %v1351, 0.0
      %v1368 = vsel %vm551, %v1352, 0.0
      %v1369 = vsel %vm552, %v1353, 0.0
      %v1370 = vsel %vm553, %v1354, 0.0
      %v1371 = vsel %vm554, %v1355, 0.0
      %v1372 = vsel %vm555, %v1356, 0.0
      %v1373 = vsel %vm556, %v1357, 0.0
      %v1374 = vsel %vm557, %v1358, 0.0
      %v1375 = vsel %vm558, %v1359, 0.0
      %v1376 = vsel %vm559, %v1360, 0.0
      %v1377 = vpack.c.bf16 %v1362, %v1361
      %v1378 = vpack.c.bf16 %v1364, %v1363
      %v1379 = vpack.c.bf16 %v1366, %v1365
      %v1380 = vpack.c.bf16 %v1368, %v1367
      %v1381 = vpack.c.bf16 %v1370, %v1369
      %v1382 = vpack.c.bf16 %v1372, %v1371
      %v1383 = vpack.c.bf16 %v1374, %v1373
      %v1384 = vpack.c.bf16 %v1376, %v1375
      %s1385 = scalar_lea.vmem %s237, 320
      %v1386 = vld [vmem:[%s1385] sm:$0xf]
      %v1387 = vld [vmem:[%s1385 + $0x4] sm:$0xf]
      %v1388 = vld [vmem:[%s1385 + $0x8] sm:$0xf]
      %v1389 = vld [vmem:[%s1385 + $0xc] sm:$0xf]
      %v1390 = vld [vmem:[%s1385 + $0x10] sm:$0xf]
      %v1391 = vld [vmem:[%s1385 + $0x14] sm:$0xf]
      %v1392 = vld [vmem:[%s1385 + $0x18] sm:$0xf]
      %v1393 = vld [vmem:[%s1385 + $0x1c] sm:$0xf]
      %v1394 = vld [vmem:[%s1385 + $0x20] sm:$0xf]
      %v1395 = vld [vmem:[%s1385 + $0x24] sm:$0xf]
      %v1396 = vld [vmem:[%s1385 + $0x28] sm:$0xf]
      %v1397 = vld [vmem:[%s1385 + $0x2c] sm:$0xf]
      %v1398 = vld [vmem:[%s1385 + $0x30] sm:$0xf]
      %v1399 = vld [vmem:[%s1385 + $0x34] sm:$0xf]
      %v1400 = vld [vmem:[%s1385 + $0x38] sm:$0xf]
      %v1401 = vld [vmem:[%s1385 + $0x3c] sm:$0xf]
      %v1418 = vunpack.c.l.b16 %v1386
      %v1419 = vunpack.c.l.b16 %v1387
      %v1420 = vunpack.c.l.b16 %v1388
      %v1421 = vunpack.c.l.b16 %v1389
      %v1422 = vunpack.c.l.b16 %v1390
      %v1423 = vunpack.c.l.b16 %v1391
      %v1424 = vunpack.c.l.b16 %v1392
      %v1425 = vunpack.c.l.b16 %v1393
      %v1426 = vunpack.c.l.b16 %v1394
      %v1427 = vunpack.c.l.b16 %v1395
      %v1428 = vunpack.c.l.b16 %v1396
      %v1429 = vunpack.c.l.b16 %v1397
      %v1430 = vunpack.c.l.b16 %v1398
      %v1431 = vunpack.c.l.b16 %v1399
      %v1432 = vunpack.c.l.b16 %v1400
      %v1433 = vunpack.c.l.b16 %v1401
      %v1434 = vpack.c.b16 %v1419, %v1418
      %v1435 = vpack.c.b16 %v1421, %v1420
      %v1436 = vpack.c.b16 %v1423, %v1422
      %v1437 = vpack.c.b16 %v1425, %v1424
      %v1438 = vpack.c.b16 %v1427, %v1426
      %v1439 = vpack.c.b16 %v1429, %v1428
      %v1440 = vpack.c.b16 %v1431, %v1430
      %v1441 = vpack.c.b16 %v1433, %v1432
      %1450 = vmatpush.bf16.msra.mxu0 %v1441
      %1451 = vmatpush.bf16.msra.mxu0 %v1440
      %1452 = vmatpush.bf16.msra.mxu0 %v1439
      %1453 = vmatpush.bf16.msra.mxu0 %v1438
      %1454 = vmatpush.bf16.msra.mxu0 %v1437
      %1455 = vmatpush.bf16.msra.mxu0 %v1436
      %1456 = vmatpush.bf16.msra.mxu0 %v1435
      %1457 = vmatpush.bf16.msra.mxu0 %v1434
      %1458 = vmatmul.bf16.gmra.mxu0 %v1377
      %v1459 = vpop.f32.mrf.mxu0
      %v1460 = vadd.f32 0.0, %v1459
      %v1461 = vpop.f32.mrf.mxu0
      %v1462 = vadd.f32 0.0, %v1461
      %1463 = vmatmul.bf16.gmra.mxu0 %v1378
      %v1464 = vpop.f32.mrf.mxu0
      %v1465 = vadd.f32 0.0, %v1464
      %v1466 = vpop.f32.mrf.mxu0
      %v1467 = vadd.f32 0.0, %v1466
      %1468 = vmatmul.bf16.gmra.mxu0 %v1379
      %v1469 = vpop.f32.mrf.mxu0
      %v1470 = vadd.f32 0.0, %v1469
      %v1471 = vpop.f32.mrf.mxu0
      %v1472 = vadd.f32 0.0, %v1471
      %1473 = vmatmul.bf16.gmra.mxu0 %v1380
      %v1474 = vpop.f32.mrf.mxu0
      %v1475 = vadd.f32 0.0, %v1474
      %v1476 = vpop.f32.mrf.mxu0
      %v1477 = vadd.f32 0.0, %v1476
      %1478 = vmatmul.bf16.gmra.mxu0 %v1381
      %v1479 = vpop.f32.mrf.mxu0
      %v1480 = vadd.f32 0.0, %v1479
      %v1481 = vpop.f32.mrf.mxu0
      %v1482 = vadd.f32 0.0, %v1481
      %1483 = vmatmul.bf16.gmra.mxu0 %v1382
      %v1484 = vpop.f32.mrf.mxu0
      %v1485 = vadd.f32 0.0, %v1484
      %v1486 = vpop.f32.mrf.mxu0
      %v1487 = vadd.f32 0.0, %v1486
      %1488 = vmatmul.bf16.gmra.mxu0 %v1383
      %v1489 = vpop.f32.mrf.mxu0
      %v1490 = vadd.f32 0.0, %v1489
      %v1491 = vpop.f32.mrf.mxu0
      %v1492 = vadd.f32 0.0, %v1491
      %1493 = vmatmul.bf16.gmra.mxu0 %v1384
      %v1494 = vpop.f32.mrf.mxu0
      %v1495 = vadd.f32 0.0, %v1494
      %v1496 = vpop.f32.mrf.mxu0
      %v1497 = vadd.f32 0.0, %v1496
      %1498 = vdwg.mxu0
      %v1499 = vadd.f32 %v1329, %v1460
      %v1500 = vadd.f32 %v1330, %v1462
      %v1501 = vadd.f32 %v1331, %v1465
      %v1502 = vadd.f32 %v1332, %v1467
      %v1503 = vadd.f32 %v1333, %v1470
      %v1504 = vadd.f32 %v1334, %v1472
      %v1505 = vadd.f32 %v1335, %v1475
      %v1506 = vadd.f32 %v1336, %v1477
      %v1507 = vadd.f32 %v1337, %v1480
      %v1508 = vadd.f32 %v1338, %v1482
      %v1509 = vadd.f32 %v1339, %v1485
      %v1510 = vadd.f32 %v1340, %v1487
      %v1511 = vadd.f32 %v1341, %v1490
      %v1512 = vadd.f32 %v1342, %v1492
      %v1513 = vadd.f32 %v1343, %v1495
      %v1514 = vadd.f32 %v1344, %v1497
      %v1515 = vld [vmem:[#allocation2 + $0x27] sm:$0xff]
      %v1516 = vld [vmem:[#allocation2 + $0x2f] sm:$0xff]
      %v1517 = vld [vmem:[#allocation2 + $0x37] sm:$0xff]
      %v1518 = vld [vmem:[#allocation2 + $0x3f] sm:$0xff]
      %v1519 = vld [vmem:[#allocation2 + $0x47] sm:$0xff]
      %v1520 = vld [vmem:[#allocation2 + $0x4f] sm:$0xff]
      %v1521 = vld [vmem:[#allocation2 + $0x57] sm:$0xff]
      %v1522 = vld [vmem:[#allocation2 + $0x5f] sm:$0xff]
      %v1523 = vld [vmem:[#allocation2 + $0x67] sm:$0xff]
      %v1524 = vld [vmem:[#allocation2 + $0x6f] sm:$0xff]
      %v1525 = vld [vmem:[#allocation2 + $0x77] sm:$0xff]
      %v1526 = vld [vmem:[#allocation2 + $0x7f] sm:$0xff]
      %v1527 = vld [vmem:[#allocation2 + $0x87] sm:$0xff]
      %v1528 = vld [vmem:[#allocation2 + $0x8f] sm:$0xff]
      %v1529 = vld [vmem:[#allocation2 + $0x97] sm:$0xff]
      %v1530 = vld [vmem:[#allocation2 + $0x9f] sm:$0xff]
      %v1531 = vsel %vm528, %v1515, 0.0
      %v1532 = vsel %vm529, %v1516, 0.0
      %v1533 = vsel %vm530, %v1517, 0.0
      %v1534 = vsel %vm531, %v1518, 0.0
      %v1535 = vsel %vm532, %v1519, 0.0
      %v1536 = vsel %vm533, %v1520, 0.0
      %v1537 = vsel %vm534, %v1521, 0.0
      %v1538 = vsel %vm535, %v1522, 0.0
      %v1539 = vsel %vm536, %v1523, 0.0
      %v1540 = vsel %vm537, %v1524, 0.0
      %v1541 = vsel %vm538, %v1525, 0.0
      %v1542 = vsel %vm539, %v1526, 0.0
      %v1543 = vsel %vm540, %v1527, 0.0
      %v1544 = vsel %vm541, %v1528, 0.0
      %v1545 = vsel %vm542, %v1529, 0.0
      %v1546 = vsel %vm543, %v1530, 0.0
      %v1547 = vpack.c.bf16 %v1532, %v1531
      %v1548 = vpack.c.bf16 %v1534, %v1533
      %v1549 = vpack.c.bf16 %v1536, %v1535
      %v1550 = vpack.c.bf16 %v1538, %v1537
      %v1551 = vpack.c.bf16 %v1540, %v1539
      %v1552 = vpack.c.bf16 %v1542, %v1541
      %v1553 = vpack.c.bf16 %v1544, %v1543
      %v1554 = vpack.c.bf16 %v1546, %v1545
      %s1555 = scalar_lea.vmem %s237, 384
      %v1556 = vld [vmem:[%s1555] sm:$0xf]
      %v1557 = vld [vmem:[%s1555 + $0x4] sm:$0xf]
      %v1558 = vld [vmem:[%s1555 + $0x8] sm:$0xf]
      %v1559 = vld [vmem:[%s1555 + $0xc] sm:$0xf]
      %v1560 = vld [vmem:[%s1555 + $0x10] sm:$0xf]
      %v1561 = vld [vmem:[%s1555 + $0x14] sm:$0xf]
      %v1562 = vld [vmem:[%s1555 + $0x18] sm:$0xf]
      %v1563 = vld [vmem:[%s1555 + $0x1c] sm:$0xf]
      %v1564 = vld [vmem:[%s1555 + $0x20] sm:$0xf]
      %v1565 = vld [vmem:[%s1555 + $0x24] sm:$0xf]
      %v1566 = vld [vmem:[%s1555 + $0x28] sm:$0xf]
      %v1567 = vld [vmem:[%s1555 + $0x2c] sm:$0xf]
      %v1568 = vld [vmem:[%s1555 + $0x30] sm:$0xf]
      %v1569 = vld [vmem:[%s1555 + $0x34] sm:$0xf]
      %v1570 = vld [vmem:[%s1555 + $0x38] sm:$0xf]
      %v1571 = vld [vmem:[%s1555 + $0x3c] sm:$0xf]
      %v1588 = vunpack.c.l.b16 %v1556
      %v1589 = vunpack.c.l.b16 %v1557
      %v1590 = vunpack.c.l.b16 %v1558
      %v1591 = vunpack.c.l.b16 %v1559
      %v1592 = vunpack.c.l.b16 %v1560
      %v1593 = vunpack.c.l.b16 %v1561
      %v1594 = vunpack.c.l.b16 %v1562
      %v1595 = vunpack.c.l.b16 %v1563
      %v1596 = vunpack.c.l.b16 %v1564
      %v1597 = vunpack.c.l.b16 %v1565
      %v1598 = vunpack.c.l.b16 %v1566
      %v1599 = vunpack.c.l.b16 %v1567
      %v1600 = vunpack.c.l.b16 %v1568
      %v1601 = vunpack.c.l.b16 %v1569
      %v1602 = vunpack.c.l.b16 %v1570
      %v1603 = vunpack.c.l.b16 %v1571
      %v1604 = vpack.c.b16 %v1589, %v1588
      %v1605 = vpack.c.b16 %v1591, %v1590
      %v1606 = vpack.c.b16 %v1593, %v1592
      %v1607 = vpack.c.b16 %v1595, %v1594
      %v1608 = vpack.c.b16 %v1597, %v1596
      %v1609 = vpack.c.b16 %v1599, %v1598
      %v1610 = vpack.c.b16 %v1601, %v1600
      %v1611 = vpack.c.b16 %v1603, %v1602
      %1620 = vmatpush.bf16.msra.mxu0 %v1611
      %1621 = vmatpush.bf16.msra.mxu0 %v1610
      %1622 = vmatpush.bf16.msra.mxu0 %v1609
      %1623 = vmatpush.bf16.msra.mxu0 %v1608
      %1624 = vmatpush.bf16.msra.mxu0 %v1607
      %1625 = vmatpush.bf16.msra.mxu0 %v1606
      %1626 = vmatpush.bf16.msra.mxu0 %v1605
      %1627 = vmatpush.bf16.msra.mxu0 %v1604
      %1628 = vmatmul.bf16.gmra.mxu0 %v1547
      %v1629 = vpop.f32.mrf.mxu0
      %v1630 = vadd.f32 0.0, %v1629
      %v1631 = vpop.f32.mrf.mxu0
      %v1632 = vadd.f32 0.0, %v1631
      %1633 = vmatmul.bf16.gmra.mxu0 %v1548
      %v1634 = vpop.f32.mrf.mxu0
      %v1635 = vadd.f32 0.0, %v1634
      %v1636 = vpop.f32.mrf.mxu0
      %v1637 = vadd.f32 0.0, %v1636
      %1638 = vmatmul.bf16.gmra.mxu0 %v1549
      %v1639 = vpop.f32.mrf.mxu0
      %v1640 = vadd.f32 0.0, %v1639
      %v1641 = vpop.f32.mrf.mxu0
      %v1642 = vadd.f32 0.0, %v1641
      %1643 = vmatmul.bf16.gmra.mxu0 %v1550
      %v1644 = vpop.f32.mrf.mxu0
      %v1645 = vadd.f32 0.0, %v1644
      %v1646 = vpop.f32.mrf.mxu0
      %v1647 = vadd.f32 0.0, %v1646
      %1648 = vmatmul.bf16.gmra.mxu0 %v1551
      %v1649 = vpop.f32.mrf.mxu0
      %v1650 = vadd.f32 0.0, %v1649
      %v1651 = vpop.f32.mrf.mxu0
      %v1652 = vadd.f32 0.0, %v1651
      %1653 = vmatmul.bf16.gmra.mxu0 %v1552
      %v1654 = vpop.f32.mrf.mxu0
      %v1655 = vadd.f32 0.0, %v1654
      %v1656 = vpop.f32.mrf.mxu0
      %v1657 = vadd.f32 0.0, %v1656
      %1658 = vmatmul.bf16.gmra.mxu0 %v1553
      %v1659 = vpop.f32.mrf.mxu0
      %v1660 = vadd.f32 0.0, %v1659
      %v1661 = vpop.f32.mrf.mxu0
      %v1662 = vadd.f32 0.0, %v1661
      %1663 = vmatmul.bf16.gmra.mxu0 %v1554
      %v1664 = vpop.f32.mrf.mxu0
      %v1665 = vadd.f32 0.0, %v1664
      %v1666 = vpop.f32.mrf.mxu0
      %v1667 = vadd.f32 0.0, %v1666
      %1668 = vdwg.mxu0
      %v1669 = vadd.f32 %v1499, %v1630
      %v1670 = vadd.f32 %v1500, %v1632
      %v1671 = vadd.f32 %v1501, %v1635
      %v1672 = vadd.f32 %v1502, %v1637
      %v1673 = vadd.f32 %v1503, %v1640
      %v1674 = vadd.f32 %v1504, %v1642
      %v1675 = vadd.f32 %v1505, %v1645
      %v1676 = vadd.f32 %v1506, %v1647
      %v1677 = vadd.f32 %v1507, %v1650
      %v1678 = vadd.f32 %v1508, %v1652
      %v1679 = vadd.f32 %v1509, %v1655
      %v1680 = vadd.f32 %v1510, %v1657
      %v1681 = vadd.f32 %v1511, %v1660
      %v1682 = vadd.f32 %v1512, %v1662
      %v1683 = vadd.f32 %v1513, %v1665
      %v1684 = vadd.f32 %v1514, %v1667
      %v1685 = vld [vmem:[#allocation2 + $0x28] sm:$0xff]
      %v1686 = vld [vmem:[#allocation2 + $0x30] sm:$0xff]
      %v1687 = vld [vmem:[#allocation2 + $0x38] sm:$0xff]
      %v1688 = vld [vmem:[#allocation2 + $0x40] sm:$0xff]
      %v1689 = vld [vmem:[#allocation2 + $0x48] sm:$0xff]
      %v1690 = vld [vmem:[#allocation2 + $0x50] sm:$0xff]
      %v1691 = vld [vmem:[#allocation2 + $0x58] sm:$0xff]
      %v1692 = vld [vmem:[#allocation2 + $0x60] sm:$0xff]
      %v1693 = vld [vmem:[#allocation2 + $0x68] sm:$0xff]
      %v1694 = vld [vmem:[#allocation2 + $0x70] sm:$0xff]
      %v1695 = vld [vmem:[#allocation2 + $0x78] sm:$0xff]
      %v1696 = vld [vmem:[#allocation2 + $0x80] sm:$0xff]
      %v1697 = vld [vmem:[#allocation2 + $0x88] sm:$0xff]
      %v1698 = vld [vmem:[#allocation2 + $0x90] sm:$0xff]
      %v1699 = vld [vmem:[#allocation2 + $0x98] sm:$0xff]
      %v1700 = vld [vmem:[#allocation2 + $0xa0] sm:$0xff]
      %v1701 = vpack.c.bf16 %v1686, %v1685
      %v1702 = vpack.c.bf16 %v1688, %v1687
      %v1703 = vpack.c.bf16 %v1690, %v1689
      %v1704 = vpack.c.bf16 %v1692, %v1691
      %v1705 = vpack.c.bf16 %v1694, %v1693
      %v1706 = vpack.c.bf16 %v1696, %v1695
      %v1707 = vpack.c.bf16 %v1698, %v1697
      %v1708 = vpack.c.bf16 %v1700, %v1699
      %s1709 = scalar_lea.vmem %s237, 448
      %v1710 = vld [vmem:[%s1709] sm:$0xf]
      %v1711 = vld [vmem:[%s1709 + $0x4] sm:$0xf]
      %v1712 = vld [vmem:[%s1709 + $0x8] sm:$0xf]
      %v1713 = vld [vmem:[%s1709 + $0xc] sm:$0xf]
      %v1714 = vld [vmem:[%s1709 + $0x10] sm:$0xf]
      %v1715 = vld [vmem:[%s1709 + $0x14] sm:$0xf]
      %v1716 = vld [vmem:[%s1709 + $0x18] sm:$0xf]
      %v1717 = vld [vmem:[%s1709 + $0x1c] sm:$0xf]
      %v1718 = vld [vmem:[%s1709 + $0x20] sm:$0xf]
      %v1719 = vld [vmem:[%s1709 + $0x24] sm:$0xf]
      %v1720 = vld [vmem:[%s1709 + $0x28] sm:$0xf]
      %v1721 = vld [vmem:[%s1709 + $0x2c] sm:$0xf]
      %v1722 = vld [vmem:[%s1709 + $0x30] sm:$0xf]
      %v1723 = vld [vmem:[%s1709 + $0x34] sm:$0xf]
      %v1724 = vld [vmem:[%s1709 + $0x38] sm:$0xf]
      %v1725 = vld [vmem:[%s1709 + $0x3c] sm:$0xf]
      %v1742 = vunpack.c.l.b16 %v1710
      %v1743 = vunpack.c.l.b16 %v1711
      %v1744 = vunpack.c.l.b16 %v1712
      %v1745 = vunpack.c.l.b16 %v1713
      %v1746 = vunpack.c.l.b16 %v1714
      %v1747 = vunpack.c.l.b16 %v1715
      %v1748 = vunpack.c.l.b16 %v1716
      %v1749 = vunpack.c.l.b16 %v1717
      %v1750 = vunpack.c.l.b16 %v1718
      %v1751 = vunpack.c.l.b16 %v1719
      %v1752 = vunpack.c.l.b16 %v1720
      %v1753 = vunpack.c.l.b16 %v1721
      %v1754 = vunpack.c.l.b16 %v1722
      %v1755 = vunpack.c.l.b16 %v1723
      %v1756 = vunpack.c.l.b16 %v1724
      %v1757 = vunpack.c.l.b16 %v1725
      %v1758 = vpack.c.b16 %v1743, %v1742
      %v1759 = vpack.c.b16 %v1745, %v1744
      %v1760 = vpack.c.b16 %v1747, %v1746
      %v1761 = vpack.c.b16 %v1749, %v1748
      %v1762 = vpack.c.b16 %v1751, %v1750
      %v1763 = vpack.c.b16 %v1753, %v1752
      %v1764 = vpack.c.b16 %v1755, %v1754
      %v1765 = vpack.c.b16 %v1757, %v1756
      %1774 = vmatpush.bf16.msra.mxu0 %v1765
      %1775 = vmatpush.bf16.msra.mxu0 %v1764
      %1776 = vmatpush.bf16.msra.mxu0 %v1763
      %1777 = vmatpush.bf16.msra.mxu0 %v1762
      %1778 = vmatpush.bf16.msra.mxu0 %v1761
      %1779 = vmatpush.bf16.msra.mxu0 %v1760
      %1780 = vmatpush.bf16.msra.mxu0 %v1759
      %1781 = vmatpush.bf16.msra.mxu0 %v1758
      %1782 = vmatmul.bf16.gmra.mxu0 %v1701
      %v1783 = vpop.f32.mrf.mxu0
      %v1784 = vadd.f32 0.0, %v1783
      %v1785 = vpop.f32.mrf.mxu0
      %v1786 = vadd.f32 0.0, %v1785
      %1787 = vmatmul.bf16.gmra.mxu0 %v1702
      %v1788 = vpop.f32.mrf.mxu0
      %v1789 = vadd.f32 0.0, %v1788
      %v1790 = vpop.f32.mrf.mxu0
      %v1791 = vadd.f32 0.0, %v1790
      %1792 = vmatmul.bf16.gmra.mxu0 %v1703
      %v1793 = vpop.f32.mrf.mxu0
      %v1794 = vadd.f32 0.0, %v1793
      %v1795 = vpop.f32.mrf.mxu0
      %v1796 = vadd.f32 0.0, %v1795
      %1797 = vmatmul.bf16.gmra.mxu0 %v1704
      %v1798 = vpop.f32.mrf.mxu0
      %v1799 = vadd.f32 0.0, %v1798
      %v1800 = vpop.f32.mrf.mxu0
      %v1801 = vadd.f32 0.0, %v1800
      %1802 = vmatmul.bf16.gmra.mxu0 %v1705
      %v1803 = vpop.f32.mrf.mxu0
      %v1804 = vadd.f32 0.0, %v1803
      %v1805 = vpop.f32.mrf.mxu0
      %v1806 = vadd.f32 0.0, %v1805
      %1807 = vmatmul.bf16.gmra.mxu0 %v1706
      %v1808 = vpop.f32.mrf.mxu0
      %v1809 = vadd.f32 0.0, %v1808
      %v1810 = vpop.f32.mrf.mxu0
      %v1811 = vadd.f32 0.0, %v1810
      %1812 = vmatmul.bf16.gmra.mxu0 %v1707
      %v1813 = vpop.f32.mrf.mxu0
      %v1814 = vadd.f32 0.0, %v1813
      %v1815 = vpop.f32.mrf.mxu0
      %v1816 = vadd.f32 0.0, %v1815
      %1817 = vmatmul.bf16.gmra.mxu0 %v1708
      %v1818 = vpop.f32.mrf.mxu0
      %v1819 = vadd.f32 0.0, %v1818
      %v1820 = vpop.f32.mrf.mxu0
      %v1821 = vadd.f32 0.0, %v1820
      %1822 = vdwg.mxu0
      %v1823 = vadd.f32 %v1669, %v1784
      %v1824 = vadd.f32 %v1670, %v1786
      %v1825 = vadd.f32 %v1671, %v1789
      %v1826 = vadd.f32 %v1672, %v1791
      %v1827 = vadd.f32 %v1673, %v1794
      %v1828 = vadd.f32 %v1674, %v1796
      %v1829 = vadd.f32 %v1675, %v1799
      %v1830 = vadd.f32 %v1676, %v1801
      %v1831 = vadd.f32 %v1677, %v1804
      %v1832 = vadd.f32 %v1678, %v1806
      %v1833 = vadd.f32 %v1679, %v1809
      %v1834 = vadd.f32 %v1680, %v1811
      %v1835 = vadd.f32 %v1681, %v1814
      %v1836 = vadd.f32 %v1682, %v1816
      %v1837 = vadd.f32 %v1683, %v1819
      %v1838 = vadd.f32 %v1684, %v1821
      %v1839 = vld [vmem:[#allocation2 + $0x29] sm:$0xff]
      %v1840 = vld [vmem:[#allocation2 + $0x31] sm:$0xff]
      %v1841 = vld [vmem:[#allocation2 + $0x39] sm:$0xff]
      %v1842 = vld [vmem:[#allocation2 + $0x41] sm:$0xff]
      %v1843 = vld [vmem:[#allocation2 + $0x49] sm:$0xff]
      %v1844 = vld [vmem:[#allocation2 + $0x51] sm:$0xff]
      %v1845 = vld [vmem:[#allocation2 + $0x59] sm:$0xff]
      %v1846 = vld [vmem:[#allocation2 + $0x61] sm:$0xff]
      %v1847 = vld [vmem:[#allocation2 + $0x69] sm:$0xff]
      %v1848 = vld [vmem:[#allocation2 + $0x71] sm:$0xff]
      %v1849 = vld [vmem:[#allocation2 + $0x79] sm:$0xff]
      %v1850 = vld [vmem:[#allocation2 + $0x81] sm:$0xff]
      %v1851 = vld [vmem:[#allocation2 + $0x89] sm:$0xff]
      %v1852 = vld [vmem:[#allocation2 + $0x91] sm:$0xff]
      %v1853 = vld [vmem:[#allocation2 + $0x99] sm:$0xff]
      %v1854 = vld [vmem:[#allocation2 + $0xa1] sm:$0xff]
      %v1855 = vsel %vm544, %v1839, 0.0
      %v1856 = vsel %vm545, %v1840, 0.0
      %v1857 = vsel %vm546, %v1841, 0.0
      %v1858 = vsel %vm547, %v1842, 0.0
      %v1859 = vsel %vm548, %v1843, 0.0
      %v1860 = vsel %vm549, %v1844, 0.0
      %v1861 = vsel %vm550, %v1845, 0.0
      %v1862 = vsel %vm551, %v1846, 0.0
      %v1863 = vsel %vm552, %v1847, 0.0
      %v1864 = vsel %vm553, %v1848, 0.0
      %v1865 = vsel %vm554, %v1849, 0.0
      %v1866 = vsel %vm555, %v1850, 0.0
      %v1867 = vsel %vm556, %v1851, 0.0
      %v1868 = vsel %vm557, %v1852, 0.0
      %v1869 = vsel %vm558, %v1853, 0.0
      %v1870 = vsel %vm559, %v1854, 0.0
      %v1871 = vpack.c.bf16 %v1856, %v1855
      %v1872 = vpack.c.bf16 %v1858, %v1857
      %v1873 = vpack.c.bf16 %v1860, %v1859
      %v1874 = vpack.c.bf16 %v1862, %v1861
      %v1875 = vpack.c.bf16 %v1864, %v1863
      %v1876 = vpack.c.bf16 %v1866, %v1865
      %v1877 = vpack.c.bf16 %v1868, %v1867
      %v1878 = vpack.c.bf16 %v1870, %v1869
      %s1879 = scalar_lea.vmem %s237, 512
      %v1880 = vld [vmem:[%s1879] sm:$0xf]
      %v1881 = vld [vmem:[%s1879 + $0x4] sm:$0xf]
      %v1882 = vld [vmem:[%s1879 + $0x8] sm:$0xf]
      %v1883 = vld [vmem:[%s1879 + $0xc] sm:$0xf]
      %v1884 = vld [vmem:[%s1879 + $0x10] sm:$0xf]
      %v1885 = vld [vmem:[%s1879 + $0x14] sm:$0xf]
      %v1886 = vld [vmem:[%s1879 + $0x18] sm:$0xf]
      %v1887 = vld [vmem:[%s1879 + $0x1c] sm:$0xf]
      %v1888 = vld [vmem:[%s1879 + $0x20] sm:$0xf]
      %v1889 = vld [vmem:[%s1879 + $0x24] sm:$0xf]
      %v1890 = vld [vmem:[%s1879 + $0x28] sm:$0xf]
      %v1891 = vld [vmem:[%s1879 + $0x2c] sm:$0xf]
      %v1892 = vld [vmem:[%s1879 + $0x30] sm:$0xf]
      %v1893 = vld [vmem:[%s1879 + $0x34] sm:$0xf]
      %v1894 = vld [vmem:[%s1879 + $0x38] sm:$0xf]
      %v1895 = vld [vmem:[%s1879 + $0x3c] sm:$0xf]
      %v1912 = vunpack.c.l.b16 %v1880
      %v1913 = vunpack.c.l.b16 %v1881
      %v1914 = vunpack.c.l.b16 %v1882
      %v1915 = vunpack.c.l.b16 %v1883
      %v1916 = vunpack.c.l.b16 %v1884
      %v1917 = vunpack.c.l.b16 %v1885
      %v1918 = vunpack.c.l.b16 %v1886
      %v1919 = vunpack.c.l.b16 %v1887
      %v1920 = vunpack.c.l.b16 %v1888
      %v1921 = vunpack.c.l.b16 %v1889
      %v1922 = vunpack.c.l.b16 %v1890
      %v1923 = vunpack.c.l.b16 %v1891
      %v1924 = vunpack.c.l.b16 %v1892
      %v1925 = vunpack.c.l.b16 %v1893
      %v1926 = vunpack.c.l.b16 %v1894
      %v1927 = vunpack.c.l.b16 %v1895
      %v1928 = vpack.c.b16 %v1913, %v1912
      %v1929 = vpack.c.b16 %v1915, %v1914
      %v1930 = vpack.c.b16 %v1917, %v1916
      %v1931 = vpack.c.b16 %v1919, %v1918
      %v1932 = vpack.c.b16 %v1921, %v1920
      %v1933 = vpack.c.b16 %v1923, %v1922
      %v1934 = vpack.c.b16 %v1925, %v1924
      %v1935 = vpack.c.b16 %v1927, %v1926
      %1944 = vmatpush.bf16.msra.mxu0 %v1935
      %1945 = vmatpush.bf16.msra.mxu0 %v1934
      %1946 = vmatpush.bf16.msra.mxu0 %v1933
      %1947 = vmatpush.bf16.msra.mxu0 %v1932
      %1948 = vmatpush.bf16.msra.mxu0 %v1931
      %1949 = vmatpush.bf16.msra.mxu0 %v1930
      %1950 = vmatpush.bf16.msra.mxu0 %v1929
      %1951 = vmatpush.bf16.msra.mxu0 %v1928
      %1952 = vmatmul.bf16.gmra.mxu0 %v1871
      %v1953 = vpop.f32.mrf.mxu0
      %v1954 = vadd.f32 0.0, %v1953
      %v1955 = vpop.f32.mrf.mxu0
      %v1956 = vadd.f32 0.0, %v1955
      %1957 = vmatmul.bf16.gmra.mxu0 %v1872
      %v1958 = vpop.f32.mrf.mxu0
      %v1959 = vadd.f32 0.0, %v1958
      %v1960 = vpop.f32.mrf.mxu0
      %v1961 = vadd.f32 0.0, %v1960
      %1962 = vmatmul.bf16.gmra.mxu0 %v1873
      %v1963 = vpop.f32.mrf.mxu0
      %v1964 = vadd.f32 0.0, %v1963
      %v1965 = vpop.f32.mrf.mxu0
      %v1966 = vadd.f32 0.0, %v1965
      %1967 = vmatmul.bf16.gmra.mxu0 %v1874
      %v1968 = vpop.f32.mrf.mxu0
      %v1969 = vadd.f32 0.0, %v1968
      %v1970 = vpop.f32.mrf.mxu0
      %v1971 = vadd.f32 0.0, %v1970
      %1972 = vmatmul.bf16.gmra.mxu0 %v1875
      %v1973 = vpop.f32.mrf.mxu0
      %v1974 = vadd.f32 0.0, %v1973
      %v1975 = vpop.f32.mrf.mxu0
      %v1976 = vadd.f32 0.0, %v1975
      %1977 = vmatmul.bf16.gmra.mxu0 %v1876
      %v1978 = vpop.f32.mrf.mxu0
      %v1979 = vadd.f32 0.0, %v1978
      %v1980 = vpop.f32.mrf.mxu0
      %v1981 = vadd.f32 0.0, %v1980
      %1982 = vmatmul.bf16.gmra.mxu0 %v1877
      %v1983 = vpop.f32.mrf.mxu0
      %v1984 = vadd.f32 0.0, %v1983
      %v1985 = vpop.f32.mrf.mxu0
      %v1986 = vadd.f32 0.0, %v1985
      %1987 = vmatmul.bf16.gmra.mxu0 %v1878
      %v1988 = vpop.f32.mrf.mxu0
      %v1989 = vadd.f32 0.0, %v1988
      %v1990 = vpop.f32.mrf.mxu0
      %v1991 = vadd.f32 0.0, %v1990
      %1992 = vdwg.mxu0
      %v1993 = vadd.f32 %v1823, %v1954
      %v1994 = vadd.f32 %v1824, %v1956
      %v1995 = vadd.f32 %v1825, %v1959
      %v1996 = vadd.f32 %v1826, %v1961
      %v1997 = vadd.f32 %v1827, %v1964
      %v1998 = vadd.f32 %v1828, %v1966
      %v1999 = vadd.f32 %v1829, %v1969
      %v2000 = vadd.f32 %v1830, %v1971
      %v2001 = vadd.f32 %v1831, %v1974
      %v2002 = vadd.f32 %v1832, %v1976
      %v2003 = vadd.f32 %v1833, %v1979
      %v2004 = vadd.f32 %v1834, %v1981
      %v2005 = vadd.f32 %v1835, %v1984
      %v2006 = vadd.f32 %v1836, %v1986
      %v2007 = vadd.f32 %v1837, %v1989
      %v2008 = vadd.f32 %v1838, %v1991
      %v2009 = vld [vmem:[%s240] sm:$0x1]
      %v2011 = vperm.slane %v2009, 0
      %v2013 = vadd.f32 %v1993, %v2011
      %v2014 = vadd.f32 %v1994, %v2011
      %v2015 = vadd.f32 %v1995, %v2011
      %v2016 = vadd.f32 %v1996, %v2011
      %v2017 = vadd.f32 %v1997, %v2011
      %v2018 = vadd.f32 %v1998, %v2011
      %v2019 = vadd.f32 %v1999, %v2011
      %v2020 = vadd.f32 %v2000, %v2011
      %v2021 = vadd.f32 %v2001, %v2011
      %v2022 = vadd.f32 %v2002, %v2011
      %v2023 = vadd.f32 %v2003, %v2011
      %v2024 = vadd.f32 %v2004, %v2011
      %v2025 = vadd.f32 %v2005, %v2011
      %v2026 = vadd.f32 %v2006, %v2011
      %v2027 = vadd.f32 %v2007, %v2011
      %v2028 = vadd.f32 %v2008, %v2011
      %v2029 = vmax.f32 %v2013, 0.0
      %v2030 = vmax.f32 %v2014, 0.0
      %v2031 = vmax.f32 %v2015, 0.0
      %v2032 = vmax.f32 %v2016, 0.0
      %v2033 = vmax.f32 %v2017, 0.0
      %v2034 = vmax.f32 %v2018, 0.0
      %v2035 = vmax.f32 %v2019, 0.0
      %v2036 = vmax.f32 %v2020, 0.0
      %v2037 = vmax.f32 %v2021, 0.0
      %v2038 = vmax.f32 %v2022, 0.0
      %v2039 = vmax.f32 %v2023, 0.0
      %v2040 = vmax.f32 %v2024, 0.0
      %v2041 = vmax.f32 %v2025, 0.0
      %v2042 = vmax.f32 %v2026, 0.0
      %v2043 = vmax.f32 %v2027, 0.0
      %v2044 = vmax.f32 %v2028, 0.0
      %v2045 = vpack.c.bf16 %v2029, %v2029
      %v2046 = vpack.c.bf16 %v2030, %v2030
      %v2047 = vpack.c.bf16 %v2031, %v2031
      %v2048 = vpack.c.bf16 %v2032, %v2032
      %v2049 = vpack.c.bf16 %v2033, %v2033
      %v2050 = vpack.c.bf16 %v2034, %v2034
      %v2051 = vpack.c.bf16 %v2035, %v2035
      %v2052 = vpack.c.bf16 %v2036, %v2036
      %v2053 = vpack.c.bf16 %v2037, %v2037
      %v2054 = vpack.c.bf16 %v2038, %v2038
      %v2055 = vpack.c.bf16 %v2039, %v2039
      %v2056 = vpack.c.bf16 %v2040, %v2040
      %v2057 = vpack.c.bf16 %v2041, %v2041
      %v2058 = vpack.c.bf16 %v2042, %v2042
      %v2059 = vpack.c.bf16 %v2043, %v2043
      %v2060 = vpack.c.bf16 %v2044, %v2044
      %2061 = vst [vmem:[%s252] sm:$0xf] %v2045
      %2062 = vst [vmem:[%s252 + $0x4] sm:$0xf] %v2046
      %2063 = vst [vmem:[%s252 + $0x8] sm:$0xf] %v2047
      %2064 = vst [vmem:[%s252 + $0xc] sm:$0xf] %v2048
      %2065 = vst [vmem:[%s252 + $0x10] sm:$0xf] %v2049
      %2066 = vst [vmem:[%s252 + $0x14] sm:$0xf] %v2050
      %2067 = vst [vmem:[%s252 + $0x18] sm:$0xf] %v2051
      %2068 = vst [vmem:[%s252 + $0x1c] sm:$0xf] %v2052
      %2069 = vst [vmem:[%s252 + $0x20] sm:$0xf] %v2053
      %2070 = vst [vmem:[%s252 + $0x24] sm:$0xf] %v2054
      %2071 = vst [vmem:[%s252 + $0x28] sm:$0xf] %v2055
      %2072 = vst [vmem:[%s252 + $0x2c] sm:$0xf] %v2056
      %2073 = vst [vmem:[%s252 + $0x30] sm:$0xf] %v2057
      %2074 = vst [vmem:[%s252 + $0x34] sm:$0xf] %v2058
      %2075 = vst [vmem:[%s252 + $0x38] sm:$0xf] %v2059
      %2076 = vst [vmem:[%s252 + $0x3c] sm:$0xf] %v2060
      %p2077 = scmp.lt.s32.totalorder %s19, 1
      %s2078 = scalar_select %p2077, %s19, 1
      %p2079 = scmp.lt.s32.totalorder %s20, 1
      %s2080 = scalar_select %p2079, %s20, 1
      %p2081 = scmp.lt.s32.totalorder %s21, 0
      %s2082 = scalar_select %p2081, %s21, 0
      %s2083 = smul.addr %s2080, 16
      %s2084 = sadd.s32 %s2082, %s2083
      %s2085 = smul.addr %s2078, 32
      %s2086 = sadd.s32 %s2084, %s2085
      %s2087 = smul.addr %s2086, 4
      %s2088 = scalar_lea.vmem %s3, %s2087
      // Predicated region
      $region33: #{resnet_forward.10} parent=31 // pred_check
        %p2089 = pneg %p135
      $region34: #{resnet_forward.10} parent=31 // pred_check_branch
        %2091 = sbr.rel (%p2089) target = $region36
      $region35: #{resnet_forward.10} parent=31 // pred_region
        _
      $region36: #{resnet_forward.10} parent=31 // pred_fallthru
        _
    $region32: #{resnet_forward.10} parent=5 // pred_fallthru
      _
    %p2092 = scmp.le.s32.totalorder 2, %s9
    // Predicated region
    $region37: #{resnet_forward.10} parent=5 // pred_check
      %p2093 = pneg %p2092
    $region38: #{resnet_forward.10} parent=5 // pred_check_branch
      %2095 = sbr.rel (%p2093) target = $region40
    $region39: #{resnet_forward.10} parent=5 // pred_region
      %s2096 = ssub.s32 %s9, 2
      // Predicated region
      $region41: #{resnet_forward.10} parent=39 // pred_check
        %p2097 = pneg %p141
      $region42: #{resnet_forward.10} parent=39 // pred_check_branch
        %2099 = sbr.rel (%p2097) target = $region44
      $region43: #{resnet_forward.10} parent=39 // pred_region
        %p2100 = scmp.lt.s32.totalorder %s22, 1
        %s2101 = scalar_select %p2100, %s22, 1
        %p2102 = scmp.lt.s32.totalorder %s23, 1
        %s2103 = scalar_select %p2102, %s23, 1
        %p2104 = scmp.lt.s32.totalorder %s24, 0
        %s2105 = scalar_select %p2104, %s24, 0
        %s2106 = smul.addr %s2103, 16
        %s2107 = sadd.s32 %s2105, %s2106
        %s2108 = smul.addr %s2101, 32
        %s2109 = sadd.s32 %s2107, %s2108
        %s2110 = smul.addr %s2109, 4
        %s2111 = scalar_lea.vmem %s3, %s2110
      $region44: #{resnet_forward.10} parent=39 // pred_fallthru
        _
    $region40: #{resnet_forward.10} parent=5 // pred_fallthru
      _
  $region6: #{resnet_forward.10} parent=0 // loop_footer
    %s13 = sadd.s32 1, %s9
  $region7: #{resnet_forward.10} parent=0 // loop_footer_branch
    %8 = sbr.rel target = $region3
  $region8: #{resnet_forward.10} parent=0 // loop_exit
    _

// kernel: resnet_forward.11
$region0: #{resnet_forward.11}
  #allocation0 [shape = 'u32[]', space=smem, size = 0x4, offset = 0x4, fixed_abs, tag = 'smem constant byte address 0x4 - core index']
  #allocation1 [shape = 'u32[72,128]{1,0:T(1,128)}', space=vmem, size = 0x9000, scoped, tag = 'internal scratch']
  #allocation2 [shape = 'f32[176,128]{1,0:T(8,128)}', space=vmem, size = 0x16000, scoped, tag = 'scratch operand']
  %s0 = inlined_call_operand.vmem [shape: bf16[2,2,176,128], index: 0, kind: input, shape index: {}]
  %s1 = inlined_call_operand.vmem [shape: bf16[9,128,128], index: 1, kind: input, shape index: {}]
  %s2 = inlined_call_operand.vmem [shape: f32[1,128], index: 2, kind: input, shape index: {}]
  %s3 = inlined_call_operand.vmem [shape: bf16[128,128], index: 3, kind: input, shape index: {}]
  %s4 = inlined_call_operand.vmem [shape: f32[1,128], index: 4, kind: input, shape index: {}]
  %s5 = inlined_call_operand.vmem [shape: bf16[2,2,128,128], index: 5, kind: output, shape index: {0}]
  %s6 = inlined_call_operand.vmem [shape: bf16[2,2,128,128], index: 6, kind: output, shape index: {1}]
  %7 = xla_tuple %s5, %s6
  %s8 = sld [smem:[#allocation0]]
  $region61: #{resnet_forward.11} parent=0
    _
  %s10 = ssub.s32 1, %s8
  %s11 = scalar_select 0, %s10, %s8
  loop: start=0, step=1, limit=6
  $region2: #{resnet_forward.11} parent=0 // loop_pre_header
    _
  $region3: #{resnet_forward.11} parent=0 // loop_header
    %s13 = sphi 0, %s17
    %p14 = scmp.ge.s32.totalorder %s13, 6
    %s20 = sphi 0, %s39
    %s21 = sphi 0, %s35
    %s22 = sphi 0, %s31
    %s23 = sphi 0, %s20
    %s24 = sphi 0, %s21
    %s25 = sphi 0, %s22
    %s26 = sphi 0, %s23
    %s27 = sphi 0, %s24
    %s28 = sphi 0, %s25
    %s44 = sphi 0, %s46
    %s47 = sphi 0, %s44
    %s48 = sphi 0, %s47
    %s64 = sphi 0, %s48
    %s70 = sphi 0, %s72
    %s73 = sphi 0, %s70
    %s74 = sphi 0, %s73
    %s90 = sphi 0, %s74
    %s96 = sphi 0, %s98
    %s99 = sphi 0, %s96
    %s100 = sphi 0, %s99
    %s116 = sphi 0, %s100
    %s122 = sphi 0, %s124
    %s125 = sphi 0, %s122
    %s126 = sphi 0, %s125
    %s142 = sphi 0, %s126
    %s148 = sphi 0, %s150
    %s151 = sphi 0, %s148
    %s152 = sphi 0, %s151
    %s168 = sphi 0, %s152
    %s178 = sphi 0, %s180
    %s181 = sphi 0, %s178
    %s182 = sphi 0, %s181
    %s198 = sphi 0, %s182
    %s208 = sphi 0, %s210
    %s211 = sphi 0, %s208
    %s212 = sphi 0, %s211
    %s228 = sphi 0, %s212
  $region4: #{resnet_forward.11} parent=0 // loop_header_branch
    %16 = sbr.rel (%p14) target = $region8
  $region5: #{resnet_forward.11} parent=0 // loop_body
    %s18 = ssub.s32 %s13, 1
    %s19 = ssub.s32 %s13, 2
    %s29 = sadd.s32 1, %s22
    %p30 = scmp.ge.s32.totalorder %s29, 1
    %s31 = scalar_select %p30, 0, %s29
    %s32 = sadd.s32 1, %s21
    %s33 = scalar_select %p30, %s32, %s21
    %p34 = scmp.ge.s32.totalorder %s33, 2
    %s35 = scalar_select %p34, 0, %s33
    %s36 = sadd.s32 1, %s20
    %s37 = scalar_select %p34, %s36, %s20
    %p38 = scmp.ge.s32.totalorder %s37, 2
    %s39 = scalar_select %p38, 0, %s37
    %s40 = ssub.s32 %s20, %s39
    %s41 = ssub.s32 %s21, %s35
    %s42 = sor.u32 %s40, %s41
    %p43 = scmp.eq.s32.totalorder %s42, 0
    %s45 = sadd.s32 %s44, 1
    %s46 = scalar_select %p43, %s44, %s45
    %p49 = pneg %p43
    %p50 = scmp.eq.s32.totalorder %s13, 3
    %p51 = por %p49, %p50
    %p52 = scmp.ne.s32.totalorder %s44, %s47
    %p53 = scmp.eq.s32.totalorder %s13, 0
    %p54 = por %p52, %p53
    %p55 = scmp.ne.s32.totalorder %s44, %s47
    %p56 = scmp.eq.s32.totalorder %s18, 3
    %p57 = por %p55, %p56
    %p58 = scmp.ne.s32.totalorder %s47, %s48
    %p59 = scmp.eq.s32.totalorder %s18, 0
    %p60 = por %p58, %p59
    %p61 = scmp.ne.s32.totalorder %s47, %s48
    %p62 = scmp.eq.s32.totalorder %s19, 3
    %p63 = por %p61, %p62
    %p65 = scmp.ne.s32.totalorder %s48, %s64
    %p66 = scmp.eq.s32.totalorder %s19, 0
    %p67 = por %p65, %p66
    %s68 = ssub.s32 %s22, %s31
    %p69 = scmp.eq.s32.totalorder %s68, 0
    %s71 = sadd.s32 %s70, 1
    %s72 = scalar_select %p69, %s70, %s71
    %p75 = pneg %p69
    %p76 = scmp.eq.s32.totalorder %s13, 3
    %p77 = por %p75, %p76
    %p78 = scmp.ne.s32.totalorder %s70, %s73
    %p79 = scmp.eq.s32.totalorder %s13, 0
    %p80 = por %p78, %p79
    %p81 = scmp.ne.s32.totalorder %s70, %s73
    %p82 = scmp.eq.s32.totalorder %s18, 3
    %p83 = por %p81, %p82
    %p84 = scmp.ne.s32.totalorder %s73, %s74
    %p85 = scmp.eq.s32.totalorder %s18, 0
    %p86 = por %p84, %p85
    %p87 = scmp.ne.s32.totalorder %s73, %s74
    %p88 = scmp.eq.s32.totalorder %s19, 3
    %p89 = por %p87, %p88
    %p91 = scmp.ne.s32.totalorder %s74, %s90
    %p92 = scmp.eq.s32.totalorder %s19, 0
    %p93 = por %p91, %p92
    %s94 = ssub.s32 %s22, %s31
    %p95 = scmp.eq.s32.totalorder %s94, 0
    %s97 = sadd.s32 %s96, 1
    %s98 = scalar_select %p95, %s96, %s97
    %p101 = pneg %p95
    %p102 = scmp.eq.s32.totalorder %s13, 3
    %p103 = por %p101, %p102
    %p104 = scmp.ne.s32.totalorder %s96, %s99
    %p105 = scmp.eq.s32.totalorder %s13, 0
    %p106 = por %p104, %p105
    %p107 = scmp.ne.s32.totalorder %s96, %s99
    %p108 = scmp.eq.s32.totalorder %s18, 3
    %p109 = por %p107, %p108
    %p110 = scmp.ne.s32.totalorder %s99, %s100
    %p111 = scmp.eq.s32.totalorder %s18, 0
    %p112 = por %p110, %p111
    %p113 = scmp.ne.s32.totalorder %s99, %s100
    %p114 = scmp.eq.s32.totalorder %s19, 3
    %p115 = por %p113, %p114
    %p117 = scmp.ne.s32.totalorder %s100, %s116
    %p118 = scmp.eq.s32.totalorder %s19, 0
    %p119 = por %p117, %p118
    %s120 = ssub.s32 %s22, %s31
    %p121 = scmp.eq.s32.totalorder %s120, 0
    %s123 = sadd.s32 %s122, 1
    %s124 = scalar_select %p121, %s122, %s123
    %p127 = pneg %p121
    %p128 = scmp.eq.s32.totalorder %s13, 3
    %p129 = por %p127, %p128
    %p130 = scmp.ne.s32.totalorder %s122, %s125
    %p131 = scmp.eq.s32.totalorder %s13, 0
    %p132 = por %p130, %p131
    %p133 = scmp.ne.s32.totalorder %s122, %s125
    %p134 = scmp.eq.s32.totalorder %s18, 3
    %p135 = por %p133, %p134
    %p136 = scmp.ne.s32.totalorder %s125, %s126
    %p137 = scmp.eq.s32.totalorder %s18, 0
    %p138 = por %p136, %p137
    %p139 = scmp.ne.s32.totalorder %s125, %s126
    %p140 = scmp.eq.s32.totalorder %s19, 3
    %p141 = por %p139, %p140
    %p143 = scmp.ne.s32.totalorder %s126, %s142
    %p144 = scmp.eq.s32.totalorder %s19, 0
    %p145 = por %p143, %p144
    %s146 = ssub.s32 %s22, %s31
    %p147 = scmp.eq.s32.totalorder %s146, 0
    %s149 = sadd.s32 %s148, 1
    %s150 = scalar_select %p147, %s148, %s149
    %p153 = pneg %p147
    %p154 = scmp.eq.s32.totalorder %s13, 3
    %p155 = por %p153, %p154
    %p156 = scmp.ne.s32.totalorder %s148, %s151
    %p157 = scmp.eq.s32.totalorder %s13, 0
    %p158 = por %p156, %p157
    %p159 = scmp.ne.s32.totalorder %s148, %s151
    %p160 = scmp.eq.s32.totalorder %s18, 3
    %p161 = por %p159, %p160
    %p162 = scmp.ne.s32.totalorder %s151, %s152
    %p163 = scmp.eq.s32.totalorder %s18, 0
    %p164 = por %p162, %p163
    %p165 = scmp.ne.s32.totalorder %s151, %s152
    %p166 = scmp.eq.s32.totalorder %s19, 3
    %p167 = por %p165, %p166
    %p169 = scmp.ne.s32.totalorder %s152, %s168
    %p170 = scmp.eq.s32.totalorder %s19, 0
    %p171 = por %p169, %p170
    %s172 = ssub.s32 %s20, %s39
    %s173 = ssub.s32 %s21, %s35
    %s174 = sor.u32 %s172, %s173
    %s175 = ssub.s32 %s22, %s31
    %s176 = sor.u32 %s174, %s175
    %p177 = scmp.eq.s32.totalorder %s176, 0
    %s179 = sadd.s32 %s178, 1
    %s180 = scalar_select %p177, %s178, %s179
    %p183 = pneg %p177
    %p184 = scmp.eq.s32.totalorder %s13, 3
    %p185 = por %p183, %p184
    %p186 = scmp.ne.s32.totalorder %s178, %s181
    %p187 = scmp.eq.s32.totalorder %s13, 0
    %p188 = por %p186, %p187
    %p189 = scmp.ne.s32.totalorder %s178, %s181
    %p190 = scmp.eq.s32.totalorder %s18, 3
    %p191 = por %p189, %p190
    %p192 = scmp.ne.s32.totalorder %s181, %s182
    %p193 = scmp.eq.s32.totalorder %s18, 0
    %p194 = por %p192, %p193
    %p195 = scmp.ne.s32.totalorder %s181, %s182
    %p196 = scmp.eq.s32.totalorder %s19, 3
    %p197 = por %p195, %p196
    %p199 = scmp.ne.s32.totalorder %s182, %s198
    %p200 = scmp.eq.s32.totalorder %s19, 0
    %p201 = por %p199, %p200
    %s202 = ssub.s32 %s20, %s39
    %s203 = ssub.s32 %s21, %s35
    %s204 = sor.u32 %s202, %s203
    %s205 = ssub.s32 %s22, %s31
    %s206 = sor.u32 %s204, %s205
    %p207 = scmp.eq.s32.totalorder %s206, 0
    %s209 = sadd.s32 %s208, 1
    %s210 = scalar_select %p207, %s208, %s209
    %p213 = pneg %p207
    %p214 = scmp.eq.s32.totalorder %s13, 3
    %p215 = por %p213, %p214
    %p216 = scmp.ne.s32.totalorder %s208, %s211
    %p217 = scmp.eq.s32.totalorder %s13, 0
    %p218 = por %p216, %p217
    %p219 = scmp.ne.s32.totalorder %s208, %s211
    %p220 = scmp.eq.s32.totalorder %s18, 3
    %p221 = por %p219, %p220
    %p222 = scmp.ne.s32.totalorder %s211, %s212
    %p223 = scmp.eq.s32.totalorder %s18, 0
    %p224 = por %p222, %p223
    %p225 = scmp.ne.s32.totalorder %s211, %s212
    %p226 = scmp.eq.s32.totalorder %s19, 3
    %p227 = por %p225, %p226
    %p229 = scmp.ne.s32.totalorder %s212, %s228
    %p230 = scmp.eq.s32.totalorder %s19, 0
    %p231 = por %p229, %p230
    %p232 = scmp.le.s32.totalorder 1, %s13
    %p233 = scmp.lt.s32.totalorder %s13, 5
    %p234 = pnand %p232, %p233
    %p235 = pneg %p234
    // Predicated region
    $region9: #{resnet_forward.11} parent=5 // pred_check
      _
    $region10: #{resnet_forward.11} parent=5 // pred_check_branch
      %237 = sbr.rel (%p234) target = $region12
    $region11: #{resnet_forward.11} parent=5 // pred_region
      %s238 = ssub.s32 %s13, 1
      // Predicated region
      $region13: #{resnet_forward.11} parent=11 // pred_check
        %p239 = pneg %p86
      $region14: #{resnet_forward.11} parent=11 // pred_check_branch
        %241 = sbr.rel (%p239) target = $region16
      $region15: #{resnet_forward.11} parent=11 // pred_region
        %p242 = scmp.lt.s32.totalorder %s25, 0
        %s243 = scalar_select %p242, %s25, 0
        %s244 = smul.addr %s243, 4
        %s245 = scalar_lea.vmem %s1, %s244
      $region16: #{resnet_forward.11} parent=11 // pred_fallthru
        _
      // Predicated region
      $region17: #{resnet_forward.11} parent=11 // pred_check
        %p246 = pneg %p112
      $region18: #{resnet_forward.11} parent=11 // pred_check_branch
        %248 = sbr.rel (%p246) target = $region20
      $region19: #{resnet_forward.11} parent=11 // pred_region
        %p249 = scmp.lt.s32.totalorder %s25, 0
        %s250 = scalar_select %p249, %s25, 0
        %s251 = scalar_lea.vmem %s2, %s250
      $region20: #{resnet_forward.11} parent=11 // pred_fallthru
        _
      // Predicated region
      $region21: #{resnet_forward.11} parent=11 // pred_check
        %p252 = pneg %p138
      $region22: #{resnet_forward.11} parent=11 // pred_check_branch
        %254 = sbr.rel (%p252) target = $region24
      $region23: #{resnet_forward.11} parent=11 // pred_region
        %p255 = scmp.lt.s32.totalorder %s25, 0
        %s256 = scalar_select %p255, %s25, 0
        %s257 = smul.addr %s256, 4
        %s258 = scalar_lea.vmem %s3, %s257
      $region24: #{resnet_forward.11} parent=11 // pred_fallthru
        _
      // Predicated region
      $region25: #{resnet_forward.11} parent=11 // pred_check
        %p259 = pneg %p164
      $region26: #{resnet_forward.11} parent=11 // pred_check_branch
        %261 = sbr.rel (%p259) target = $region28
      $region27: #{resnet_forward.11} parent=11 // pred_region
        %p262 = scmp.lt.s32.totalorder %s25, 0
        %s263 = scalar_select %p262, %s25, 0
        %s264 = scalar_lea.vmem %s4, %s263
      $region28: #{resnet_forward.11} parent=11 // pred_fallthru
        _
    $region12: #{resnet_forward.11} parent=5 // pred_fallthru
      _
    %p265 = scmp.lt.s32.totalorder %s13, 4
    // Predicated region
    $region29: #{resnet_forward.11} parent=5 // pred_check
      %p266 = pneg %p265
    $region30: #{resnet_forward.11} parent=5 // pred_check_branch
      %268 = sbr.rel (%p266) target = $region32
    $region31: #{resnet_forward.11} parent=5 // pred_region
      // Predicated region
      $region33: #{resnet_forward.11} parent=31 // pred_check
        %p269 = pneg %p54
      $region34: #{resnet_forward.11} parent=31 // pred_check_branch
        %271 = sbr.rel (%p269) target = $region36
      $region35: #{resnet_forward.11} parent=31 // pred_region
        %p272 = scmp.lt.s32.totalorder %s20, 1
        %s273 = scalar_select %p272, %s20, 1
        %p274 = scmp.lt.s32.totalorder %s21, 1
        %s275 = scalar_select %p274, %s21, 1
        %s276 = smul.addr %s275, 22
        %s277 = smul.addr %s273, 44
        %s278 = sadd.s32 %s276, %s277
        %s279 = smul.addr %s278, 4
        %s280 = scalar_lea.vmem %s0, %s279
      $region36: #{resnet_forward.11} parent=31 // pred_fallthru
        _
    $region32: #{resnet_forward.11} parent=5 // pred_fallthru
      _
    %p281 = scmp.le.s32.totalorder 1, %s13
    %p282 = scmp.lt.s32.totalorder %s13, 5
    %p283 = pnand %p281, %p282
    %p284 = pneg %p283
    // Predicated region
    $region37: #{resnet_forward.11} parent=5 // pred_check
      _
    $region38: #{resnet_forward.11} parent=5 // pred_check_branch
      %286 = sbr.rel (%p283) target = $region40
    $region39: #{resnet_forward.11} parent=5 // pred_region
      %s287 = ssub.s32 %s13, 1
      %p288 = scmp.lt.s32.totalorder %s23, 1
      %s289 = scalar_select %p288, %s23, 1
      %p290 = scmp.lt.s32.totalorder %s24, 1
      %s291 = scalar_select %p290, %s24, 1
      %s292 = smul.addr %s291, 22
      %s293 = smul.addr %s289, 44
      %s294 = sadd.s32 %s292, %s293
      %s295 = smul.addr %s294, 4
      %s296 = scalar_lea.vmem %s0, %s295
      %p297 = pneg %p60
      %p298 = pneg %p57
      %p299 = scmp.lt.s32.totalorder %s25, 0
      %s300 = scalar_select %p299, %s25, 0
      %s301 = smul.addr %s300, 4
      %s302 = scalar_lea.vmem %s1, %s301
      %p303 = pneg %p86
      %p304 = pneg %p83
      %p305 = scmp.lt.s32.totalorder %s25, 0
      %s306 = scalar_select %p305, %s25, 0
      %s307 = scalar_lea.vmem %s2, %s306
      %p308 = pneg %p112
      %p309 = pneg %p109
      %p310 = scmp.lt.s32.totalorder %s25, 0
      %s311 = scalar_select %p310, %s25, 0
      %s312 = smul.addr %s311, 4
      %s313 = scalar_lea.vmem %s3, %s312
      %p314 = pneg %p138
      %p315 = pneg %p135
      %p316 = scmp.lt.s32.totalorder %s25, 0
      %s317 = scalar_select %p316, %s25, 0
      %s318 = scalar_lea.vmem %s4, %s317
      %p319 = pneg %p164
      %p320 = pneg %p161
      %p321 = pneg %p194
      %p322 = pneg %p191
      %p323 = scmp.lt.s32.totalorder %s23, 1
      %s324 = scalar_select %p323, %s23, 1
      %p325 = scmp.lt.s32.totalorder %s24, 1
      %s326 = scalar_select %p325, %s24, 1
      %p327 = scmp.lt.s32.totalorder %s25, 0
      %s328 = scalar_select %p327, %s25, 0
      %s329 = smul.addr %s326, 16
      %s330 = sadd.s32 %s328, %s329
      %s331 = smul.addr %s324, 32
      %s332 = sadd.s32 %s330, %s331
      %s333 = smul.addr %s332, 4
      %s334 = scalar_lea.vmem %s5, %s333
      %p335 = pneg %p224
      %p336 = pneg %p221
      %p337 = scmp.lt.s32.totalorder %s23, 1
      %s338 = scalar_select %p337, %s23, 1
      %p339 = scmp.lt.s32.totalorder %s24, 1
      %s340 = scalar_select %p339, %s24, 1
      %p341 = scmp.lt.s32.totalorder %s25, 0
      %s342 = scalar_select %p341, %s25, 0
      %s343 = smul.addr %s340, 16
      %s344 = sadd.s32 %s342, %s343
      %s345 = smul.addr %s338, 32
      %s346 = sadd.s32 %s344, %s345
      %s347 = smul.addr %s346, 4
      %s348 = scalar_lea.vmem %s6, %s347
      %p349 = scmp.lt.s32.totalorder %s23, 1
      %s350 = scalar_select %p349, %s23, 1
      %p351 = scmp.lt.s32.totalorder %s24, 1
      %s352 = scalar_select %p351, %s24, 1
      %s353 = smul.addr %s352, 22
      %s354 = smul.addr %s350, 44
      %s355 = sadd.s32 %s353, %s354
      %s356 = smul.addr %s355, 4
      %s357 = scalar_lea.vmem %s0, %s356
      %p358 = scmp.lt.s32.totalorder %s25, 0
      %s359 = scalar_select %p358, %s25, 0
      %s360 = smul.addr %s359, 4
      %s361 = scalar_lea.vmem %s1, %s360
      %p362 = scmp.lt.s32.totalorder %s25, 0
      %s363 = scalar_select %p362, %s25, 0
      %s364 = scalar_lea.vmem %s2, %s363
      %p365 = scmp.lt.s32.totalorder %s25, 0
      %s366 = scalar_select %p365, %s25, 0
      %s367 = smul.addr %s366, 4
      %s368 = scalar_lea.vmem %s3, %s367
      %p369 = scmp.lt.s32.totalorder %s25, 0
      %s370 = scalar_select %p369, %s25, 0
      %s371 = scalar_lea.vmem %s4, %s370
      %p372 = scmp.lt.s32.totalorder %s23, 1
      %s373 = scalar_select %p372, %s23, 1
      %p374 = scmp.lt.s32.totalorder %s24, 1
      %s375 = scalar_select %p374, %s24, 1
      %p376 = scmp.lt.s32.totalorder %s25, 0
      %s377 = scalar_select %p376, %s25, 0
      %s378 = smul.addr %s375, 16
      %s379 = sadd.s32 %s377, %s378
      %s380 = smul.addr %s373, 32
      %s381 = sadd.s32 %s379, %s380
      %s382 = smul.addr %s381, 4
      %s383 = scalar_lea.vmem %s5, %s382
      %p384 = scmp.lt.s32.totalorder %s23, 1
      %s385 = scalar_select %p384, %s23, 1
      %p386 = scmp.lt.s32.totalorder %s24, 1
      %s387 = scalar_select %p386, %s24, 1
      %p388 = scmp.lt.s32.totalorder %s25, 0
      %s389 = scalar_select %p388, %s25, 0
      %s390 = smul.addr %s387, 16
      %s391 = sadd.s32 %s389, %s390
      %s392 = smul.addr %s385, 32
      %s393 = sadd.s32 %s391, %s392
      %s394 = smul.addr %s393, 4
      %s395 = scalar_lea.vmem %s6, %s394
      %v396 = vld [vmem:[%s357] sm:$0xf]
      %v397 = vld [vmem:[%s357 + $0x4] sm:$0xf]
      %v398 = vld [vmem:[%s357 + $0x8] sm:$0xf]
      %v399 = vld [vmem:[%s357 + $0xc] sm:$0xf]
      %v400 = vld [vmem:[%s357 + $0x10] sm:$0xf]
      %v401 = vld [vmem:[%s357 + $0x14] sm:$0xf]
      %v402 = vld [vmem:[%s357 + $0x18] sm:$0xf]
      %v403 = vld [vmem:[%s357 + $0x1c] sm:$0xf]
      %v404 = vld [vmem:[%s357 + $0x20] sm:$0xf]
      %v405 = vld [vmem:[%s357 + $0x24] sm:$0xf]
      %v406 = vld [vmem:[%s357 + $0x28] sm:$0xf]
      %v407 = vld [vmem:[%s357 + $0x2c] sm:$0xf]
      %v408 = vld [vmem:[%s357 + $0x30] sm:$0xf]
      %v409 = vld [vmem:[%s357 + $0x34] sm:$0xf]
      %v410 = vld [vmem:[%s357 + $0x38] sm:$0xf]
      %v411 = vld [vmem:[%s357 + $0x3c] sm:$0xf]
      %v412 = vld [vmem:[%s357 + $0x40] sm:$0xf]
      %v413 = vld [vmem:[%s357 + $0x44] sm:$0xf]
      %v414 = vld [vmem:[%s357 + $0x48] sm:$0xf]
      %v415 = vld [vmem:[%s357 + $0x4c] sm:$0xf]
      %v416 = vld [vmem:[%s357 + $0x50] sm:$0xf]
      %v417 = vld [vmem:[%s357 + $0x54] sm:$0xf]
      %v418 = vunpack.c.l.bf16 %v396
      %v419 = vunpack.c.l.bf16 %v397
      %v420 = vunpack.c.l.bf16 %v398
      %v421 = vunpack.c.l.bf16 %v399
      %v422 = vunpack.c.l.bf16 %v400
      %v423 = vunpack.c.l.bf16 %v401
      %v424 = vunpack.c.l.bf16 %v402
      %v425 = vunpack.c.l.bf16 %v403
      %v426 = vunpack.c.l.bf16 %v404
      %v427 = vunpack.c.l.bf16 %v405
      %v428 = vunpack.c.l.bf16 %v406
      %v429 = vunpack.c.l.bf16 %v407
      %v430 = vunpack.c.l.bf16 %v408
      %v431 = vunpack.c.l.bf16 %v409
      %v432 = vunpack.c.l.bf16 %v410
      %v433 = vunpack.c.l.bf16 %v411
      %v434 = vunpack.c.l.bf16 %v412
      %v435 = vunpack.c.l.bf16 %v413
      %v436 = vunpack.c.l.bf16 %v414
      %v437 = vunpack.c.l.bf16 %v415
      %v438 = vunpack.c.l.bf16 %v416
      %v439 = vunpack.c.l.bf16 %v417
      %440 = vst [vmem:[#allocation2] sm:$0xff] %v418
      %441 = vst [vmem:[#allocation2 + $0x8] sm:$0xff] %v419
      %442 = vst [vmem:[#allocation2 + $0x10] sm:$0xff] %v420
      %443 = vst [vmem:[#allocation2 + $0x18] sm:$0xff] %v421
      %444 = vst [vmem:[#allocation2 + $0x20] sm:$0xff] %v422
      %445 = vst [vmem:[#allocation2 + $0x28] sm:$0xff] %v423
      %446 = vst [vmem:[#allocation2 + $0x30] sm:$0xff] %v424
      %447 = vst [vmem:[#allocation2 + $0x38] sm:$0xff] %v425
      %448 = vst [vmem:[#allocation2 + $0x40] sm:$0xff] %v426
      %449 = vst [vmem:[#allocation2 + $0x48] sm:$0xff] %v427
      %450 = vst [vmem:[#allocation2 + $0x50] sm:$0xff] %v428
      %451 = vst [vmem:[#allocation2 + $0x58] sm:$0xff] %v429
      %452 = vst [vmem:[#allocation2 + $0x60] sm:$0xff] %v430
      %453 = vst [vmem:[#allocation2 + $0x68] sm:$0xff] %v431
      %454 = vst [vmem:[#allocation2 + $0x70] sm:$0xff] %v432
      %455 = vst [vmem:[#allocation2 + $0x78] sm:$0xff] %v433
      %456 = vst [vmem:[#allocation2 + $0x80] sm:$0xff] %v434
      %457 = vst [vmem:[#allocation2 + $0x88] sm:$0xff] %v435
      %458 = vst [vmem:[#allocation2 + $0x90] sm:$0xff] %v436
      %459 = vst [vmem:[#allocation2 + $0x98] sm:$0xff] %v437
      %460 = vst [vmem:[#allocation2 + $0xa0] sm:$0xff] %v438
      %461 = vst [vmem:[#allocation2 + $0xa8] sm:$0xff] %v439
      %v462 = vlaneseq
      %v463 = vshrl.u32 %v462, 7
      %v464 = vadd.s32 %v463, 8
      %v465 = vadd.s32 %v463, 16
      %v466 = vadd.s32 %v463, 24
      %v467 = vadd.s32 %v463, 32
      %v468 = vadd.s32 %v463, 40
      %v469 = vadd.s32 %v463, 48
      %v470 = vadd.s32 %v463, 56
      %v471 = vadd.s32 %v463, 64
      %v472 = vadd.s32 %v463, 72
      %v473 = vadd.s32 %v463, 80
      %v474 = vadd.s32 %v463, 88
      %v475 = vadd.s32 %v463, 96
      %v476 = vadd.s32 %v463, 104
      %v477 = vadd.s32 %v463, 112
      %v478 = vadd.s32 %v463, 120
      %vm479 = vcmp.lt.s32.totalorder %v463, 0
      %v480 = vsub.s32 0, %v463
      %v481 = vsel %vm479, %v480, %v463
      %v482 = vshrl.u32 %v481, 4
      %v483 = vand.u32 %v481, 15
      %v484 = vsub.s32 0, %v483
      %v485 = vsel %vm479, %v484, %v483
      %vm486 = vcmp.lt.s32.totalorder %v464, 0
      %v487 = vsub.s32 0, %v464
      %v488 = vsel %vm486, %v487, %v464
      %v489 = vshrl.u32 %v488, 4
      %v490 = vand.u32 %v488, 15
      %v491 = vsub.s32 0, %v490
      %v492 = vsel %vm486, %v491, %v490
      %vm493 = vcmp.lt.s32.totalorder %v465, 0
      %v494 = vsub.s32 0, %v465
      %v495 = vsel %vm493, %v494, %v465
      %v496 = vshrl.u32 %v495, 4
      %v497 = vand.u32 %v495, 15
      %v498 = vsub.s32 0, %v497
      %v499 = vsel %vm493, %v498, %v497
      %vm500 = vcmp.lt.s32.totalorder %v466, 0
      %v501 = vsub.s32 0, %v466
      %v502 = vsel %vm500, %v501, %v466
      %v503 = vshrl.u32 %v502, 4
      %v504 = vand.u32 %v502, 15
      %v505 = vsub.s32 0, %v504
      %v506 = vsel %vm500, %v505, %v504
      %vm507 = vcmp.lt.s32.totalorder %v467, 0
      %v508 = vsub.s32 0, %v467
      %v509 = vsel %vm507, %v508, %v467
      %v510 = vshrl.u32 %v509, 4
      %v511 = vand.u32 %v509, 15
      %v512 = vsub.s32 0, %v511
      %v513 = vsel %vm507, %v512, %v511
      %vm514 = vcmp.lt.s32.totalorder %v468, 0
      %v515 = vsub.s32 0, %v468
      %v516 = vsel %vm514, %v515, %v468
      %v517 = vshrl.u32 %v516, 4
      %v518 = vand.u32 %v516, 15
      %v519 = vsub.s32 0, %v518
      %v520 = vsel %vm514, %v519, %v518
      %vm521 = vcmp.lt.s32.totalorder %v469, 0
      %v522 = vsub.s32 0, %v469
      %v523 = vsel %vm521, %v522, %v469
      %v524 = vshrl.u32 %v523, 4
      %v525 = vand.u32 %v523, 15
      %v526 = vsub.s32 0, %v525
      %v527 = vsel %vm521, %v526, %v525
      %vm528 = vcmp.lt.s32.totalorder %v470, 0
      %v529 = vsub.s32 0, %v470
      %v530 = vsel %vm528, %v529, %v470
      %v531 = vshrl.u32 %v530, 4
      %v532 = vand.u32 %v530, 15
      %v533 = vsub.s32 0, %v532
      %v534 = vsel %vm528, %v533, %v532
      %vm535 = vcmp.lt.s32.totalorder %v471, 0
      %v536 = vsub.s32 0, %v471
      %v537 = vsel %vm535, %v536, %v471
      %v538 = vshrl.u32 %v537, 4
      %v539 = vand.u32 %v537, 15
      %v540 = vsub.s32 0, %v539
      %v541 = vsel %vm535, %v540, %v539
      %vm542 = vcmp.lt.s32.totalorder %v472, 0
      %v543 = vsub.s32 0, %v472
      %v544 = vsel %vm542, %v543, %v472
      %v545 = vshrl.u32 %v544, 4
      %v546 = vand.u32 %v544, 15
      %v547 = vsub.s32 0, %v546
      %v548 = vsel %vm542, %v547, %v546
      %vm549 = vcmp.lt.s32.totalorder %v473, 0
      %v550 = vsub.s32 0, %v473
      %v551 = vsel %vm549, %v550, %v473
      %v552 = vshrl.u32 %v551, 4
      %v553 = vand.u32 %v551, 15
      %v554 = vsub.s32 0, %v553
      %v555 = vsel %vm549, %v554, %v553
      %vm556 = vcmp.lt.s32.totalorder %v474, 0
      %v557 = vsub.s32 0, %v474
      %v558 = vsel %vm556, %v557, %v474
      %v559 = vshrl.u32 %v558, 4
      %v560 = vand.u32 %v558, 15
      %v561 = vsub.s32 0, %v560
      %v562 = vsel %vm556, %v561, %v560
      %vm563 = vcmp.lt.s32.totalorder %v475, 0
      %v564 = vsub.s32 0, %v475
      %v565 = vsel %vm563, %v564, %v475
      %v566 = vshrl.u32 %v565, 4
      %v567 = vand.u32 %v565, 15
      %v568 = vsub.s32 0, %v567
      %v569 = vsel %vm563, %v568, %v567
      %vm570 = vcmp.lt.s32.totalorder %v476, 0
      %v571 = vsub.s32 0, %v476
      %v572 = vsel %vm570, %v571, %v476
      %v573 = vshrl.u32 %v572, 4
      %v574 = vand.u32 %v572, 15
      %v575 = vsub.s32 0, %v574
      %v576 = vsel %vm570, %v575, %v574
      %vm577 = vcmp.lt.s32.totalorder %v477, 0
      %v578 = vsub.s32 0, %v477
      %v579 = vsel %vm577, %v578, %v477
      %v580 = vshrl.u32 %v579, 4
      %v581 = vand.u32 %v579, 15
      %v582 = vsub.s32 0, %v581
      %v583 = vsel %vm577, %v582, %v581
      %vm584 = vcmp.lt.s32.totalorder %v478, 0
      %v585 = vsub.s32 0, %v478
      %v586 = vsel %vm584, %v585, %v478
      %v587 = vshrl.u32 %v586, 4
      %v588 = vand.u32 %v586, 15
      %v589 = vsub.s32 0, %v588
      %v590 = vsel %vm584, %v589, %v588
      %vm591 = vcmp.ne.s32.totalorder %v485, 0
      %vm592 = vcmp.ne.s32.totalorder %v492, 0
      %vm593 = vcmp.ne.s32.totalorder %v499, 0
      %vm594 = vcmp.ne.s32.totalorder %v506, 0
      %vm595 = vcmp.ne.s32.totalorder %v513, 0
      %vm596 = vcmp.ne.s32.totalorder %v520, 0
      %vm597 = vcmp.ne.s32.totalorder %v527, 0
      %vm598 = vcmp.ne.s32.totalorder %v534, 0
      %vm599 = vcmp.ne.s32.totalorder %v541, 0
      %vm600 = vcmp.ne.s32.totalorder %v548, 0
      %vm601 = vcmp.ne.s32.totalorder %v555, 0
      %vm602 = vcmp.ne.s32.totalorder %v562, 0
      %vm603 = vcmp.ne.s32.totalorder %v569, 0
      %vm604 = vcmp.ne.s32.totalorder %v576, 0
      %vm605 = vcmp.ne.s32.totalorder %v583, 0
      %vm606 = vcmp.ne.s32.totalorder %v590, 0
      %vm607 = vcmp.lt.s32.totalorder %v485, 0
      %vm608 = vcmp.lt.s32.totalorder %v492, 0
      %vm609 = vcmp.lt.s32.totalorder %v499, 0
      %vm610 = vcmp.lt.s32.totalorder %v506, 0
      %vm611 = vcmp.lt.s32.totalorder %v513, 0
      %vm612 = vcmp.lt.s32.totalorder %v520, 0
      %vm613 = vcmp.lt.s32.totalorder %v527, 0
      %vm614 = vcmp.lt.s32.totalorder %v534, 0
      %vm615 = vcmp.lt.s32.totalorder %v541, 0
      %vm616 = vcmp.lt.s32.totalorder %v548, 0
      %vm617 = vcmp.lt.s32.totalorder %v555, 0
      %vm618 = vcmp.lt.s32.totalorder %v562, 0
      %vm619 = vcmp.lt.s32.totalorder %v569, 0
      %vm620 = vcmp.lt.s32.totalorder %v576, 0
      %vm621 = vcmp.lt.s32.totalorder %v583, 0
      %vm622 = vcmp.lt.s32.totalorder %v590, 0
      %vm623 = vmand %vm607, %vm591
      %vm624 = vmand %vm608, %vm592
      %vm625 = vmand %vm609, %vm593
      %vm626 = vmand %vm610, %vm594
      %vm627 = vmand %vm611, %vm595
      %vm628 = vmand %vm612, %vm596
      %vm629 = vmand %vm613, %vm597
      %vm630 = vmand %vm614, %vm598
      %vm631 = vmand %vm615, %vm599
      %vm632 = vmand %vm616, %vm600
      %vm633 = vmand %vm617, %vm601
      %vm634 = vmand %vm618, %vm602
      %vm635 = vmand %vm619, %vm603
      %vm636 = vmand %vm620, %vm604
      %vm637 = vmand %vm621, %vm605
      %vm638 = vmand %vm622, %vm606
      %v639 = vadd.s32 %v485, 16
      %v640 = vadd.s32 %v492, 16
      %v641 = vadd.s32 %v499, 16
      %v642 = vadd.s32 %v506, 16
      %v643 = vadd.s32 %v513, 16
      %v644 = vadd.s32 %v520, 16
      %v645 = vadd.s32 %v527, 16
      %v646 = vadd.s32 %v534, 16
      %v647 = vadd.s32 %v541, 16
      %v648 = vadd.s32 %v548, 16
      %v649 = vadd.s32 %v555, 16
      %v650 = vadd.s32 %v562, 16
      %v651 = vadd.s32 %v569, 16
      %v652 = vadd.s32 %v576, 16
      %v653 = vadd.s32 %v583, 16
      %v654 = vadd.s32 %v590, 16
      %v655 = vsel %vm623, %v639, %v485
      %v656 = vsel %vm624, %v640, %v492
      %v657 = vsel %vm625, %v641, %v499
      %v658 = vsel %vm626, %v642, %v506
      %v659 = vsel %vm627, %v643, %v513
      %v660 = vsel %vm628, %v644, %v520
      %v661 = vsel %vm629, %v645, %v527
      %v662 = vsel %vm630, %v646, %v534
      %v663 = vsel %vm631, %v647, %v541
      %v664 = vsel %vm632, %v648, %v548
      %v665 = vsel %vm633, %v649, %v555
      %v666 = vsel %vm634, %v650, %v562
      %v667 = vsel %vm635, %v651, %v569
      %v668 = vsel %vm636, %v652, %v576
      %v669 = vsel %vm637, %v653, %v583
      %v670 = vsel %vm638, %v654, %v590
      %vm671 = vcmp.ne.s32.totalorder %v655, 0
      %vm672 = vcmp.ne.s32.totalorder %v656, 0
      %vm673 = vcmp.ne.s32.totalorder %v657, 0
      %vm674 = vcmp.ne.s32.totalorder %v658, 0
      %vm675 = vcmp.ne.s32.totalorder %v659, 0
      %vm676 = vcmp.ne.s32.totalorder %v660, 0
      %vm677 = vcmp.ne.s32.totalorder %v661, 0
      %vm678 = vcmp.ne.s32.totalorder %v662, 0
      %vm679 = vcmp.ne.s32.totalorder %v663, 0
      %vm680 = vcmp.ne.s32.totalorder %v664, 0
      %vm681 = vcmp.ne.s32.totalorder %v665, 0
      %vm682 = vcmp.ne.s32.totalorder %v666, 0
      %vm683 = vcmp.ne.s32.totalorder %v667, 0
      %vm684 = vcmp.ne.s32.totalorder %v668, 0
      %vm685 = vcmp.ne.s32.totalorder %v669, 0
      %vm686 = vcmp.ne.s32.totalorder %v670, 0
      %vm687 = vcmp.ne.s32.totalorder %v655, 15
      %vm688 = vcmp.ne.s32.totalorder %v656, 15
      %vm689 = vcmp.ne.s32.totalorder %v657, 15
      %vm690 = vcmp.ne.s32.totalorder %v658, 15
      %vm691 = vcmp.ne.s32.totalorder %v659, 15
      %vm692 = vcmp.ne.s32.totalorder %v660, 15
      %vm693 = vcmp.ne.s32.totalorder %v661, 15
      %vm694 = vcmp.ne.s32.totalorder %v662, 15
      %vm695 = vcmp.ne.s32.totalorder %v663, 15
      %vm696 = vcmp.ne.s32.totalorder %v664, 15
      %vm697 = vcmp.ne.s32.totalorder %v665, 15
      %vm698 = vcmp.ne.s32.totalorder %v666, 15
      %vm699 = vcmp.ne.s32.totalorder %v667, 15
      %vm700 = vcmp.ne.s32.totalorder %v668, 15
      %vm701 = vcmp.ne.s32.totalorder %v669, 15
      %vm702 = vcmp.ne.s32.totalorder %v670, 15
      %v703 = vld [vmem:[#allocation2 + $0x7] sm:$0xff]
      %v704 = vld [vmem:[#allocation2 + $0xf] sm:$0xff]
      %v705 = vld [vmem:[#allocation2 + $0x17] sm:$0xff]
      %v706 = vld [vmem:[#allocation2 + $0x1f] sm:$0xff]
      %v707 = vld [vmem:[#allocation2 + $0x27] sm:$0xff]
      %v708 = vld [vmem:[#allocation2 + $0x2f] sm:$0xff]
      %v709 = vld [vmem:[#allocation2 + $0x37] sm:$0xff]
      %v710 = vld [vmem:[#allocation2 + $0x3f] sm:$0xff]
      %v711 = vld [vmem:[#allocation2 + $0x47] sm:$0xff]
      %v712 = vld [vmem:[#allocation2 + $0x4f] sm:$0xff]
      %v713 = vld [vmem:[#allocation2 + $0x57] sm:$0xff]
      %v714 = vld [vmem:[#allocation2 + $0x5f] sm:$0xff]
      %v715 = vld [vmem:[#allocation2 + $0x67] sm:$0xff]
      %v716 = vld [vmem:[#allocation2 + $0x6f] sm:$0xff]
      %v717 = vld [vmem:[#allocation2 + $0x77] sm:$0xff]
      %v718 = vld [vmem:[#allocation2 + $0x7f] sm:$0xff]
      %v719 = vsel %vm671, %v703, 0.0
      %v720 = vsel %vm672, %v704, 0.0
      %v721 = vsel %vm673, %v705, 0.0
      %v722 = vsel %vm674, %v706, 0.0
      %v723 = vsel %vm675, %v707, 0.0
      %v724 = vsel %vm676, %v708, 0.0
      %v725 = vsel %vm677, %v709, 0.0
      %v726 = vsel %vm678, %v710, 0.0
      %v727 = vsel %vm679, %v711, 0.0
      %v728 = vsel %vm680, %v712, 0.0
      %v729 = vsel %vm681, %v713, 0.0
      %v730 = vsel %vm682, %v714, 0.0
      %v731 = vsel %vm683, %v715, 0.0
      %v732 = vsel %vm684, %v716, 0.0
      %v733 = vsel %vm685, %v717, 0.0
      %v734 = vsel %vm686, %v718, 0.0
      %v735 = vpack.c.bf16 %v720, %v719
      %v736 = vpack.c.bf16 %v722, %v721
      %v737 = vpack.c.bf16 %v724, %v723
      %v738 = vpack.c.bf16 %v726, %v725
      %v739 = vpack.c.bf16 %v728, %v727
      %v740 = vpack.c.bf16 %v730, %v729
      %v741 = vpack.c.bf16 %v732, %v731
      %v742 = vpack.c.bf16 %v734, %v733
      %v743 = vld [vmem:[%s361] sm:$0xf]
      %v744 = vld [vmem:[%s361 + $0x4] sm:$0xf]
      %v745 = vld [vmem:[%s361 + $0x8] sm:$0xf]
      %v746 = vld [vmem:[%s361 + $0xc] sm:$0xf]
      %v747 = vld [vmem:[%s361 + $0x10] sm:$0xf]
      %v748 = vld [vmem:[%s361 + $0x14] sm:$0xf]
      %v749 = vld [vmem:[%s361 + $0x18] sm:$0xf]
      %v750 = vld [vmem:[%s361 + $0x1c] sm:$0xf]
      %v751 = vld [vmem:[%s361 + $0x20] sm:$0xf]
      %v752 = vld [vmem:[%s361 + $0x24] sm:$0xf]
      %v753 = vld [vmem:[%s361 + $0x28] sm:$0xf]
      %v754 = vld [vmem:[%s361 + $0x2c] sm:$0xf]
      %v755 = vld [vmem:[%s361 + $0x30] sm:$0xf]
      %v756 = vld [vmem:[%s361 + $0x34] sm:$0xf]
      %v757 = vld [vmem:[%s361 + $0x38] sm:$0xf]
      %v758 = vld [vmem:[%s361 + $0x3c] sm:$0xf]
      %v759 = vld [vmem:[#allocation2 + $0x8] sm:$0xff]
      %v760 = vld [vmem:[#allocation2 + $0x10] sm:$0xff]
      %v761 = vld [vmem:[#allocation2 + $0x18] sm:$0xff]
      %v762 = vld [vmem:[#allocation2 + $0x20] sm:$0xff]
      %v763 = vld [vmem:[#allocation2 + $0x28] sm:$0xff]
      %v764 = vld [vmem:[#allocation2 + $0x30] sm:$0xff]
      %v765 = vld [vmem:[#allocation2 + $0x38] sm:$0xff]
      %v766 = vld [vmem:[#allocation2 + $0x40] sm:$0xff]
      %v767 = vld [vmem:[#allocation2 + $0x48] sm:$0xff]
      %v768 = vld [vmem:[#allocation2 + $0x50] sm:$0xff]
      %v769 = vld [vmem:[#allocation2 + $0x58] sm:$0xff]
      %v770 = vld [vmem:[#allocation2 + $0x60] sm:$0xff]
      %v771 = vld [vmem:[#allocation2 + $0x68] sm:$0xff]
      %v772 = vld [vmem:[#allocation2 + $0x70] sm:$0xff]
      %v773 = vld [vmem:[#allocation2 + $0x78] sm:$0xff]
      %v774 = vld [vmem:[#allocation2 + $0x80] sm:$0xff]
      %v775 = vpack.c.bf16 %v760, %v759
      %v776 = vpack.c.bf16 %v762, %v761
      %v777 = vpack.c.bf16 %v764, %v763
      %v778 = vpack.c.bf16 %v766, %v765
      %v779 = vpack.c.bf16 %v768, %v767
      %v780 = vpack.c.bf16 %v770, %v769
      %v781 = vpack.c.bf16 %v772, %v771
      %v782 = vpack.c.bf16 %v774, %v773
      %s783 = scalar_lea.vmem %s361, 64
      %v784 = vld [vmem:[%s783] sm:$0xf]
      %v785 = vld [vmem:[%s783 + $0x4] sm:$0xf]
      %v786 = vld [vmem:[%s783 + $0x8] sm:$0xf]
      %v787 = vld [vmem:[%s783 + $0xc] sm:$0xf]
      %v788 = vld [vmem:[%s783 + $0x10] sm:$0xf]
      %v789 = vld [vmem:[%s783 + $0x14] sm:$0xf]
      %v790 = vld [vmem:[%s783 + $0x18] sm:$0xf]
      %v791 = vld [vmem:[%s783 + $0x1c] sm:$0xf]
      %v792 = vld [vmem:[%s783 + $0x20] sm:$0xf]
      %v793 = vld [vmem:[%s783 + $0x24] sm:$0xf]
      %v794 = vld [vmem:[%s783 + $0x28] sm:$0xf]
      %v795 = vld [vmem:[%s783 + $0x2c] sm:$0xf]
      %v796 = vld [vmem:[%s783 + $0x30] sm:$0xf]
      %v797 = vld [vmem:[%s783 + $0x34] sm:$0xf]
      %v798 = vld [vmem:[%s783 + $0x38] sm:$0xf]
      %v799 = vld [vmem:[%s783 + $0x3c] sm:$0xf]
      %v816 = vunpack.c.l.b16 %v784
      %v817 = vunpack.c.l.b16 %v785
      %v818 = vunpack.c.l.b16 %v786
      %v819 = vunpack.c.l.b16 %v787
      %v820 = vunpack.c.l.b16 %v788
      %v821 = vunpack.c.l.b16 %v789
      %v822 = vunpack.c.l.b16 %v790
      %v823 = vunpack.c.l.b16 %v791
      %v824 = vunpack.c.l.b16 %v792
      %v825 = vunpack.c.l.b16 %v793
      %v826 = vunpack.c.l.b16 %v794
      %v827 = vunpack.c.l.b16 %v795
      %v828 = vunpack.c.l.b16 %v796
      %v829 = vunpack.c.l.b16 %v797
      %v830 = vunpack.c.l.b16 %v798
      %v831 = vunpack.c.l.b16 %v799
      %v832 = vpack.c.b16 %v817, %v816
      %v833 = vpack.c.b16 %v819, %v818
      %v834 = vpack.c.b16 %v821, %v820
      %v835 = vpack.c.b16 %v823, %v822
      %v836 = vpack.c.b16 %v825, %v824
      %v837 = vpack.c.b16 %v827, %v826
      %v838 = vpack.c.b16 %v829, %v828
      %v839 = vpack.c.b16 %v831, %v830
      %848 = vmatpush.bf16.msra.mxu0 %v839
      %849 = vmatpush.bf16.msra.mxu0 %v838
      %850 = vmatpush.bf16.msra.mxu0 %v837
      %851 = vmatpush.bf16.msra.mxu0 %v836
      %852 = vmatpush.bf16.msra.mxu0 %v835
      %853 = vmatpush.bf16.msra.mxu0 %v834
      %854 = vmatpush.bf16.msra.mxu0 %v833
      %855 = vmatpush.bf16.msra.mxu0 %v832
      %856 = vmatmul.bf16.gmra.mxu0 %v775
      %v857 = vpop.f32.mrf.mxu0
      %v858 = vadd.f32 0.0, %v857
      %v859 = vpop.f32.mrf.mxu0
      %v860 = vadd.f32 0.0, %v859
      %861 = vmatmul.bf16.gmra.mxu0 %v776
      %v862 = vpop.f32.mrf.mxu0
      %v863 = vadd.f32 0.0, %v862
      %v864 = vpop.f32.mrf.mxu0
      %v865 = vadd.f32 0.0, %v864
      %866 = vmatmul.bf16.gmra.mxu0 %v777
      %v867 = vpop.f32.mrf.mxu0
      %v868 = vadd.f32 0.0, %v867
      %v869 = vpop.f32.mrf.mxu0
      %v870 = vadd.f32 0.0, %v869
      %871 = vmatmul.bf16.gmra.mxu0 %v778
      %v872 = vpop.f32.mrf.mxu0
      %v873 = vadd.f32 0.0, %v872
      %v874 = vpop.f32.mrf.mxu0
      %v875 = vadd.f32 0.0, %v874
      %876 = vmatmul.bf16.gmra.mxu0 %v779
      %v877 = vpop.f32.mrf.mxu0
      %v878 = vadd.f32 0.0, %v877
      %v879 = vpop.f32.mrf.mxu0
      %v880 = vadd.f32 0.0, %v879
      %881 = vmatmul.bf16.gmra.mxu0 %v780
      %v882 = vpop.f32.mrf.mxu0
      %v883 = vadd.f32 0.0, %v882
      %v884 = vpop.f32.mrf.mxu0
      %v885 = vadd.f32 0.0, %v884
      %886 = vmatmul.bf16.gmra.mxu0 %v781
      %v887 = vpop.f32.mrf.mxu0
      %v888 = vadd.f32 0.0, %v887
      %v889 = vpop.f32.mrf.mxu0
      %v890 = vadd.f32 0.0, %v889
      %891 = vmatmul.bf16.gmra.mxu0 %v782
      %v892 = vpop.f32.mrf.mxu0
      %v893 = vadd.f32 0.0, %v892
      %v894 = vpop.f32.mrf.mxu0
      %v895 = vadd.f32 0.0, %v894
      %896 = vdwg.mxu0
      %v913 = vunpack.c.l.b16 %v743
      %v914 = vunpack.c.l.b16 %v744
      %v915 = vunpack.c.l.b16 %v745
      %v916 = vunpack.c.l.b16 %v746
      %v917 = vunpack.c.l.b16 %v747
      %v918 = vunpack.c.l.b16 %v748
      %v919 = vunpack.c.l.b16 %v749
      %v920 = vunpack.c.l.b16 %v750
      %v921 = vunpack.c.l.b16 %v751
      %v922 = vunpack.c.l.b16 %v752
      %v923 = vunpack.c.l.b16 %v753
      %v924 = vunpack.c.l.b16 %v754
      %v925 = vunpack.c.l.b16 %v755
      %v926 = vunpack.c.l.b16 %v756
      %v927 = vunpack.c.l.b16 %v757
      %v928 = vunpack.c.l.b16 %v758
      %v929 = vpack.c.b16 %v914, %v913
      %v930 = vpack.c.b16 %v916, %v915
      %v931 = vpack.c.b16 %v918, %v917
      %v932 = vpack.c.b16 %v920, %v919
      %v933 = vpack.c.b16 %v922, %v921
      %v934 = vpack.c.b16 %v924, %v923
      %v935 = vpack.c.b16 %v926, %v925
      %v936 = vpack.c.b16 %v928, %v927
      %945 = vmatpush.bf16.msra.mxu0 %v936
      %946 = vmatpush.bf16.msra.mxu0 %v935
      %947 = vmatpush.bf16.msra.mxu0 %v934
      %948 = vmatpush.bf16.msra.mxu0 %v933
      %949 = vmatpush.bf16.msra.mxu0 %v932
      %950 = vmatpush.bf16.msra.mxu0 %v931
      %951 = vmatpush.bf16.msra.mxu0 %v930
      %952 = vmatpush.bf16.msra.mxu0 %v929
      %953 = vmatmul.bf16.gmra.mxu0 %v735
      %v954 = vpop.f32.mrf.mxu0
      %v955 = vadd.f32 %v858, %v954
      %v956 = vpop.f32.mrf.mxu0
      %v957 = vadd.f32 %v860, %v956
      %958 = vmatmul.bf16.gmra.mxu0 %v736
      %v959 = vpop.f32.mrf.mxu0
      %v960 = vadd.f32 %v863, %v959
      %v961 = vpop.f32.mrf.mxu0
      %v962 = vadd.f32 %v865, %v961
      %963 = vmatmul.bf16.gmra.mxu0 %v737
      %v964 = vpop.f32.mrf.mxu0
      %v965 = vadd.f32 %v868, %v964
      %v966 = vpop.f32.mrf.mxu0
      %v967 = vadd.f32 %v870, %v966
      %968 = vmatmul.bf16.gmra.mxu0 %v738
      %v969 = vpop.f32.mrf.mxu0
      %v970 = vadd.f32 %v873, %v969
      %v971 = vpop.f32.mrf.mxu0
      %v972 = vadd.f32 %v875, %v971
      %973 = vmatmul.bf16.gmra.mxu0 %v739
      %v974 = vpop.f32.mrf.mxu0
      %v975 = vadd.f32 %v878, %v974
      %v976 = vpop.f32.mrf.mxu0
      %v977 = vadd.f32 %v880, %v976
      %978 = vmatmul.bf16.gmra.mxu0 %v740
      %v979 = vpop.f32.mrf.mxu0
      %v980 = vadd.f32 %v883, %v979
      %v981 = vpop.f32.mrf.mxu0
      %v982 = vadd.f32 %v885, %v981
      %983 = vmatmul.bf16.gmra.mxu0 %v741
      %v984 = vpop.f32.mrf.mxu0
      %v985 = vadd.f32 %v888, %v984
      %v986 = vpop.f32.mrf.mxu0
      %v987 = vadd.f32 %v890, %v986
      %988 = vmatmul.bf16.gmra.mxu0 %v742
      %v989 = vpop.f32.mrf.mxu0
      %v990 = vadd.f32 %v893, %v989
      %v991 = vpop.f32.mrf.mxu0
      %v992 = vadd.f32 %v895, %v991
      %993 = vdwg.mxu0
      %v994 = vld [vmem:[#allocation2 + $0x9] sm:$0xff]
      %v995 = vld [vmem:[#allocation2 + $0x11] sm:$0xff]
      %v996 = vld [vmem:[#allocation2 + $0x19] sm:$0xff]
      %v997 = vld [vmem:[#allocation2 + $0x21] sm:$0xff]
      %v998 = vld [vmem:[#allocation2 + $0x29] sm:$0xff]
      %v999 = vld [vmem:[#allocation2 + $0x31] sm:$0xff]
      %v1000 = vld [vmem:[#allocation2 + $0x39] sm:$0xff]
      %v1001 = vld [vmem:[#allocation2 + $0x41] sm:$0xff]
      %v1002 = vld [vmem:[#allocation2 + $0x49] sm:$0xff]
      %v1003 = vld [vmem:[#allocation2 + $0x51] sm:$0xff]
      %v1004 = vld [vmem:[#allocation2 + $0x59] sm:$0xff]
      %v1005 = vld [vmem:[#allocation2 + $0x61] sm:$0xff]
      %v1006 = vld [vmem:[#allocation2 + $0x69] sm:$0xff]
      %v1007 = vld [vmem:[#allocation2 + $0x71] sm:$0xff]
      %v1008 = vld [vmem:[#allocation2 + $0x79] sm:$0xff]
      %v1009 = vld [vmem:[#allocation2 + $0x81] sm:$0xff]
      %v1010 = vsel %vm687, %v994, 0.0
      %v1011 = vsel %vm688, %v995, 0.0
      %v1012 = vsel %vm689, %v996, 0.0
      %v1013 = vsel %vm690, %v997, 0.0
      %v1014 = vsel %vm691, %v998, 0.0
      %v1015 = vsel %vm692, %v999, 0.0
      %v1016 = vsel %vm693, %v1000, 0.0
      %v1017 = vsel %vm694, %v1001, 0.0
      %v1018 = vsel %vm695, %v1002, 0.0
      %v1019 = vsel %vm696, %v1003, 0.0
      %v1020 = vsel %vm697, %v1004, 0.0
      %v1021 = vsel %vm698, %v1005, 0.0
      %v1022 = vsel %vm699, %v1006, 0.0
      %v1023 = vsel %vm700, %v1007, 0.0
      %v1024 = vsel %vm701, %v1008, 0.0
      %v1025 = vsel %vm702, %v1009, 0.0
      %v1026 = vpack.c.bf16 %v1011, %v1010
      %v1027 = vpack.c.bf16 %v1013, %v1012
      %v1028 = vpack.c.bf16 %v1015, %v1014
      %v1029 = vpack.c.bf16 %v1017, %v1016
      %v1030 = vpack.c.bf16 %v1019, %v1018
      %v1031 = vpack.c.bf16 %v1021, %v1020
      %v1032 = vpack.c.bf16 %v1023, %v1022
      %v1033 = vpack.c.bf16 %v1025, %v1024
      %s1034 = scalar_lea.vmem %s361, 128
      %v1035 = vld [vmem:[%s1034] sm:$0xf]
      %v1036 = vld [vmem:[%s1034 + $0x4] sm:$0xf]
      %v1037 = vld [vmem:[%s1034 + $0x8] sm:$0xf]
      %v1038 = vld [vmem:[%s1034 + $0xc] sm:$0xf]
      %v1039 = vld [vmem:[%s1034 + $0x10] sm:$0xf]
      %v1040 = vld [vmem:[%s1034 + $0x14] sm:$0xf]
      %v1041 = vld [vmem:[%s1034 + $0x18] sm:$0xf]
      %v1042 = vld [vmem:[%s1034 + $0x1c] sm:$0xf]
      %v1043 = vld [vmem:[%s1034 + $0x20] sm:$0xf]
      %v1044 = vld [vmem:[%s1034 + $0x24] sm:$0xf]
      %v1045 = vld [vmem:[%s1034 + $0x28] sm:$0xf]
      %v1046 = vld [vmem:[%s1034 + $0x2c] sm:$0xf]
      %v1047 = vld [vmem:[%s1034 + $0x30] sm:$0xf]
      %v1048 = vld [vmem:[%s1034 + $0x34] sm:$0xf]
      %v1049 = vld [vmem:[%s1034 + $0x38] sm:$0xf]
      %v1050 = vld [vmem:[%s1034 + $0x3c] sm:$0xf]
      %v1067 = vunpack.c.l.b16 %v1035
      %v1068 = vunpack.c.l.b16 %v1036
      %v1069 = vunpack.c.l.b16 %v1037
      %v1070 = vunpack.c.l.b16 %v1038
      %v1071 = vunpack.c.l.b16 %v1039
      %v1072 = vunpack.c.l.b16 %v1040
      %v1073 = vunpack.c.l.b16 %v1041
      %v1074 = vunpack.c.l.b16 %v1042
      %v1075 = vunpack.c.l.b16 %v1043
      %v1076 = vunpack.c.l.b16 %v1044
      %v1077 = vunpack.c.l.b16 %v1045
      %v1078 = vunpack.c.l.b16 %v1046
      %v1079 = vunpack.c.l.b16 %v1047
      %v1080 = vunpack.c.l.b16 %v1048
      %v1081 = vunpack.c.l.b16 %v1049
      %v1082 = vunpack.c.l.b16 %v1050
      %v1083 = vpack.c.b16 %v1068, %v1067
      %v1084 = vpack.c.b16 %v1070, %v1069
      %v1085 = vpack.c.b16 %v1072, %v1071
      %v1086 = vpack.c.b16 %v1074, %v1073
      %v1087 = vpack.c.b16 %v1076, %v1075
      %v1088 = vpack.c.b16 %v1078, %v1077
      %v1089 = vpack.c.b16 %v1080, %v1079
      %v1090 = vpack.c.b16 %v1082, %v1081
      %1099 = vmatpush.bf16.msra.mxu0 %v1090
      %1100 = vmatpush.bf16.msra.mxu0 %v1089
      %1101 = vmatpush.bf16.msra.mxu0 %v1088
      %1102 = vmatpush.bf16.msra.mxu0 %v1087
      %1103 = vmatpush.bf16.msra.mxu0 %v1086
      %1104 = vmatpush.bf16.msra.mxu0 %v1085
      %1105 = vmatpush.bf16.msra.mxu0 %v1084
      %1106 = vmatpush.bf16.msra.mxu0 %v1083
      %1107 = vmatmul.bf16.gmra.mxu0 %v1026
      %v1108 = vpop.f32.mrf.mxu0
      %v1109 = vadd.f32 0.0, %v1108
      %v1110 = vpop.f32.mrf.mxu0
      %v1111 = vadd.f32 0.0, %v1110
      %1112 = vmatmul.bf16.gmra.mxu0 %v1027
      %v1113 = vpop.f32.mrf.mxu0
      %v1114 = vadd.f32 0.0, %v1113
      %v1115 = vpop.f32.mrf.mxu0
      %v1116 = vadd.f32 0.0, %v1115
      %1117 = vmatmul.bf16.gmra.mxu0 %v1028
      %v1118 = vpop.f32.mrf.mxu0
      %v1119 = vadd.f32 0.0, %v1118
      %v1120 = vpop.f32.mrf.mxu0
      %v1121 = vadd.f32 0.0, %v1120
      %1122 = vmatmul.bf16.gmra.mxu0 %v1029
      %v1123 = vpop.f32.mrf.mxu0
      %v1124 = vadd.f32 0.0, %v1123
      %v1125 = vpop.f32.mrf.mxu0
      %v1126 = vadd.f32 0.0, %v1125
      %1127 = vmatmul.bf16.gmra.mxu0 %v1030
      %v1128 = vpop.f32.mrf.mxu0
      %v1129 = vadd.f32 0.0, %v1128
      %v1130 = vpop.f32.mrf.mxu0
      %v1131 = vadd.f32 0.0, %v1130
      %1132 = vmatmul.bf16.gmra.mxu0 %v1031
      %v1133 = vpop.f32.mrf.mxu0
      %v1134 = vadd.f32 0.0, %v1133
      %v1135 = vpop.f32.mrf.mxu0
      %v1136 = vadd.f32 0.0, %v1135
      %1137 = vmatmul.bf16.gmra.mxu0 %v1032
      %v1138 = vpop.f32.mrf.mxu0
      %v1139 = vadd.f32 0.0, %v1138
      %v1140 = vpop.f32.mrf.mxu0
      %v1141 = vadd.f32 0.0, %v1140
      %1142 = vmatmul.bf16.gmra.mxu0 %v1033
      %v1143 = vpop.f32.mrf.mxu0
      %v1144 = vadd.f32 0.0, %v1143
      %v1145 = vpop.f32.mrf.mxu0
      %v1146 = vadd.f32 0.0, %v1145
      %1147 = vdwg.mxu0
      %v1148 = vadd.f32 %v955, %v1109
      %v1149 = vadd.f32 %v957, %v1111
      %v1150 = vadd.f32 %v960, %v1114
      %v1151 = vadd.f32 %v962, %v1116
      %v1152 = vadd.f32 %v965, %v1119
      %v1153 = vadd.f32 %v967, %v1121
      %v1154 = vadd.f32 %v970, %v1124
      %v1155 = vadd.f32 %v972, %v1126
      %v1156 = vadd.f32 %v975, %v1129
      %v1157 = vadd.f32 %v977, %v1131
      %v1158 = vadd.f32 %v980, %v1134
      %v1159 = vadd.f32 %v982, %v1136
      %v1160 = vadd.f32 %v985, %v1139
      %v1161 = vadd.f32 %v987, %v1141
      %v1162 = vadd.f32 %v990, %v1144
      %v1163 = vadd.f32 %v992, %v1146
      %v1164 = vld [vmem:[#allocation2 + $0x17] sm:$0xff]
      %v1165 = vld [vmem:[#allocation2 + $0x1f] sm:$0xff]
      %v1166 = vld [vmem:[#allocation2 + $0x27] sm:$0xff]
      %v1167 = vld [vmem:[#allocation2 + $0x2f] sm:$0xff]
      %v1168 = vld [vmem:[#allocation2 + $0x37] sm:$0xff]
      %v1169 = vld [vmem:[#allocation2 + $0x3f] sm:$0xff]
      %v1170 = vld [vmem:[#allocation2 + $0x47] sm:$0xff]
      %v1171 = vld [vmem:[#allocation2 + $0x4f] sm:$0xff]
      %v1172 = vld [vmem:[#allocation2 + $0x57] sm:$0xff]
      %v1173 = vld [vmem:[#allocation2 + $0x5f] sm:$0xff]
      %v1174 = vld [vmem:[#allocation2 + $0x67] sm:$0xff]
      %v1175 = vld [vmem:[#allocation2 + $0x6f] sm:$0xff]
      %v1176 = vld [vmem:[#allocation2 + $0x77] sm:$0xff]
      %v1177 = vld [vmem:[#allocation2 + $0x7f] sm:$0xff]
      %v1178 = vld [vmem:[#allocation2 + $0x87] sm:$0xff]
      %v1179 = vld [vmem:[#allocation2 + $0x8f] sm:$0xff]
      %v1180 = vsel %vm671, %v1164, 0.0
      %v1181 = vsel %vm672, %v1165, 0.0
      %v1182 = vsel %vm673, %v1166, 0.0
      %v1183 = vsel %vm674, %v1167, 0.0
      %v1184 = vsel %vm675, %v1168, 0.0
      %v1185 = vsel %vm676, %v1169, 0.0
      %v1186 = vsel %vm677, %v1170, 0.0
      %v1187 = vsel %vm678, %v1171, 0.0
      %v1188 = vsel %vm679, %v1172, 0.0
      %v1189 = vsel %vm680, %v1173, 0.0
      %v1190 = vsel %vm681, %v1174, 0.0
      %v1191 = vsel %vm682, %v1175, 0.0
      %v1192 = vsel %vm683, %v1176, 0.0
      %v1193 = vsel %vm684, %v1177, 0.0
      %v1194 = vsel %vm685, %v1178, 0.0
      %v1195 = vsel %vm686, %v1179, 0.0
      %v1196 = vpack.c.bf16 %v1181, %v1180
      %v1197 = vpack.c.bf16 %v1183, %v1182
      %v1198 = vpack.c.bf16 %v1185, %v1184
      %v1199 = vpack.c.bf16 %v1187, %v1186
      %v1200 = vpack.c.bf16 %v1189, %v1188
      %v1201 = vpack.c.bf16 %v1191, %v1190
      %v1202 = vpack.c.bf16 %v1193, %v1192
      %v1203 = vpack.c.bf16 %v1195, %v1194
      %s1204 = scalar_lea.vmem %s361, 192
      %v1205 = vld [vmem:[%s1204] sm:$0xf]
      %v1206 = vld [vmem:[%s1204 + $0x4] sm:$0xf]
      %v1207 = vld [vmem:[%s1204 + $0x8] sm:$0xf]
      %v1208 = vld [vmem:[%s1204 + $0xc] sm:$0xf]
      %v1209 = vld [vmem:[%s1204 + $0x10] sm:$0xf]
      %v1210 = vld [vmem:[%s1204 + $0x14] sm:$0xf]
      %v1211 = vld [vmem:[%s1204 + $0x18] sm:$0xf]
      %v1212 = vld [vmem:[%s1204 + $0x1c] sm:$0xf]
      %v1213 = vld [vmem:[%s1204 + $0x20] sm:$0xf]
      %v1214 = vld [vmem:[%s1204 + $0x24] sm:$0xf]
      %v1215 = vld [vmem:[%s1204 + $0x28] sm:$0xf]
      %v1216 = vld [vmem:[%s1204 + $0x2c] sm:$0xf]
      %v1217 = vld [vmem:[%s1204 + $0x30] sm:$0xf]
      %v1218 = vld [vmem:[%s1204 + $0x34] sm:$0xf]
      %v1219 = vld [vmem:[%s1204 + $0x38] sm:$0xf]
      %v1220 = vld [vmem:[%s1204 + $0x3c] sm:$0xf]
      %v1237 = vunpack.c.l.b16 %v1205
      %v1238 = vunpack.c.l.b16 %v1206
      %v1239 = vunpack.c.l.b16 %v1207
      %v1240 = vunpack.c.l.b16 %v1208
      %v1241 = vunpack.c.l.b16 %v1209
      %v1242 = vunpack.c.l.b16 %v1210
      %v1243 = vunpack.c.l.b16 %v1211
      %v1244 = vunpack.c.l.b16 %v1212
      %v1245 = vunpack.c.l.b16 %v1213
      %v1246 = vunpack.c.l.b16 %v1214
      %v1247 = vunpack.c.l.b16 %v1215
      %v1248 = vunpack.c.l.b16 %v1216
      %v1249 = vunpack.c.l.b16 %v1217
      %v1250 = vunpack.c.l.b16 %v1218
      %v1251 = vunpack.c.l.b16 %v1219
      %v1252 = vunpack.c.l.b16 %v1220
      %v1253 = vpack.c.b16 %v1238, %v1237
      %v1254 = vpack.c.b16 %v1240, %v1239
      %v1255 = vpack.c.b16 %v1242, %v1241
      %v1256 = vpack.c.b16 %v1244, %v1243
      %v1257 = vpack.c.b16 %v1246, %v1245
      %v1258 = vpack.c.b16 %v1248, %v1247
      %v1259 = vpack.c.b16 %v1250, %v1249
      %v1260 = vpack.c.b16 %v1252, %v1251
      %1269 = vmatpush.bf16.msra.mxu0 %v1260
      %1270 = vmatpush.bf16.msra.mxu0 %v1259
      %1271 = vmatpush.bf16.msra.mxu0 %v1258
      %1272 = vmatpush.bf16.msra.mxu0 %v1257
      %1273 = vmatpush.bf16.msra.mxu0 %v1256
      %1274 = vmatpush.bf16.msra.mxu0 %v1255
      %1275 = vmatpush.bf16.msra.mxu0 %v1254
      %1276 = vmatpush.bf16.msra.mxu0 %v1253
      %1277 = vmatmul.bf16.gmra.mxu0 %v1196
      %v1278 = vpop.f32.mrf.mxu0
      %v1279 = vadd.f32 0.0, %v1278
      %v1280 = vpop.f32.mrf.mxu0
      %v1281 = vadd.f32 0.0, %v1280
      %1282 = vmatmul.bf16.gmra.mxu0 %v1197
      %v1283 = vpop.f32.mrf.mxu0
      %v1284 = vadd.f32 0.0, %v1283
      %v1285 = vpop.f32.mrf.mxu0
      %v1286 = vadd.f32 0.0, %v1285
      %1287 = vmatmul.bf16.gmra.mxu0 %v1198
      %v1288 = vpop.f32.mrf.mxu0
      %v1289 = vadd.f32 0.0, %v1288
      %v1290 = vpop.f32.mrf.mxu0
      %v1291 = vadd.f32 0.0, %v1290
      %1292 = vmatmul.bf16.gmra.mxu0 %v1199
      %v1293 = vpop.f32.mrf.mxu0
      %v1294 = vadd.f32 0.0, %v1293
      %v1295 = vpop.f32.mrf.mxu0
      %v1296 = vadd.f32 0.0, %v1295
      %1297 = vmatmul.bf16.gmra.mxu0 %v1200
      %v1298 = vpop.f32.mrf.mxu0
      %v1299 = vadd.f32 0.0, %v1298
      %v1300 = vpop.f32.mrf.mxu0
      %v1301 = vadd.f32 0.0, %v1300
      %1302 = vmatmul.bf16.gmra.mxu0 %v1201
      %v1303 = vpop.f32.mrf.mxu0
      %v1304 = vadd.f32 0.0, %v1303
      %v1305 = vpop.f32.mrf.mxu0
      %v1306 = vadd.f32 0.0, %v1305
      %1307 = vmatmul.bf16.gmra.mxu0 %v1202
      %v1308 = vpop.f32.mrf.mxu0
      %v1309 = vadd.f32 0.0, %v1308
      %v1310 = vpop.f32.mrf.mxu0
      %v1311 = vadd.f32 0.0, %v1310
      %1312 = vmatmul.bf16.gmra.mxu0 %v1203
      %v1313 = vpop.f32.mrf.mxu0
      %v1314 = vadd.f32 0.0, %v1313
      %v1315 = vpop.f32.mrf.mxu0
      %v1316 = vadd.f32 0.0, %v1315
      %1317 = vdwg.mxu0
      %v1318 = vadd.f32 %v1148, %v1279
      %v1319 = vadd.f32 %v1149, %v1281
      %v1320 = vadd.f32 %v1150, %v1284
      %v1321 = vadd.f32 %v1151, %v1286
      %v1322 = vadd.f32 %v1152, %v1289
      %v1323 = vadd.f32 %v1153, %v1291
      %v1324 = vadd.f32 %v1154, %v1294
      %v1325 = vadd.f32 %v1155, %v1296
      %v1326 = vadd.f32 %v1156, %v1299
      %v1327 = vadd.f32 %v1157, %v1301
      %v1328 = vadd.f32 %v1158, %v1304
      %v1329 = vadd.f32 %v1159, %v1306
      %v1330 = vadd.f32 %v1160, %v1309
      %v1331 = vadd.f32 %v1161, %v1311
      %v1332 = vadd.f32 %v1162, %v1314
      %v1333 = vadd.f32 %v1163, %v1316
      %v1334 = vld [vmem:[#allocation2 + $0x18] sm:$0xff]
      %v1335 = vld [vmem:[#allocation2 + $0x20] sm:$0xff]
      %v1336 = vld [vmem:[#allocation2 + $0x28] sm:$0xff]
      %v1337 = vld [vmem:[#allocation2 + $0x30] sm:$0xff]
      %v1338 = vld [vmem:[#allocation2 + $0x38] sm:$0xff]
      %v1339 = vld [vmem:[#allocation2 + $0x40] sm:$0xff]
      %v1340 = vld [vmem:[#allocation2 + $0x48] sm:$0xff]
      %v1341 = vld [vmem:[#allocation2 + $0x50] sm:$0xff]
      %v1342 = vld [vmem:[#allocation2 + $0x58] sm:$0xff]
      %v1343 = vld [vmem:[#allocation2 + $0x60] sm:$0xff]
      %v1344 = vld [vmem:[#allocation2 + $0x68] sm:$0xff]
      %v1345 = vld [vmem:[#allocation2 + $0x70] sm:$0xff]
      %v1346 = vld [vmem:[#allocation2 + $0x78] sm:$0xff]
      %v1347 = vld [vmem:[#allocation2 + $0x80] sm:$0xff]
      %v1348 = vld [vmem:[#allocation2 + $0x88] sm:$0xff]
      %v1349 = vld [vmem:[#allocation2 + $0x90] sm:$0xff]
      %v1350 = vpack.c.bf16 %v1335, %v1334
      %v1351 = vpack.c.bf16 %v1337, %v1336
      %v1352 = vpack.c.bf16 %v1339, %v1338
      %v1353 = vpack.c.bf16 %v1341, %v1340
      %v1354 = vpack.c.bf16 %v1343, %v1342
      %v1355 = vpack.c.bf16 %v1345, %v1344
      %v1356 = vpack.c.bf16 %v1347, %v1346
      %v1357 = vpack.c.bf16 %v1349, %v1348
      %s1358 = scalar_lea.vmem %s361, 256
      %v1359 = vld [vmem:[%s1358] sm:$0xf]
      %v1360 = vld [vmem:[%s1358 + $0x4] sm:$0xf]
      %v1361 = vld [vmem:[%s1358 + $0x8] sm:$0xf]
      %v1362 = vld [vmem:[%s1358 + $0xc] sm:$0xf]
      %v1363 = vld [vmem:[%s1358 + $0x10] sm:$0xf]
      %v1364 = vld [vmem:[%s1358 + $0x14] sm:$0xf]
      %v1365 = vld [vmem:[%s1358 + $0x18] sm:$0xf]
      %v1366 = vld [vmem:[%s1358 + $0x1c] sm:$0xf]
      %v1367 = vld [vmem:[%s1358 + $0x20] sm:$0xf]
      %v1368 = vld [vmem:[%s1358 + $0x24] sm:$0xf]
      %v1369 = vld [vmem:[%s1358 + $0x28] sm:$0xf]
      %v1370 = vld [vmem:[%s1358 + $0x2c] sm:$0xf]
      %v1371 = vld [vmem:[%s1358 + $0x30] sm:$0xf]
      %v1372 = vld [vmem:[%s1358 + $0x34] sm:$0xf]
      %v1373 = vld [vmem:[%s1358 + $0x38] sm:$0xf]
      %v1374 = vld [vmem:[%s1358 + $0x3c] sm:$0xf]
      %v1391 = vunpack.c.l.b16 %v1359
      %v1392 = vunpack.c.l.b16 %v1360
      %v1393 = vunpack.c.l.b16 %v1361
      %v1394 = vunpack.c.l.b16 %v1362
      %v1395 = vunpack.c.l.b16 %v1363
      %v1396 = vunpack.c.l.b16 %v1364
      %v1397 = vunpack.c.l.b16 %v1365
      %v1398 = vunpack.c.l.b16 %v1366
      %v1399 = vunpack.c.l.b16 %v1367
      %v1400 = vunpack.c.l.b16 %v1368
      %v1401 = vunpack.c.l.b16 %v1369
      %v1402 = vunpack.c.l.b16 %v1370
      %v1403 = vunpack.c.l.b16 %v1371
      %v1404 = vunpack.c.l.b16 %v1372
      %v1405 = vunpack.c.l.b16 %v1373
      %v1406 = vunpack.c.l.b16 %v1374
      %v1407 = vpack.c.b16 %v1392, %v1391
      %v1408 = vpack.c.b16 %v1394, %v1393
      %v1409 = vpack.c.b16 %v1396, %v1395
      %v1410 = vpack.c.b16 %v1398, %v1397
      %v1411 = vpack.c.b16 %v1400, %v1399
      %v1412 = vpack.c.b16 %v1402, %v1401
      %v1413 = vpack.c.b16 %v1404, %v1403
      %v1414 = vpack.c.b16 %v1406, %v1405
      %1423 = vmatpush.bf16.msra.mxu0 %v1414
      %1424 = vmatpush.bf16.msra.mxu0 %v1413
      %1425 = vmatpush.bf16.msra.mxu0 %v1412
      %1426 = vmatpush.bf16.msra.mxu0 %v1411
      %1427 = vmatpush.bf16.msra.mxu0 %v1410
      %1428 = vmatpush.bf16.msra.mxu0 %v1409
      %1429 = vmatpush.bf16.msra.mxu0 %v1408
      %1430 = vmatpush.bf16.msra.mxu0 %v1407
      %1431 = vmatmul.bf16.gmra.mxu0 %v1350
      %v1432 = vpop.f32.mrf.mxu0
      %v1433 = vadd.f32 0.0, %v1432
      %v1434 = vpop.f32.mrf.mxu0
      %v1435 = vadd.f32 0.0, %v1434
      %1436 = vmatmul.bf16.gmra.mxu0 %v1351
      %v1437 = vpop.f32.mrf.mxu0
      %v1438 = vadd.f32 0.0, %v1437
      %v1439 = vpop.f32.mrf.mxu0
      %v1440 = vadd.f32 0.0, %v1439
      %1441 = vmatmul.bf16.gmra.mxu0 %v1352
      %v1442 = vpop.f32.mrf.mxu0
      %v1443 = vadd.f32 0.0, %v1442
      %v1444 = vpop.f32.mrf.mxu0
      %v1445 = vadd.f32 0.0, %v1444
      %1446 = vmatmul.bf16.gmra.mxu0 %v1353
      %v1447 = vpop.f32.mrf.mxu0
      %v1448 = vadd.f32 0.0, %v1447
      %v1449 = vpop.f32.mrf.mxu0
      %v1450 = vadd.f32 0.0, %v1449
      %1451 = vmatmul.bf16.gmra.mxu0 %v1354
      %v1452 = vpop.f32.mrf.mxu0
      %v1453 = vadd.f32 0.0, %v1452
      %v1454 = vpop.f32.mrf.mxu0
      %v1455 = vadd.f32 0.0, %v1454
      %1456 = vmatmul.bf16.gmra.mxu0 %v1355
      %v1457 = vpop.f32.mrf.mxu0
      %v1458 = vadd.f32 0.0, %v1457
      %v1459 = vpop.f32.mrf.mxu0
      %v1460 = vadd.f32 0.0, %v1459
      %1461 = vmatmul.bf16.gmra.mxu0 %v1356
      %v1462 = vpop.f32.mrf.mxu0
      %v1463 = vadd.f32 0.0, %v1462
      %v1464 = vpop.f32.mrf.mxu0
      %v1465 = vadd.f32 0.0, %v1464
      %1466 = vmatmul.bf16.gmra.mxu0 %v1357
      %v1467 = vpop.f32.mrf.mxu0
      %v1468 = vadd.f32 0.0, %v1467
      %v1469 = vpop.f32.mrf.mxu0
      %v1470 = vadd.f32 0.0, %v1469
      %1471 = vdwg.mxu0
      %v1472 = vadd.f32 %v1318, %v1433
      %v1473 = vadd.f32 %v1319, %v1435
      %v1474 = vadd.f32 %v1320, %v1438
      %v1475 = vadd.f32 %v1321, %v1440
      %v1476 = vadd.f32 %v1322, %v1443
      %v1477 = vadd.f32 %v1323, %v1445
      %v1478 = vadd.f32 %v1324, %v1448
      %v1479 = vadd.f32 %v1325, %v1450
      %v1480 = vadd.f32 %v1326, %v1453
      %v1481 = vadd.f32 %v1327, %v1455
      %v1482 = vadd.f32 %v1328, %v1458
      %v1483 = vadd.f32 %v1329, %v1460
      %v1484 = vadd.f32 %v1330, %v1463
      %v1485 = vadd.f32 %v1331, %v1465
      %v1486 = vadd.f32 %v1332, %v1468
      %v1487 = vadd.f32 %v1333, %v1470
      %v1488 = vld [vmem:[#allocation2 + $0x19] sm:$0xff]
      %v1489 = vld [vmem:[#allocation2 + $0x21] sm:$0xff]
      %v1490 = vld [vmem:[#allocation2 + $0x29] sm:$0xff]
      %v1491 = vld [vmem:[#allocation2 + $0x31] sm:$0xff]
      %v1492 = vld [vmem:[#allocation2 + $0x39] sm:$0xff]
      %v1493 = vld [vmem:[#allocation2 + $0x41] sm:$0xff]
      %v1494 = vld [vmem:[#allocation2 + $0x49] sm:$0xff]
      %v1495 = vld [vmem:[#allocation2 + $0x51] sm:$0xff]
      %v1496 = vld [vmem:[#allocation2 + $0x59] sm:$0xff]
      %v1497 = vld [vmem:[#allocation2 + $0x61] sm:$0xff]
      %v1498 = vld [vmem:[#allocation2 + $0x69] sm:$0xff]
      %v1499 = vld [vmem:[#allocation2 + $0x71] sm:$0xff]
      %v1500 = vld [vmem:[#allocation2 + $0x79] sm:$0xff]
      %v1501 = vld [vmem:[#allocation2 + $0x81] sm:$0xff]
      %v1502 = vld [vmem:[#allocation2 + $0x89] sm:$0xff]
      %v1503 = vld [vmem:[#allocation2 + $0x91] sm:$0xff]
      %v1504 = vsel %vm687, %v1488, 0.0
      %v1505 = vsel %vm688, %v1489, 0.0
      %v1506 = vsel %vm689, %v1490, 0.0
      %v1507 = vsel %vm690, %v1491, 0.0
      %v1508 = vsel %vm691, %v1492, 0.0
      %v1509 = vsel %vm692, %v1493, 0.0
      %v1510 = vsel %vm693, %v1494, 0.0
      %v1511 = vsel %vm694, %v1495, 0.0
      %v1512 = vsel %vm695, %v1496, 0.0
      %v1513 = vsel %vm696, %v1497, 0.0
      %v1514 = vsel %vm697, %v1498, 0.0
      %v1515 = vsel %vm698, %v1499, 0.0
      %v1516 = vsel %vm699, %v1500, 0.0
      %v1517 = vsel %vm700, %v1501, 0.0
      %v1518 = vsel %vm701, %v1502, 0.0
      %v1519 = vsel %vm702, %v1503, 0.0
      %v1520 = vpack.c.bf16 %v1505, %v1504
      %v1521 = vpack.c.bf16 %v1507, %v1506
      %v1522 = vpack.c.bf16 %v1509, %v1508
      %v1523 = vpack.c.bf16 %v1511, %v1510
      %v1524 = vpack.c.bf16 %v1513, %v1512
      %v1525 = vpack.c.bf16 %v1515, %v1514
      %v1526 = vpack.c.bf16 %v1517, %v1516
      %v1527 = vpack.c.bf16 %v1519, %v1518
      %s1528 = scalar_lea.vmem %s361, 320
      %v1529 = vld [vmem:[%s1528] sm:$0xf]
      %v1530 = vld [vmem:[%s1528 + $0x4] sm:$0xf]
      %v1531 = vld [vmem:[%s1528 + $0x8] sm:$0xf]
      %v1532 = vld [vmem:[%s1528 + $0xc] sm:$0xf]
      %v1533 = vld [vmem:[%s1528 + $0x10] sm:$0xf]
      %v1534 = vld [vmem:[%s1528 + $0x14] sm:$0xf]
      %v1535 = vld [vmem:[%s1528 + $0x18] sm:$0xf]
      %v1536 = vld [vmem:[%s1528 + $0x1c] sm:$0xf]
      %v1537 = vld [vmem:[%s1528 + $0x20] sm:$0xf]
      %v1538 = vld [vmem:[%s1528 + $0x24] sm:$0xf]
      %v1539 = vld [vmem:[%s1528 + $0x28] sm:$0xf]
      %v1540 = vld [vmem:[%s1528 + $0x2c] sm:$0xf]
      %v1541 = vld [vmem:[%s1528 + $0x30] sm:$0xf]
      %v1542 = vld [vmem:[%s1528 + $0x34] sm:$0xf]
      %v1543 = vld [vmem:[%s1528 + $0x38] sm:$0xf]
      %v1544 = vld [vmem:[%s1528 + $0x3c] sm:$0xf]
      %v1561 = vunpack.c.l.b16 %v1529
      %v1562 = vunpack.c.l.b16 %v1530
      %v1563 = vunpack.c.l.b16 %v1531
      %v1564 = vunpack.c.l.b16 %v1532
      %v1565 = vunpack.c.l.b16 %v1533
      %v1566 = vunpack.c.l.b16 %v1534
      %v1567 = vunpack.c.l.b16 %v1535
      %v1568 = vunpack.c.l.b16 %v1536
      %v1569 = vunpack.c.l.b16 %v1537
      %v1570 = vunpack.c.l.b16 %v1538
      %v1571 = vunpack.c.l.b16 %v1539
      %v1572 = vunpack.c.l.b16 %v1540
      %v1573 = vunpack.c.l.b16 %v1541
      %v1574 = vunpack.c.l.b16 %v1542
      %v1575 = vunpack.c.l.b16 %v1543
      %v1576 = vunpack.c.l.b16 %v1544
      %v1577 = vpack.c.b16 %v1562, %v1561
      %v1578 = vpack.c.b16 %v1564, %v1563
      %v1579 = vpack.c.b16 %v1566, %v1565
      %v1580 = vpack.c.b16 %v1568, %v1567
      %v1581 = vpack.c.b16 %v1570, %v1569
      %v1582 = vpack.c.b16 %v1572, %v1571
      %v1583 = vpack.c.b16 %v1574, %v1573
      %v1584 = vpack.c.b16 %v1576, %v1575
      %1593 = vmatpush.bf16.msra.mxu0 %v1584
      %1594 = vmatpush.bf16.msra.mxu0 %v1583
      %1595 = vmatpush.bf16.msra.mxu0 %v1582
      %1596 = vmatpush.bf16.msra.mxu0 %v1581
      %1597 = vmatpush.bf16.msra.mxu0 %v1580
      %1598 = vmatpush.bf16.msra.mxu0 %v1579
      %1599 = vmatpush.bf16.msra.mxu0 %v1578
      %1600 = vmatpush.bf16.msra.mxu0 %v1577
      %1601 = vmatmul.bf16.gmra.mxu0 %v1520
      %v1602 = vpop.f32.mrf.mxu0
      %v1603 = vadd.f32 0.0, %v1602
      %v1604 = vpop.f32.mrf.mxu0
      %v1605 = vadd.f32 0.0, %v1604
      %1606 = vmatmul.bf16.gmra.mxu0 %v1521
      %v1607 = vpop.f32.mrf.mxu0
      %v1608 = vadd.f32 0.0, %v1607
      %v1609 = vpop.f32.mrf.mxu0
      %v1610 = vadd.f32 0.0, %v1609
      %1611 = vmatmul.bf16.gmra.mxu0 %v1522
      %v1612 = vpop.f32.mrf.mxu0
      %v1613 = vadd.f32 0.0, %v1612
      %v1614 = vpop.f32.mrf.mxu0
      %v1615 = vadd.f32 0.0, %v1614
      %1616 = vmatmul.bf16.gmra.mxu0 %v1523
      %v1617 = vpop.f32.mrf.mxu0
      %v1618 = vadd.f32 0.0, %v1617
      %v1619 = vpop.f32.mrf.mxu0
      %v1620 = vadd.f32 0.0, %v1619
      %1621 = vmatmul.bf16.gmra.mxu0 %v1524
      %v1622 = vpop.f32.mrf.mxu0
      %v1623 = vadd.f32 0.0, %v1622
      %v1624 = vpop.f32.mrf.mxu0
      %v1625 = vadd.f32 0.0, %v1624
      %1626 = vmatmul.bf16.gmra.mxu0 %v1525
      %v1627 = vpop.f32.mrf.mxu0
      %v1628 = vadd.f32 0.0, %v1627
      %v1629 = vpop.f32.mrf.mxu0
      %v1630 = vadd.f32 0.0, %v1629
      %1631 = vmatmul.bf16.gmra.mxu0 %v1526
      %v1632 = vpop.f32.mrf.mxu0
      %v1633 = vadd.f32 0.0, %v1632
      %v1634 = vpop.f32.mrf.mxu0
      %v1635 = vadd.f32 0.0, %v1634
      %1636 = vmatmul.bf16.gmra.mxu0 %v1527
      %v1637 = vpop.f32.mrf.mxu0
      %v1638 = vadd.f32 0.0, %v1637
      %v1639 = vpop.f32.mrf.mxu0
      %v1640 = vadd.f32 0.0, %v1639
      %1641 = vdwg.mxu0
      %v1642 = vadd.f32 %v1472, %v1603
      %v1643 = vadd.f32 %v1473, %v1605
      %v1644 = vadd.f32 %v1474, %v1608
      %v1645 = vadd.f32 %v1475, %v1610
      %v1646 = vadd.f32 %v1476, %v1613
      %v1647 = vadd.f32 %v1477, %v1615
      %v1648 = vadd.f32 %v1478, %v1618
      %v1649 = vadd.f32 %v1479, %v1620
      %v1650 = vadd.f32 %v1480, %v1623
      %v1651 = vadd.f32 %v1481, %v1625
      %v1652 = vadd.f32 %v1482, %v1628
      %v1653 = vadd.f32 %v1483, %v1630
      %v1654 = vadd.f32 %v1484, %v1633
      %v1655 = vadd.f32 %v1485, %v1635
      %v1656 = vadd.f32 %v1486, %v1638
      %v1657 = vadd.f32 %v1487, %v1640
      %v1658 = vld [vmem:[#allocation2 + $0x27] sm:$0xff]
      %v1659 = vld [vmem:[#allocation2 + $0x2f] sm:$0xff]
      %v1660 = vld [vmem:[#allocation2 + $0x37] sm:$0xff]
      %v1661 = vld [vmem:[#allocation2 + $0x3f] sm:$0xff]
      %v1662 = vld [vmem:[#allocation2 + $0x47] sm:$0xff]
      %v1663 = vld [vmem:[#allocation2 + $0x4f] sm:$0xff]
      %v1664 = vld [vmem:[#allocation2 + $0x57] sm:$0xff]
      %v1665 = vld [vmem:[#allocation2 + $0x5f] sm:$0xff]
      %v1666 = vld [vmem:[#allocation2 + $0x67] sm:$0xff]
      %v1667 = vld [vmem:[#allocation2 + $0x6f] sm:$0xff]
      %v1668 = vld [vmem:[#allocation2 + $0x77] sm:$0xff]
      %v1669 = vld [vmem:[#allocation2 + $0x7f] sm:$0xff]
      %v1670 = vld [vmem:[#allocation2 + $0x87] sm:$0xff]
      %v1671 = vld [vmem:[#allocation2 + $0x8f] sm:$0xff]
      %v1672 = vld [vmem:[#allocation2 + $0x97] sm:$0xff]
      %v1673 = vld [vmem:[#allocation2 + $0x9f] sm:$0xff]
      %v1674 = vsel %vm671, %v1658, 0.0
      %v1675 = vsel %vm672, %v1659, 0.0
      %v1676 = vsel %vm673, %v1660, 0.0
      %v1677 = vsel %vm674, %v1661, 0.0
      %v1678 = vsel %vm675, %v1662, 0.0
      %v1679 = vsel %vm676, %v1663, 0.0
      %v1680 = vsel %vm677, %v1664, 0.0
      %v1681 = vsel %vm678, %v1665, 0.0
      %v1682 = vsel %vm679, %v1666, 0.0
      %v1683 = vsel %vm680, %v1667, 0.0
      %v1684 = vsel %vm681, %v1668, 0.0
      %v1685 = vsel %vm682, %v1669, 0.0
      %v1686 = vsel %vm683, %v1670, 0.0
      %v1687 = vsel %vm684, %v1671, 0.0
      %v1688 = vsel %vm685, %v1672, 0.0
      %v1689 = vsel %vm686, %v1673, 0.0
      %v1690 = vpack.c.bf16 %v1675, %v1674
      %v1691 = vpack.c.bf16 %v1677, %v1676
      %v1692 = vpack.c.bf16 %v1679, %v1678
      %v1693 = vpack.c.bf16 %v1681, %v1680
      %v1694 = vpack.c.bf16 %v1683, %v1682
      %v1695 = vpack.c.bf16 %v1685, %v1684
      %v1696 = vpack.c.bf16 %v1687, %v1686
      %v1697 = vpack.c.bf16 %v1689, %v1688
      %s1698 = scalar_lea.vmem %s361, 384
      %v1699 = vld [vmem:[%s1698] sm:$0xf]
      %v1700 = vld [vmem:[%s1698 + $0x4] sm:$0xf]
      %v1701 = vld [vmem:[%s1698 + $0x8] sm:$0xf]
      %v1702 = vld [vmem:[%s1698 + $0xc] sm:$0xf]
      %v1703 = vld [vmem:[%s1698 + $0x10] sm:$0xf]
      %v1704 = vld [vmem:[%s1698 + $0x14] sm:$0xf]
      %v1705 = vld [vmem:[%s1698 + $0x18] sm:$0xf]
      %v1706 = vld [vmem:[%s1698 + $0x1c] sm:$0xf]
      %v1707 = vld [vmem:[%s1698 + $0x20] sm:$0xf]
      %v1708 = vld [vmem:[%s1698 + $0x24] sm:$0xf]
      %v1709 = vld [vmem:[%s1698 + $0x28] sm:$0xf]
      %v1710 = vld [vmem:[%s1698 + $0x2c] sm:$0xf]
      %v1711 = vld [vmem:[%s1698 + $0x30] sm:$0xf]
      %v1712 = vld [vmem:[%s1698 + $0x34] sm:$0xf]
      %v1713 = vld [vmem:[%s1698 + $0x38] sm:$0xf]
      %v1714 = vld [vmem:[%s1698 + $0x3c] sm:$0xf]
      %v1731 = vunpack.c.l.b16 %v1699
      %v1732 = vunpack.c.l.b16 %v1700
      %v1733 = vunpack.c.l.b16 %v1701
      %v1734 = vunpack.c.l.b16 %v1702
      %v1735 = vunpack.c.l.b16 %v1703
      %v1736 = vunpack.c.l.b16 %v1704
      %v1737 = vunpack.c.l.b16 %v1705
      %v1738 = vunpack.c.l.b16 %v1706
      %v1739 = vunpack.c.l.b16 %v1707
      %v1740 = vunpack.c.l.b16 %v1708
      %v1741 = vunpack.c.l.b16 %v1709
      %v1742 = vunpack.c.l.b16 %v1710
      %v1743 = vunpack.c.l.b16 %v1711
      %v1744 = vunpack.c.l.b16 %v1712
      %v1745 = vunpack.c.l.b16 %v1713
      %v1746 = vunpack.c.l.b16 %v1714
      %v1747 = vpack.c.b16 %v1732, %v1731
      %v1748 = vpack.c.b16 %v1734, %v1733
      %v1749 = vpack.c.b16 %v1736, %v1735
      %v1750 = vpack.c.b16 %v1738, %v1737
      %v1751 = vpack.c.b16 %v1740, %v1739
      %v1752 = vpack.c.b16 %v1742, %v1741
      %v1753 = vpack.c.b16 %v1744, %v1743
      %v1754 = vpack.c.b16 %v1746, %v1745
      %1763 = vmatpush.bf16.msra.mxu0 %v1754
      %1764 = vmatpush.bf16.msra.mxu0 %v1753
      %1765 = vmatpush.bf16.msra.mxu0 %v1752
      %1766 = vmatpush.bf16.msra.mxu0 %v1751
      %1767 = vmatpush.bf16.msra.mxu0 %v1750
      %1768 = vmatpush.bf16.msra.mxu0 %v1749
      %1769 = vmatpush.bf16.msra.mxu0 %v1748
      %1770 = vmatpush.bf16.msra.mxu0 %v1747
      %1771 = vmatmul.bf16.gmra.mxu0 %v1690
      %v1772 = vpop.f32.mrf.mxu0
      %v1773 = vadd.f32 0.0, %v1772
      %v1774 = vpop.f32.mrf.mxu0
      %v1775 = vadd.f32 0.0, %v1774
      %1776 = vmatmul.bf16.gmra.mxu0 %v1691
      %v1777 = vpop.f32.mrf.mxu0
      %v1778 = vadd.f32 0.0, %v1777
      %v1779 = vpop.f32.mrf.mxu0
      %v1780 = vadd.f32 0.0, %v1779
      %1781 = vmatmul.bf16.gmra.mxu0 %v1692
      %v1782 = vpop.f32.mrf.mxu0
      %v1783 = vadd.f32 0.0, %v1782
      %v1784 = vpop.f32.mrf.mxu0
      %v1785 = vadd.f32 0.0, %v1784
      %1786 = vmatmul.bf16.gmra.mxu0 %v1693
      %v1787 = vpop.f32.mrf.mxu0
      %v1788 = vadd.f32 0.0, %v1787
      %v1789 = vpop.f32.mrf.mxu0
      %v1790 = vadd.f32 0.0, %v1789
      %1791 = vmatmul.bf16.gmra.mxu0 %v1694
      %v1792 = vpop.f32.mrf.mxu0
      %v1793 = vadd.f32 0.0, %v1792
      %v1794 = vpop.f32.mrf.mxu0
      %v1795 = vadd.f32 0.0, %v1794
      %1796 = vmatmul.bf16.gmra.mxu0 %v1695
      %v1797 = vpop.f32.mrf.mxu0
      %v1798 = vadd.f32 0.0, %v1797
      %v1799 = vpop.f32.mrf.mxu0
      %v1800 = vadd.f32 0.0, %v1799
      %1801 = vmatmul.bf16.gmra.mxu0 %v1696
      %v1802 = vpop.f32.mrf.mxu0
      %v1803 = vadd.f32 0.0, %v1802
      %v1804 = vpop.f32.mrf.mxu0
      %v1805 = vadd.f32 0.0, %v1804
      %1806 = vmatmul.bf16.gmra.mxu0 %v1697
      %v1807 = vpop.f32.mrf.mxu0
      %v1808 = vadd.f32 0.0, %v1807
      %v1809 = vpop.f32.mrf.mxu0
      %v1810 = vadd.f32 0.0, %v1809
      %1811 = vdwg.mxu0
      %v1812 = vadd.f32 %v1642, %v1773
      %v1813 = vadd.f32 %v1643, %v1775
      %v1814 = vadd.f32 %v1644, %v1778
      %v1815 = vadd.f32 %v1645, %v1780
      %v1816 = vadd.f32 %v1646, %v1783
      %v1817 = vadd.f32 %v1647, %v1785
      %v1818 = vadd.f32 %v1648, %v1788
      %v1819 = vadd.f32 %v1649, %v1790
      %v1820 = vadd.f32 %v1650, %v1793
      %v1821 = vadd.f32 %v1651, %v1795
      %v1822 = vadd.f32 %v1652, %v1798
      %v1823 = vadd.f32 %v1653, %v1800
      %v1824 = vadd.f32 %v1654, %v1803
      %v1825 = vadd.f32 %v1655, %v1805
      %v1826 = vadd.f32 %v1656, %v1808
      %v1827 = vadd.f32 %v1657, %v1810
      %v1828 = vld [vmem:[#allocation2 + $0x28] sm:$0xff]
      %v1829 = vld [vmem:[#allocation2 + $0x30] sm:$0xff]
      %v1830 = vld [vmem:[#allocation2 + $0x38] sm:$0xff]
      %v1831 = vld [vmem:[#allocation2 + $0x40] sm:$0xff]
      %v1832 = vld [vmem:[#allocation2 + $0x48] sm:$0xff]
      %v1833 = vld [vmem:[#allocation2 + $0x50] sm:$0xff]
      %v1834 = vld [vmem:[#allocation2 + $0x58] sm:$0xff]
      %v1835 = vld [vmem:[#allocation2 + $0x60] sm:$0xff]
      %v1836 = vld [vmem:[#allocation2 + $0x68] sm:$0xff]
      %v1837 = vld [vmem:[#allocation2 + $0x70] sm:$0xff]
      %v1838 = vld [vmem:[#allocation2 + $0x78] sm:$0xff]
      %v1839 = vld [vmem:[#allocation2 + $0x80] sm:$0xff]
      %v1840 = vld [vmem:[#allocation2 + $0x88] sm:$0xff]
      %v1841 = vld [vmem:[#allocation2 + $0x90] sm:$0xff]
      %v1842 = vld [vmem:[#allocation2 + $0x98] sm:$0xff]
      %v1843 = vld [vmem:[#allocation2 + $0xa0] sm:$0xff]
      %v1844 = vpack.c.bf16 %v1829, %v1828
      %v1845 = vpack.c.bf16 %v1831, %v1830
      %v1846 = vpack.c.bf16 %v1833, %v1832
      %v1847 = vpack.c.bf16 %v1835, %v1834
      %v1848 = vpack.c.bf16 %v1837, %v1836
      %v1849 = vpack.c.bf16 %v1839, %v1838
      %v1850 = vpack.c.bf16 %v1841, %v1840
      %v1851 = vpack.c.bf16 %v1843, %v1842
      %s1852 = scalar_lea.vmem %s361, 448
      %v1853 = vld [vmem:[%s1852] sm:$0xf]
      %v1854 = vld [vmem:[%s1852 + $0x4] sm:$0xf]
      %v1855 = vld [vmem:[%s1852 + $0x8] sm:$0xf]
      %v1856 = vld [vmem:[%s1852 + $0xc] sm:$0xf]
      %v1857 = vld [vmem:[%s1852 + $0x10] sm:$0xf]
      %v1858 = vld [vmem:[%s1852 + $0x14] sm:$0xf]
      %v1859 = vld [vmem:[%s1852 + $0x18] sm:$0xf]
      %v1860 = vld [vmem:[%s1852 + $0x1c] sm:$0xf]
      %v1861 = vld [vmem:[%s1852 + $0x20] sm:$0xf]
      %v1862 = vld [vmem:[%s1852 + $0x24] sm:$0xf]
      %v1863 = vld [vmem:[%s1852 + $0x28] sm:$0xf]
      %v1864 = vld [vmem:[%s1852 + $0x2c] sm:$0xf]
      %v1865 = vld [vmem:[%s1852 + $0x30] sm:$0xf]
      %v1866 = vld [vmem:[%s1852 + $0x34] sm:$0xf]
      %v1867 = vld [vmem:[%s1852 + $0x38] sm:$0xf]
      %v1868 = vld [vmem:[%s1852 + $0x3c] sm:$0xf]
      %v1885 = vunpack.c.l.b16 %v1853
      %v1886 = vunpack.c.l.b16 %v1854
      %v1887 = vunpack.c.l.b16 %v1855
      %v1888 = vunpack.c.l.b16 %v1856
      %v1889 = vunpack.c.l.b16 %v1857
      %v1890 = vunpack.c.l.b16 %v1858
      %v1891 = vunpack.c.l.b16 %v1859
      %v1892 = vunpack.c.l.b16 %v1860
      %v1893 = vunpack.c.l.b16 %v1861
      %v1894 = vunpack.c.l.b16 %v1862
      %v1895 = vunpack.c.l.b16 %v1863
      %v1896 = vunpack.c.l.b16 %v1864
      %v1897 = vunpack.c.l.b16 %v1865
      %v1898 = vunpack.c.l.b16 %v1866
      %v1899 = vunpack.c.l.b16 %v1867
      %v1900 = vunpack.c.l.b16 %v1868
      %v1901 = vpack.c.b16 %v1886, %v1885
      %v1902 = vpack.c.b16 %v1888, %v1887
      %v1903 = vpack.c.b16 %v1890, %v1889
      %v1904 = vpack.c.b16 %v1892, %v1891
      %v1905 = vpack.c.b16 %v1894, %v1893
      %v1906 = vpack.c.b16 %v1896, %v1895
      %v1907 = vpack.c.b16 %v1898, %v1897
      %v1908 = vpack.c.b16 %v1900, %v1899
      %1917 = vmatpush.bf16.msra.mxu0 %v1908
      %1918 = vmatpush.bf16.msra.mxu0 %v1907
      %1919 = vmatpush.bf16.msra.mxu0 %v1906
      %1920 = vmatpush.bf16.msra.mxu0 %v1905
      %1921 = vmatpush.bf16.msra.mxu0 %v1904
      %1922 = vmatpush.bf16.msra.mxu0 %v1903
      %1923 = vmatpush.bf16.msra.mxu0 %v1902
      %1924 = vmatpush.bf16.msra.mxu0 %v1901
      %1925 = vmatmul.bf16.gmra.mxu0 %v1844
      %v1926 = vpop.f32.mrf.mxu0
      %v1927 = vadd.f32 0.0, %v1926
      %v1928 = vpop.f32.mrf.mxu0
      %v1929 = vadd.f32 0.0, %v1928
      %1930 = vmatmul.bf16.gmra.mxu0 %v1845
      %v1931 = vpop.f32.mrf.mxu0
      %v1932 = vadd.f32 0.0, %v1931
      %v1933 = vpop.f32.mrf.mxu0
      %v1934 = vadd.f32 0.0, %v1933
      %1935 = vmatmul.bf16.gmra.mxu0 %v1846
      %v1936 = vpop.f32.mrf.mxu0
      %v1937 = vadd.f32 0.0, %v1936
      %v1938 = vpop.f32.mrf.mxu0
      %v1939 = vadd.f32 0.0, %v1938
      %1940 = vmatmul.bf16.gmra.mxu0 %v1847
      %v1941 = vpop.f32.mrf.mxu0
      %v1942 = vadd.f32 0.0, %v1941
      %v1943 = vpop.f32.mrf.mxu0
      %v1944 = vadd.f32 0.0, %v1943
      %1945 = vmatmul.bf16.gmra.mxu0 %v1848
      %v1946 = vpop.f32.mrf.mxu0
      %v1947 = vadd.f32 0.0, %v1946
      %v1948 = vpop.f32.mrf.mxu0
      %v1949 = vadd.f32 0.0, %v1948
      %1950 = vmatmul.bf16.gmra.mxu0 %v1849
      %v1951 = vpop.f32.mrf.mxu0
      %v1952 = vadd.f32 0.0, %v1951
      %v1953 = vpop.f32.mrf.mxu0
      %v1954 = vadd.f32 0.0, %v1953
      %1955 = vmatmul.bf16.gmra.mxu0 %v1850
      %v1956 = vpop.f32.mrf.mxu0
      %v1957 = vadd.f32 0.0, %v1956
      %v1958 = vpop.f32.mrf.mxu0
      %v1959 = vadd.f32 0.0, %v1958
      %1960 = vmatmul.bf16.gmra.mxu0 %v1851
      %v1961 = vpop.f32.mrf.mxu0
      %v1962 = vadd.f32 0.0, %v1961
      %v1963 = vpop.f32.mrf.mxu0
      %v1964 = vadd.f32 0.0, %v1963
      %1965 = vdwg.mxu0
      %v1966 = vadd.f32 %v1812, %v1927
      %v1967 = vadd.f32 %v1813, %v1929
      %v1968 = vadd.f32 %v1814, %v1932
      %v1969 = vadd.f32 %v1815, %v1934
      %v1970 = vadd.f32 %v1816, %v1937
      %v1971 = vadd.f32 %v1817, %v1939
      %v1972 = vadd.f32 %v1818, %v1942
      %v1973 = vadd.f32 %v1819, %v1944
      %v1974 = vadd.f32 %v1820, %v1947
      %v1975 = vadd.f32 %v1821, %v1949
      %v1976 = vadd.f32 %v1822, %v1952
      %v1977 = vadd.f32 %v1823, %v1954
      %v1978 = vadd.f32 %v1824, %v1957
      %v1979 = vadd.f32 %v1825, %v1959
      %v1980 = vadd.f32 %v1826, %v1962
      %v1981 = vadd.f32 %v1827, %v1964
      %v1982 = vld [vmem:[#allocation2 + $0x29] sm:$0xff]
      %v1983 = vld [vmem:[#allocation2 + $0x31] sm:$0xff]
      %v1984 = vld [vmem:[#allocation2 + $0x39] sm:$0xff]
      %v1985 = vld [vmem:[#allocation2 + $0x41] sm:$0xff]
      %v1986 = vld [vmem:[#allocation2 + $0x49] sm:$0xff]
      %v1987 = vld [vmem:[#allocation2 + $0x51] sm:$0xff]
      %v1988 = vld [vmem:[#allocation2 + $0x59] sm:$0xff]
      %v1989 = vld [vmem:[#allocation2 + $0x61] sm:$0xff]
      %v1990 = vld [vmem:[#allocation2 + $0x69] sm:$0xff]
      %v1991 = vld [vmem:[#allocation2 + $0x71] sm:$0xff]
      %v1992 = vld [vmem:[#allocation2 + $0x79] sm:$0xff]
      %v1993 = vld [vmem:[#allocation2 + $0x81] sm:$0xff]
      %v1994 = vld [vmem:[#allocation2 + $0x89] sm:$0xff]
      %v1995 = vld [vmem:[#allocation2 + $0x91] sm:$0xff]
      %v1996 = vld [vmem:[#allocation2 + $0x99] sm:$0xff]
      %v1997 = vld [vmem:[#allocation2 + $0xa1] sm:$0xff]
      %v1998 = vsel %vm687, %v1982, 0.0
      %v1999 = vsel %vm688, %v1983, 0.0
      %v2000 = vsel %vm689, %v1984, 0.0
      %v2001 = vsel %vm690, %v1985, 0.0
      %v2002 = vsel %vm691, %v1986, 0.0
      %v2003 = vsel %vm692, %v1987, 0.0
      %v2004 = vsel %vm693, %v1988, 0.0
      %v2005 = vsel %vm694, %v1989, 0.0
      %v2006 = vsel %vm695, %v1990, 0.0
      %v2007 = vsel %vm696, %v1991, 0.0
      %v2008 = vsel %vm697, %v1992, 0.0
      %v2009 = vsel %vm698, %v1993, 0.0
      %v2010 = vsel %vm699, %v1994, 0.0
      %v2011 = vsel %vm700, %v1995, 0.0
      %v2012 = vsel %vm701, %v1996, 0.0
      %v2013 = vsel %vm702, %v1997, 0.0
      %v2014 = vpack.c.bf16 %v1999, %v1998
      %v2015 = vpack.c.bf16 %v2001, %v2000
      %v2016 = vpack.c.bf16 %v2003, %v2002
      %v2017 = vpack.c.bf16 %v2005, %v2004
      %v2018 = vpack.c.bf16 %v2007, %v2006
      %v2019 = vpack.c.bf16 %v2009, %v2008
      %v2020 = vpack.c.bf16 %v2011, %v2010
      %v2021 = vpack.c.bf16 %v2013, %v2012
      %s2022 = scalar_lea.vmem %s361, 512
      %v2023 = vld [vmem:[%s2022] sm:$0xf]
      %v2024 = vld [vmem:[%s2022 + $0x4] sm:$0xf]
      %v2025 = vld [vmem:[%s2022 + $0x8] sm:$0xf]
      %v2026 = vld [vmem:[%s2022 + $0xc] sm:$0xf]
      %v2027 = vld [vmem:[%s2022 + $0x10] sm:$0xf]
      %v2028 = vld [vmem:[%s2022 + $0x14] sm:$0xf]
      %v2029 = vld [vmem:[%s2022 + $0x18] sm:$0xf]
      %v2030 = vld [vmem:[%s2022 + $0x1c] sm:$0xf]
      %v2031 = vld [vmem:[%s2022 + $0x20] sm:$0xf]
      %v2032 = vld [vmem:[%s2022 + $0x24] sm:$0xf]
      %v2033 = vld [vmem:[%s2022 + $0x28] sm:$0xf]
      %v2034 = vld [vmem:[%s2022 + $0x2c] sm:$0xf]
      %v2035 = vld [vmem:[%s2022 + $0x30] sm:$0xf]
      %v2036 = vld [vmem:[%s2022 + $0x34] sm:$0xf]
      %v2037 = vld [vmem:[%s2022 + $0x38] sm:$0xf]
      %v2038 = vld [vmem:[%s2022 + $0x3c] sm:$0xf]
      %v2055 = vunpack.c.l.b16 %v2023
      %v2056 = vunpack.c.l.b16 %v2024
      %v2057 = vunpack.c.l.b16 %v2025
      %v2058 = vunpack.c.l.b16 %v2026
      %v2059 = vunpack.c.l.b16 %v2027
      %v2060 = vunpack.c.l.b16 %v2028
      %v2061 = vunpack.c.l.b16 %v2029
      %v2062 = vunpack.c.l.b16 %v2030
      %v2063 = vunpack.c.l.b16 %v2031
      %v2064 = vunpack.c.l.b16 %v2032
      %v2065 = vunpack.c.l.b16 %v2033
      %v2066 = vunpack.c.l.b16 %v2034
      %v2067 = vunpack.c.l.b16 %v2035
      %v2068 = vunpack.c.l.b16 %v2036
      %v2069 = vunpack.c.l.b16 %v2037
      %v2070 = vunpack.c.l.b16 %v2038
      %v2071 = vpack.c.b16 %v2056, %v2055
      %v2072 = vpack.c.b16 %v2058, %v2057
      %v2073 = vpack.c.b16 %v2060, %v2059
      %v2074 = vpack.c.b16 %v2062, %v2061
      %v2075 = vpack.c.b16 %v2064, %v2063
      %v2076 = vpack.c.b16 %v2066, %v2065
      %v2077 = vpack.c.b16 %v2068, %v2067
      %v2078 = vpack.c.b16 %v2070, %v2069
      %2087 = vmatpush.bf16.msra.mxu0 %v2078
      %2088 = vmatpush.bf16.msra.mxu0 %v2077
      %2089 = vmatpush.bf16.msra.mxu0 %v2076
      %2090 = vmatpush.bf16.msra.mxu0 %v2075
      %2091 = vmatpush.bf16.msra.mxu0 %v2074
      %2092 = vmatpush.bf16.msra.mxu0 %v2073
      %2093 = vmatpush.bf16.msra.mxu0 %v2072
      %2094 = vmatpush.bf16.msra.mxu0 %v2071
      %2095 = vmatmul.bf16.gmra.mxu0 %v2014
      %v2096 = vpop.f32.mrf.mxu0
      %v2097 = vadd.f32 0.0, %v2096
      %v2098 = vpop.f32.mrf.mxu0
      %v2099 = vadd.f32 0.0, %v2098
      %2100 = vmatmul.bf16.gmra.mxu0 %v2015
      %v2101 = vpop.f32.mrf.mxu0
      %v2102 = vadd.f32 0.0, %v2101
      %v2103 = vpop.f32.mrf.mxu0
      %v2104 = vadd.f32 0.0, %v2103
      %2105 = vmatmul.bf16.gmra.mxu0 %v2016
      %v2106 = vpop.f32.mrf.mxu0
      %v2107 = vadd.f32 0.0, %v2106
      %v2108 = vpop.f32.mrf.mxu0
      %v2109 = vadd.f32 0.0, %v2108
      %2110 = vmatmul.bf16.gmra.mxu0 %v2017
      %v2111 = vpop.f32.mrf.mxu0
      %v2112 = vadd.f32 0.0, %v2111
      %v2113 = vpop.f32.mrf.mxu0
      %v2114 = vadd.f32 0.0, %v2113
      %2115 = vmatmul.bf16.gmra.mxu0 %v2018
      %v2116 = vpop.f32.mrf.mxu0
      %v2117 = vadd.f32 0.0, %v2116
      %v2118 = vpop.f32.mrf.mxu0
      %v2119 = vadd.f32 0.0, %v2118
      %2120 = vmatmul.bf16.gmra.mxu0 %v2019
      %v2121 = vpop.f32.mrf.mxu0
      %v2122 = vadd.f32 0.0, %v2121
      %v2123 = vpop.f32.mrf.mxu0
      %v2124 = vadd.f32 0.0, %v2123
      %2125 = vmatmul.bf16.gmra.mxu0 %v2020
      %v2126 = vpop.f32.mrf.mxu0
      %v2127 = vadd.f32 0.0, %v2126
      %v2128 = vpop.f32.mrf.mxu0
      %v2129 = vadd.f32 0.0, %v2128
      %2130 = vmatmul.bf16.gmra.mxu0 %v2021
      %v2131 = vpop.f32.mrf.mxu0
      %v2132 = vadd.f32 0.0, %v2131
      %v2133 = vpop.f32.mrf.mxu0
      %v2134 = vadd.f32 0.0, %v2133
      %2135 = vdwg.mxu0
      %v2136 = vadd.f32 %v1966, %v2097
      %v2137 = vadd.f32 %v1967, %v2099
      %v2138 = vadd.f32 %v1968, %v2102
      %v2139 = vadd.f32 %v1969, %v2104
      %v2140 = vadd.f32 %v1970, %v2107
      %v2141 = vadd.f32 %v1971, %v2109
      %v2142 = vadd.f32 %v1972, %v2112
      %v2143 = vadd.f32 %v1973, %v2114
      %v2144 = vadd.f32 %v1974, %v2117
      %v2145 = vadd.f32 %v1975, %v2119
      %v2146 = vadd.f32 %v1976, %v2122
      %v2147 = vadd.f32 %v1977, %v2124
      %v2148 = vadd.f32 %v1978, %v2127
      %v2149 = vadd.f32 %v1979, %v2129
      %v2150 = vadd.f32 %v1980, %v2132
      %v2151 = vadd.f32 %v1981, %v2134
      %v2152 = vld [vmem:[%s364] sm:$0x1]
      %v2154 = vperm.slane %v2152, 0
      %v2156 = vadd.f32 %v2136, %v2154
      %v2157 = vadd.f32 %v2137, %v2154
      %v2158 = vadd.f32 %v2138, %v2154
      %v2159 = vadd.f32 %v2139, %v2154
      %v2160 = vadd.f32 %v2140, %v2154
      %v2161 = vadd.f32 %v2141, %v2154
      %v2162 = vadd.f32 %v2142, %v2154
      %v2163 = vadd.f32 %v2143, %v2154
      %v2164 = vadd.f32 %v2144, %v2154
      %v2165 = vadd.f32 %v2145, %v2154
      %v2166 = vadd.f32 %v2146, %v2154
      %v2167 = vadd.f32 %v2147, %v2154
      %v2168 = vadd.f32 %v2148, %v2154
      %v2169 = vadd.f32 %v2149, %v2154
      %v2170 = vadd.f32 %v2150, %v2154
      %v2171 = vadd.f32 %v2151, %v2154
      %v2172 = vmax.f32 %v2156, 0.0
      %v2173 = vmax.f32 %v2157, 0.0
      %v2174 = vmax.f32 %v2158, 0.0
      %v2175 = vmax.f32 %v2159, 0.0
      %v2176 = vmax.f32 %v2160, 0.0
      %v2177 = vmax.f32 %v2161, 0.0
      %v2178 = vmax.f32 %v2162, 0.0
      %v2179 = vmax.f32 %v2163, 0.0
      %v2180 = vmax.f32 %v2164, 0.0
      %v2181 = vmax.f32 %v2165, 0.0
      %v2182 = vmax.f32 %v2166, 0.0
      %v2183 = vmax.f32 %v2167, 0.0
      %v2184 = vmax.f32 %v2168, 0.0
      %v2185 = vmax.f32 %v2169, 0.0
      %v2186 = vmax.f32 %v2170, 0.0
      %v2187 = vmax.f32 %v2171, 0.0
      %v2188 = vpack.c.bf16 %v2172, %v2172
      %v2189 = vpack.c.bf16 %v2173, %v2173
      %v2190 = vpack.c.bf16 %v2174, %v2174
      %v2191 = vpack.c.bf16 %v2175, %v2175
      %v2192 = vpack.c.bf16 %v2176, %v2176
      %v2193 = vpack.c.bf16 %v2177, %v2177
      %v2194 = vpack.c.bf16 %v2178, %v2178
      %v2195 = vpack.c.bf16 %v2179, %v2179
      %v2196 = vpack.c.bf16 %v2180, %v2180
      %v2197 = vpack.c.bf16 %v2181, %v2181
      %v2198 = vpack.c.bf16 %v2182, %v2182
      %v2199 = vpack.c.bf16 %v2183, %v2183
      %v2200 = vpack.c.bf16 %v2184, %v2184
      %v2201 = vpack.c.bf16 %v2185, %v2185
      %v2202 = vpack.c.bf16 %v2186, %v2186
      %v2203 = vpack.c.bf16 %v2187, %v2187
      %2204 = vst [vmem:[%s383] sm:$0xf] %v2188
      %2205 = vst [vmem:[%s383 + $0x4] sm:$0xf] %v2189
      %2206 = vst [vmem:[%s383 + $0x8] sm:$0xf] %v2190
      %2207 = vst [vmem:[%s383 + $0xc] sm:$0xf] %v2191
      %2208 = vst [vmem:[%s383 + $0x10] sm:$0xf] %v2192
      %2209 = vst [vmem:[%s383 + $0x14] sm:$0xf] %v2193
      %2210 = vst [vmem:[%s383 + $0x18] sm:$0xf] %v2194
      %2211 = vst [vmem:[%s383 + $0x1c] sm:$0xf] %v2195
      %2212 = vst [vmem:[%s383 + $0x20] sm:$0xf] %v2196
      %2213 = vst [vmem:[%s383 + $0x24] sm:$0xf] %v2197
      %2214 = vst [vmem:[%s383 + $0x28] sm:$0xf] %v2198
      %2215 = vst [vmem:[%s383 + $0x2c] sm:$0xf] %v2199
      %2216 = vst [vmem:[%s383 + $0x30] sm:$0xf] %v2200
      %2217 = vst [vmem:[%s383 + $0x34] sm:$0xf] %v2201
      %2218 = vst [vmem:[%s383 + $0x38] sm:$0xf] %v2202
      %2219 = vst [vmem:[%s383 + $0x3c] sm:$0xf] %v2203
      %v2220 = vld [vmem:[#allocation2 + $0x18] sm:$0xff]
      %v2221 = vld [vmem:[#allocation2 + $0x20] sm:$0xff]
      %v2222 = vld [vmem:[#allocation2 + $0x28] sm:$0xff]
      %v2223 = vld [vmem:[#allocation2 + $0x30] sm:$0xff]
      %v2224 = vld [vmem:[#allocation2 + $0x38] sm:$0xff]
      %v2225 = vld [vmem:[#allocation2 + $0x40] sm:$0xff]
      %v2226 = vld [vmem:[#allocation2 + $0x48] sm:$0xff]
      %v2227 = vld [vmem:[#allocation2 + $0x50] sm:$0xff]
      %v2228 = vld [vmem:[#allocation2 + $0x58] sm:$0xff]
      %v2229 = vld [vmem:[#allocation2 + $0x60] sm:$0xff]
      %v2230 = vld [vmem:[#allocation2 + $0x68] sm:$0xff]
      %v2231 = vld [vmem:[#allocation2 + $0x70] sm:$0xff]
      %v2232 = vld [vmem:[#allocation2 + $0x78] sm:$0xff]
      %v2233 = vld [vmem:[#allocation2 + $0x80] sm:$0xff]
      %v2234 = vld [vmem:[#allocation2 + $0x88] sm:$0xff]
      %v2235 = vld [vmem:[#allocation2 + $0x90] sm:$0xff]
      %v2236 = vpack.c.bf16 %v2221, %v2220
      %v2237 = vpack.c.bf16 %v2223, %v2222
      %v2238 = vpack.c.bf16 %v2225, %v2224
      %v2239 = vpack.c.bf16 %v2227, %v2226
      %v2240 = vpack.c.bf16 %v2229, %v2228
      %v2241 = vpack.c.bf16 %v2231, %v2230
      %v2242 = vpack.c.bf16 %v2233, %v2232
      %v2243 = vpack.c.bf16 %v2235, %v2234
      %v2244 = vld [vmem:[%s368] sm:$0xf]
      %v2245 = vld [vmem:[%s368 + $0x4] sm:$0xf]
      %v2246 = vld [vmem:[%s368 + $0x8] sm:$0xf]
      %v2247 = vld [vmem:[%s368 + $0xc] sm:$0xf]
      %v2248 = vld [vmem:[%s368 + $0x10] sm:$0xf]
      %v2249 = vld [vmem:[%s368 + $0x14] sm:$0xf]
      %v2250 = vld [vmem:[%s368 + $0x18] sm:$0xf]
      %v2251 = vld [vmem:[%s368 + $0x1c] sm:$0xf]
      %v2252 = vld [vmem:[%s368 + $0x20] sm:$0xf]
      %v2253 = vld [vmem:[%s368 + $0x24] sm:$0xf]
      %v2254 = vld [vmem:[%s368 + $0x28] sm:$0xf]
      %v2255 = vld [vmem:[%s368 + $0x2c] sm:$0xf]
      %v2256 = vld [vmem:[%s368 + $0x30] sm:$0xf]
      %v2257 = vld [vmem:[%s368 + $0x34] sm:$0xf]
      %v2258 = vld [vmem:[%s368 + $0x38] sm:$0xf]
      %v2259 = vld [vmem:[%s368 + $0x3c] sm:$0xf]
      %v2260 = vld [vmem:[%s371] sm:$0x1]
      %v2262 = vperm.slane %v2260, 0
      %v2280 = vunpack.c.l.b16 %v2244
      %v2281 = vunpack.c.l.b16 %v2245
      %v2282 = vunpack.c.l.b16 %v2246
      %v2283 = vunpack.c.l.b16 %v2247
      %v2284 = vunpack.c.l.b16 %v2248
      %v2285 = vunpack.c.l.b16 %v2249
      %v2286 = vunpack.c.l.b16 %v2250
      %v2287 = vunpack.c.l.b16 %v2251
      %v2288 = vunpack.c.l.b16 %v2252
      %v2289 = vunpack.c.l.b16 %v2253
      %v2290 = vunpack.c.l.b16 %v2254
      %v2291 = vunpack.c.l.b16 %v2255
      %v2292 = vunpack.c.l.b16 %v2256
      %v2293 = vunpack.c.l.b16 %v2257
      %v2294 = vunpack.c.l.b16 %v2258
      %v2295 = vunpack.c.l.b16 %v2259
      %v2296 = vpack.c.b16 %v2281, %v2280
      %v2297 = vpack.c.b16 %v2283, %v2282
      %v2298 = vpack.c.b16 %v2285, %v2284
      %v2299 = vpack.c.b16 %v2287, %v2286
      %v2300 = vpack.c.b16 %v2289, %v2288
      %v2301 = vpack.c.b16 %v2291, %v2290
      %v2302 = vpack.c.b16 %v2293, %v2292
      %v2303 = vpack.c.b16 %v2295, %v2294
      %2312 = vmatpush.bf16.msra.mxu0 %v2303
      %2313 = vmatpush.bf16.msra.mxu0 %v2302
      %2314 = vmatpush.bf16.msra.mxu0 %v2301
      %2315 = vmatpush.bf16.msra.mxu0 %v2300
      %2316 = vmatpush.bf16.msra.mxu0 %v2299
      %2317 = vmatpush.bf16.msra.mxu0 %v2298
      %2318 = vmatpush.bf16.msra.mxu0 %v2297
      %2319 = vmatpush.bf16.msra.mxu0 %v2296
      %2320 = vmatmul.bf16.gmra.mxu0 %v2236
      %v2321 = vpop.f32.mrf.mxu0
      %v2322 = vadd.f32 %v2262, %v2321
      %v2323 = vpop.f32.mrf.mxu0
      %v2324 = vadd.f32 %v2262, %v2323
      %2325 = vmatmul.bf16.gmra.mxu0 %v2237
      %v2326 = vpop.f32.mrf.mxu0
      %v2327 = vadd.f32 %v2262, %v2326
      %v2328 = vpop.f32.mrf.mxu0
      %v2329 = vadd.f32 %v2262, %v2328
      %2330 = vmatmul.bf16.gmra.mxu0 %v2238
      %v2331 = vpop.f32.mrf.mxu0
      %v2332 = vadd.f32 %v2262, %v2331
      %v2333 = vpop.f32.mrf.mxu0
      %v2334 = vadd.f32 %v2262, %v2333
      %2335 = vmatmul.bf16.gmra.mxu0 %v2239
      %v2336 = vpop.f32.mrf.mxu0
      %v2337 = vadd.f32 %v2262, %v2336
      %v2338 = vpop.f32.mrf.mxu0
      %v2339 = vadd.f32 %v2262, %v2338
      %2340 = vmatmul.bf16.gmra.mxu0 %v2240
      %v2341 = vpop.f32.mrf.mxu0
      %v2342 = vadd.f32 %v2262, %v2341
      %v2343 = vpop.f32.mrf.mxu0
      %v2344 = vadd.f32 %v2262, %v2343
      %2345 = vmatmul.bf16.gmra.mxu0 %v2241
      %v2346 = vpop.f32.mrf.mxu0
      %v2347 = vadd.f32 %v2262, %v2346
      %v2348 = vpop.f32.mrf.mxu0
      %v2349 = vadd.f32 %v2262, %v2348
      %2350 = vmatmul.bf16.gmra.mxu0 %v2242
      %v2351 = vpop.f32.mrf.mxu0
      %v2352 = vadd.f32 %v2262, %v2351
      %v2353 = vpop.f32.mrf.mxu0
      %v2354 = vadd.f32 %v2262, %v2353
      %2355 = vmatmul.bf16.gmra.mxu0 %v2243
      %v2356 = vpop.f32.mrf.mxu0
      %v2357 = vadd.f32 %v2262, %v2356
      %v2358 = vpop.f32.mrf.mxu0
      %v2359 = vadd.f32 %v2262, %v2358
      %2360 = vdwg.mxu0
      %v2361 = vpack.c.bf16 %v2322, %v2322
      %v2362 = vpack.c.bf16 %v2324, %v2324
      %v2363 = vpack.c.bf16 %v2327, %v2327
      %v2364 = vpack.c.bf16 %v2329, %v2329
      %v2365 = vpack.c.bf16 %v2332, %v2332
      %v2366 = vpack.c.bf16 %v2334, %v2334
      %v2367 = vpack.c.bf16 %v2337, %v2337
      %v2368 = vpack.c.bf16 %v2339, %v2339
      %v2369 = vpack.c.bf16 %v2342, %v2342
      %v2370 = vpack.c.bf16 %v2344, %v2344
      %v2371 = vpack.c.bf16 %v2347, %v2347
      %v2372 = vpack.c.bf16 %v2349, %v2349
      %v2373 = vpack.c.bf16 %v2352, %v2352
      %v2374 = vpack.c.bf16 %v2354, %v2354
      %v2375 = vpack.c.bf16 %v2357, %v2357
      %v2376 = vpack.c.bf16 %v2359, %v2359
      %2377 = vst [vmem:[%s395] sm:$0xf] %v2361
      %2378 = vst [vmem:[%s395 + $0x4] sm:$0xf] %v2362
      %2379 = vst [vmem:[%s395 + $0x8] sm:$0xf] %v2363
      %2380 = vst [vmem:[%s395 + $0xc] sm:$0xf] %v2364
      %2381 = vst [vmem:[%s395 + $0x10] sm:$0xf] %v2365
      %2382 = vst [vmem:[%s395 + $0x14] sm:$0xf] %v2366
      %2383 = vst [vmem:[%s395 + $0x18] sm:$0xf] %v2367
      %2384 = vst [vmem:[%s395 + $0x1c] sm:$0xf] %v2368
      %2385 = vst [vmem:[%s395 + $0x20] sm:$0xf] %v2369
      %2386 = vst [vmem:[%s395 + $0x24] sm:$0xf] %v2370
      %2387 = vst [vmem:[%s395 + $0x28] sm:$0xf] %v2371
      %2388 = vst [vmem:[%s395 + $0x2c] sm:$0xf] %v2372
      %2389 = vst [vmem:[%s395 + $0x30] sm:$0xf] %v2373
      %2390 = vst [vmem:[%s395 + $0x34] sm:$0xf] %v2374
      %2391 = vst [vmem:[%s395 + $0x38] sm:$0xf] %v2375
      %2392 = vst [vmem:[%s395 + $0x3c] sm:$0xf] %v2376
      %p2393 = scmp.lt.s32.totalorder %s23, 1
      %s2394 = scalar_select %p2393, %s23, 1
      %p2395 = scmp.lt.s32.totalorder %s24, 1
      %s2396 = scalar_select %p2395, %s24, 1
      %p2397 = scmp.lt.s32.totalorder %s25, 0
      %s2398 = scalar_select %p2397, %s25, 0
      %s2399 = smul.addr %s2396, 16
      %s2400 = sadd.s32 %s2398, %s2399
      %s2401 = smul.addr %s2394, 32
      %s2402 = sadd.s32 %s2400, %s2401
      %s2403 = smul.addr %s2402, 4
      %s2404 = scalar_lea.vmem %s5, %s2403
      %p2405 = scmp.lt.s32.totalorder %s23, 1
      %s2406 = scalar_select %p2405, %s23, 1
      %p2407 = scmp.lt.s32.totalorder %s24, 1
      %s2408 = scalar_select %p2407, %s24, 1
      %p2409 = scmp.lt.s32.totalorder %s25, 0
      %s2410 = scalar_select %p2409, %s25, 0
      %s2411 = smul.addr %s2408, 16
      %s2412 = sadd.s32 %s2410, %s2411
      %s2413 = smul.addr %s2406, 32
      %s2414 = sadd.s32 %s2412, %s2413
      %s2415 = smul.addr %s2414, 4
      %s2416 = scalar_lea.vmem %s6, %s2415
      // Predicated region
      $region41: #{resnet_forward.11} parent=39 // pred_check
        %p2417 = pneg %p191
      $region42: #{resnet_forward.11} parent=39 // pred_check_branch
        %2419 = sbr.rel (%p2417) target = $region44
      $region43: #{resnet_forward.11} parent=39 // pred_region
        _
      $region44: #{resnet_forward.11} parent=39 // pred_fallthru
        _
      // Predicated region
      $region45: #{resnet_forward.11} parent=39 // pred_check
        %p2420 = pneg %p221
      $region46: #{resnet_forward.11} parent=39 // pred_check_branch
        %2422 = sbr.rel (%p2420) target = $region48
      $region47: #{resnet_forward.11} parent=39 // pred_region
        _
      $region48: #{resnet_forward.11} parent=39 // pred_fallthru
        _
    $region40: #{resnet_forward.11} parent=5 // pred_fallthru
      _
    %p2423 = scmp.le.s32.totalorder 2, %s13
    // Predicated region
    $region49: #{resnet_forward.11} parent=5 // pred_check
      %p2424 = pneg %p2423
    $region50: #{resnet_forward.11} parent=5 // pred_check_branch
      %2426 = sbr.rel (%p2424) target = $region52
    $region51: #{resnet_forward.11} parent=5 // pred_region
      %s2427 = ssub.s32 %s13, 2
      // Predicated region
      $region53: #{resnet_forward.11} parent=51 // pred_check
        %p2428 = pneg %p197
      $region54: #{resnet_forward.11} parent=51 // pred_check_branch
        %2430 = sbr.rel (%p2428) target = $region56
      $region55: #{resnet_forward.11} parent=51 // pred_region
        %p2431 = scmp.lt.s32.totalorder %s26, 1
        %s2432 = scalar_select %p2431, %s26, 1
        %p2433 = scmp.lt.s32.totalorder %s27, 1
        %s2434 = scalar_select %p2433, %s27, 1
        %p2435 = scmp.lt.s32.totalorder %s28, 0
        %s2436 = scalar_select %p2435, %s28, 0
        %s2437 = smul.addr %s2434, 16
        %s2438 = sadd.s32 %s2436, %s2437
        %s2439 = smul.addr %s2432, 32
        %s2440 = sadd.s32 %s2438, %s2439
        %s2441 = smul.addr %s2440, 4
        %s2442 = scalar_lea.vmem %s5, %s2441
      $region56: #{resnet_forward.11} parent=51 // pred_fallthru
        _
      // Predicated region
      $region57: #{resnet_forward.11} parent=51 // pred_check
        %p2443 = pneg %p227
      $region58: #{resnet_forward.11} parent=51 // pred_check_branch
        %2445 = sbr.rel (%p2443) target = $region60
      $region59: #{resnet_forward.11} parent=51 // pred_region
        %p2446 = scmp.lt.s32.totalorder %s26, 1
        %s2447 = scalar_select %p2446, %s26, 1
        %p2448 = scmp.lt.s32.totalorder %s27, 1
        %s2449 = scalar_select %p2448, %s27, 1
        %p2450 = scmp.lt.s32.totalorder %s28, 0
        %s2451 = scalar_select %p2450, %s28, 0
        %s2452 = smul.addr %s2449, 16
        %s2453 = sadd.s32 %s2451, %s2452
        %s2454 = smul.addr %s2447, 32
        %s2455 = sadd.s32 %s2453, %s2454
        %s2456 = smul.addr %s2455, 4
        %s2457 = scalar_lea.vmem %s6, %s2456
      $region60: #{resnet_forward.11} parent=51 // pred_fallthru
        _
    $region52: #{resnet_forward.11} parent=5 // pred_fallthru
      _
  $region6: #{resnet_forward.11} parent=0 // loop_footer
    %s17 = sadd.s32 1, %s13
  $region7: #{resnet_forward.11} parent=0 // loop_footer_branch
    %12 = sbr.rel target = $region3
  $region8: #{resnet_forward.11} parent=0 // loop_exit
    _

// kernel: resnet_forward.12
$region0: #{resnet_forward.12}
  #allocation0 [shape = 'u32[]', space=smem, size = 0x4, offset = 0x4, fixed_abs, tag = 'smem constant byte address 0x4 - core index']
  #allocation1 [shape = 'u32[72,128]{1,0:T(1,128)}', space=vmem, size = 0x9000, scoped, tag = 'internal scratch']
  #allocation2 [shape = 'f32[176,128]{1,0:T(8,128)}', space=vmem, size = 0x16000, scoped, tag = 'scratch operand']
  %s0 = inlined_call_operand.vmem [shape: bf16[2,2,176,128], index: 0, kind: input, shape index: {}]
  %s1 = inlined_call_operand.vmem [shape: bf16[9,128,128], index: 1, kind: input, shape index: {}]
  %s2 = inlined_call_operand.vmem [shape: f32[1,128], index: 2, kind: input, shape index: {}]
  %s3 = inlined_call_operand.vmem [shape: bf16[2,2,128,128], index: 3, kind: input, shape index: {}]
  %s4 = inlined_call_operand.vmem [shape: bf16[2,2,128,128], index: 4, kind: output, shape index: {}]
  %s5 = sld [smem:[#allocation0]]
  $region49: #{resnet_forward.12} parent=0
    _
  %s7 = ssub.s32 1, %s5
  %s8 = scalar_select 0, %s7, %s5
  loop: start=0, step=1, limit=6
  $region2: #{resnet_forward.12} parent=0 // loop_pre_header
    _
  $region3: #{resnet_forward.12} parent=0 // loop_header
    %s10 = sphi 0, %s14
    %p11 = scmp.ge.s32.totalorder %s10, 6
    %s17 = sphi 0, %s36
    %s18 = sphi 0, %s32
    %s19 = sphi 0, %s28
    %s20 = sphi 0, %s17
    %s21 = sphi 0, %s18
    %s22 = sphi 0, %s19
    %s23 = sphi 0, %s20
    %s24 = sphi 0, %s21
    %s25 = sphi 0, %s22
    %s41 = sphi 0, %s43
    %s44 = sphi 0, %s41
    %s45 = sphi 0, %s44
    %s61 = sphi 0, %s45
    %s67 = sphi 0, %s69
    %s70 = sphi 0, %s67
    %s71 = sphi 0, %s70
    %s87 = sphi 0, %s71
    %s93 = sphi 0, %s95
    %s96 = sphi 0, %s93
    %s97 = sphi 0, %s96
    %s113 = sphi 0, %s97
    %s123 = sphi 0, %s125
    %s126 = sphi 0, %s123
    %s127 = sphi 0, %s126
    %s143 = sphi 0, %s127
    %s153 = sphi 0, %s155
    %s156 = sphi 0, %s153
    %s157 = sphi 0, %s156
    %s173 = sphi 0, %s157
  $region4: #{resnet_forward.12} parent=0 // loop_header_branch
    %13 = sbr.rel (%p11) target = $region8
  $region5: #{resnet_forward.12} parent=0 // loop_body
    %s15 = ssub.s32 %s10, 1
    %s16 = ssub.s32 %s10, 2
    %s26 = sadd.s32 1, %s19
    %p27 = scmp.ge.s32.totalorder %s26, 1
    %s28 = scalar_select %p27, 0, %s26
    %s29 = sadd.s32 1, %s18
    %s30 = scalar_select %p27, %s29, %s18
    %p31 = scmp.ge.s32.totalorder %s30, 2
    %s32 = scalar_select %p31, 0, %s30
    %s33 = sadd.s32 1, %s17
    %s34 = scalar_select %p31, %s33, %s17
    %p35 = scmp.ge.s32.totalorder %s34, 2
    %s36 = scalar_select %p35, 0, %s34
    %s37 = ssub.s32 %s17, %s36
    %s38 = ssub.s32 %s18, %s32
    %s39 = sor.u32 %s37, %s38
    %p40 = scmp.eq.s32.totalorder %s39, 0
    %s42 = sadd.s32 %s41, 1
    %s43 = scalar_select %p40, %s41, %s42
    %p46 = pneg %p40
    %p47 = scmp.eq.s32.totalorder %s10, 3
    %p48 = por %p46, %p47
    %p49 = scmp.ne.s32.totalorder %s41, %s44
    %p50 = scmp.eq.s32.totalorder %s10, 0
    %p51 = por %p49, %p50
    %p52 = scmp.ne.s32.totalorder %s41, %s44
    %p53 = scmp.eq.s32.totalorder %s15, 3
    %p54 = por %p52, %p53
    %p55 = scmp.ne.s32.totalorder %s44, %s45
    %p56 = scmp.eq.s32.totalorder %s15, 0
    %p57 = por %p55, %p56
    %p58 = scmp.ne.s32.totalorder %s44, %s45
    %p59 = scmp.eq.s32.totalorder %s16, 3
    %p60 = por %p58, %p59
    %p62 = scmp.ne.s32.totalorder %s45, %s61
    %p63 = scmp.eq.s32.totalorder %s16, 0
    %p64 = por %p62, %p63
    %s65 = ssub.s32 %s19, %s28
    %p66 = scmp.eq.s32.totalorder %s65, 0
    %s68 = sadd.s32 %s67, 1
    %s69 = scalar_select %p66, %s67, %s68
    %p72 = pneg %p66
    %p73 = scmp.eq.s32.totalorder %s10, 3
    %p74 = por %p72, %p73
    %p75 = scmp.ne.s32.totalorder %s67, %s70
    %p76 = scmp.eq.s32.totalorder %s10, 0
    %p77 = por %p75, %p76
    %p78 = scmp.ne.s32.totalorder %s67, %s70
    %p79 = scmp.eq.s32.totalorder %s15, 3
    %p80 = por %p78, %p79
    %p81 = scmp.ne.s32.totalorder %s70, %s71
    %p82 = scmp.eq.s32.totalorder %s15, 0
    %p83 = por %p81, %p82
    %p84 = scmp.ne.s32.totalorder %s70, %s71
    %p85 = scmp.eq.s32.totalorder %s16, 3
    %p86 = por %p84, %p85
    %p88 = scmp.ne.s32.totalorder %s71, %s87
    %p89 = scmp.eq.s32.totalorder %s16, 0
    %p90 = por %p88, %p89
    %s91 = ssub.s32 %s19, %s28
    %p92 = scmp.eq.s32.totalorder %s91, 0
    %s94 = sadd.s32 %s93, 1
    %s95 = scalar_select %p92, %s93, %s94
    %p98 = pneg %p92
    %p99 = scmp.eq.s32.totalorder %s10, 3
    %p100 = por %p98, %p99
    %p101 = scmp.ne.s32.totalorder %s93, %s96
    %p102 = scmp.eq.s32.totalorder %s10, 0
    %p103 = por %p101, %p102
    %p104 = scmp.ne.s32.totalorder %s93, %s96
    %p105 = scmp.eq.s32.totalorder %s15, 3
    %p106 = por %p104, %p105
    %p107 = scmp.ne.s32.totalorder %s96, %s97
    %p108 = scmp.eq.s32.totalorder %s15, 0
    %p109 = por %p107, %p108
    %p110 = scmp.ne.s32.totalorder %s96, %s97
    %p111 = scmp.eq.s32.totalorder %s16, 3
    %p112 = por %p110, %p111
    %p114 = scmp.ne.s32.totalorder %s97, %s113
    %p115 = scmp.eq.s32.totalorder %s16, 0
    %p116 = por %p114, %p115
    %s117 = ssub.s32 %s17, %s36
    %s118 = ssub.s32 %s18, %s32
    %s119 = sor.u32 %s117, %s118
    %s120 = ssub.s32 %s19, %s28
    %s121 = sor.u32 %s119, %s120
    %p122 = scmp.eq.s32.totalorder %s121, 0
    %s124 = sadd.s32 %s123, 1
    %s125 = scalar_select %p122, %s123, %s124
    %p128 = pneg %p122
    %p129 = scmp.eq.s32.totalorder %s10, 3
    %p130 = por %p128, %p129
    %p131 = scmp.ne.s32.totalorder %s123, %s126
    %p132 = scmp.eq.s32.totalorder %s10, 0
    %p133 = por %p131, %p132
    %p134 = scmp.ne.s32.totalorder %s123, %s126
    %p135 = scmp.eq.s32.totalorder %s15, 3
    %p136 = por %p134, %p135
    %p137 = scmp.ne.s32.totalorder %s126, %s127
    %p138 = scmp.eq.s32.totalorder %s15, 0
    %p139 = por %p137, %p138
    %p140 = scmp.ne.s32.totalorder %s126, %s127
    %p141 = scmp.eq.s32.totalorder %s16, 3
    %p142 = por %p140, %p141
    %p144 = scmp.ne.s32.totalorder %s127, %s143
    %p145 = scmp.eq.s32.totalorder %s16, 0
    %p146 = por %p144, %p145
    %s147 = ssub.s32 %s17, %s36
    %s148 = ssub.s32 %s18, %s32
    %s149 = sor.u32 %s147, %s148
    %s150 = ssub.s32 %s19, %s28
    %s151 = sor.u32 %s149, %s150
    %p152 = scmp.eq.s32.totalorder %s151, 0
    %s154 = sadd.s32 %s153, 1
    %s155 = scalar_select %p152, %s153, %s154
    %p158 = pneg %p152
    %p159 = scmp.eq.s32.totalorder %s10, 3
    %p160 = por %p158, %p159
    %p161 = scmp.ne.s32.totalorder %s153, %s156
    %p162 = scmp.eq.s32.totalorder %s10, 0
    %p163 = por %p161, %p162
    %p164 = scmp.ne.s32.totalorder %s153, %s156
    %p165 = scmp.eq.s32.totalorder %s15, 3
    %p166 = por %p164, %p165
    %p167 = scmp.ne.s32.totalorder %s156, %s157
    %p168 = scmp.eq.s32.totalorder %s15, 0
    %p169 = por %p167, %p168
    %p170 = scmp.ne.s32.totalorder %s156, %s157
    %p171 = scmp.eq.s32.totalorder %s16, 3
    %p172 = por %p170, %p171
    %p174 = scmp.ne.s32.totalorder %s157, %s173
    %p175 = scmp.eq.s32.totalorder %s16, 0
    %p176 = por %p174, %p175
    %p177 = scmp.le.s32.totalorder 1, %s10
    %p178 = scmp.lt.s32.totalorder %s10, 5
    %p179 = pnand %p177, %p178
    %p180 = pneg %p179
    // Predicated region
    $region9: #{resnet_forward.12} parent=5 // pred_check
      _
    $region10: #{resnet_forward.12} parent=5 // pred_check_branch
      %182 = sbr.rel (%p179) target = $region12
    $region11: #{resnet_forward.12} parent=5 // pred_region
      %s183 = ssub.s32 %s10, 1
      // Predicated region
      $region13: #{resnet_forward.12} parent=11 // pred_check
        %p184 = pneg %p83
      $region14: #{resnet_forward.12} parent=11 // pred_check_branch
        %186 = sbr.rel (%p184) target = $region16
      $region15: #{resnet_forward.12} parent=11 // pred_region
        %p187 = scmp.lt.s32.totalorder %s22, 0
        %s188 = scalar_select %p187, %s22, 0
        %s189 = smul.addr %s188, 4
        %s190 = scalar_lea.vmem %s1, %s189
      $region16: #{resnet_forward.12} parent=11 // pred_fallthru
        _
      // Predicated region
      $region17: #{resnet_forward.12} parent=11 // pred_check
        %p191 = pneg %p109
      $region18: #{resnet_forward.12} parent=11 // pred_check_branch
        %193 = sbr.rel (%p191) target = $region20
      $region19: #{resnet_forward.12} parent=11 // pred_region
        %p194 = scmp.lt.s32.totalorder %s22, 0
        %s195 = scalar_select %p194, %s22, 0
        %s196 = scalar_lea.vmem %s2, %s195
      $region20: #{resnet_forward.12} parent=11 // pred_fallthru
        _
    $region12: #{resnet_forward.12} parent=5 // pred_fallthru
      _
    %p197 = scmp.lt.s32.totalorder %s10, 4
    // Predicated region
    $region21: #{resnet_forward.12} parent=5 // pred_check
      %p198 = pneg %p197
    $region22: #{resnet_forward.12} parent=5 // pred_check_branch
      %200 = sbr.rel (%p198) target = $region24
    $region23: #{resnet_forward.12} parent=5 // pred_region
      // Predicated region
      $region25: #{resnet_forward.12} parent=23 // pred_check
        %p201 = pneg %p51
      $region26: #{resnet_forward.12} parent=23 // pred_check_branch
        %203 = sbr.rel (%p201) target = $region28
      $region27: #{resnet_forward.12} parent=23 // pred_region
        %p204 = scmp.lt.s32.totalorder %s17, 1
        %s205 = scalar_select %p204, %s17, 1
        %p206 = scmp.lt.s32.totalorder %s18, 1
        %s207 = scalar_select %p206, %s18, 1
        %s208 = smul.addr %s207, 22
        %s209 = smul.addr %s205, 44
        %s210 = sadd.s32 %s208, %s209
        %s211 = smul.addr %s210, 4
        %s212 = scalar_lea.vmem %s0, %s211
      $region28: #{resnet_forward.12} parent=23 // pred_fallthru
        _
      // Predicated region
      $region29: #{resnet_forward.12} parent=23 // pred_check
        %p213 = pneg %p133
      $region30: #{resnet_forward.12} parent=23 // pred_check_branch
        %215 = sbr.rel (%p213) target = $region32
      $region31: #{resnet_forward.12} parent=23 // pred_region
        %p216 = scmp.lt.s32.totalorder %s17, 1
        %s217 = scalar_select %p216, %s17, 1
        %p218 = scmp.lt.s32.totalorder %s18, 1
        %s219 = scalar_select %p218, %s18, 1
        %p220 = scmp.lt.s32.totalorder %s19, 0
        %s221 = scalar_select %p220, %s19, 0
        %s222 = smul.addr %s219, 16
        %s223 = sadd.s32 %s221, %s222
        %s224 = smul.addr %s217, 32
        %s225 = sadd.s32 %s223, %s224
        %s226 = smul.addr %s225, 4
        %s227 = scalar_lea.vmem %s3, %s226
      $region32: #{resnet_forward.12} parent=23 // pred_fallthru
        _
    $region24: #{resnet_forward.12} parent=5 // pred_fallthru
      _
    %p228 = scmp.le.s32.totalorder 1, %s10
    %p229 = scmp.lt.s32.totalorder %s10, 5
    %p230 = pnand %p228, %p229
    %p231 = pneg %p230
    // Predicated region
    $region33: #{resnet_forward.12} parent=5 // pred_check
      _
    $region34: #{resnet_forward.12} parent=5 // pred_check_branch
      %233 = sbr.rel (%p230) target = $region36
    $region35: #{resnet_forward.12} parent=5 // pred_region
      %s234 = ssub.s32 %s10, 1
      %p235 = scmp.lt.s32.totalorder %s20, 1
      %s236 = scalar_select %p235, %s20, 1
      %p237 = scmp.lt.s32.totalorder %s21, 1
      %s238 = scalar_select %p237, %s21, 1
      %s239 = smul.addr %s238, 22
      %s240 = smul.addr %s236, 44
      %s241 = sadd.s32 %s239, %s240
      %s242 = smul.addr %s241, 4
      %s243 = scalar_lea.vmem %s0, %s242
      %p244 = pneg %p57
      %p245 = pneg %p54
      %p246 = scmp.lt.s32.totalorder %s22, 0
      %s247 = scalar_select %p246, %s22, 0
      %s248 = smul.addr %s247, 4
      %s249 = scalar_lea.vmem %s1, %s248
      %p250 = pneg %p83
      %p251 = pneg %p80
      %p252 = scmp.lt.s32.totalorder %s22, 0
      %s253 = scalar_select %p252, %s22, 0
      %s254 = scalar_lea.vmem %s2, %s253
      %p255 = pneg %p109
      %p256 = pneg %p106
      %p257 = scmp.lt.s32.totalorder %s20, 1
      %s258 = scalar_select %p257, %s20, 1
      %p259 = scmp.lt.s32.totalorder %s21, 1
      %s260 = scalar_select %p259, %s21, 1
      %p261 = scmp.lt.s32.totalorder %s22, 0
      %s262 = scalar_select %p261, %s22, 0
      %s263 = smul.addr %s260, 16
      %s264 = sadd.s32 %s262, %s263
      %s265 = smul.addr %s258, 32
      %s266 = sadd.s32 %s264, %s265
      %s267 = smul.addr %s266, 4
      %s268 = scalar_lea.vmem %s3, %s267
      %p269 = pneg %p139
      %p270 = pneg %p136
      %p271 = pneg %p169
      %p272 = pneg %p166
      %p273 = scmp.lt.s32.totalorder %s20, 1
      %s274 = scalar_select %p273, %s20, 1
      %p275 = scmp.lt.s32.totalorder %s21, 1
      %s276 = scalar_select %p275, %s21, 1
      %p277 = scmp.lt.s32.totalorder %s22, 0
      %s278 = scalar_select %p277, %s22, 0
      %s279 = smul.addr %s276, 16
      %s280 = sadd.s32 %s278, %s279
      %s281 = smul.addr %s274, 32
      %s282 = sadd.s32 %s280, %s281
      %s283 = smul.addr %s282, 4
      %s284 = scalar_lea.vmem %s4, %s283
      %p285 = scmp.lt.s32.totalorder %s20, 1
      %s286 = scalar_select %p285, %s20, 1
      %p287 = scmp.lt.s32.totalorder %s21, 1
      %s288 = scalar_select %p287, %s21, 1
      %s289 = smul.addr %s288, 22
      %s290 = smul.addr %s286, 44
      %s291 = sadd.s32 %s289, %s290
      %s292 = smul.addr %s291, 4
      %s293 = scalar_lea.vmem %s0, %s292
      %p294 = scmp.lt.s32.totalorder %s22, 0
      %s295 = scalar_select %p294, %s22, 0
      %s296 = smul.addr %s295, 4
      %s297 = scalar_lea.vmem %s1, %s296
      %p298 = scmp.lt.s32.totalorder %s22, 0
      %s299 = scalar_select %p298, %s22, 0
      %s300 = scalar_lea.vmem %s2, %s299
      %p301 = scmp.lt.s32.totalorder %s20, 1
      %s302 = scalar_select %p301, %s20, 1
      %p303 = scmp.lt.s32.totalorder %s21, 1
      %s304 = scalar_select %p303, %s21, 1
      %p305 = scmp.lt.s32.totalorder %s22, 0
      %s306 = scalar_select %p305, %s22, 0
      %s307 = smul.addr %s304, 16
      %s308 = sadd.s32 %s306, %s307
      %s309 = smul.addr %s302, 32
      %s310 = sadd.s32 %s308, %s309
      %s311 = smul.addr %s310, 4
      %s312 = scalar_lea.vmem %s3, %s311
      %p313 = scmp.lt.s32.totalorder %s20, 1
      %s314 = scalar_select %p313, %s20, 1
      %p315 = scmp.lt.s32.totalorder %s21, 1
      %s316 = scalar_select %p315, %s21, 1
      %p317 = scmp.lt.s32.totalorder %s22, 0
      %s318 = scalar_select %p317, %s22, 0
      %s319 = smul.addr %s316, 16
      %s320 = sadd.s32 %s318, %s319
      %s321 = smul.addr %s314, 32
      %s322 = sadd.s32 %s320, %s321
      %s323 = smul.addr %s322, 4
      %s324 = scalar_lea.vmem %s4, %s323
      %v325 = vld [vmem:[%s293] sm:$0xf]
      %v326 = vld [vmem:[%s293 + $0x4] sm:$0xf]
      %v327 = vld [vmem:[%s293 + $0x8] sm:$0xf]
      %v328 = vld [vmem:[%s293 + $0xc] sm:$0xf]
      %v329 = vld [vmem:[%s293 + $0x10] sm:$0xf]
      %v330 = vld [vmem:[%s293 + $0x14] sm:$0xf]
      %v331 = vld [vmem:[%s293 + $0x18] sm:$0xf]
      %v332 = vld [vmem:[%s293 + $0x1c] sm:$0xf]
      %v333 = vld [vmem:[%s293 + $0x20] sm:$0xf]
      %v334 = vld [vmem:[%s293 + $0x24] sm:$0xf]
      %v335 = vld [vmem:[%s293 + $0x28] sm:$0xf]
      %v336 = vld [vmem:[%s293 + $0x2c] sm:$0xf]
      %v337 = vld [vmem:[%s293 + $0x30] sm:$0xf]
      %v338 = vld [vmem:[%s293 + $0x34] sm:$0xf]
      %v339 = vld [vmem:[%s293 + $0x38] sm:$0xf]
      %v340 = vld [vmem:[%s293 + $0x3c] sm:$0xf]
      %v341 = vld [vmem:[%s293 + $0x40] sm:$0xf]
      %v342 = vld [vmem:[%s293 + $0x44] sm:$0xf]
      %v343 = vld [vmem:[%s293 + $0x48] sm:$0xf]
      %v344 = vld [vmem:[%s293 + $0x4c] sm:$0xf]
      %v345 = vld [vmem:[%s293 + $0x50] sm:$0xf]
      %v346 = vld [vmem:[%s293 + $0x54] sm:$0xf]
      %v347 = vunpack.c.l.bf16 %v325
      %v348 = vunpack.c.l.bf16 %v326
      %v349 = vunpack.c.l.bf16 %v327
      %v350 = vunpack.c.l.bf16 %v328
      %v351 = vunpack.c.l.bf16 %v329
      %v352 = vunpack.c.l.bf16 %v330
      %v353 = vunpack.c.l.bf16 %v331
      %v354 = vunpack.c.l.bf16 %v332
      %v355 = vunpack.c.l.bf16 %v333
      %v356 = vunpack.c.l.bf16 %v334
      %v357 = vunpack.c.l.bf16 %v335
      %v358 = vunpack.c.l.bf16 %v336
      %v359 = vunpack.c.l.bf16 %v337
      %v360 = vunpack.c.l.bf16 %v338
      %v361 = vunpack.c.l.bf16 %v339
      %v362 = vunpack.c.l.bf16 %v340
      %v363 = vunpack.c.l.bf16 %v341
      %v364 = vunpack.c.l.bf16 %v342
      %v365 = vunpack.c.l.bf16 %v343
      %v366 = vunpack.c.l.bf16 %v344
      %v367 = vunpack.c.l.bf16 %v345
      %v368 = vunpack.c.l.bf16 %v346
      %369 = vst [vmem:[#allocation2] sm:$0xff] %v347
      %370 = vst [vmem:[#allocation2 + $0x8] sm:$0xff] %v348
      %371 = vst [vmem:[#allocation2 + $0x10] sm:$0xff] %v349
      %372 = vst [vmem:[#allocation2 + $0x18] sm:$0xff] %v350
      %373 = vst [vmem:[#allocation2 + $0x20] sm:$0xff] %v351
      %374 = vst [vmem:[#allocation2 + $0x28] sm:$0xff] %v352
      %375 = vst [vmem:[#allocation2 + $0x30] sm:$0xff] %v353
      %376 = vst [vmem:[#allocation2 + $0x38] sm:$0xff] %v354
      %377 = vst [vmem:[#allocation2 + $0x40] sm:$0xff] %v355
      %378 = vst [vmem:[#allocation2 + $0x48] sm:$0xff] %v356
      %379 = vst [vmem:[#allocation2 + $0x50] sm:$0xff] %v357
      %380 = vst [vmem:[#allocation2 + $0x58] sm:$0xff] %v358
      %381 = vst [vmem:[#allocation2 + $0x60] sm:$0xff] %v359
      %382 = vst [vmem:[#allocation2 + $0x68] sm:$0xff] %v360
      %383 = vst [vmem:[#allocation2 + $0x70] sm:$0xff] %v361
      %384 = vst [vmem:[#allocation2 + $0x78] sm:$0xff] %v362
      %385 = vst [vmem:[#allocation2 + $0x80] sm:$0xff] %v363
      %386 = vst [vmem:[#allocation2 + $0x88] sm:$0xff] %v364
      %387 = vst [vmem:[#allocation2 + $0x90] sm:$0xff] %v365
      %388 = vst [vmem:[#allocation2 + $0x98] sm:$0xff] %v366
      %389 = vst [vmem:[#allocation2 + $0xa0] sm:$0xff] %v367
      %390 = vst [vmem:[#allocation2 + $0xa8] sm:$0xff] %v368
      %v391 = vlaneseq
      %v392 = vshrl.u32 %v391, 7
      %v393 = vadd.s32 %v392, 8
      %v394 = vadd.s32 %v392, 16
      %v395 = vadd.s32 %v392, 24
      %v396 = vadd.s32 %v392, 32
      %v397 = vadd.s32 %v392, 40
      %v398 = vadd.s32 %v392, 48
      %v399 = vadd.s32 %v392, 56
      %v400 = vadd.s32 %v392, 64
      %v401 = vadd.s32 %v392, 72
      %v402 = vadd.s32 %v392, 80
      %v403 = vadd.s32 %v392, 88
      %v404 = vadd.s32 %v392, 96
      %v405 = vadd.s32 %v392, 104
      %v406 = vadd.s32 %v392, 112
      %v407 = vadd.s32 %v392, 120
      %vm408 = vcmp.lt.s32.totalorder %v392, 0
      %v409 = vsub.s32 0, %v392
      %v410 = vsel %vm408, %v409, %v392
      %v411 = vshrl.u32 %v410, 4
      %v412 = vand.u32 %v410, 15
      %v413 = vsub.s32 0, %v412
      %v414 = vsel %vm408, %v413, %v412
      %vm415 = vcmp.lt.s32.totalorder %v393, 0
      %v416 = vsub.s32 0, %v393
      %v417 = vsel %vm415, %v416, %v393
      %v418 = vshrl.u32 %v417, 4
      %v419 = vand.u32 %v417, 15
      %v420 = vsub.s32 0, %v419
      %v421 = vsel %vm415, %v420, %v419
      %vm422 = vcmp.lt.s32.totalorder %v394, 0
      %v423 = vsub.s32 0, %v394
      %v424 = vsel %vm422, %v423, %v394
      %v425 = vshrl.u32 %v424, 4
      %v426 = vand.u32 %v424, 15
      %v427 = vsub.s32 0, %v426
      %v428 = vsel %vm422, %v427, %v426
      %vm429 = vcmp.lt.s32.totalorder %v395, 0
      %v430 = vsub.s32 0, %v395
      %v431 = vsel %vm429, %v430, %v395
      %v432 = vshrl.u32 %v431, 4
      %v433 = vand.u32 %v431, 15
      %v434 = vsub.s32 0, %v433
      %v435 = vsel %vm429, %v434, %v433
      %vm436 = vcmp.lt.s32.totalorder %v396, 0
      %v437 = vsub.s32 0, %v396
      %v438 = vsel %vm436, %v437, %v396
      %v439 = vshrl.u32 %v438, 4
      %v440 = vand.u32 %v438, 15
      %v441 = vsub.s32 0, %v440
      %v442 = vsel %vm436, %v441, %v440
      %vm443 = vcmp.lt.s32.totalorder %v397, 0
      %v444 = vsub.s32 0, %v397
      %v445 = vsel %vm443, %v444, %v397
      %v446 = vshrl.u32 %v445, 4
      %v447 = vand.u32 %v445, 15
      %v448 = vsub.s32 0, %v447
      %v449 = vsel %vm443, %v448, %v447
      %vm450 = vcmp.lt.s32.totalorder %v398, 0
      %v451 = vsub.s32 0, %v398
      %v452 = vsel %vm450, %v451, %v398
      %v453 = vshrl.u32 %v452, 4
      %v454 = vand.u32 %v452, 15
      %v455 = vsub.s32 0, %v454
      %v456 = vsel %vm450, %v455, %v454
      %vm457 = vcmp.lt.s32.totalorder %v399, 0
      %v458 = vsub.s32 0, %v399
      %v459 = vsel %vm457, %v458, %v399
      %v460 = vshrl.u32 %v459, 4
      %v461 = vand.u32 %v459, 15
      %v462 = vsub.s32 0, %v461
      %v463 = vsel %vm457, %v462, %v461
      %vm464 = vcmp.lt.s32.totalorder %v400, 0
      %v465 = vsub.s32 0, %v400
      %v466 = vsel %vm464, %v465, %v400
      %v467 = vshrl.u32 %v466, 4
      %v468 = vand.u32 %v466, 15
      %v469 = vsub.s32 0, %v468
      %v470 = vsel %vm464, %v469, %v468
      %vm471 = vcmp.lt.s32.totalorder %v401, 0
      %v472 = vsub.s32 0, %v401
      %v473 = vsel %vm471, %v472, %v401
      %v474 = vshrl.u32 %v473, 4
      %v475 = vand.u32 %v473, 15
      %v476 = vsub.s32 0, %v475
      %v477 = vsel %vm471, %v476, %v475
      %vm478 = vcmp.lt.s32.totalorder %v402, 0
      %v479 = vsub.s32 0, %v402
      %v480 = vsel %vm478, %v479, %v402
      %v481 = vshrl.u32 %v480, 4
      %v482 = vand.u32 %v480, 15
      %v483 = vsub.s32 0, %v482
      %v484 = vsel %vm478, %v483, %v482
      %vm485 = vcmp.lt.s32.totalorder %v403, 0
      %v486 = vsub.s32 0, %v403
      %v487 = vsel %vm485, %v486, %v403
      %v488 = vshrl.u32 %v487, 4
      %v489 = vand.u32 %v487, 15
      %v490 = vsub.s32 0, %v489
      %v491 = vsel %vm485, %v490, %v489
      %vm492 = vcmp.lt.s32.totalorder %v404, 0
      %v493 = vsub.s32 0, %v404
      %v494 = vsel %vm492, %v493, %v404
      %v495 = vshrl.u32 %v494, 4
      %v496 = vand.u32 %v494, 15
      %v497 = vsub.s32 0, %v496
      %v498 = vsel %vm492, %v497, %v496
      %vm499 = vcmp.lt.s32.totalorder %v405, 0
      %v500 = vsub.s32 0, %v405
      %v501 = vsel %vm499, %v500, %v405
      %v502 = vshrl.u32 %v501, 4
      %v503 = vand.u32 %v501, 15
      %v504 = vsub.s32 0, %v503
      %v505 = vsel %vm499, %v504, %v503
      %vm506 = vcmp.lt.s32.totalorder %v406, 0
      %v507 = vsub.s32 0, %v406
      %v508 = vsel %vm506, %v507, %v406
      %v509 = vshrl.u32 %v508, 4
      %v510 = vand.u32 %v508, 15
      %v511 = vsub.s32 0, %v510
      %v512 = vsel %vm506, %v511, %v510
      %vm513 = vcmp.lt.s32.totalorder %v407, 0
      %v514 = vsub.s32 0, %v407
      %v515 = vsel %vm513, %v514, %v407
      %v516 = vshrl.u32 %v515, 4
      %v517 = vand.u32 %v515, 15
      %v518 = vsub.s32 0, %v517
      %v519 = vsel %vm513, %v518, %v517
      %vm520 = vcmp.ne.s32.totalorder %v414, 0
      %vm521 = vcmp.ne.s32.totalorder %v421, 0
      %vm522 = vcmp.ne.s32.totalorder %v428, 0
      %vm523 = vcmp.ne.s32.totalorder %v435, 0
      %vm524 = vcmp.ne.s32.totalorder %v442, 0
      %vm525 = vcmp.ne.s32.totalorder %v449, 0
      %vm526 = vcmp.ne.s32.totalorder %v456, 0
      %vm527 = vcmp.ne.s32.totalorder %v463, 0
      %vm528 = vcmp.ne.s32.totalorder %v470, 0
      %vm529 = vcmp.ne.s32.totalorder %v477, 0
      %vm530 = vcmp.ne.s32.totalorder %v484, 0
      %vm531 = vcmp.ne.s32.totalorder %v491, 0
      %vm532 = vcmp.ne.s32.totalorder %v498, 0
      %vm533 = vcmp.ne.s32.totalorder %v505, 0
      %vm534 = vcmp.ne.s32.totalorder %v512, 0
      %vm535 = vcmp.ne.s32.totalorder %v519, 0
      %vm536 = vcmp.lt.s32.totalorder %v414, 0
      %vm537 = vcmp.lt.s32.totalorder %v421, 0
      %vm538 = vcmp.lt.s32.totalorder %v428, 0
      %vm539 = vcmp.lt.s32.totalorder %v435, 0
      %vm540 = vcmp.lt.s32.totalorder %v442, 0
      %vm541 = vcmp.lt.s32.totalorder %v449, 0
      %vm542 = vcmp.lt.s32.totalorder %v456, 0
      %vm543 = vcmp.lt.s32.totalorder %v463, 0
      %vm544 = vcmp.lt.s32.totalorder %v470, 0
      %vm545 = vcmp.lt.s32.totalorder %v477, 0
      %vm546 = vcmp.lt.s32.totalorder %v484, 0
      %vm547 = vcmp.lt.s32.totalorder %v491, 0
      %vm548 = vcmp.lt.s32.totalorder %v498, 0
      %vm549 = vcmp.lt.s32.totalorder %v505, 0
      %vm550 = vcmp.lt.s32.totalorder %v512, 0
      %vm551 = vcmp.lt.s32.totalorder %v519, 0
      %vm552 = vmand %vm536, %vm520
      %vm553 = vmand %vm537, %vm521
      %vm554 = vmand %vm538, %vm522
      %vm555 = vmand %vm539, %vm523
      %vm556 = vmand %vm540, %vm524
      %vm557 = vmand %vm541, %vm525
      %vm558 = vmand %vm542, %vm526
      %vm559 = vmand %vm543, %vm527
      %vm560 = vmand %vm544, %vm528
      %vm561 = vmand %vm545, %vm529
      %vm562 = vmand %vm546, %vm530
      %vm563 = vmand %vm547, %vm531
      %vm564 = vmand %vm548, %vm532
      %vm565 = vmand %vm549, %vm533
      %vm566 = vmand %vm550, %vm534
      %vm567 = vmand %vm551, %vm535
      %v568 = vadd.s32 %v414, 16
      %v569 = vadd.s32 %v421, 16
      %v570 = vadd.s32 %v428, 16
      %v571 = vadd.s32 %v435, 16
      %v572 = vadd.s32 %v442, 16
      %v573 = vadd.s32 %v449, 16
      %v574 = vadd.s32 %v456, 16
      %v575 = vadd.s32 %v463, 16
      %v576 = vadd.s32 %v470, 16
      %v577 = vadd.s32 %v477, 16
      %v578 = vadd.s32 %v484, 16
      %v579 = vadd.s32 %v491, 16
      %v580 = vadd.s32 %v498, 16
      %v581 = vadd.s32 %v505, 16
      %v582 = vadd.s32 %v512, 16
      %v583 = vadd.s32 %v519, 16
      %v584 = vsel %vm552, %v568, %v414
      %v585 = vsel %vm553, %v569, %v421
      %v586 = vsel %vm554, %v570, %v428
      %v587 = vsel %vm555, %v571, %v435
      %v588 = vsel %vm556, %v572, %v442
      %v589 = vsel %vm557, %v573, %v449
      %v590 = vsel %vm558, %v574, %v456
      %v591 = vsel %vm559, %v575, %v463
      %v592 = vsel %vm560, %v576, %v470
      %v593 = vsel %vm561, %v577, %v477
      %v594 = vsel %vm562, %v578, %v484
      %v595 = vsel %vm563, %v579, %v491
      %v596 = vsel %vm564, %v580, %v498
      %v597 = vsel %vm565, %v581, %v505
      %v598 = vsel %vm566, %v582, %v512
      %v599 = vsel %vm567, %v583, %v519
      %vm600 = vcmp.ne.s32.totalorder %v584, 0
      %vm601 = vcmp.ne.s32.totalorder %v585, 0
      %vm602 = vcmp.ne.s32.totalorder %v586, 0
      %vm603 = vcmp.ne.s32.totalorder %v587, 0
      %vm604 = vcmp.ne.s32.totalorder %v588, 0
      %vm605 = vcmp.ne.s32.totalorder %v589, 0
      %vm606 = vcmp.ne.s32.totalorder %v590, 0
      %vm607 = vcmp.ne.s32.totalorder %v591, 0
      %vm608 = vcmp.ne.s32.totalorder %v592, 0
      %vm609 = vcmp.ne.s32.totalorder %v593, 0
      %vm610 = vcmp.ne.s32.totalorder %v594, 0
      %vm611 = vcmp.ne.s32.totalorder %v595, 0
      %vm612 = vcmp.ne.s32.totalorder %v596, 0
      %vm613 = vcmp.ne.s32.totalorder %v597, 0
      %vm614 = vcmp.ne.s32.totalorder %v598, 0
      %vm615 = vcmp.ne.s32.totalorder %v599, 0
      %vm616 = vcmp.ne.s32.totalorder %v584, 15
      %vm617 = vcmp.ne.s32.totalorder %v585, 15
      %vm618 = vcmp.ne.s32.totalorder %v586, 15
      %vm619 = vcmp.ne.s32.totalorder %v587, 15
      %vm620 = vcmp.ne.s32.totalorder %v588, 15
      %vm621 = vcmp.ne.s32.totalorder %v589, 15
      %vm622 = vcmp.ne.s32.totalorder %v590, 15
      %vm623 = vcmp.ne.s32.totalorder %v591, 15
      %vm624 = vcmp.ne.s32.totalorder %v592, 15
      %vm625 = vcmp.ne.s32.totalorder %v593, 15
      %vm626 = vcmp.ne.s32.totalorder %v594, 15
      %vm627 = vcmp.ne.s32.totalorder %v595, 15
      %vm628 = vcmp.ne.s32.totalorder %v596, 15
      %vm629 = vcmp.ne.s32.totalorder %v597, 15
      %vm630 = vcmp.ne.s32.totalorder %v598, 15
      %vm631 = vcmp.ne.s32.totalorder %v599, 15
      %v632 = vld [vmem:[#allocation2 + $0x7] sm:$0xff]
      %v633 = vld [vmem:[#allocation2 + $0xf] sm:$0xff]
      %v634 = vld [vmem:[#allocation2 + $0x17] sm:$0xff]
      %v635 = vld [vmem:[#allocation2 + $0x1f] sm:$0xff]
      %v636 = vld [vmem:[#allocation2 + $0x27] sm:$0xff]
      %v637 = vld [vmem:[#allocation2 + $0x2f] sm:$0xff]
      %v638 = vld [vmem:[#allocation2 + $0x37] sm:$0xff]
      %v639 = vld [vmem:[#allocation2 + $0x3f] sm:$0xff]
      %v640 = vld [vmem:[#allocation2 + $0x47] sm:$0xff]
      %v641 = vld [vmem:[#allocation2 + $0x4f] sm:$0xff]
      %v642 = vld [vmem:[#allocation2 + $0x57] sm:$0xff]
      %v643 = vld [vmem:[#allocation2 + $0x5f] sm:$0xff]
      %v644 = vld [vmem:[#allocation2 + $0x67] sm:$0xff]
      %v645 = vld [vmem:[#allocation2 + $0x6f] sm:$0xff]
      %v646 = vld [vmem:[#allocation2 + $0x77] sm:$0xff]
      %v647 = vld [vmem:[#allocation2 + $0x7f] sm:$0xff]
      %v648 = vsel %vm600, %v632, 0.0
      %v649 = vsel %vm601, %v633, 0.0
      %v650 = vsel %vm602, %v634, 0.0
      %v651 = vsel %vm603, %v635, 0.0
      %v652 = vsel %vm604, %v636, 0.0
      %v653 = vsel %vm605, %v637, 0.0
      %v654 = vsel %vm606, %v638, 0.0
      %v655 = vsel %vm607, %v639, 0.0
      %v656 = vsel %vm608, %v640, 0.0
      %v657 = vsel %vm609, %v641, 0.0
      %v658 = vsel %vm610, %v642, 0.0
      %v659 = vsel %vm611, %v643, 0.0
      %v660 = vsel %vm612, %v644, 0.0
      %v661 = vsel %vm613, %v645, 0.0
      %v662 = vsel %vm614, %v646, 0.0
      %v663 = vsel %vm615, %v647, 0.0
      %v664 = vpack.c.bf16 %v649, %v648
      %v665 = vpack.c.bf16 %v651, %v650
      %v666 = vpack.c.bf16 %v653, %v652
      %v667 = vpack.c.bf16 %v655, %v654
      %v668 = vpack.c.bf16 %v657, %v656
      %v669 = vpack.c.bf16 %v659, %v658
      %v670 = vpack.c.bf16 %v661, %v660
      %v671 = vpack.c.bf16 %v663, %v662
      %v672 = vld [vmem:[%s297] sm:$0xf]
      %v673 = vld [vmem:[%s297 + $0x4] sm:$0xf]
      %v674 = vld [vmem:[%s297 + $0x8] sm:$0xf]
      %v675 = vld [vmem:[%s297 + $0xc] sm:$0xf]
      %v676 = vld [vmem:[%s297 + $0x10] sm:$0xf]
      %v677 = vld [vmem:[%s297 + $0x14] sm:$0xf]
      %v678 = vld [vmem:[%s297 + $0x18] sm:$0xf]
      %v679 = vld [vmem:[%s297 + $0x1c] sm:$0xf]
      %v680 = vld [vmem:[%s297 + $0x20] sm:$0xf]
      %v681 = vld [vmem:[%s297 + $0x24] sm:$0xf]
      %v682 = vld [vmem:[%s297 + $0x28] sm:$0xf]
      %v683 = vld [vmem:[%s297 + $0x2c] sm:$0xf]
      %v684 = vld [vmem:[%s297 + $0x30] sm:$0xf]
      %v685 = vld [vmem:[%s297 + $0x34] sm:$0xf]
      %v686 = vld [vmem:[%s297 + $0x38] sm:$0xf]
      %v687 = vld [vmem:[%s297 + $0x3c] sm:$0xf]
      %v688 = vld [vmem:[#allocation2 + $0x8] sm:$0xff]
      %v689 = vld [vmem:[#allocation2 + $0x10] sm:$0xff]
      %v690 = vld [vmem:[#allocation2 + $0x18] sm:$0xff]
      %v691 = vld [vmem:[#allocation2 + $0x20] sm:$0xff]
      %v692 = vld [vmem:[#allocation2 + $0x28] sm:$0xff]
      %v693 = vld [vmem:[#allocation2 + $0x30] sm:$0xff]
      %v694 = vld [vmem:[#allocation2 + $0x38] sm:$0xff]
      %v695 = vld [vmem:[#allocation2 + $0x40] sm:$0xff]
      %v696 = vld [vmem:[#allocation2 + $0x48] sm:$0xff]
      %v697 = vld [vmem:[#allocation2 + $0x50] sm:$0xff]
      %v698 = vld [vmem:[#allocation2 + $0x58] sm:$0xff]
      %v699 = vld [vmem:[#allocation2 + $0x60] sm:$0xff]
      %v700 = vld [vmem:[#allocation2 + $0x68] sm:$0xff]
      %v701 = vld [vmem:[#allocation2 + $0x70] sm:$0xff]
      %v702 = vld [vmem:[#allocation2 + $0x78] sm:$0xff]
      %v703 = vld [vmem:[#allocation2 + $0x80] sm:$0xff]
      %v704 = vpack.c.bf16 %v689, %v688
      %v705 = vpack.c.bf16 %v691, %v690
      %v706 = vpack.c.bf16 %v693, %v692
      %v707 = vpack.c.bf16 %v695, %v694
      %v708 = vpack.c.bf16 %v697, %v696
      %v709 = vpack.c.bf16 %v699, %v698
      %v710 = vpack.c.bf16 %v701, %v700
      %v711 = vpack.c.bf16 %v703, %v702
      %s712 = scalar_lea.vmem %s297, 64
      %v713 = vld [vmem:[%s712] sm:$0xf]
      %v714 = vld [vmem:[%s712 + $0x4] sm:$0xf]
      %v715 = vld [vmem:[%s712 + $0x8] sm:$0xf]
      %v716 = vld [vmem:[%s712 + $0xc] sm:$0xf]
      %v717 = vld [vmem:[%s712 + $0x10] sm:$0xf]
      %v718 = vld [vmem:[%s712 + $0x14] sm:$0xf]
      %v719 = vld [vmem:[%s712 + $0x18] sm:$0xf]
      %v720 = vld [vmem:[%s712 + $0x1c] sm:$0xf]
      %v721 = vld [vmem:[%s712 + $0x20] sm:$0xf]
      %v722 = vld [vmem:[%s712 + $0x24] sm:$0xf]
      %v723 = vld [vmem:[%s712 + $0x28] sm:$0xf]
      %v724 = vld [vmem:[%s712 + $0x2c] sm:$0xf]
      %v725 = vld [vmem:[%s712 + $0x30] sm:$0xf]
      %v726 = vld [vmem:[%s712 + $0x34] sm:$0xf]
      %v727 = vld [vmem:[%s712 + $0x38] sm:$0xf]
      %v728 = vld [vmem:[%s712 + $0x3c] sm:$0xf]
      %v745 = vunpack.c.l.b16 %v713
      %v746 = vunpack.c.l.b16 %v714
      %v747 = vunpack.c.l.b16 %v715
      %v748 = vunpack.c.l.b16 %v716
      %v749 = vunpack.c.l.b16 %v717
      %v750 = vunpack.c.l.b16 %v718
      %v751 = vunpack.c.l.b16 %v719
      %v752 = vunpack.c.l.b16 %v720
      %v753 = vunpack.c.l.b16 %v721
      %v754 = vunpack.c.l.b16 %v722
      %v755 = vunpack.c.l.b16 %v723
      %v756 = vunpack.c.l.b16 %v724
      %v757 = vunpack.c.l.b16 %v725
      %v758 = vunpack.c.l.b16 %v726
      %v759 = vunpack.c.l.b16 %v727
      %v760 = vunpack.c.l.b16 %v728
      %v761 = vpack.c.b16 %v746, %v745
      %v762 = vpack.c.b16 %v748, %v747
      %v763 = vpack.c.b16 %v750, %v749
      %v764 = vpack.c.b16 %v752, %v751
      %v765 = vpack.c.b16 %v754, %v753
      %v766 = vpack.c.b16 %v756, %v755
      %v767 = vpack.c.b16 %v758, %v757
      %v768 = vpack.c.b16 %v760, %v759
      %777 = vmatpush.bf16.msra.mxu0 %v768
      %778 = vmatpush.bf16.msra.mxu0 %v767
      %779 = vmatpush.bf16.msra.mxu0 %v766
      %780 = vmatpush.bf16.msra.mxu0 %v765
      %781 = vmatpush.bf16.msra.mxu0 %v764
      %782 = vmatpush.bf16.msra.mxu0 %v763
      %783 = vmatpush.bf16.msra.mxu0 %v762
      %784 = vmatpush.bf16.msra.mxu0 %v761
      %785 = vmatmul.bf16.gmra.mxu0 %v704
      %v786 = vpop.f32.mrf.mxu0
      %v787 = vadd.f32 0.0, %v786
      %v788 = vpop.f32.mrf.mxu0
      %v789 = vadd.f32 0.0, %v788
      %790 = vmatmul.bf16.gmra.mxu0 %v705
      %v791 = vpop.f32.mrf.mxu0
      %v792 = vadd.f32 0.0, %v791
      %v793 = vpop.f32.mrf.mxu0
      %v794 = vadd.f32 0.0, %v793
      %795 = vmatmul.bf16.gmra.mxu0 %v706
      %v796 = vpop.f32.mrf.mxu0
      %v797 = vadd.f32 0.0, %v796
      %v798 = vpop.f32.mrf.mxu0
      %v799 = vadd.f32 0.0, %v798
      %800 = vmatmul.bf16.gmra.mxu0 %v707
      %v801 = vpop.f32.mrf.mxu0
      %v802 = vadd.f32 0.0, %v801
      %v803 = vpop.f32.mrf.mxu0
      %v804 = vadd.f32 0.0, %v803
      %805 = vmatmul.bf16.gmra.mxu0 %v708
      %v806 = vpop.f32.mrf.mxu0
      %v807 = vadd.f32 0.0, %v806
      %v808 = vpop.f32.mrf.mxu0
      %v809 = vadd.f32 0.0, %v808
      %810 = vmatmul.bf16.gmra.mxu0 %v709
      %v811 = vpop.f32.mrf.mxu0
      %v812 = vadd.f32 0.0, %v811
      %v813 = vpop.f32.mrf.mxu0
      %v814 = vadd.f32 0.0, %v813
      %815 = vmatmul.bf16.gmra.mxu0 %v710
      %v816 = vpop.f32.mrf.mxu0
      %v817 = vadd.f32 0.0, %v816
      %v818 = vpop.f32.mrf.mxu0
      %v819 = vadd.f32 0.0, %v818
      %820 = vmatmul.bf16.gmra.mxu0 %v711
      %v821 = vpop.f32.mrf.mxu0
      %v822 = vadd.f32 0.0, %v821
      %v823 = vpop.f32.mrf.mxu0
      %v824 = vadd.f32 0.0, %v823
      %825 = vdwg.mxu0
      %v842 = vunpack.c.l.b16 %v672
      %v843 = vunpack.c.l.b16 %v673
      %v844 = vunpack.c.l.b16 %v674
      %v845 = vunpack.c.l.b16 %v675
      %v846 = vunpack.c.l.b16 %v676
      %v847 = vunpack.c.l.b16 %v677
      %v848 = vunpack.c.l.b16 %v678
      %v849 = vunpack.c.l.b16 %v679
      %v850 = vunpack.c.l.b16 %v680
      %v851 = vunpack.c.l.b16 %v681
      %v852 = vunpack.c.l.b16 %v682
      %v853 = vunpack.c.l.b16 %v683
      %v854 = vunpack.c.l.b16 %v684
      %v855 = vunpack.c.l.b16 %v685
      %v856 = vunpack.c.l.b16 %v686
      %v857 = vunpack.c.l.b16 %v687
      %v858 = vpack.c.b16 %v843, %v842
      %v859 = vpack.c.b16 %v845, %v844
      %v860 = vpack.c.b16 %v847, %v846
      %v861 = vpack.c.b16 %v849, %v848
      %v862 = vpack.c.b16 %v851, %v850
      %v863 = vpack.c.b16 %v853, %v852
      %v864 = vpack.c.b16 %v855, %v854
      %v865 = vpack.c.b16 %v857, %v856
      %874 = vmatpush.bf16.msra.mxu0 %v865
      %875 = vmatpush.bf16.msra.mxu0 %v864
      %876 = vmatpush.bf16.msra.mxu0 %v863
      %877 = vmatpush.bf16.msra.mxu0 %v862
      %878 = vmatpush.bf16.msra.mxu0 %v861
      %879 = vmatpush.bf16.msra.mxu0 %v860
      %880 = vmatpush.bf16.msra.mxu0 %v859
      %881 = vmatpush.bf16.msra.mxu0 %v858
      %882 = vmatmul.bf16.gmra.mxu0 %v664
      %v883 = vpop.f32.mrf.mxu0
      %v884 = vadd.f32 %v787, %v883
      %v885 = vpop.f32.mrf.mxu0
      %v886 = vadd.f32 %v789, %v885
      %887 = vmatmul.bf16.gmra.mxu0 %v665
      %v888 = vpop.f32.mrf.mxu0
      %v889 = vadd.f32 %v792, %v888
      %v890 = vpop.f32.mrf.mxu0
      %v891 = vadd.f32 %v794, %v890
      %892 = vmatmul.bf16.gmra.mxu0 %v666
      %v893 = vpop.f32.mrf.mxu0
      %v894 = vadd.f32 %v797, %v893
      %v895 = vpop.f32.mrf.mxu0
      %v896 = vadd.f32 %v799, %v895
      %897 = vmatmul.bf16.gmra.mxu0 %v667
      %v898 = vpop.f32.mrf.mxu0
      %v899 = vadd.f32 %v802, %v898
      %v900 = vpop.f32.mrf.mxu0
      %v901 = vadd.f32 %v804, %v900
      %902 = vmatmul.bf16.gmra.mxu0 %v668
      %v903 = vpop.f32.mrf.mxu0
      %v904 = vadd.f32 %v807, %v903
      %v905 = vpop.f32.mrf.mxu0
      %v906 = vadd.f32 %v809, %v905
      %907 = vmatmul.bf16.gmra.mxu0 %v669
      %v908 = vpop.f32.mrf.mxu0
      %v909 = vadd.f32 %v812, %v908
      %v910 = vpop.f32.mrf.mxu0
      %v911 = vadd.f32 %v814, %v910
      %912 = vmatmul.bf16.gmra.mxu0 %v670
      %v913 = vpop.f32.mrf.mxu0
      %v914 = vadd.f32 %v817, %v913
      %v915 = vpop.f32.mrf.mxu0
      %v916 = vadd.f32 %v819, %v915
      %917 = vmatmul.bf16.gmra.mxu0 %v671
      %v918 = vpop.f32.mrf.mxu0
      %v919 = vadd.f32 %v822, %v918
      %v920 = vpop.f32.mrf.mxu0
      %v921 = vadd.f32 %v824, %v920
      %922 = vdwg.mxu0
      %v923 = vld [vmem:[#allocation2 + $0x9] sm:$0xff]
      %v924 = vld [vmem:[#allocation2 + $0x11] sm:$0xff]
      %v925 = vld [vmem:[#allocation2 + $0x19] sm:$0xff]
      %v926 = vld [vmem:[#allocation2 + $0x21] sm:$0xff]
      %v927 = vld [vmem:[#allocation2 + $0x29] sm:$0xff]
      %v928 = vld [vmem:[#allocation2 + $0x31] sm:$0xff]
      %v929 = vld [vmem:[#allocation2 + $0x39] sm:$0xff]
      %v930 = vld [vmem:[#allocation2 + $0x41] sm:$0xff]
      %v931 = vld [vmem:[#allocation2 + $0x49] sm:$0xff]
      %v932 = vld [vmem:[#allocation2 + $0x51] sm:$0xff]
      %v933 = vld [vmem:[#allocation2 + $0x59] sm:$0xff]
      %v934 = vld [vmem:[#allocation2 + $0x61] sm:$0xff]
      %v935 = vld [vmem:[#allocation2 + $0x69] sm:$0xff]
      %v936 = vld [vmem:[#allocation2 + $0x71] sm:$0xff]
      %v937 = vld [vmem:[#allocation2 + $0x79] sm:$0xff]
      %v938 = vld [vmem:[#allocation2 + $0x81] sm:$0xff]
      %v939 = vsel %vm616, %v923, 0.0
      %v940 = vsel %vm617, %v924, 0.0
      %v941 = vsel %vm618, %v925, 0.0
      %v942 = vsel %vm619, %v926, 0.0
      %v943 = vsel %vm620, %v927, 0.0
      %v944 = vsel %vm621, %v928, 0.0
      %v945 = vsel %vm622, %v929, 0.0
      %v946 = vsel %vm623, %v930, 0.0
      %v947 = vsel %vm624, %v931, 0.0
      %v948 = vsel %vm625, %v932, 0.0
      %v949 = vsel %vm626, %v933, 0.0
      %v950 = vsel %vm627, %v934, 0.0
      %v951 = vsel %vm628, %v935, 0.0
      %v952 = vsel %vm629, %v936, 0.0
      %v953 = vsel %vm630, %v937, 0.0
      %v954 = vsel %vm631, %v938, 0.0
      %v955 = vpack.c.bf16 %v940, %v939
      %v956 = vpack.c.bf16 %v942, %v941
      %v957 = vpack.c.bf16 %v944, %v943
      %v958 = vpack.c.bf16 %v946, %v945
      %v959 = vpack.c.bf16 %v948, %v947
      %v960 = vpack.c.bf16 %v950, %v949
      %v961 = vpack.c.bf16 %v952, %v951
      %v962 = vpack.c.bf16 %v954, %v953
      %s963 = scalar_lea.vmem %s297, 128
      %v964 = vld [vmem:[%s963] sm:$0xf]
      %v965 = vld [vmem:[%s963 + $0x4] sm:$0xf]
      %v966 = vld [vmem:[%s963 + $0x8] sm:$0xf]
      %v967 = vld [vmem:[%s963 + $0xc] sm:$0xf]
      %v968 = vld [vmem:[%s963 + $0x10] sm:$0xf]
      %v969 = vld [vmem:[%s963 + $0x14] sm:$0xf]
      %v970 = vld [vmem:[%s963 + $0x18] sm:$0xf]
      %v971 = vld [vmem:[%s963 + $0x1c] sm:$0xf]
      %v972 = vld [vmem:[%s963 + $0x20] sm:$0xf]
      %v973 = vld [vmem:[%s963 + $0x24] sm:$0xf]
      %v974 = vld [vmem:[%s963 + $0x28] sm:$0xf]
      %v975 = vld [vmem:[%s963 + $0x2c] sm:$0xf]
      %v976 = vld [vmem:[%s963 + $0x30] sm:$0xf]
      %v977 = vld [vmem:[%s963 + $0x34] sm:$0xf]
      %v978 = vld [vmem:[%s963 + $0x38] sm:$0xf]
      %v979 = vld [vmem:[%s963 + $0x3c] sm:$0xf]
      %v996 = vunpack.c.l.b16 %v964
      %v997 = vunpack.c.l.b16 %v965
      %v998 = vunpack.c.l.b16 %v966
      %v999 = vunpack.c.l.b16 %v967
      %v1000 = vunpack.c.l.b16 %v968
      %v1001 = vunpack.c.l.b16 %v969
      %v1002 = vunpack.c.l.b16 %v970
      %v1003 = vunpack.c.l.b16 %v971
      %v1004 = vunpack.c.l.b16 %v972
      %v1005 = vunpack.c.l.b16 %v973
      %v1006 = vunpack.c.l.b16 %v974
      %v1007 = vunpack.c.l.b16 %v975
      %v1008 = vunpack.c.l.b16 %v976
      %v1009 = vunpack.c.l.b16 %v977
      %v1010 = vunpack.c.l.b16 %v978
      %v1011 = vunpack.c.l.b16 %v979
      %v1012 = vpack.c.b16 %v997, %v996
      %v1013 = vpack.c.b16 %v999, %v998
      %v1014 = vpack.c.b16 %v1001, %v1000
      %v1015 = vpack.c.b16 %v1003, %v1002
      %v1016 = vpack.c.b16 %v1005, %v1004
      %v1017 = vpack.c.b16 %v1007, %v1006
      %v1018 = vpack.c.b16 %v1009, %v1008
      %v1019 = vpack.c.b16 %v1011, %v1010
      %1028 = vmatpush.bf16.msra.mxu0 %v1019
      %1029 = vmatpush.bf16.msra.mxu0 %v1018
      %1030 = vmatpush.bf16.msra.mxu0 %v1017
      %1031 = vmatpush.bf16.msra.mxu0 %v1016
      %1032 = vmatpush.bf16.msra.mxu0 %v1015
      %1033 = vmatpush.bf16.msra.mxu0 %v1014
      %1034 = vmatpush.bf16.msra.mxu0 %v1013
      %1035 = vmatpush.bf16.msra.mxu0 %v1012
      %1036 = vmatmul.bf16.gmra.mxu0 %v955
      %v1037 = vpop.f32.mrf.mxu0
      %v1038 = vadd.f32 0.0, %v1037
      %v1039 = vpop.f32.mrf.mxu0
      %v1040 = vadd.f32 0.0, %v1039
      %1041 = vmatmul.bf16.gmra.mxu0 %v956
      %v1042 = vpop.f32.mrf.mxu0
      %v1043 = vadd.f32 0.0, %v1042
      %v1044 = vpop.f32.mrf.mxu0
      %v1045 = vadd.f32 0.0, %v1044
      %1046 = vmatmul.bf16.gmra.mxu0 %v957
      %v1047 = vpop.f32.mrf.mxu0
      %v1048 = vadd.f32 0.0, %v1047
      %v1049 = vpop.f32.mrf.mxu0
      %v1050 = vadd.f32 0.0, %v1049
      %1051 = vmatmul.bf16.gmra.mxu0 %v958
      %v1052 = vpop.f32.mrf.mxu0
      %v1053 = vadd.f32 0.0, %v1052
      %v1054 = vpop.f32.mrf.mxu0
      %v1055 = vadd.f32 0.0, %v1054
      %1056 = vmatmul.bf16.gmra.mxu0 %v959
      %v1057 = vpop.f32.mrf.mxu0
      %v1058 = vadd.f32 0.0, %v1057
      %v1059 = vpop.f32.mrf.mxu0
      %v1060 = vadd.f32 0.0, %v1059
      %1061 = vmatmul.bf16.gmra.mxu0 %v960
      %v1062 = vpop.f32.mrf.mxu0
      %v1063 = vadd.f32 0.0, %v1062
      %v1064 = vpop.f32.mrf.mxu0
      %v1065 = vadd.f32 0.0, %v1064
      %1066 = vmatmul.bf16.gmra.mxu0 %v961
      %v1067 = vpop.f32.mrf.mxu0
      %v1068 = vadd.f32 0.0, %v1067
      %v1069 = vpop.f32.mrf.mxu0
      %v1070 = vadd.f32 0.0, %v1069
      %1071 = vmatmul.bf16.gmra.mxu0 %v962
      %v1072 = vpop.f32.mrf.mxu0
      %v1073 = vadd.f32 0.0, %v1072
      %v1074 = vpop.f32.mrf.mxu0
      %v1075 = vadd.f32 0.0, %v1074
      %1076 = vdwg.mxu0
      %v1077 = vadd.f32 %v884, %v1038
      %v1078 = vadd.f32 %v886, %v1040
      %v1079 = vadd.f32 %v889, %v1043
      %v1080 = vadd.f32 %v891, %v1045
      %v1081 = vadd.f32 %v894, %v1048
      %v1082 = vadd.f32 %v896, %v1050
      %v1083 = vadd.f32 %v899, %v1053
      %v1084 = vadd.f32 %v901, %v1055
      %v1085 = vadd.f32 %v904, %v1058
      %v1086 = vadd.f32 %v906, %v1060
      %v1087 = vadd.f32 %v909, %v1063
      %v1088 = vadd.f32 %v911, %v1065
      %v1089 = vadd.f32 %v914, %v1068
      %v1090 = vadd.f32 %v916, %v1070
      %v1091 = vadd.f32 %v919, %v1073
      %v1092 = vadd.f32 %v921, %v1075
      %v1093 = vld [vmem:[#allocation2 + $0x17] sm:$0xff]
      %v1094 = vld [vmem:[#allocation2 + $0x1f] sm:$0xff]
      %v1095 = vld [vmem:[#allocation2 + $0x27] sm:$0xff]
      %v1096 = vld [vmem:[#allocation2 + $0x2f] sm:$0xff]
      %v1097 = vld [vmem:[#allocation2 + $0x37] sm:$0xff]
      %v1098 = vld [vmem:[#allocation2 + $0x3f] sm:$0xff]
      %v1099 = vld [vmem:[#allocation2 + $0x47] sm:$0xff]
      %v1100 = vld [vmem:[#allocation2 + $0x4f] sm:$0xff]
      %v1101 = vld [vmem:[#allocation2 + $0x57] sm:$0xff]
      %v1102 = vld [vmem:[#allocation2 + $0x5f] sm:$0xff]
      %v1103 = vld [vmem:[#allocation2 + $0x67] sm:$0xff]
      %v1104 = vld [vmem:[#allocation2 + $0x6f] sm:$0xff]
      %v1105 = vld [vmem:[#allocation2 + $0x77] sm:$0xff]
      %v1106 = vld [vmem:[#allocation2 + $0x7f] sm:$0xff]
      %v1107 = vld [vmem:[#allocation2 + $0x87] sm:$0xff]
      %v1108 = vld [vmem:[#allocation2 + $0x8f] sm:$0xff]
      %v1109 = vsel %vm600, %v1093, 0.0
      %v1110 = vsel %vm601, %v1094, 0.0
      %v1111 = vsel %vm602, %v1095, 0.0
      %v1112 = vsel %vm603, %v1096, 0.0
      %v1113 = vsel %vm604, %v1097, 0.0
      %v1114 = vsel %vm605, %v1098, 0.0
      %v1115 = vsel %vm606, %v1099, 0.0
      %v1116 = vsel %vm607, %v1100, 0.0
      %v1117 = vsel %vm608, %v1101, 0.0
      %v1118 = vsel %vm609, %v1102, 0.0
      %v1119 = vsel %vm610, %v1103, 0.0
      %v1120 = vsel %vm611, %v1104, 0.0
      %v1121 = vsel %vm612, %v1105, 0.0
      %v1122 = vsel %vm613, %v1106, 0.0
      %v1123 = vsel %vm614, %v1107, 0.0
      %v1124 = vsel %vm615, %v1108, 0.0
      %v1125 = vpack.c.bf16 %v1110, %v1109
      %v1126 = vpack.c.bf16 %v1112, %v1111
      %v1127 = vpack.c.bf16 %v1114, %v1113
      %v1128 = vpack.c.bf16 %v1116, %v1115
      %v1129 = vpack.c.bf16 %v1118, %v1117
      %v1130 = vpack.c.bf16 %v1120, %v1119
      %v1131 = vpack.c.bf16 %v1122, %v1121
      %v1132 = vpack.c.bf16 %v1124, %v1123
      %s1133 = scalar_lea.vmem %s297, 192
      %v1134 = vld [vmem:[%s1133] sm:$0xf]
      %v1135 = vld [vmem:[%s1133 + $0x4] sm:$0xf]
      %v1136 = vld [vmem:[%s1133 + $0x8] sm:$0xf]
      %v1137 = vld [vmem:[%s1133 + $0xc] sm:$0xf]
      %v1138 = vld [vmem:[%s1133 + $0x10] sm:$0xf]
      %v1139 = vld [vmem:[%s1133 + $0x14] sm:$0xf]
      %v1140 = vld [vmem:[%s1133 + $0x18] sm:$0xf]
      %v1141 = vld [vmem:[%s1133 + $0x1c] sm:$0xf]
      %v1142 = vld [vmem:[%s1133 + $0x20] sm:$0xf]
      %v1143 = vld [vmem:[%s1133 + $0x24] sm:$0xf]
      %v1144 = vld [vmem:[%s1133 + $0x28] sm:$0xf]
      %v1145 = vld [vmem:[%s1133 + $0x2c] sm:$0xf]
      %v1146 = vld [vmem:[%s1133 + $0x30] sm:$0xf]
      %v1147 = vld [vmem:[%s1133 + $0x34] sm:$0xf]
      %v1148 = vld [vmem:[%s1133 + $0x38] sm:$0xf]
      %v1149 = vld [vmem:[%s1133 + $0x3c] sm:$0xf]
      %v1166 = vunpack.c.l.b16 %v1134
      %v1167 = vunpack.c.l.b16 %v1135
      %v1168 = vunpack.c.l.b16 %v1136
      %v1169 = vunpack.c.l.b16 %v1137
      %v1170 = vunpack.c.l.b16 %v1138
      %v1171 = vunpack.c.l.b16 %v1139
      %v1172 = vunpack.c.l.b16 %v1140
      %v1173 = vunpack.c.l.b16 %v1141
      %v1174 = vunpack.c.l.b16 %v1142
      %v1175 = vunpack.c.l.b16 %v1143
      %v1176 = vunpack.c.l.b16 %v1144
      %v1177 = vunpack.c.l.b16 %v1145
      %v1178 = vunpack.c.l.b16 %v1146
      %v1179 = vunpack.c.l.b16 %v1147
      %v1180 = vunpack.c.l.b16 %v1148
      %v1181 = vunpack.c.l.b16 %v1149
      %v1182 = vpack.c.b16 %v1167, %v1166
      %v1183 = vpack.c.b16 %v1169, %v1168
      %v1184 = vpack.c.b16 %v1171, %v1170
      %v1185 = vpack.c.b16 %v1173, %v1172
      %v1186 = vpack.c.b16 %v1175, %v1174
      %v1187 = vpack.c.b16 %v1177, %v1176
      %v1188 = vpack.c.b16 %v1179, %v1178
      %v1189 = vpack.c.b16 %v1181, %v1180
      %1198 = vmatpush.bf16.msra.mxu0 %v1189
      %1199 = vmatpush.bf16.msra.mxu0 %v1188
      %1200 = vmatpush.bf16.msra.mxu0 %v1187
      %1201 = vmatpush.bf16.msra.mxu0 %v1186
      %1202 = vmatpush.bf16.msra.mxu0 %v1185
      %1203 = vmatpush.bf16.msra.mxu0 %v1184
      %1204 = vmatpush.bf16.msra.mxu0 %v1183
      %1205 = vmatpush.bf16.msra.mxu0 %v1182
      %1206 = vmatmul.bf16.gmra.mxu0 %v1125
      %v1207 = vpop.f32.mrf.mxu0
      %v1208 = vadd.f32 0.0, %v1207
      %v1209 = vpop.f32.mrf.mxu0
      %v1210 = vadd.f32 0.0, %v1209
      %1211 = vmatmul.bf16.gmra.mxu0 %v1126
      %v1212 = vpop.f32.mrf.mxu0
      %v1213 = vadd.f32 0.0, %v1212
      %v1214 = vpop.f32.mrf.mxu0
      %v1215 = vadd.f32 0.0, %v1214
      %1216 = vmatmul.bf16.gmra.mxu0 %v1127
      %v1217 = vpop.f32.mrf.mxu0
      %v1218 = vadd.f32 0.0, %v1217
      %v1219 = vpop.f32.mrf.mxu0
      %v1220 = vadd.f32 0.0, %v1219
      %1221 = vmatmul.bf16.gmra.mxu0 %v1128
      %v1222 = vpop.f32.mrf.mxu0
      %v1223 = vadd.f32 0.0, %v1222
      %v1224 = vpop.f32.mrf.mxu0
      %v1225 = vadd.f32 0.0, %v1224
      %1226 = vmatmul.bf16.gmra.mxu0 %v1129
      %v1227 = vpop.f32.mrf.mxu0
      %v1228 = vadd.f32 0.0, %v1227
      %v1229 = vpop.f32.mrf.mxu0
      %v1230 = vadd.f32 0.0, %v1229
      %1231 = vmatmul.bf16.gmra.mxu0 %v1130
      %v1232 = vpop.f32.mrf.mxu0
      %v1233 = vadd.f32 0.0, %v1232
      %v1234 = vpop.f32.mrf.mxu0
      %v1235 = vadd.f32 0.0, %v1234
      %1236 = vmatmul.bf16.gmra.mxu0 %v1131
      %v1237 = vpop.f32.mrf.mxu0
      %v1238 = vadd.f32 0.0, %v1237
      %v1239 = vpop.f32.mrf.mxu0
      %v1240 = vadd.f32 0.0, %v1239
      %1241 = vmatmul.bf16.gmra.mxu0 %v1132
      %v1242 = vpop.f32.mrf.mxu0
      %v1243 = vadd.f32 0.0, %v1242
      %v1244 = vpop.f32.mrf.mxu0
      %v1245 = vadd.f32 0.0, %v1244
      %1246 = vdwg.mxu0
      %v1247 = vadd.f32 %v1077, %v1208
      %v1248 = vadd.f32 %v1078, %v1210
      %v1249 = vadd.f32 %v1079, %v1213
      %v1250 = vadd.f32 %v1080, %v1215
      %v1251 = vadd.f32 %v1081, %v1218
      %v1252 = vadd.f32 %v1082, %v1220
      %v1253 = vadd.f32 %v1083, %v1223
      %v1254 = vadd.f32 %v1084, %v1225
      %v1255 = vadd.f32 %v1085, %v1228
      %v1256 = vadd.f32 %v1086, %v1230
      %v1257 = vadd.f32 %v1087, %v1233
      %v1258 = vadd.f32 %v1088, %v1235
      %v1259 = vadd.f32 %v1089, %v1238
      %v1260 = vadd.f32 %v1090, %v1240
      %v1261 = vadd.f32 %v1091, %v1243
      %v1262 = vadd.f32 %v1092, %v1245
      %v1263 = vld [vmem:[#allocation2 + $0x18] sm:$0xff]
      %v1264 = vld [vmem:[#allocation2 + $0x20] sm:$0xff]
      %v1265 = vld [vmem:[#allocation2 + $0x28] sm:$0xff]
      %v1266 = vld [vmem:[#allocation2 + $0x30] sm:$0xff]
      %v1267 = vld [vmem:[#allocation2 + $0x38] sm:$0xff]
      %v1268 = vld [vmem:[#allocation2 + $0x40] sm:$0xff]
      %v1269 = vld [vmem:[#allocation2 + $0x48] sm:$0xff]
      %v1270 = vld [vmem:[#allocation2 + $0x50] sm:$0xff]
      %v1271 = vld [vmem:[#allocation2 + $0x58] sm:$0xff]
      %v1272 = vld [vmem:[#allocation2 + $0x60] sm:$0xff]
      %v1273 = vld [vmem:[#allocation2 + $0x68] sm:$0xff]
      %v1274 = vld [vmem:[#allocation2 + $0x70] sm:$0xff]
      %v1275 = vld [vmem:[#allocation2 + $0x78] sm:$0xff]
      %v1276 = vld [vmem:[#allocation2 + $0x80] sm:$0xff]
      %v1277 = vld [vmem:[#allocation2 + $0x88] sm:$0xff]
      %v1278 = vld [vmem:[#allocation2 + $0x90] sm:$0xff]
      %v1279 = vpack.c.bf16 %v1264, %v1263
      %v1280 = vpack.c.bf16 %v1266, %v1265
      %v1281 = vpack.c.bf16 %v1268, %v1267
      %v1282 = vpack.c.bf16 %v1270, %v1269
      %v1283 = vpack.c.bf16 %v1272, %v1271
      %v1284 = vpack.c.bf16 %v1274, %v1273
      %v1285 = vpack.c.bf16 %v1276, %v1275
      %v1286 = vpack.c.bf16 %v1278, %v1277
      %s1287 = scalar_lea.vmem %s297, 256
      %v1288 = vld [vmem:[%s1287] sm:$0xf]
      %v1289 = vld [vmem:[%s1287 + $0x4] sm:$0xf]
      %v1290 = vld [vmem:[%s1287 + $0x8] sm:$0xf]
      %v1291 = vld [vmem:[%s1287 + $0xc] sm:$0xf]
      %v1292 = vld [vmem:[%s1287 + $0x10] sm:$0xf]
      %v1293 = vld [vmem:[%s1287 + $0x14] sm:$0xf]
      %v1294 = vld [vmem:[%s1287 + $0x18] sm:$0xf]
      %v1295 = vld [vmem:[%s1287 + $0x1c] sm:$0xf]
      %v1296 = vld [vmem:[%s1287 + $0x20] sm:$0xf]
      %v1297 = vld [vmem:[%s1287 + $0x24] sm:$0xf]
      %v1298 = vld [vmem:[%s1287 + $0x28] sm:$0xf]
      %v1299 = vld [vmem:[%s1287 + $0x2c] sm:$0xf]
      %v1300 = vld [vmem:[%s1287 + $0x30] sm:$0xf]
      %v1301 = vld [vmem:[%s1287 + $0x34] sm:$0xf]
      %v1302 = vld [vmem:[%s1287 + $0x38] sm:$0xf]
      %v1303 = vld [vmem:[%s1287 + $0x3c] sm:$0xf]
      %v1320 = vunpack.c.l.b16 %v1288
      %v1321 = vunpack.c.l.b16 %v1289
      %v1322 = vunpack.c.l.b16 %v1290
      %v1323 = vunpack.c.l.b16 %v1291
      %v1324 = vunpack.c.l.b16 %v1292
      %v1325 = vunpack.c.l.b16 %v1293
      %v1326 = vunpack.c.l.b16 %v1294
      %v1327 = vunpack.c.l.b16 %v1295
      %v1328 = vunpack.c.l.b16 %v1296
      %v1329 = vunpack.c.l.b16 %v1297
      %v1330 = vunpack.c.l.b16 %v1298
      %v1331 = vunpack.c.l.b16 %v1299
      %v1332 = vunpack.c.l.b16 %v1300
      %v1333 = vunpack.c.l.b16 %v1301
      %v1334 = vunpack.c.l.b16 %v1302
      %v1335 = vunpack.c.l.b16 %v1303
      %v1336 = vpack.c.b16 %v1321, %v1320
      %v1337 = vpack.c.b16 %v1323, %v1322
      %v1338 = vpack.c.b16 %v1325, %v1324
      %v1339 = vpack.c.b16 %v1327, %v1326
      %v1340 = vpack.c.b16 %v1329, %v1328
      %v1341 = vpack.c.b16 %v1331, %v1330
      %v1342 = vpack.c.b16 %v1333, %v1332
      %v1343 = vpack.c.b16 %v1335, %v1334
      %1352 = vmatpush.bf16.msra.mxu0 %v1343
      %1353 = vmatpush.bf16.msra.mxu0 %v1342
      %1354 = vmatpush.bf16.msra.mxu0 %v1341
      %1355 = vmatpush.bf16.msra.mxu0 %v1340
      %1356 = vmatpush.bf16.msra.mxu0 %v1339
      %1357 = vmatpush.bf16.msra.mxu0 %v1338
      %1358 = vmatpush.bf16.msra.mxu0 %v1337
      %1359 = vmatpush.bf16.msra.mxu0 %v1336
      %1360 = vmatmul.bf16.gmra.mxu0 %v1279
      %v1361 = vpop.f32.mrf.mxu0
      %v1362 = vadd.f32 0.0, %v1361
      %v1363 = vpop.f32.mrf.mxu0
      %v1364 = vadd.f32 0.0, %v1363
      %1365 = vmatmul.bf16.gmra.mxu0 %v1280
      %v1366 = vpop.f32.mrf.mxu0
      %v1367 = vadd.f32 0.0, %v1366
      %v1368 = vpop.f32.mrf.mxu0
      %v1369 = vadd.f32 0.0, %v1368
      %1370 = vmatmul.bf16.gmra.mxu0 %v1281
      %v1371 = vpop.f32.mrf.mxu0
      %v1372 = vadd.f32 0.0, %v1371
      %v1373 = vpop.f32.mrf.mxu0
      %v1374 = vadd.f32 0.0, %v1373
      %1375 = vmatmul.bf16.gmra.mxu0 %v1282
      %v1376 = vpop.f32.mrf.mxu0
      %v1377 = vadd.f32 0.0, %v1376
      %v1378 = vpop.f32.mrf.mxu0
      %v1379 = vadd.f32 0.0, %v1378
      %1380 = vmatmul.bf16.gmra.mxu0 %v1283
      %v1381 = vpop.f32.mrf.mxu0
      %v1382 = vadd.f32 0.0, %v1381
      %v1383 = vpop.f32.mrf.mxu0
      %v1384 = vadd.f32 0.0, %v1383
      %1385 = vmatmul.bf16.gmra.mxu0 %v1284
      %v1386 = vpop.f32.mrf.mxu0
      %v1387 = vadd.f32 0.0, %v1386
      %v1388 = vpop.f32.mrf.mxu0
      %v1389 = vadd.f32 0.0, %v1388
      %1390 = vmatmul.bf16.gmra.mxu0 %v1285
      %v1391 = vpop.f32.mrf.mxu0
      %v1392 = vadd.f32 0.0, %v1391
      %v1393 = vpop.f32.mrf.mxu0
      %v1394 = vadd.f32 0.0, %v1393
      %1395 = vmatmul.bf16.gmra.mxu0 %v1286
      %v1396 = vpop.f32.mrf.mxu0
      %v1397 = vadd.f32 0.0, %v1396
      %v1398 = vpop.f32.mrf.mxu0
      %v1399 = vadd.f32 0.0, %v1398
      %1400 = vdwg.mxu0
      %v1401 = vadd.f32 %v1247, %v1362
      %v1402 = vadd.f32 %v1248, %v1364
      %v1403 = vadd.f32 %v1249, %v1367
      %v1404 = vadd.f32 %v1250, %v1369
      %v1405 = vadd.f32 %v1251, %v1372
      %v1406 = vadd.f32 %v1252, %v1374
      %v1407 = vadd.f32 %v1253, %v1377
      %v1408 = vadd.f32 %v1254, %v1379
      %v1409 = vadd.f32 %v1255, %v1382
      %v1410 = vadd.f32 %v1256, %v1384
      %v1411 = vadd.f32 %v1257, %v1387
      %v1412 = vadd.f32 %v1258, %v1389
      %v1413 = vadd.f32 %v1259, %v1392
      %v1414 = vadd.f32 %v1260, %v1394
      %v1415 = vadd.f32 %v1261, %v1397
      %v1416 = vadd.f32 %v1262, %v1399
      %v1417 = vld [vmem:[#allocation2 + $0x19] sm:$0xff]
      %v1418 = vld [vmem:[#allocation2 + $0x21] sm:$0xff]
      %v1419 = vld [vmem:[#allocation2 + $0x29] sm:$0xff]
      %v1420 = vld [vmem:[#allocation2 + $0x31] sm:$0xff]
      %v1421 = vld [vmem:[#allocation2 + $0x39] sm:$0xff]
      %v1422 = vld [vmem:[#allocation2 + $0x41] sm:$0xff]
      %v1423 = vld [vmem:[#allocation2 + $0x49] sm:$0xff]
      %v1424 = vld [vmem:[#allocation2 + $0x51] sm:$0xff]
      %v1425 = vld [vmem:[#allocation2 + $0x59] sm:$0xff]
      %v1426 = vld [vmem:[#allocation2 + $0x61] sm:$0xff]
      %v1427 = vld [vmem:[#allocation2 + $0x69] sm:$0xff]
      %v1428 = vld [vmem:[#allocation2 + $0x71] sm:$0xff]
      %v1429 = vld [vmem:[#allocation2 + $0x79] sm:$0xff]
      %v1430 = vld [vmem:[#allocation2 + $0x81] sm:$0xff]
      %v1431 = vld [vmem:[#allocation2 + $0x89] sm:$0xff]
      %v1432 = vld [vmem:[#allocation2 + $0x91] sm:$0xff]
      %v1433 = vsel %vm616, %v1417, 0.0
      %v1434 = vsel %vm617, %v1418, 0.0
      %v1435 = vsel %vm618, %v1419, 0.0
      %v1436 = vsel %vm619, %v1420, 0.0
      %v1437 = vsel %vm620, %v1421, 0.0
      %v1438 = vsel %vm621, %v1422, 0.0
      %v1439 = vsel %vm622, %v1423, 0.0
      %v1440 = vsel %vm623, %v1424, 0.0
      %v1441 = vsel %vm624, %v1425, 0.0
      %v1442 = vsel %vm625, %v1426, 0.0
      %v1443 = vsel %vm626, %v1427, 0.0
      %v1444 = vsel %vm627, %v1428, 0.0
      %v1445 = vsel %vm628, %v1429, 0.0
      %v1446 = vsel %vm629, %v1430, 0.0
      %v1447 = vsel %vm630, %v1431, 0.0
      %v1448 = vsel %vm631, %v1432, 0.0
      %v1449 = vpack.c.bf16 %v1434, %v1433
      %v1450 = vpack.c.bf16 %v1436, %v1435
      %v1451 = vpack.c.bf16 %v1438, %v1437
      %v1452 = vpack.c.bf16 %v1440, %v1439
      %v1453 = vpack.c.bf16 %v1442, %v1441
      %v1454 = vpack.c.bf16 %v1444, %v1443
      %v1455 = vpack.c.bf16 %v1446, %v1445
      %v1456 = vpack.c.bf16 %v1448, %v1447
      %s1457 = scalar_lea.vmem %s297, 320
      %v1458 = vld [vmem:[%s1457] sm:$0xf]
      %v1459 = vld [vmem:[%s1457 + $0x4] sm:$0xf]
      %v1460 = vld [vmem:[%s1457 + $0x8] sm:$0xf]
      %v1461 = vld [vmem:[%s1457 + $0xc] sm:$0xf]
      %v1462 = vld [vmem:[%s1457 + $0x10] sm:$0xf]
      %v1463 = vld [vmem:[%s1457 + $0x14] sm:$0xf]
      %v1464 = vld [vmem:[%s1457 + $0x18] sm:$0xf]
      %v1465 = vld [vmem:[%s1457 + $0x1c] sm:$0xf]
      %v1466 = vld [vmem:[%s1457 + $0x20] sm:$0xf]
      %v1467 = vld [vmem:[%s1457 + $0x24] sm:$0xf]
      %v1468 = vld [vmem:[%s1457 + $0x28] sm:$0xf]
      %v1469 = vld [vmem:[%s1457 + $0x2c] sm:$0xf]
      %v1470 = vld [vmem:[%s1457 + $0x30] sm:$0xf]
      %v1471 = vld [vmem:[%s1457 + $0x34] sm:$0xf]
      %v1472 = vld [vmem:[%s1457 + $0x38] sm:$0xf]
      %v1473 = vld [vmem:[%s1457 + $0x3c] sm:$0xf]
      %v1490 = vunpack.c.l.b16 %v1458
      %v1491 = vunpack.c.l.b16 %v1459
      %v1492 = vunpack.c.l.b16 %v1460
      %v1493 = vunpack.c.l.b16 %v1461
      %v1494 = vunpack.c.l.b16 %v1462
      %v1495 = vunpack.c.l.b16 %v1463
      %v1496 = vunpack.c.l.b16 %v1464
      %v1497 = vunpack.c.l.b16 %v1465
      %v1498 = vunpack.c.l.b16 %v1466
      %v1499 = vunpack.c.l.b16 %v1467
      %v1500 = vunpack.c.l.b16 %v1468
      %v1501 = vunpack.c.l.b16 %v1469
      %v1502 = vunpack.c.l.b16 %v1470
      %v1503 = vunpack.c.l.b16 %v1471
      %v1504 = vunpack.c.l.b16 %v1472
      %v1505 = vunpack.c.l.b16 %v1473
      %v1506 = vpack.c.b16 %v1491, %v1490
      %v1507 = vpack.c.b16 %v1493, %v1492
      %v1508 = vpack.c.b16 %v1495, %v1494
      %v1509 = vpack.c.b16 %v1497, %v1496
      %v1510 = vpack.c.b16 %v1499, %v1498
      %v1511 = vpack.c.b16 %v1501, %v1500
      %v1512 = vpack.c.b16 %v1503, %v1502
      %v1513 = vpack.c.b16 %v1505, %v1504
      %1522 = vmatpush.bf16.msra.mxu0 %v1513
      %1523 = vmatpush.bf16.msra.mxu0 %v1512
      %1524 = vmatpush.bf16.msra.mxu0 %v1511
      %1525 = vmatpush.bf16.msra.mxu0 %v1510
      %1526 = vmatpush.bf16.msra.mxu0 %v1509
      %1527 = vmatpush.bf16.msra.mxu0 %v1508
      %1528 = vmatpush.bf16.msra.mxu0 %v1507
      %1529 = vmatpush.bf16.msra.mxu0 %v1506
      %1530 = vmatmul.bf16.gmra.mxu0 %v1449
      %v1531 = vpop.f32.mrf.mxu0
      %v1532 = vadd.f32 0.0, %v1531
      %v1533 = vpop.f32.mrf.mxu0
      %v1534 = vadd.f32 0.0, %v1533
      %1535 = vmatmul.bf16.gmra.mxu0 %v1450
      %v1536 = vpop.f32.mrf.mxu0
      %v1537 = vadd.f32 0.0, %v1536
      %v1538 = vpop.f32.mrf.mxu0
      %v1539 = vadd.f32 0.0, %v1538
      %1540 = vmatmul.bf16.gmra.mxu0 %v1451
      %v1541 = vpop.f32.mrf.mxu0
      %v1542 = vadd.f32 0.0, %v1541
      %v1543 = vpop.f32.mrf.mxu0
      %v1544 = vadd.f32 0.0, %v1543
      %1545 = vmatmul.bf16.gmra.mxu0 %v1452
      %v1546 = vpop.f32.mrf.mxu0
      %v1547 = vadd.f32 0.0, %v1546
      %v1548 = vpop.f32.mrf.mxu0
      %v1549 = vadd.f32 0.0, %v1548
      %1550 = vmatmul.bf16.gmra.mxu0 %v1453
      %v1551 = vpop.f32.mrf.mxu0
      %v1552 = vadd.f32 0.0, %v1551
      %v1553 = vpop.f32.mrf.mxu0
      %v1554 = vadd.f32 0.0, %v1553
      %1555 = vmatmul.bf16.gmra.mxu0 %v1454
      %v1556 = vpop.f32.mrf.mxu0
      %v1557 = vadd.f32 0.0, %v1556
      %v1558 = vpop.f32.mrf.mxu0
      %v1559 = vadd.f32 0.0, %v1558
      %1560 = vmatmul.bf16.gmra.mxu0 %v1455
      %v1561 = vpop.f32.mrf.mxu0
      %v1562 = vadd.f32 0.0, %v1561
      %v1563 = vpop.f32.mrf.mxu0
      %v1564 = vadd.f32 0.0, %v1563
      %1565 = vmatmul.bf16.gmra.mxu0 %v1456
      %v1566 = vpop.f32.mrf.mxu0
      %v1567 = vadd.f32 0.0, %v1566
      %v1568 = vpop.f32.mrf.mxu0
      %v1569 = vadd.f32 0.0, %v1568
      %1570 = vdwg.mxu0
      %v1571 = vadd.f32 %v1401, %v1532
      %v1572 = vadd.f32 %v1402, %v1534
      %v1573 = vadd.f32 %v1403, %v1537
      %v1574 = vadd.f32 %v1404, %v1539
      %v1575 = vadd.f32 %v1405, %v1542
      %v1576 = vadd.f32 %v1406, %v1544
      %v1577 = vadd.f32 %v1407, %v1547
      %v1578 = vadd.f32 %v1408, %v1549
      %v1579 = vadd.f32 %v1409, %v1552
      %v1580 = vadd.f32 %v1410, %v1554
      %v1581 = vadd.f32 %v1411, %v1557
      %v1582 = vadd.f32 %v1412, %v1559
      %v1583 = vadd.f32 %v1413, %v1562
      %v1584 = vadd.f32 %v1414, %v1564
      %v1585 = vadd.f32 %v1415, %v1567
      %v1586 = vadd.f32 %v1416, %v1569
      %v1587 = vld [vmem:[#allocation2 + $0x27] sm:$0xff]
      %v1588 = vld [vmem:[#allocation2 + $0x2f] sm:$0xff]
      %v1589 = vld [vmem:[#allocation2 + $0x37] sm:$0xff]
      %v1590 = vld [vmem:[#allocation2 + $0x3f] sm:$0xff]
      %v1591 = vld [vmem:[#allocation2 + $0x47] sm:$0xff]
      %v1592 = vld [vmem:[#allocation2 + $0x4f] sm:$0xff]
      %v1593 = vld [vmem:[#allocation2 + $0x57] sm:$0xff]
      %v1594 = vld [vmem:[#allocation2 + $0x5f] sm:$0xff]
      %v1595 = vld [vmem:[#allocation2 + $0x67] sm:$0xff]
      %v1596 = vld [vmem:[#allocation2 + $0x6f] sm:$0xff]
      %v1597 = vld [vmem:[#allocation2 + $0x77] sm:$0xff]
      %v1598 = vld [vmem:[#allocation2 + $0x7f] sm:$0xff]
      %v1599 = vld [vmem:[#allocation2 + $0x87] sm:$0xff]
      %v1600 = vld [vmem:[#allocation2 + $0x8f] sm:$0xff]
      %v1601 = vld [vmem:[#allocation2 + $0x97] sm:$0xff]
      %v1602 = vld [vmem:[#allocation2 + $0x9f] sm:$0xff]
      %v1603 = vsel %vm600, %v1587, 0.0
      %v1604 = vsel %vm601, %v1588, 0.0
      %v1605 = vsel %vm602, %v1589, 0.0
      %v1606 = vsel %vm603, %v1590, 0.0
      %v1607 = vsel %vm604, %v1591, 0.0
      %v1608 = vsel %vm605, %v1592, 0.0
      %v1609 = vsel %vm606, %v1593, 0.0
      %v1610 = vsel %vm607, %v1594, 0.0
      %v1611 = vsel %vm608, %v1595, 0.0
      %v1612 = vsel %vm609, %v1596, 0.0
      %v1613 = vsel %vm610, %v1597, 0.0
      %v1614 = vsel %vm611, %v1598, 0.0
      %v1615 = vsel %vm612, %v1599, 0.0
      %v1616 = vsel %vm613, %v1600, 0.0
      %v1617 = vsel %vm614, %v1601, 0.0
      %v1618 = vsel %vm615, %v1602, 0.0
      %v1619 = vpack.c.bf16 %v1604, %v1603
      %v1620 = vpack.c.bf16 %v1606, %v1605
      %v1621 = vpack.c.bf16 %v1608, %v1607
      %v1622 = vpack.c.bf16 %v1610, %v1609
      %v1623 = vpack.c.bf16 %v1612, %v1611
      %v1624 = vpack.c.bf16 %v1614, %v1613
      %v1625 = vpack.c.bf16 %v1616, %v1615
      %v1626 = vpack.c.bf16 %v1618, %v1617
      %s1627 = scalar_lea.vmem %s297, 384
      %v1628 = vld [vmem:[%s1627] sm:$0xf]
      %v1629 = vld [vmem:[%s1627 + $0x4] sm:$0xf]
      %v1630 = vld [vmem:[%s1627 + $0x8] sm:$0xf]
      %v1631 = vld [vmem:[%s1627 + $0xc] sm:$0xf]
      %v1632 = vld [vmem:[%s1627 + $0x10] sm:$0xf]
      %v1633 = vld [vmem:[%s1627 + $0x14] sm:$0xf]
      %v1634 = vld [vmem:[%s1627 + $0x18] sm:$0xf]
      %v1635 = vld [vmem:[%s1627 + $0x1c] sm:$0xf]
      %v1636 = vld [vmem:[%s1627 + $0x20] sm:$0xf]
      %v1637 = vld [vmem:[%s1627 + $0x24] sm:$0xf]
      %v1638 = vld [vmem:[%s1627 + $0x28] sm:$0xf]
      %v1639 = vld [vmem:[%s1627 + $0x2c] sm:$0xf]
      %v1640 = vld [vmem:[%s1627 + $0x30] sm:$0xf]
      %v1641 = vld [vmem:[%s1627 + $0x34] sm:$0xf]
      %v1642 = vld [vmem:[%s1627 + $0x38] sm:$0xf]
      %v1643 = vld [vmem:[%s1627 + $0x3c] sm:$0xf]
      %v1660 = vunpack.c.l.b16 %v1628
      %v1661 = vunpack.c.l.b16 %v1629
      %v1662 = vunpack.c.l.b16 %v1630
      %v1663 = vunpack.c.l.b16 %v1631
      %v1664 = vunpack.c.l.b16 %v1632
      %v1665 = vunpack.c.l.b16 %v1633
      %v1666 = vunpack.c.l.b16 %v1634
      %v1667 = vunpack.c.l.b16 %v1635
      %v1668 = vunpack.c.l.b16 %v1636
      %v1669 = vunpack.c.l.b16 %v1637
      %v1670 = vunpack.c.l.b16 %v1638
      %v1671 = vunpack.c.l.b16 %v1639
      %v1672 = vunpack.c.l.b16 %v1640
      %v1673 = vunpack.c.l.b16 %v1641
      %v1674 = vunpack.c.l.b16 %v1642
      %v1675 = vunpack.c.l.b16 %v1643
      %v1676 = vpack.c.b16 %v1661, %v1660
      %v1677 = vpack.c.b16 %v1663, %v1662
      %v1678 = vpack.c.b16 %v1665, %v1664
      %v1679 = vpack.c.b16 %v1667, %v1666
      %v1680 = vpack.c.b16 %v1669, %v1668
      %v1681 = vpack.c.b16 %v1671, %v1670
      %v1682 = vpack.c.b16 %v1673, %v1672
      %v1683 = vpack.c.b16 %v1675, %v1674
      %1692 = vmatpush.bf16.msra.mxu0 %v1683
      %1693 = vmatpush.bf16.msra.mxu0 %v1682
      %1694 = vmatpush.bf16.msra.mxu0 %v1681
      %1695 = vmatpush.bf16.msra.mxu0 %v1680
      %1696 = vmatpush.bf16.msra.mxu0 %v1679
      %1697 = vmatpush.bf16.msra.mxu0 %v1678
      %1698 = vmatpush.bf16.msra.mxu0 %v1677
      %1699 = vmatpush.bf16.msra.mxu0 %v1676
      %1700 = vmatmul.bf16.gmra.mxu0 %v1619
      %v1701 = vpop.f32.mrf.mxu0
      %v1702 = vadd.f32 0.0, %v1701
      %v1703 = vpop.f32.mrf.mxu0
      %v1704 = vadd.f32 0.0, %v1703
      %1705 = vmatmul.bf16.gmra.mxu0 %v1620
      %v1706 = vpop.f32.mrf.mxu0
      %v1707 = vadd.f32 0.0, %v1706
      %v1708 = vpop.f32.mrf.mxu0
      %v1709 = vadd.f32 0.0, %v1708
      %1710 = vmatmul.bf16.gmra.mxu0 %v1621
      %v1711 = vpop.f32.mrf.mxu0
      %v1712 = vadd.f32 0.0, %v1711
      %v1713 = vpop.f32.mrf.mxu0
      %v1714 = vadd.f32 0.0, %v1713
      %1715 = vmatmul.bf16.gmra.mxu0 %v1622
      %v1716 = vpop.f32.mrf.mxu0
      %v1717 = vadd.f32 0.0, %v1716
      %v1718 = vpop.f32.mrf.mxu0
      %v1719 = vadd.f32 0.0, %v1718
      %1720 = vmatmul.bf16.gmra.mxu0 %v1623
      %v1721 = vpop.f32.mrf.mxu0
      %v1722 = vadd.f32 0.0, %v1721
      %v1723 = vpop.f32.mrf.mxu0
      %v1724 = vadd.f32 0.0, %v1723
      %1725 = vmatmul.bf16.gmra.mxu0 %v1624
      %v1726 = vpop.f32.mrf.mxu0
      %v1727 = vadd.f32 0.0, %v1726
      %v1728 = vpop.f32.mrf.mxu0
      %v1729 = vadd.f32 0.0, %v1728
      %1730 = vmatmul.bf16.gmra.mxu0 %v1625
      %v1731 = vpop.f32.mrf.mxu0
      %v1732 = vadd.f32 0.0, %v1731
      %v1733 = vpop.f32.mrf.mxu0
      %v1734 = vadd.f32 0.0, %v1733
      %1735 = vmatmul.bf16.gmra.mxu0 %v1626
      %v1736 = vpop.f32.mrf.mxu0
      %v1737 = vadd.f32 0.0, %v1736
      %v1738 = vpop.f32.mrf.mxu0
      %v1739 = vadd.f32 0.0, %v1738
      %1740 = vdwg.mxu0
      %v1741 = vadd.f32 %v1571, %v1702
      %v1742 = vadd.f32 %v1572, %v1704
      %v1743 = vadd.f32 %v1573, %v1707
      %v1744 = vadd.f32 %v1574, %v1709
      %v1745 = vadd.f32 %v1575, %v1712
      %v1746 = vadd.f32 %v1576, %v1714
      %v1747 = vadd.f32 %v1577, %v1717
      %v1748 = vadd.f32 %v1578, %v1719
      %v1749 = vadd.f32 %v1579, %v1722
      %v1750 = vadd.f32 %v1580, %v1724
      %v1751 = vadd.f32 %v1581, %v1727
      %v1752 = vadd.f32 %v1582, %v1729
      %v1753 = vadd.f32 %v1583, %v1732
      %v1754 = vadd.f32 %v1584, %v1734
      %v1755 = vadd.f32 %v1585, %v1737
      %v1756 = vadd.f32 %v1586, %v1739
      %v1757 = vld [vmem:[#allocation2 + $0x28] sm:$0xff]
      %v1758 = vld [vmem:[#allocation2 + $0x30] sm:$0xff]
      %v1759 = vld [vmem:[#allocation2 + $0x38] sm:$0xff]
      %v1760 = vld [vmem:[#allocation2 + $0x40] sm:$0xff]
      %v1761 = vld [vmem:[#allocation2 + $0x48] sm:$0xff]
      %v1762 = vld [vmem:[#allocation2 + $0x50] sm:$0xff]
      %v1763 = vld [vmem:[#allocation2 + $0x58] sm:$0xff]
      %v1764 = vld [vmem:[#allocation2 + $0x60] sm:$0xff]
      %v1765 = vld [vmem:[#allocation2 + $0x68] sm:$0xff]
      %v1766 = vld [vmem:[#allocation2 + $0x70] sm:$0xff]
      %v1767 = vld [vmem:[#allocation2 + $0x78] sm:$0xff]
      %v1768 = vld [vmem:[#allocation2 + $0x80] sm:$0xff]
      %v1769 = vld [vmem:[#allocation2 + $0x88] sm:$0xff]
      %v1770 = vld [vmem:[#allocation2 + $0x90] sm:$0xff]
      %v1771 = vld [vmem:[#allocation2 + $0x98] sm:$0xff]
      %v1772 = vld [vmem:[#allocation2 + $0xa0] sm:$0xff]
      %v1773 = vpack.c.bf16 %v1758, %v1757
      %v1774 = vpack.c.bf16 %v1760, %v1759
      %v1775 = vpack.c.bf16 %v1762, %v1761
      %v1776 = vpack.c.bf16 %v1764, %v1763
      %v1777 = vpack.c.bf16 %v1766, %v1765
      %v1778 = vpack.c.bf16 %v1768, %v1767
      %v1779 = vpack.c.bf16 %v1770, %v1769
      %v1780 = vpack.c.bf16 %v1772, %v1771
      %s1781 = scalar_lea.vmem %s297, 448
      %v1782 = vld [vmem:[%s1781] sm:$0xf]
      %v1783 = vld [vmem:[%s1781 + $0x4] sm:$0xf]
      %v1784 = vld [vmem:[%s1781 + $0x8] sm:$0xf]
      %v1785 = vld [vmem:[%s1781 + $0xc] sm:$0xf]
      %v1786 = vld [vmem:[%s1781 + $0x10] sm:$0xf]
      %v1787 = vld [vmem:[%s1781 + $0x14] sm:$0xf]
      %v1788 = vld [vmem:[%s1781 + $0x18] sm:$0xf]
      %v1789 = vld [vmem:[%s1781 + $0x1c] sm:$0xf]
      %v1790 = vld [vmem:[%s1781 + $0x20] sm:$0xf]
      %v1791 = vld [vmem:[%s1781 + $0x24] sm:$0xf]
      %v1792 = vld [vmem:[%s1781 + $0x28] sm:$0xf]
      %v1793 = vld [vmem:[%s1781 + $0x2c] sm:$0xf]
      %v1794 = vld [vmem:[%s1781 + $0x30] sm:$0xf]
      %v1795 = vld [vmem:[%s1781 + $0x34] sm:$0xf]
      %v1796 = vld [vmem:[%s1781 + $0x38] sm:$0xf]
      %v1797 = vld [vmem:[%s1781 + $0x3c] sm:$0xf]
      %v1814 = vunpack.c.l.b16 %v1782
      %v1815 = vunpack.c.l.b16 %v1783
      %v1816 = vunpack.c.l.b16 %v1784
      %v1817 = vunpack.c.l.b16 %v1785
      %v1818 = vunpack.c.l.b16 %v1786
      %v1819 = vunpack.c.l.b16 %v1787
      %v1820 = vunpack.c.l.b16 %v1788
      %v1821 = vunpack.c.l.b16 %v1789
      %v1822 = vunpack.c.l.b16 %v1790
      %v1823 = vunpack.c.l.b16 %v1791
      %v1824 = vunpack.c.l.b16 %v1792
      %v1825 = vunpack.c.l.b16 %v1793
      %v1826 = vunpack.c.l.b16 %v1794
      %v1827 = vunpack.c.l.b16 %v1795
      %v1828 = vunpack.c.l.b16 %v1796
      %v1829 = vunpack.c.l.b16 %v1797
      %v1830 = vpack.c.b16 %v1815, %v1814
      %v1831 = vpack.c.b16 %v1817, %v1816
      %v1832 = vpack.c.b16 %v1819, %v1818
      %v1833 = vpack.c.b16 %v1821, %v1820
      %v1834 = vpack.c.b16 %v1823, %v1822
      %v1835 = vpack.c.b16 %v1825, %v1824
      %v1836 = vpack.c.b16 %v1827, %v1826
      %v1837 = vpack.c.b16 %v1829, %v1828
      %1846 = vmatpush.bf16.msra.mxu0 %v1837
      %1847 = vmatpush.bf16.msra.mxu0 %v1836
      %1848 = vmatpush.bf16.msra.mxu0 %v1835
      %1849 = vmatpush.bf16.msra.mxu0 %v1834
      %1850 = vmatpush.bf16.msra.mxu0 %v1833
      %1851 = vmatpush.bf16.msra.mxu0 %v1832
      %1852 = vmatpush.bf16.msra.mxu0 %v1831
      %1853 = vmatpush.bf16.msra.mxu0 %v1830
      %1854 = vmatmul.bf16.gmra.mxu0 %v1773
      %v1855 = vpop.f32.mrf.mxu0
      %v1856 = vadd.f32 0.0, %v1855
      %v1857 = vpop.f32.mrf.mxu0
      %v1858 = vadd.f32 0.0, %v1857
      %1859 = vmatmul.bf16.gmra.mxu0 %v1774
      %v1860 = vpop.f32.mrf.mxu0
      %v1861 = vadd.f32 0.0, %v1860
      %v1862 = vpop.f32.mrf.mxu0
      %v1863 = vadd.f32 0.0, %v1862
      %1864 = vmatmul.bf16.gmra.mxu0 %v1775
      %v1865 = vpop.f32.mrf.mxu0
      %v1866 = vadd.f32 0.0, %v1865
      %v1867 = vpop.f32.mrf.mxu0
      %v1868 = vadd.f32 0.0, %v1867
      %1869 = vmatmul.bf16.gmra.mxu0 %v1776
      %v1870 = vpop.f32.mrf.mxu0
      %v1871 = vadd.f32 0.0, %v1870
      %v1872 = vpop.f32.mrf.mxu0
      %v1873 = vadd.f32 0.0, %v1872
      %1874 = vmatmul.bf16.gmra.mxu0 %v1777
      %v1875 = vpop.f32.mrf.mxu0
      %v1876 = vadd.f32 0.0, %v1875
      %v1877 = vpop.f32.mrf.mxu0
      %v1878 = vadd.f32 0.0, %v1877
      %1879 = vmatmul.bf16.gmra.mxu0 %v1778
      %v1880 = vpop.f32.mrf.mxu0
      %v1881 = vadd.f32 0.0, %v1880
      %v1882 = vpop.f32.mrf.mxu0
      %v1883 = vadd.f32 0.0, %v1882
      %1884 = vmatmul.bf16.gmra.mxu0 %v1779
      %v1885 = vpop.f32.mrf.mxu0
      %v1886 = vadd.f32 0.0, %v1885
      %v1887 = vpop.f32.mrf.mxu0
      %v1888 = vadd.f32 0.0, %v1887
      %1889 = vmatmul.bf16.gmra.mxu0 %v1780
      %v1890 = vpop.f32.mrf.mxu0
      %v1891 = vadd.f32 0.0, %v1890
      %v1892 = vpop.f32.mrf.mxu0
      %v1893 = vadd.f32 0.0, %v1892
      %1894 = vdwg.mxu0
      %v1895 = vadd.f32 %v1741, %v1856
      %v1896 = vadd.f32 %v1742, %v1858
      %v1897 = vadd.f32 %v1743, %v1861
      %v1898 = vadd.f32 %v1744, %v1863
      %v1899 = vadd.f32 %v1745, %v1866
      %v1900 = vadd.f32 %v1746, %v1868
      %v1901 = vadd.f32 %v1747, %v1871
      %v1902 = vadd.f32 %v1748, %v1873
      %v1903 = vadd.f32 %v1749, %v1876
      %v1904 = vadd.f32 %v1750, %v1878
      %v1905 = vadd.f32 %v1751, %v1881
      %v1906 = vadd.f32 %v1752, %v1883
      %v1907 = vadd.f32 %v1753, %v1886
      %v1908 = vadd.f32 %v1754, %v1888
      %v1909 = vadd.f32 %v1755, %v1891
      %v1910 = vadd.f32 %v1756, %v1893
      %v1911 = vld [vmem:[#allocation2 + $0x29] sm:$0xff]
      %v1912 = vld [vmem:[#allocation2 + $0x31] sm:$0xff]
      %v1913 = vld [vmem:[#allocation2 + $0x39] sm:$0xff]
      %v1914 = vld [vmem:[#allocation2 + $0x41] sm:$0xff]
      %v1915 = vld [vmem:[#allocation2 + $0x49] sm:$0xff]
      %v1916 = vld [vmem:[#allocation2 + $0x51] sm:$0xff]
      %v1917 = vld [vmem:[#allocation2 + $0x59] sm:$0xff]
      %v1918 = vld [vmem:[#allocation2 + $0x61] sm:$0xff]
      %v1919 = vld [vmem:[#allocation2 + $0x69] sm:$0xff]
      %v1920 = vld [vmem:[#allocation2 + $0x71] sm:$0xff]
      %v1921 = vld [vmem:[#allocation2 + $0x79] sm:$0xff]
      %v1922 = vld [vmem:[#allocation2 + $0x81] sm:$0xff]
      %v1923 = vld [vmem:[#allocation2 + $0x89] sm:$0xff]
      %v1924 = vld [vmem:[#allocation2 + $0x91] sm:$0xff]
      %v1925 = vld [vmem:[#allocation2 + $0x99] sm:$0xff]
      %v1926 = vld [vmem:[#allocation2 + $0xa1] sm:$0xff]
      %v1927 = vsel %vm616, %v1911, 0.0
      %v1928 = vsel %vm617, %v1912, 0.0
      %v1929 = vsel %vm618, %v1913, 0.0
      %v1930 = vsel %vm619, %v1914, 0.0
      %v1931 = vsel %vm620, %v1915, 0.0
      %v1932 = vsel %vm621, %v1916, 0.0
      %v1933 = vsel %vm622, %v1917, 0.0
      %v1934 = vsel %vm623, %v1918, 0.0
      %v1935 = vsel %vm624, %v1919, 0.0
      %v1936 = vsel %vm625, %v1920, 0.0
      %v1937 = vsel %vm626, %v1921, 0.0
      %v1938 = vsel %vm627, %v1922, 0.0
      %v1939 = vsel %vm628, %v1923, 0.0
      %v1940 = vsel %vm629, %v1924, 0.0
      %v1941 = vsel %vm630, %v1925, 0.0
      %v1942 = vsel %vm631, %v1926, 0.0
      %v1943 = vpack.c.bf16 %v1928, %v1927
      %v1944 = vpack.c.bf16 %v1930, %v1929
      %v1945 = vpack.c.bf16 %v1932, %v1931
      %v1946 = vpack.c.bf16 %v1934, %v1933
      %v1947 = vpack.c.bf16 %v1936, %v1935
      %v1948 = vpack.c.bf16 %v1938, %v1937
      %v1949 = vpack.c.bf16 %v1940, %v1939
      %v1950 = vpack.c.bf16 %v1942, %v1941
      %s1951 = scalar_lea.vmem %s297, 512
      %v1952 = vld [vmem:[%s1951] sm:$0xf]
      %v1953 = vld [vmem:[%s1951 + $0x4] sm:$0xf]
      %v1954 = vld [vmem:[%s1951 + $0x8] sm:$0xf]
      %v1955 = vld [vmem:[%s1951 + $0xc] sm:$0xf]
      %v1956 = vld [vmem:[%s1951 + $0x10] sm:$0xf]
      %v1957 = vld [vmem:[%s1951 + $0x14] sm:$0xf]
      %v1958 = vld [vmem:[%s1951 + $0x18] sm:$0xf]
      %v1959 = vld [vmem:[%s1951 + $0x1c] sm:$0xf]
      %v1960 = vld [vmem:[%s1951 + $0x20] sm:$0xf]
      %v1961 = vld [vmem:[%s1951 + $0x24] sm:$0xf]
      %v1962 = vld [vmem:[%s1951 + $0x28] sm:$0xf]
      %v1963 = vld [vmem:[%s1951 + $0x2c] sm:$0xf]
      %v1964 = vld [vmem:[%s1951 + $0x30] sm:$0xf]
      %v1965 = vld [vmem:[%s1951 + $0x34] sm:$0xf]
      %v1966 = vld [vmem:[%s1951 + $0x38] sm:$0xf]
      %v1967 = vld [vmem:[%s1951 + $0x3c] sm:$0xf]
      %v1984 = vunpack.c.l.b16 %v1952
      %v1985 = vunpack.c.l.b16 %v1953
      %v1986 = vunpack.c.l.b16 %v1954
      %v1987 = vunpack.c.l.b16 %v1955
      %v1988 = vunpack.c.l.b16 %v1956
      %v1989 = vunpack.c.l.b16 %v1957
      %v1990 = vunpack.c.l.b16 %v1958
      %v1991 = vunpack.c.l.b16 %v1959
      %v1992 = vunpack.c.l.b16 %v1960
      %v1993 = vunpack.c.l.b16 %v1961
      %v1994 = vunpack.c.l.b16 %v1962
      %v1995 = vunpack.c.l.b16 %v1963
      %v1996 = vunpack.c.l.b16 %v1964
      %v1997 = vunpack.c.l.b16 %v1965
      %v1998 = vunpack.c.l.b16 %v1966
      %v1999 = vunpack.c.l.b16 %v1967
      %v2000 = vpack.c.b16 %v1985, %v1984
      %v2001 = vpack.c.b16 %v1987, %v1986
      %v2002 = vpack.c.b16 %v1989, %v1988
      %v2003 = vpack.c.b16 %v1991, %v1990
      %v2004 = vpack.c.b16 %v1993, %v1992
      %v2005 = vpack.c.b16 %v1995, %v1994
      %v2006 = vpack.c.b16 %v1997, %v1996
      %v2007 = vpack.c.b16 %v1999, %v1998
      %2016 = vmatpush.bf16.msra.mxu0 %v2007
      %2017 = vmatpush.bf16.msra.mxu0 %v2006
      %2018 = vmatpush.bf16.msra.mxu0 %v2005
      %2019 = vmatpush.bf16.msra.mxu0 %v2004
      %2020 = vmatpush.bf16.msra.mxu0 %v2003
      %2021 = vmatpush.bf16.msra.mxu0 %v2002
      %2022 = vmatpush.bf16.msra.mxu0 %v2001
      %2023 = vmatpush.bf16.msra.mxu0 %v2000
      %2024 = vmatmul.bf16.gmra.mxu0 %v1943
      %v2025 = vpop.f32.mrf.mxu0
      %v2026 = vadd.f32 0.0, %v2025
      %v2027 = vpop.f32.mrf.mxu0
      %v2028 = vadd.f32 0.0, %v2027
      %2029 = vmatmul.bf16.gmra.mxu0 %v1944
      %v2030 = vpop.f32.mrf.mxu0
      %v2031 = vadd.f32 0.0, %v2030
      %v2032 = vpop.f32.mrf.mxu0
      %v2033 = vadd.f32 0.0, %v2032
      %2034 = vmatmul.bf16.gmra.mxu0 %v1945
      %v2035 = vpop.f32.mrf.mxu0
      %v2036 = vadd.f32 0.0, %v2035
      %v2037 = vpop.f32.mrf.mxu0
      %v2038 = vadd.f32 0.0, %v2037
      %2039 = vmatmul.bf16.gmra.mxu0 %v1946
      %v2040 = vpop.f32.mrf.mxu0
      %v2041 = vadd.f32 0.0, %v2040
      %v2042 = vpop.f32.mrf.mxu0
      %v2043 = vadd.f32 0.0, %v2042
      %2044 = vmatmul.bf16.gmra.mxu0 %v1947
      %v2045 = vpop.f32.mrf.mxu0
      %v2046 = vadd.f32 0.0, %v2045
      %v2047 = vpop.f32.mrf.mxu0
      %v2048 = vadd.f32 0.0, %v2047
      %2049 = vmatmul.bf16.gmra.mxu0 %v1948
      %v2050 = vpop.f32.mrf.mxu0
      %v2051 = vadd.f32 0.0, %v2050
      %v2052 = vpop.f32.mrf.mxu0
      %v2053 = vadd.f32 0.0, %v2052
      %2054 = vmatmul.bf16.gmra.mxu0 %v1949
      %v2055 = vpop.f32.mrf.mxu0
      %v2056 = vadd.f32 0.0, %v2055
      %v2057 = vpop.f32.mrf.mxu0
      %v2058 = vadd.f32 0.0, %v2057
      %2059 = vmatmul.bf16.gmra.mxu0 %v1950
      %v2060 = vpop.f32.mrf.mxu0
      %v2061 = vadd.f32 0.0, %v2060
      %v2062 = vpop.f32.mrf.mxu0
      %v2063 = vadd.f32 0.0, %v2062
      %2064 = vdwg.mxu0
      %v2065 = vadd.f32 %v1895, %v2026
      %v2066 = vadd.f32 %v1896, %v2028
      %v2067 = vadd.f32 %v1897, %v2031
      %v2068 = vadd.f32 %v1898, %v2033
      %v2069 = vadd.f32 %v1899, %v2036
      %v2070 = vadd.f32 %v1900, %v2038
      %v2071 = vadd.f32 %v1901, %v2041
      %v2072 = vadd.f32 %v1902, %v2043
      %v2073 = vadd.f32 %v1903, %v2046
      %v2074 = vadd.f32 %v1904, %v2048
      %v2075 = vadd.f32 %v1905, %v2051
      %v2076 = vadd.f32 %v1906, %v2053
      %v2077 = vadd.f32 %v1907, %v2056
      %v2078 = vadd.f32 %v1908, %v2058
      %v2079 = vadd.f32 %v1909, %v2061
      %v2080 = vadd.f32 %v1910, %v2063
      %v2081 = vld [vmem:[%s300] sm:$0x1]
      %v2083 = vperm.slane %v2081, 0
      %v2085 = vadd.f32 %v2065, %v2083
      %v2086 = vadd.f32 %v2066, %v2083
      %v2087 = vadd.f32 %v2067, %v2083
      %v2088 = vadd.f32 %v2068, %v2083
      %v2089 = vadd.f32 %v2069, %v2083
      %v2090 = vadd.f32 %v2070, %v2083
      %v2091 = vadd.f32 %v2071, %v2083
      %v2092 = vadd.f32 %v2072, %v2083
      %v2093 = vadd.f32 %v2073, %v2083
      %v2094 = vadd.f32 %v2074, %v2083
      %v2095 = vadd.f32 %v2075, %v2083
      %v2096 = vadd.f32 %v2076, %v2083
      %v2097 = vadd.f32 %v2077, %v2083
      %v2098 = vadd.f32 %v2078, %v2083
      %v2099 = vadd.f32 %v2079, %v2083
      %v2100 = vadd.f32 %v2080, %v2083
      %v2101 = vmax.f32 %v2085, 0.0
      %v2102 = vmax.f32 %v2086, 0.0
      %v2103 = vmax.f32 %v2087, 0.0
      %v2104 = vmax.f32 %v2088, 0.0
      %v2105 = vmax.f32 %v2089, 0.0
      %v2106 = vmax.f32 %v2090, 0.0
      %v2107 = vmax.f32 %v2091, 0.0
      %v2108 = vmax.f32 %v2092, 0.0
      %v2109 = vmax.f32 %v2093, 0.0
      %v2110 = vmax.f32 %v2094, 0.0
      %v2111 = vmax.f32 %v2095, 0.0
      %v2112 = vmax.f32 %v2096, 0.0
      %v2113 = vmax.f32 %v2097, 0.0
      %v2114 = vmax.f32 %v2098, 0.0
      %v2115 = vmax.f32 %v2099, 0.0
      %v2116 = vmax.f32 %v2100, 0.0
      %v2117 = vld [vmem:[%s312] sm:$0xf]
      %v2118 = vld [vmem:[%s312 + $0x4] sm:$0xf]
      %v2119 = vld [vmem:[%s312 + $0x8] sm:$0xf]
      %v2120 = vld [vmem:[%s312 + $0xc] sm:$0xf]
      %v2121 = vld [vmem:[%s312 + $0x10] sm:$0xf]
      %v2122 = vld [vmem:[%s312 + $0x14] sm:$0xf]
      %v2123 = vld [vmem:[%s312 + $0x18] sm:$0xf]
      %v2124 = vld [vmem:[%s312 + $0x1c] sm:$0xf]
      %v2125 = vld [vmem:[%s312 + $0x20] sm:$0xf]
      %v2126 = vld [vmem:[%s312 + $0x24] sm:$0xf]
      %v2127 = vld [vmem:[%s312 + $0x28] sm:$0xf]
      %v2128 = vld [vmem:[%s312 + $0x2c] sm:$0xf]
      %v2129 = vld [vmem:[%s312 + $0x30] sm:$0xf]
      %v2130 = vld [vmem:[%s312 + $0x34] sm:$0xf]
      %v2131 = vld [vmem:[%s312 + $0x38] sm:$0xf]
      %v2132 = vld [vmem:[%s312 + $0x3c] sm:$0xf]
      %v2133 = vunpack.c.l.bf16 %v2117
      %v2134 = vunpack.c.l.bf16 %v2118
      %v2135 = vunpack.c.l.bf16 %v2119
      %v2136 = vunpack.c.l.bf16 %v2120
      %v2137 = vunpack.c.l.bf16 %v2121
      %v2138 = vunpack.c.l.bf16 %v2122
      %v2139 = vunpack.c.l.bf16 %v2123
      %v2140 = vunpack.c.l.bf16 %v2124
      %v2141 = vunpack.c.l.bf16 %v2125
      %v2142 = vunpack.c.l.bf16 %v2126
      %v2143 = vunpack.c.l.bf16 %v2127
      %v2144 = vunpack.c.l.bf16 %v2128
      %v2145 = vunpack.c.l.bf16 %v2129
      %v2146 = vunpack.c.l.bf16 %v2130
      %v2147 = vunpack.c.l.bf16 %v2131
      %v2148 = vunpack.c.l.bf16 %v2132
      %v2149 = vadd.f32 %v2101, %v2133
      %v2150 = vadd.f32 %v2102, %v2134
      %v2151 = vadd.f32 %v2103, %v2135
      %v2152 = vadd.f32 %v2104, %v2136
      %v2153 = vadd.f32 %v2105, %v2137
      %v2154 = vadd.f32 %v2106, %v2138
      %v2155 = vadd.f32 %v2107, %v2139
      %v2156 = vadd.f32 %v2108, %v2140
      %v2157 = vadd.f32 %v2109, %v2141
      %v2158 = vadd.f32 %v2110, %v2142
      %v2159 = vadd.f32 %v2111, %v2143
      %v2160 = vadd.f32 %v2112, %v2144
      %v2161 = vadd.f32 %v2113, %v2145
      %v2162 = vadd.f32 %v2114, %v2146
      %v2163 = vadd.f32 %v2115, %v2147
      %v2164 = vadd.f32 %v2116, %v2148
      %v2165 = vmax.f32 %v2149, 0.0
      %v2166 = vmax.f32 %v2150, 0.0
      %v2167 = vmax.f32 %v2151, 0.0
      %v2168 = vmax.f32 %v2152, 0.0
      %v2169 = vmax.f32 %v2153, 0.0
      %v2170 = vmax.f32 %v2154, 0.0
      %v2171 = vmax.f32 %v2155, 0.0
      %v2172 = vmax.f32 %v2156, 0.0
      %v2173 = vmax.f32 %v2157, 0.0
      %v2174 = vmax.f32 %v2158, 0.0
      %v2175 = vmax.f32 %v2159, 0.0
      %v2176 = vmax.f32 %v2160, 0.0
      %v2177 = vmax.f32 %v2161, 0.0
      %v2178 = vmax.f32 %v2162, 0.0
      %v2179 = vmax.f32 %v2163, 0.0
      %v2180 = vmax.f32 %v2164, 0.0
      %v2181 = vpack.c.bf16 %v2165, %v2165
      %v2182 = vpack.c.bf16 %v2166, %v2166
      %v2183 = vpack.c.bf16 %v2167, %v2167
      %v2184 = vpack.c.bf16 %v2168, %v2168
      %v2185 = vpack.c.bf16 %v2169, %v2169
      %v2186 = vpack.c.bf16 %v2170, %v2170
      %v2187 = vpack.c.bf16 %v2171, %v2171
      %v2188 = vpack.c.bf16 %v2172, %v2172
      %v2189 = vpack.c.bf16 %v2173, %v2173
      %v2190 = vpack.c.bf16 %v2174, %v2174
      %v2191 = vpack.c.bf16 %v2175, %v2175
      %v2192 = vpack.c.bf16 %v2176, %v2176
      %v2193 = vpack.c.bf16 %v2177, %v2177
      %v2194 = vpack.c.bf16 %v2178, %v2178
      %v2195 = vpack.c.bf16 %v2179, %v2179
      %v2196 = vpack.c.bf16 %v2180, %v2180
      %2197 = vst [vmem:[%s324] sm:$0xf] %v2181
      %2198 = vst [vmem:[%s324 + $0x4] sm:$0xf] %v2182
      %2199 = vst [vmem:[%s324 + $0x8] sm:$0xf] %v2183
      %2200 = vst [vmem:[%s324 + $0xc] sm:$0xf] %v2184
      %2201 = vst [vmem:[%s324 + $0x10] sm:$0xf] %v2185
      %2202 = vst [vmem:[%s324 + $0x14] sm:$0xf] %v2186
      %2203 = vst [vmem:[%s324 + $0x18] sm:$0xf] %v2187
      %2204 = vst [vmem:[%s324 + $0x1c] sm:$0xf] %v2188
      %2205 = vst [vmem:[%s324 + $0x20] sm:$0xf] %v2189
      %2206 = vst [vmem:[%s324 + $0x24] sm:$0xf] %v2190
      %2207 = vst [vmem:[%s324 + $0x28] sm:$0xf] %v2191
      %2208 = vst [vmem:[%s324 + $0x2c] sm:$0xf] %v2192
      %2209 = vst [vmem:[%s324 + $0x30] sm:$0xf] %v2193
      %2210 = vst [vmem:[%s324 + $0x34] sm:$0xf] %v2194
      %2211 = vst [vmem:[%s324 + $0x38] sm:$0xf] %v2195
      %2212 = vst [vmem:[%s324 + $0x3c] sm:$0xf] %v2196
      %p2213 = scmp.lt.s32.totalorder %s20, 1
      %s2214 = scalar_select %p2213, %s20, 1
      %p2215 = scmp.lt.s32.totalorder %s21, 1
      %s2216 = scalar_select %p2215, %s21, 1
      %p2217 = scmp.lt.s32.totalorder %s22, 0
      %s2218 = scalar_select %p2217, %s22, 0
      %s2219 = smul.addr %s2216, 16
      %s2220 = sadd.s32 %s2218, %s2219
      %s2221 = smul.addr %s2214, 32
      %s2222 = sadd.s32 %s2220, %s2221
      %s2223 = smul.addr %s2222, 4
      %s2224 = scalar_lea.vmem %s4, %s2223
      // Predicated region
      $region37: #{resnet_forward.12} parent=35 // pred_check
        %p2225 = pneg %p166
      $region38: #{resnet_forward.12} parent=35 // pred_check_branch
        %2227 = sbr.rel (%p2225) target = $region40
      $region39: #{resnet_forward.12} parent=35 // pred_region
        _
      $region40: #{resnet_forward.12} parent=35 // pred_fallthru
        _
    $region36: #{resnet_forward.12} parent=5 // pred_fallthru
      _
    %p2228 = scmp.le.s32.totalorder 2, %s10
    // Predicated region
    $region41: #{resnet_forward.12} parent=5 // pred_check
      %p2229 = pneg %p2228
    $region42: #{resnet_forward.12} parent=5 // pred_check_branch
      %2231 = sbr.rel (%p2229) target = $region44
    $region43: #{resnet_forward.12} parent=5 // pred_region
      %s2232 = ssub.s32 %s10, 2
      // Predicated region
      $region45: #{resnet_forward.12} parent=43 // pred_check
        %p2233 = pneg %p172
      $region46: #{resnet_forward.12} parent=43 // pred_check_branch
        %2235 = sbr.rel (%p2233) target = $region48
      $region47: #{resnet_forward.12} parent=43 // pred_region
        %p2236 = scmp.lt.s32.totalorder %s23, 1
        %s2237 = scalar_select %p2236, %s23, 1
        %p2238 = scmp.lt.s32.totalorder %s24, 1
        %s2239 = scalar_select %p2238, %s24, 1
        %p2240 = scmp.lt.s32.totalorder %s25, 0
        %s2241 = scalar_select %p2240, %s25, 0
        %s2242 = smul.addr %s2239, 16
        %s2243 = sadd.s32 %s2241, %s2242
        %s2244 = smul.addr %s2237, 32
        %s2245 = sadd.s32 %s2243, %s2244
        %s2246 = smul.addr %s2245, 4
        %s2247 = scalar_lea.vmem %s4, %s2246
      $region48: #{resnet_forward.12} parent=43 // pred_fallthru
        _
    $region44: #{resnet_forward.12} parent=5 // pred_fallthru
      _
  $region6: #{resnet_forward.12} parent=0 // loop_footer
    %s14 = sadd.s32 1, %s10
  $region7: #{resnet_forward.12} parent=0 // loop_footer_branch
    %9 = sbr.rel target = $region3
  $region8: #{resnet_forward.12} parent=0 // loop_exit
    _

// kernel: resnet_forward.19
$region0: #{resnet_forward.19}
  #allocation0 [shape = 'u32[]', space=smem, size = 0x4, offset = 0x4, fixed_abs, tag = 'smem constant byte address 0x4 - core index']
  #allocation1 [shape = 'u32[72,128]{1,0:T(1,128)}', space=vmem, size = 0x9000, scoped, tag = 'internal scratch']
  #allocation2 [shape = 'f32[176,128]{1,0:T(8,128)}', space=vmem, size = 0x16000, scoped, tag = 'scratch operand']
  %s0 = inlined_call_operand.vmem [shape: bf16[2,2,176,128], index: 0, kind: input, shape index: {}]
  %s1 = inlined_call_operand.vmem [shape: bf16[9,128,128], index: 1, kind: input, shape index: {}]
  %s2 = inlined_call_operand.vmem [shape: f32[1,128], index: 2, kind: input, shape index: {}]
  %s3 = inlined_call_operand.vmem [shape: f32[2,2,128,128], index: 3, kind: input, shape index: {}]
  %s4 = inlined_call_operand.vmem [shape: f32[2,2,128,128], index: 4, kind: output, shape index: {}]
  %s5 = sld [smem:[#allocation0]]
  $region49: #{resnet_forward.19} parent=0
    _
  %s7 = ssub.s32 1, %s5
  %s8 = scalar_select 0, %s7, %s5
  loop: start=0, step=1, limit=6
  $region2: #{resnet_forward.19} parent=0 // loop_pre_header
    _
  $region3: #{resnet_forward.19} parent=0 // loop_header
    %s10 = sphi 0, %s14
    %p11 = scmp.ge.s32.totalorder %s10, 6
    %s17 = sphi 0, %s36
    %s18 = sphi 0, %s32
    %s19 = sphi 0, %s28
    %s20 = sphi 0, %s17
    %s21 = sphi 0, %s18
    %s22 = sphi 0, %s19
    %s23 = sphi 0, %s20
    %s24 = sphi 0, %s21
    %s25 = sphi 0, %s22
    %s41 = sphi 0, %s43
    %s44 = sphi 0, %s41
    %s45 = sphi 0, %s44
    %s61 = sphi 0, %s45
    %s67 = sphi 0, %s69
    %s70 = sphi 0, %s67
    %s71 = sphi 0, %s70
    %s87 = sphi 0, %s71
    %s93 = sphi 0, %s95
    %s96 = sphi 0, %s93
    %s97 = sphi 0, %s96
    %s113 = sphi 0, %s97
    %s123 = sphi 0, %s125
    %s126 = sphi 0, %s123
    %s127 = sphi 0, %s126
    %s143 = sphi 0, %s127
    %s153 = sphi 0, %s155
    %s156 = sphi 0, %s153
    %s157 = sphi 0, %s156
    %s173 = sphi 0, %s157
  $region4: #{resnet_forward.19} parent=0 // loop_header_branch
    %13 = sbr.rel (%p11) target = $region8
  $region5: #{resnet_forward.19} parent=0 // loop_body
    %s15 = ssub.s32 %s10, 1
    %s16 = ssub.s32 %s10, 2
    %s26 = sadd.s32 1, %s19
    %p27 = scmp.ge.s32.totalorder %s26, 1
    %s28 = scalar_select %p27, 0, %s26
    %s29 = sadd.s32 1, %s18
    %s30 = scalar_select %p27, %s29, %s18
    %p31 = scmp.ge.s32.totalorder %s30, 2
    %s32 = scalar_select %p31, 0, %s30
    %s33 = sadd.s32 1, %s17
    %s34 = scalar_select %p31, %s33, %s17
    %p35 = scmp.ge.s32.totalorder %s34, 2
    %s36 = scalar_select %p35, 0, %s34
    %s37 = ssub.s32 %s17, %s36
    %s38 = ssub.s32 %s18, %s32
    %s39 = sor.u32 %s37, %s38
    %p40 = scmp.eq.s32.totalorder %s39, 0
    %s42 = sadd.s32 %s41, 1
    %s43 = scalar_select %p40, %s41, %s42
    %p46 = pneg %p40
    %p47 = scmp.eq.s32.totalorder %s10, 3
    %p48 = por %p46, %p47
    %p49 = scmp.ne.s32.totalorder %s41, %s44
    %p50 = scmp.eq.s32.totalorder %s10, 0
    %p51 = por %p49, %p50
    %p52 = scmp.ne.s32.totalorder %s41, %s44
    %p53 = scmp.eq.s32.totalorder %s15, 3
    %p54 = por %p52, %p53
    %p55 = scmp.ne.s32.totalorder %s44, %s45
    %p56 = scmp.eq.s32.totalorder %s15, 0
    %p57 = por %p55, %p56
    %p58 = scmp.ne.s32.totalorder %s44, %s45
    %p59 = scmp.eq.s32.totalorder %s16, 3
    %p60 = por %p58, %p59
    %p62 = scmp.ne.s32.totalorder %s45, %s61
    %p63 = scmp.eq.s32.totalorder %s16, 0
    %p64 = por %p62, %p63
    %s65 = ssub.s32 %s19, %s28
    %p66 = scmp.eq.s32.totalorder %s65, 0
    %s68 = sadd.s32 %s67, 1
    %s69 = scalar_select %p66, %s67, %s68
    %p72 = pneg %p66
    %p73 = scmp.eq.s32.totalorder %s10, 3
    %p74 = por %p72, %p73
    %p75 = scmp.ne.s32.totalorder %s67, %s70
    %p76 = scmp.eq.s32.totalorder %s10, 0
    %p77 = por %p75, %p76
    %p78 = scmp.ne.s32.totalorder %s67, %s70
    %p79 = scmp.eq.s32.totalorder %s15, 3
    %p80 = por %p78, %p79
    %p81 = scmp.ne.s32.totalorder %s70, %s71
    %p82 = scmp.eq.s32.totalorder %s15, 0
    %p83 = por %p81, %p82
    %p84 = scmp.ne.s32.totalorder %s70, %s71
    %p85 = scmp.eq.s32.totalorder %s16, 3
    %p86 = por %p84, %p85
    %p88 = scmp.ne.s32.totalorder %s71, %s87
    %p89 = scmp.eq.s32.totalorder %s16, 0
    %p90 = por %p88, %p89
    %s91 = ssub.s32 %s19, %s28
    %p92 = scmp.eq.s32.totalorder %s91, 0
    %s94 = sadd.s32 %s93, 1
    %s95 = scalar_select %p92, %s93, %s94
    %p98 = pneg %p92
    %p99 = scmp.eq.s32.totalorder %s10, 3
    %p100 = por %p98, %p99
    %p101 = scmp.ne.s32.totalorder %s93, %s96
    %p102 = scmp.eq.s32.totalorder %s10, 0
    %p103 = por %p101, %p102
    %p104 = scmp.ne.s32.totalorder %s93, %s96
    %p105 = scmp.eq.s32.totalorder %s15, 3
    %p106 = por %p104, %p105
    %p107 = scmp.ne.s32.totalorder %s96, %s97
    %p108 = scmp.eq.s32.totalorder %s15, 0
    %p109 = por %p107, %p108
    %p110 = scmp.ne.s32.totalorder %s96, %s97
    %p111 = scmp.eq.s32.totalorder %s16, 3
    %p112 = por %p110, %p111
    %p114 = scmp.ne.s32.totalorder %s97, %s113
    %p115 = scmp.eq.s32.totalorder %s16, 0
    %p116 = por %p114, %p115
    %s117 = ssub.s32 %s17, %s36
    %s118 = ssub.s32 %s18, %s32
    %s119 = sor.u32 %s117, %s118
    %s120 = ssub.s32 %s19, %s28
    %s121 = sor.u32 %s119, %s120
    %p122 = scmp.eq.s32.totalorder %s121, 0
    %s124 = sadd.s32 %s123, 1
    %s125 = scalar_select %p122, %s123, %s124
    %p128 = pneg %p122
    %p129 = scmp.eq.s32.totalorder %s10, 3
    %p130 = por %p128, %p129
    %p131 = scmp.ne.s32.totalorder %s123, %s126
    %p132 = scmp.eq.s32.totalorder %s10, 0
    %p133 = por %p131, %p132
    %p134 = scmp.ne.s32.totalorder %s123, %s126
    %p135 = scmp.eq.s32.totalorder %s15, 3
    %p136 = por %p134, %p135
    %p137 = scmp.ne.s32.totalorder %s126, %s127
    %p138 = scmp.eq.s32.totalorder %s15, 0
    %p139 = por %p137, %p138
    %p140 = scmp.ne.s32.totalorder %s126, %s127
    %p141 = scmp.eq.s32.totalorder %s16, 3
    %p142 = por %p140, %p141
    %p144 = scmp.ne.s32.totalorder %s127, %s143
    %p145 = scmp.eq.s32.totalorder %s16, 0
    %p146 = por %p144, %p145
    %s147 = ssub.s32 %s17, %s36
    %s148 = ssub.s32 %s18, %s32
    %s149 = sor.u32 %s147, %s148
    %s150 = ssub.s32 %s19, %s28
    %s151 = sor.u32 %s149, %s150
    %p152 = scmp.eq.s32.totalorder %s151, 0
    %s154 = sadd.s32 %s153, 1
    %s155 = scalar_select %p152, %s153, %s154
    %p158 = pneg %p152
    %p159 = scmp.eq.s32.totalorder %s10, 3
    %p160 = por %p158, %p159
    %p161 = scmp.ne.s32.totalorder %s153, %s156
    %p162 = scmp.eq.s32.totalorder %s10, 0
    %p163 = por %p161, %p162
    %p164 = scmp.ne.s32.totalorder %s153, %s156
    %p165 = scmp.eq.s32.totalorder %s15, 3
    %p166 = por %p164, %p165
    %p167 = scmp.ne.s32.totalorder %s156, %s157
    %p168 = scmp.eq.s32.totalorder %s15, 0
    %p169 = por %p167, %p168
    %p170 = scmp.ne.s32.totalorder %s156, %s157
    %p171 = scmp.eq.s32.totalorder %s16, 3
    %p172 = por %p170, %p171
    %p174 = scmp.ne.s32.totalorder %s157, %s173
    %p175 = scmp.eq.s32.totalorder %s16, 0
    %p176 = por %p174, %p175
    %p177 = scmp.le.s32.totalorder 1, %s10
    %p178 = scmp.lt.s32.totalorder %s10, 5
    %p179 = pnand %p177, %p178
    %p180 = pneg %p179
    // Predicated region
    $region9: #{resnet_forward.19} parent=5 // pred_check
      _
    $region10: #{resnet_forward.19} parent=5 // pred_check_branch
      %182 = sbr.rel (%p179) target = $region12
    $region11: #{resnet_forward.19} parent=5 // pred_region
      %s183 = ssub.s32 %s10, 1
      // Predicated region
      $region13: #{resnet_forward.19} parent=11 // pred_check
        %p184 = pneg %p83
      $region14: #{resnet_forward.19} parent=11 // pred_check_branch
        %186 = sbr.rel (%p184) target = $region16
      $region15: #{resnet_forward.19} parent=11 // pred_region
        %p187 = scmp.lt.s32.totalorder %s22, 0
        %s188 = scalar_select %p187, %s22, 0
        %s189 = smul.addr %s188, 4
        %s190 = scalar_lea.vmem %s1, %s189
      $region16: #{resnet_forward.19} parent=11 // pred_fallthru
        _
      // Predicated region
      $region17: #{resnet_forward.19} parent=11 // pred_check
        %p191 = pneg %p109
      $region18: #{resnet_forward.19} parent=11 // pred_check_branch
        %193 = sbr.rel (%p191) target = $region20
      $region19: #{resnet_forward.19} parent=11 // pred_region
        %p194 = scmp.lt.s32.totalorder %s22, 0
        %s195 = scalar_select %p194, %s22, 0
        %s196 = scalar_lea.vmem %s2, %s195
      $region20: #{resnet_forward.19} parent=11 // pred_fallthru
        _
    $region12: #{resnet_forward.19} parent=5 // pred_fallthru
      _
    %p197 = scmp.lt.s32.totalorder %s10, 4
    // Predicated region
    $region21: #{resnet_forward.19} parent=5 // pred_check
      %p198 = pneg %p197
    $region22: #{resnet_forward.19} parent=5 // pred_check_branch
      %200 = sbr.rel (%p198) target = $region24
    $region23: #{resnet_forward.19} parent=5 // pred_region
      // Predicated region
      $region25: #{resnet_forward.19} parent=23 // pred_check
        %p201 = pneg %p51
      $region26: #{resnet_forward.19} parent=23 // pred_check_branch
        %203 = sbr.rel (%p201) target = $region28
      $region27: #{resnet_forward.19} parent=23 // pred_region
        %p204 = scmp.lt.s32.totalorder %s17, 1
        %s205 = scalar_select %p204, %s17, 1
        %p206 = scmp.lt.s32.totalorder %s18, 1
        %s207 = scalar_select %p206, %s18, 1
        %s208 = smul.addr %s207, 22
        %s209 = smul.addr %s205, 44
        %s210 = sadd.s32 %s208, %s209
        %s211 = smul.addr %s210, 4
        %s212 = scalar_lea.vmem %s0, %s211
      $region28: #{resnet_forward.19} parent=23 // pred_fallthru
        _
      // Predicated region
      $region29: #{resnet_forward.19} parent=23 // pred_check
        %p213 = pneg %p133
      $region30: #{resnet_forward.19} parent=23 // pred_check_branch
        %215 = sbr.rel (%p213) target = $region32
      $region31: #{resnet_forward.19} parent=23 // pred_region
        %p216 = scmp.lt.s32.totalorder %s17, 1
        %s217 = scalar_select %p216, %s17, 1
        %p218 = scmp.lt.s32.totalorder %s18, 1
        %s219 = scalar_select %p218, %s18, 1
        %p220 = scmp.lt.s32.totalorder %s19, 0
        %s221 = scalar_select %p220, %s19, 0
        %s222 = smul.addr %s219, 16
        %s223 = sadd.s32 %s221, %s222
        %s224 = smul.addr %s217, 32
        %s225 = sadd.s32 %s223, %s224
        %s226 = smul.addr %s225, 8
        %s227 = scalar_lea.vmem %s3, %s226
      $region32: #{resnet_forward.19} parent=23 // pred_fallthru
        _
    $region24: #{resnet_forward.19} parent=5 // pred_fallthru
      _
    %p228 = scmp.le.s32.totalorder 1, %s10
    %p229 = scmp.lt.s32.totalorder %s10, 5
    %p230 = pnand %p228, %p229
    %p231 = pneg %p230
    // Predicated region
    $region33: #{resnet_forward.19} parent=5 // pred_check
      _
    $region34: #{resnet_forward.19} parent=5 // pred_check_branch
      %233 = sbr.rel (%p230) target = $region36
    $region35: #{resnet_forward.19} parent=5 // pred_region
      %s234 = ssub.s32 %s10, 1
      %p235 = scmp.lt.s32.totalorder %s20, 1
      %s236 = scalar_select %p235, %s20, 1
      %p237 = scmp.lt.s32.totalorder %s21, 1
      %s238 = scalar_select %p237, %s21, 1
      %s239 = smul.addr %s238, 22
      %s240 = smul.addr %s236, 44
      %s241 = sadd.s32 %s239, %s240
      %s242 = smul.addr %s241, 4
      %s243 = scalar_lea.vmem %s0, %s242
      %p244 = pneg %p57
      %p245 = pneg %p54
      %p246 = scmp.lt.s32.totalorder %s22, 0
      %s247 = scalar_select %p246, %s22, 0
      %s248 = smul.addr %s247, 4
      %s249 = scalar_lea.vmem %s1, %s248
      %p250 = pneg %p83
      %p251 = pneg %p80
      %p252 = scmp.lt.s32.totalorder %s22, 0
      %s253 = scalar_select %p252, %s22, 0
      %s254 = scalar_lea.vmem %s2, %s253
      %p255 = pneg %p109
      %p256 = pneg %p106
      %p257 = scmp.lt.s32.totalorder %s20, 1
      %s258 = scalar_select %p257, %s20, 1
      %p259 = scmp.lt.s32.totalorder %s21, 1
      %s260 = scalar_select %p259, %s21, 1
      %p261 = scmp.lt.s32.totalorder %s22, 0
      %s262 = scalar_select %p261, %s22, 0
      %s263 = smul.addr %s260, 16
      %s264 = sadd.s32 %s262, %s263
      %s265 = smul.addr %s258, 32
      %s266 = sadd.s32 %s264, %s265
      %s267 = smul.addr %s266, 8
      %s268 = scalar_lea.vmem %s3, %s267
      %p269 = pneg %p139
      %p270 = pneg %p136
      %p271 = pneg %p169
      %p272 = pneg %p166
      %p273 = scmp.lt.s32.totalorder %s20, 1
      %s274 = scalar_select %p273, %s20, 1
      %p275 = scmp.lt.s32.totalorder %s21, 1
      %s276 = scalar_select %p275, %s21, 1
      %p277 = scmp.lt.s32.totalorder %s22, 0
      %s278 = scalar_select %p277, %s22, 0
      %s279 = smul.addr %s276, 16
      %s280 = sadd.s32 %s278, %s279
      %s281 = smul.addr %s274, 32
      %s282 = sadd.s32 %s280, %s281
      %s283 = smul.addr %s282, 8
      %s284 = scalar_lea.vmem %s4, %s283
      %p285 = scmp.lt.s32.totalorder %s20, 1
      %s286 = scalar_select %p285, %s20, 1
      %p287 = scmp.lt.s32.totalorder %s21, 1
      %s288 = scalar_select %p287, %s21, 1
      %s289 = smul.addr %s288, 22
      %s290 = smul.addr %s286, 44
      %s291 = sadd.s32 %s289, %s290
      %s292 = smul.addr %s291, 4
      %s293 = scalar_lea.vmem %s0, %s292
      %p294 = scmp.lt.s32.totalorder %s22, 0
      %s295 = scalar_select %p294, %s22, 0
      %s296 = smul.addr %s295, 4
      %s297 = scalar_lea.vmem %s1, %s296
      %p298 = scmp.lt.s32.totalorder %s22, 0
      %s299 = scalar_select %p298, %s22, 0
      %s300 = scalar_lea.vmem %s2, %s299
      %p301 = scmp.lt.s32.totalorder %s20, 1
      %s302 = scalar_select %p301, %s20, 1
      %p303 = scmp.lt.s32.totalorder %s21, 1
      %s304 = scalar_select %p303, %s21, 1
      %p305 = scmp.lt.s32.totalorder %s22, 0
      %s306 = scalar_select %p305, %s22, 0
      %s307 = smul.addr %s304, 16
      %s308 = sadd.s32 %s306, %s307
      %s309 = smul.addr %s302, 32
      %s310 = sadd.s32 %s308, %s309
      %s311 = smul.addr %s310, 8
      %s312 = scalar_lea.vmem %s3, %s311
      %p313 = scmp.lt.s32.totalorder %s20, 1
      %s314 = scalar_select %p313, %s20, 1
      %p315 = scmp.lt.s32.totalorder %s21, 1
      %s316 = scalar_select %p315, %s21, 1
      %p317 = scmp.lt.s32.totalorder %s22, 0
      %s318 = scalar_select %p317, %s22, 0
      %s319 = smul.addr %s316, 16
      %s320 = sadd.s32 %s318, %s319
      %s321 = smul.addr %s314, 32
      %s322 = sadd.s32 %s320, %s321
      %s323 = smul.addr %s322, 8
      %s324 = scalar_lea.vmem %s4, %s323
      %v325 = vld [vmem:[%s293] sm:$0xf]
      %v326 = vld [vmem:[%s293 + $0x4] sm:$0xf]
      %v327 = vld [vmem:[%s293 + $0x8] sm:$0xf]
      %v328 = vld [vmem:[%s293 + $0xc] sm:$0xf]
      %v329 = vld [vmem:[%s293 + $0x10] sm:$0xf]
      %v330 = vld [vmem:[%s293 + $0x14] sm:$0xf]
      %v331 = vld [vmem:[%s293 + $0x18] sm:$0xf]
      %v332 = vld [vmem:[%s293 + $0x1c] sm:$0xf]
      %v333 = vld [vmem:[%s293 + $0x20] sm:$0xf]
      %v334 = vld [vmem:[%s293 + $0x24] sm:$0xf]
      %v335 = vld [vmem:[%s293 + $0x28] sm:$0xf]
      %v336 = vld [vmem:[%s293 + $0x2c] sm:$0xf]
      %v337 = vld [vmem:[%s293 + $0x30] sm:$0xf]
      %v338 = vld [vmem:[%s293 + $0x34] sm:$0xf]
      %v339 = vld [vmem:[%s293 + $0x38] sm:$0xf]
      %v340 = vld [vmem:[%s293 + $0x3c] sm:$0xf]
      %v341 = vld [vmem:[%s293 + $0x40] sm:$0xf]
      %v342 = vld [vmem:[%s293 + $0x44] sm:$0xf]
      %v343 = vld [vmem:[%s293 + $0x48] sm:$0xf]
      %v344 = vld [vmem:[%s293 + $0x4c] sm:$0xf]
      %v345 = vld [vmem:[%s293 + $0x50] sm:$0xf]
      %v346 = vld [vmem:[%s293 + $0x54] sm:$0xf]
      %v347 = vunpack.c.l.bf16 %v325
      %v348 = vunpack.c.l.bf16 %v326
      %v349 = vunpack.c.l.bf16 %v327
      %v350 = vunpack.c.l.bf16 %v328
      %v351 = vunpack.c.l.bf16 %v329
      %v352 = vunpack.c.l.bf16 %v330
      %v353 = vunpack.c.l.bf16 %v331
      %v354 = vunpack.c.l.bf16 %v332
      %v355 = vunpack.c.l.bf16 %v333
      %v356 = vunpack.c.l.bf16 %v334
      %v357 = vunpack.c.l.bf16 %v335
      %v358 = vunpack.c.l.bf16 %v336
      %v359 = vunpack.c.l.bf16 %v337
      %v360 = vunpack.c.l.bf16 %v338
      %v361 = vunpack.c.l.bf16 %v339
      %v362 = vunpack.c.l.bf16 %v340
      %v363 = vunpack.c.l.bf16 %v341
      %v364 = vunpack.c.l.bf16 %v342
      %v365 = vunpack.c.l.bf16 %v343
      %v366 = vunpack.c.l.bf16 %v344
      %v367 = vunpack.c.l.bf16 %v345
      %v368 = vunpack.c.l.bf16 %v346
      %369 = vst [vmem:[#allocation2] sm:$0xff] %v347
      %370 = vst [vmem:[#allocation2 + $0x8] sm:$0xff] %v348
      %371 = vst [vmem:[#allocation2 + $0x10] sm:$0xff] %v349
      %372 = vst [vmem:[#allocation2 + $0x18] sm:$0xff] %v350
      %373 = vst [vmem:[#allocation2 + $0x20] sm:$0xff] %v351
      %374 = vst [vmem:[#allocation2 + $0x28] sm:$0xff] %v352
      %375 = vst [vmem:[#allocation2 + $0x30] sm:$0xff] %v353
      %376 = vst [vmem:[#allocation2 + $0x38] sm:$0xff] %v354
      %377 = vst [vmem:[#allocation2 + $0x40] sm:$0xff] %v355
      %378 = vst [vmem:[#allocation2 + $0x48] sm:$0xff] %v356
      %379 = vst [vmem:[#allocation2 + $0x50] sm:$0xff] %v357
      %380 = vst [vmem:[#allocation2 + $0x58] sm:$0xff] %v358
      %381 = vst [vmem:[#allocation2 + $0x60] sm:$0xff] %v359
      %382 = vst [vmem:[#allocation2 + $0x68] sm:$0xff] %v360
      %383 = vst [vmem:[#allocation2 + $0x70] sm:$0xff] %v361
      %384 = vst [vmem:[#allocation2 + $0x78] sm:$0xff] %v362
      %385 = vst [vmem:[#allocation2 + $0x80] sm:$0xff] %v363
      %386 = vst [vmem:[#allocation2 + $0x88] sm:$0xff] %v364
      %387 = vst [vmem:[#allocation2 + $0x90] sm:$0xff] %v365
      %388 = vst [vmem:[#allocation2 + $0x98] sm:$0xff] %v366
      %389 = vst [vmem:[#allocation2 + $0xa0] sm:$0xff] %v367
      %390 = vst [vmem:[#allocation2 + $0xa8] sm:$0xff] %v368
      %v391 = vlaneseq
      %v392 = vshrl.u32 %v391, 7
      %v393 = vadd.s32 %v392, 8
      %v394 = vadd.s32 %v392, 16
      %v395 = vadd.s32 %v392, 24
      %v396 = vadd.s32 %v392, 32
      %v397 = vadd.s32 %v392, 40
      %v398 = vadd.s32 %v392, 48
      %v399 = vadd.s32 %v392, 56
      %v400 = vadd.s32 %v392, 64
      %v401 = vadd.s32 %v392, 72
      %v402 = vadd.s32 %v392, 80
      %v403 = vadd.s32 %v392, 88
      %v404 = vadd.s32 %v392, 96
      %v405 = vadd.s32 %v392, 104
      %v406 = vadd.s32 %v392, 112
      %v407 = vadd.s32 %v392, 120
      %vm408 = vcmp.lt.s32.totalorder %v392, 0
      %v409 = vsub.s32 0, %v392
      %v410 = vsel %vm408, %v409, %v392
      %v411 = vshrl.u32 %v410, 4
      %v412 = vand.u32 %v410, 15
      %v413 = vsub.s32 0, %v412
      %v414 = vsel %vm408, %v413, %v412
      %vm415 = vcmp.lt.s32.totalorder %v393, 0
      %v416 = vsub.s32 0, %v393
      %v417 = vsel %vm415, %v416, %v393
      %v418 = vshrl.u32 %v417, 4
      %v419 = vand.u32 %v417, 15
      %v420 = vsub.s32 0, %v419
      %v421 = vsel %vm415, %v420, %v419
      %vm422 = vcmp.lt.s32.totalorder %v394, 0
      %v423 = vsub.s32 0, %v394
      %v424 = vsel %vm422, %v423, %v394
      %v425 = vshrl.u32 %v424, 4
      %v426 = vand.u32 %v424, 15
      %v427 = vsub.s32 0, %v426
      %v428 = vsel %vm422, %v427, %v426
      %vm429 = vcmp.lt.s32.totalorder %v395, 0
      %v430 = vsub.s32 0, %v395
      %v431 = vsel %vm429, %v430, %v395
      %v432 = vshrl.u32 %v431, 4
      %v433 = vand.u32 %v431, 15
      %v434 = vsub.s32 0, %v433
      %v435 = vsel %vm429, %v434, %v433
      %vm436 = vcmp.lt.s32.totalorder %v396, 0
      %v437 = vsub.s32 0, %v396
      %v438 = vsel %vm436, %v437, %v396
      %v439 = vshrl.u32 %v438, 4
      %v440 = vand.u32 %v438, 15
      %v441 = vsub.s32 0, %v440
      %v442 = vsel %vm436, %v441, %v440
      %vm443 = vcmp.lt.s32.totalorder %v397, 0
      %v444 = vsub.s32 0, %v397
      %v445 = vsel %vm443, %v444, %v397
      %v446 = vshrl.u32 %v445, 4
      %v447 = vand.u32 %v445, 15
      %v448 = vsub.s32 0, %v447
      %v449 = vsel %vm443, %v448, %v447
      %vm450 = vcmp.lt.s32.totalorder %v398, 0
      %v451 = vsub.s32 0, %v398
      %v452 = vsel %vm450, %v451, %v398
      %v453 = vshrl.u32 %v452, 4
      %v454 = vand.u32 %v452, 15
      %v455 = vsub.s32 0, %v454
      %v456 = vsel %vm450, %v455, %v454
      %vm457 = vcmp.lt.s32.totalorder %v399, 0
      %v458 = vsub.s32 0, %v399
      %v459 = vsel %vm457, %v458, %v399
      %v460 = vshrl.u32 %v459, 4
      %v461 = vand.u32 %v459, 15
      %v462 = vsub.s32 0, %v461
      %v463 = vsel %vm457, %v462, %v461
      %vm464 = vcmp.lt.s32.totalorder %v400, 0
      %v465 = vsub.s32 0, %v400
      %v466 = vsel %vm464, %v465, %v400
      %v467 = vshrl.u32 %v466, 4
      %v468 = vand.u32 %v466, 15
      %v469 = vsub.s32 0, %v468
      %v470 = vsel %vm464, %v469, %v468
      %vm471 = vcmp.lt.s32.totalorder %v401, 0
      %v472 = vsub.s32 0, %v401
      %v473 = vsel %vm471, %v472, %v401
      %v474 = vshrl.u32 %v473, 4
      %v475 = vand.u32 %v473, 15
      %v476 = vsub.s32 0, %v475
      %v477 = vsel %vm471, %v476, %v475
      %vm478 = vcmp.lt.s32.totalorder %v402, 0
      %v479 = vsub.s32 0, %v402
      %v480 = vsel %vm478, %v479, %v402
      %v481 = vshrl.u32 %v480, 4
      %v482 = vand.u32 %v480, 15
      %v483 = vsub.s32 0, %v482
      %v484 = vsel %vm478, %v483, %v482
      %vm485 = vcmp.lt.s32.totalorder %v403, 0
      %v486 = vsub.s32 0, %v403
      %v487 = vsel %vm485, %v486, %v403
      %v488 = vshrl.u32 %v487, 4
      %v489 = vand.u32 %v487, 15
      %v490 = vsub.s32 0, %v489
      %v491 = vsel %vm485, %v490, %v489
      %vm492 = vcmp.lt.s32.totalorder %v404, 0
      %v493 = vsub.s32 0, %v404
      %v494 = vsel %vm492, %v493, %v404
      %v495 = vshrl.u32 %v494, 4
      %v496 = vand.u32 %v494, 15
      %v497 = vsub.s32 0, %v496
      %v498 = vsel %vm492, %v497, %v496
      %vm499 = vcmp.lt.s32.totalorder %v405, 0
      %v500 = vsub.s32 0, %v405
      %v501 = vsel %vm499, %v500, %v405
      %v502 = vshrl.u32 %v501, 4
      %v503 = vand.u32 %v501, 15
      %v504 = vsub.s32 0, %v503
      %v505 = vsel %vm499, %v504, %v503
      %vm506 = vcmp.lt.s32.totalorder %v406, 0
      %v507 = vsub.s32 0, %v406
      %v508 = vsel %vm506, %v507, %v406
      %v509 = vshrl.u32 %v508, 4
      %v510 = vand.u32 %v508, 15
      %v511 = vsub.s32 0, %v510
      %v512 = vsel %vm506, %v511, %v510
      %vm513 = vcmp.lt.s32.totalorder %v407, 0
      %v514 = vsub.s32 0, %v407
      %v515 = vsel %vm513, %v514, %v407
      %v516 = vshrl.u32 %v515, 4
      %v517 = vand.u32 %v515, 15
      %v518 = vsub.s32 0, %v517
      %v519 = vsel %vm513, %v518, %v517
      %vm520 = vcmp.ne.s32.totalorder %v414, 0
      %vm521 = vcmp.ne.s32.totalorder %v421, 0
      %vm522 = vcmp.ne.s32.totalorder %v428, 0
      %vm523 = vcmp.ne.s32.totalorder %v435, 0
      %vm524 = vcmp.ne.s32.totalorder %v442, 0
      %vm525 = vcmp.ne.s32.totalorder %v449, 0
      %vm526 = vcmp.ne.s32.totalorder %v456, 0
      %vm527 = vcmp.ne.s32.totalorder %v463, 0
      %vm528 = vcmp.ne.s32.totalorder %v470, 0
      %vm529 = vcmp.ne.s32.totalorder %v477, 0
      %vm530 = vcmp.ne.s32.totalorder %v484, 0
      %vm531 = vcmp.ne.s32.totalorder %v491, 0
      %vm532 = vcmp.ne.s32.totalorder %v498, 0
      %vm533 = vcmp.ne.s32.totalorder %v505, 0
      %vm534 = vcmp.ne.s32.totalorder %v512, 0
      %vm535 = vcmp.ne.s32.totalorder %v519, 0
      %vm536 = vcmp.lt.s32.totalorder %v414, 0
      %vm537 = vcmp.lt.s32.totalorder %v421, 0
      %vm538 = vcmp.lt.s32.totalorder %v428, 0
      %vm539 = vcmp.lt.s32.totalorder %v435, 0
      %vm540 = vcmp.lt.s32.totalorder %v442, 0
      %vm541 = vcmp.lt.s32.totalorder %v449, 0
      %vm542 = vcmp.lt.s32.totalorder %v456, 0
      %vm543 = vcmp.lt.s32.totalorder %v463, 0
      %vm544 = vcmp.lt.s32.totalorder %v470, 0
      %vm545 = vcmp.lt.s32.totalorder %v477, 0
      %vm546 = vcmp.lt.s32.totalorder %v484, 0
      %vm547 = vcmp.lt.s32.totalorder %v491, 0
      %vm548 = vcmp.lt.s32.totalorder %v498, 0
      %vm549 = vcmp.lt.s32.totalorder %v505, 0
      %vm550 = vcmp.lt.s32.totalorder %v512, 0
      %vm551 = vcmp.lt.s32.totalorder %v519, 0
      %vm552 = vmand %vm536, %vm520
      %vm553 = vmand %vm537, %vm521
      %vm554 = vmand %vm538, %vm522
      %vm555 = vmand %vm539, %vm523
      %vm556 = vmand %vm540, %vm524
      %vm557 = vmand %vm541, %vm525
      %vm558 = vmand %vm542, %vm526
      %vm559 = vmand %vm543, %vm527
      %vm560 = vmand %vm544, %vm528
      %vm561 = vmand %vm545, %vm529
      %vm562 = vmand %vm546, %vm530
      %vm563 = vmand %vm547, %vm531
      %vm564 = vmand %vm548, %vm532
      %vm565 = vmand %vm549, %vm533
      %vm566 = vmand %vm550, %vm534
      %vm567 = vmand %vm551, %vm535
      %v568 = vadd.s32 %v414, 16
      %v569 = vadd.s32 %v421, 16
      %v570 = vadd.s32 %v428, 16
      %v571 = vadd.s32 %v435, 16
      %v572 = vadd.s32 %v442, 16
      %v573 = vadd.s32 %v449, 16
      %v574 = vadd.s32 %v456, 16
      %v575 = vadd.s32 %v463, 16
      %v576 = vadd.s32 %v470, 16
      %v577 = vadd.s32 %v477, 16
      %v578 = vadd.s32 %v484, 16
      %v579 = vadd.s32 %v491, 16
      %v580 = vadd.s32 %v498, 16
      %v581 = vadd.s32 %v505, 16
      %v582 = vadd.s32 %v512, 16
      %v583 = vadd.s32 %v519, 16
      %v584 = vsel %vm552, %v568, %v414
      %v585 = vsel %vm553, %v569, %v421
      %v586 = vsel %vm554, %v570, %v428
      %v587 = vsel %vm555, %v571, %v435
      %v588 = vsel %vm556, %v572, %v442
      %v589 = vsel %vm557, %v573, %v449
      %v590 = vsel %vm558, %v574, %v456
      %v591 = vsel %vm559, %v575, %v463
      %v592 = vsel %vm560, %v576, %v470
      %v593 = vsel %vm561, %v577, %v477
      %v594 = vsel %vm562, %v578, %v484
      %v595 = vsel %vm563, %v579, %v491
      %v596 = vsel %vm564, %v580, %v498
      %v597 = vsel %vm565, %v581, %v505
      %v598 = vsel %vm566, %v582, %v512
      %v599 = vsel %vm567, %v583, %v519
      %vm600 = vcmp.ne.s32.totalorder %v584, 0
      %vm601 = vcmp.ne.s32.totalorder %v585, 0
      %vm602 = vcmp.ne.s32.totalorder %v586, 0
      %vm603 = vcmp.ne.s32.totalorder %v587, 0
      %vm604 = vcmp.ne.s32.totalorder %v588, 0
      %vm605 = vcmp.ne.s32.totalorder %v589, 0
      %vm606 = vcmp.ne.s32.totalorder %v590, 0
      %vm607 = vcmp.ne.s32.totalorder %v591, 0
      %vm608 = vcmp.ne.s32.totalorder %v592, 0
      %vm609 = vcmp.ne.s32.totalorder %v593, 0
      %vm610 = vcmp.ne.s32.totalorder %v594, 0
      %vm611 = vcmp.ne.s32.totalorder %v595, 0
      %vm612 = vcmp.ne.s32.totalorder %v596, 0
      %vm613 = vcmp.ne.s32.totalorder %v597, 0
      %vm614 = vcmp.ne.s32.totalorder %v598, 0
      %vm615 = vcmp.ne.s32.totalorder %v599, 0
      %vm616 = vcmp.ne.s32.totalorder %v584, 15
      %vm617 = vcmp.ne.s32.totalorder %v585, 15
      %vm618 = vcmp.ne.s32.totalorder %v586, 15
      %vm619 = vcmp.ne.s32.totalorder %v587, 15
      %vm620 = vcmp.ne.s32.totalorder %v588, 15
      %vm621 = vcmp.ne.s32.totalorder %v589, 15
      %vm622 = vcmp.ne.s32.totalorder %v590, 15
      %vm623 = vcmp.ne.s32.totalorder %v591, 15
      %vm624 = vcmp.ne.s32.totalorder %v592, 15
      %vm625 = vcmp.ne.s32.totalorder %v593, 15
      %vm626 = vcmp.ne.s32.totalorder %v594, 15
      %vm627 = vcmp.ne.s32.totalorder %v595, 15
      %vm628 = vcmp.ne.s32.totalorder %v596, 15
      %vm629 = vcmp.ne.s32.totalorder %v597, 15
      %vm630 = vcmp.ne.s32.totalorder %v598, 15
      %vm631 = vcmp.ne.s32.totalorder %v599, 15
      %v632 = vld [vmem:[#allocation2 + $0x7] sm:$0xff]
      %v633 = vld [vmem:[#allocation2 + $0xf] sm:$0xff]
      %v634 = vld [vmem:[#allocation2 + $0x17] sm:$0xff]
      %v635 = vld [vmem:[#allocation2 + $0x1f] sm:$0xff]
      %v636 = vld [vmem:[#allocation2 + $0x27] sm:$0xff]
      %v637 = vld [vmem:[#allocation2 + $0x2f] sm:$0xff]
      %v638 = vld [vmem:[#allocation2 + $0x37] sm:$0xff]
      %v639 = vld [vmem:[#allocation2 + $0x3f] sm:$0xff]
      %v640 = vld [vmem:[#allocation2 + $0x47] sm:$0xff]
      %v641 = vld [vmem:[#allocation2 + $0x4f] sm:$0xff]
      %v642 = vld [vmem:[#allocation2 + $0x57] sm:$0xff]
      %v643 = vld [vmem:[#allocation2 + $0x5f] sm:$0xff]
      %v644 = vld [vmem:[#allocation2 + $0x67] sm:$0xff]
      %v645 = vld [vmem:[#allocation2 + $0x6f] sm:$0xff]
      %v646 = vld [vmem:[#allocation2 + $0x77] sm:$0xff]
      %v647 = vld [vmem:[#allocation2 + $0x7f] sm:$0xff]
      %v648 = vsel %vm600, %v632, 0.0
      %v649 = vsel %vm601, %v633, 0.0
      %v650 = vsel %vm602, %v634, 0.0
      %v651 = vsel %vm603, %v635, 0.0
      %v652 = vsel %vm604, %v636, 0.0
      %v653 = vsel %vm605, %v637, 0.0
      %v654 = vsel %vm606, %v638, 0.0
      %v655 = vsel %vm607, %v639, 0.0
      %v656 = vsel %vm608, %v640, 0.0
      %v657 = vsel %vm609, %v641, 0.0
      %v658 = vsel %vm610, %v642, 0.0
      %v659 = vsel %vm611, %v643, 0.0
      %v660 = vsel %vm612, %v644, 0.0
      %v661 = vsel %vm613, %v645, 0.0
      %v662 = vsel %vm614, %v646, 0.0
      %v663 = vsel %vm615, %v647, 0.0
      %v664 = vpack.c.bf16 %v649, %v648
      %v665 = vpack.c.bf16 %v651, %v650
      %v666 = vpack.c.bf16 %v653, %v652
      %v667 = vpack.c.bf16 %v655, %v654
      %v668 = vpack.c.bf16 %v657, %v656
      %v669 = vpack.c.bf16 %v659, %v658
      %v670 = vpack.c.bf16 %v661, %v660
      %v671 = vpack.c.bf16 %v663, %v662
      %v672 = vld [vmem:[%s297] sm:$0xf]
      %v673 = vld [vmem:[%s297 + $0x4] sm:$0xf]
      %v674 = vld [vmem:[%s297 + $0x8] sm:$0xf]
      %v675 = vld [vmem:[%s297 + $0xc] sm:$0xf]
      %v676 = vld [vmem:[%s297 + $0x10] sm:$0xf]
      %v677 = vld [vmem:[%s297 + $0x14] sm:$0xf]
      %v678 = vld [vmem:[%s297 + $0x18] sm:$0xf]
      %v679 = vld [vmem:[%s297 + $0x1c] sm:$0xf]
      %v680 = vld [vmem:[%s297 + $0x20] sm:$0xf]
      %v681 = vld [vmem:[%s297 + $0x24] sm:$0xf]
      %v682 = vld [vmem:[%s297 + $0x28] sm:$0xf]
      %v683 = vld [vmem:[%s297 + $0x2c] sm:$0xf]
      %v684 = vld [vmem:[%s297 + $0x30] sm:$0xf]
      %v685 = vld [vmem:[%s297 + $0x34] sm:$0xf]
      %v686 = vld [vmem:[%s297 + $0x38] sm:$0xf]
      %v687 = vld [vmem:[%s297 + $0x3c] sm:$0xf]
      %v688 = vld [vmem:[#allocation2 + $0x8] sm:$0xff]
      %v689 = vld [vmem:[#allocation2 + $0x10] sm:$0xff]
      %v690 = vld [vmem:[#allocation2 + $0x18] sm:$0xff]
      %v691 = vld [vmem:[#allocation2 + $0x20] sm:$0xff]
      %v692 = vld [vmem:[#allocation2 + $0x28] sm:$0xff]
      %v693 = vld [vmem:[#allocation2 + $0x30] sm:$0xff]
      %v694 = vld [vmem:[#allocation2 + $0x38] sm:$0xff]
      %v695 = vld [vmem:[#allocation2 + $0x40] sm:$0xff]
      %v696 = vld [vmem:[#allocation2 + $0x48] sm:$0xff]
      %v697 = vld [vmem:[#allocation2 + $0x50] sm:$0xff]
      %v698 = vld [vmem:[#allocation2 + $0x58] sm:$0xff]
      %v699 = vld [vmem:[#allocation2 + $0x60] sm:$0xff]
      %v700 = vld [vmem:[#allocation2 + $0x68] sm:$0xff]
      %v701 = vld [vmem:[#allocation2 + $0x70] sm:$0xff]
      %v702 = vld [vmem:[#allocation2 + $0x78] sm:$0xff]
      %v703 = vld [vmem:[#allocation2 + $0x80] sm:$0xff]
      %v704 = vpack.c.bf16 %v689, %v688
      %v705 = vpack.c.bf16 %v691, %v690
      %v706 = vpack.c.bf16 %v693, %v692
      %v707 = vpack.c.bf16 %v695, %v694
      %v708 = vpack.c.bf16 %v697, %v696
      %v709 = vpack.c.bf16 %v699, %v698
      %v710 = vpack.c.bf16 %v701, %v700
      %v711 = vpack.c.bf16 %v703, %v702
      %s712 = scalar_lea.vmem %s297, 64
      %v713 = vld [vmem:[%s712] sm:$0xf]
      %v714 = vld [vmem:[%s712 + $0x4] sm:$0xf]
      %v715 = vld [vmem:[%s712 + $0x8] sm:$0xf]
      %v716 = vld [vmem:[%s712 + $0xc] sm:$0xf]
      %v717 = vld [vmem:[%s712 + $0x10] sm:$0xf]
      %v718 = vld [vmem:[%s712 + $0x14] sm:$0xf]
      %v719 = vld [vmem:[%s712 + $0x18] sm:$0xf]
      %v720 = vld [vmem:[%s712 + $0x1c] sm:$0xf]
      %v721 = vld [vmem:[%s712 + $0x20] sm:$0xf]
      %v722 = vld [vmem:[%s712 + $0x24] sm:$0xf]
      %v723 = vld [vmem:[%s712 + $0x28] sm:$0xf]
      %v724 = vld [vmem:[%s712 + $0x2c] sm:$0xf]
      %v725 = vld [vmem:[%s712 + $0x30] sm:$0xf]
      %v726 = vld [vmem:[%s712 + $0x34] sm:$0xf]
      %v727 = vld [vmem:[%s712 + $0x38] sm:$0xf]
      %v728 = vld [vmem:[%s712 + $0x3c] sm:$0xf]
      %v745 = vunpack.c.l.b16 %v713
      %v746 = vunpack.c.l.b16 %v714
      %v747 = vunpack.c.l.b16 %v715
      %v748 = vunpack.c.l.b16 %v716
      %v749 = vunpack.c.l.b16 %v717
      %v750 = vunpack.c.l.b16 %v718
      %v751 = vunpack.c.l.b16 %v719
      %v752 = vunpack.c.l.b16 %v720
      %v753 = vunpack.c.l.b16 %v721
      %v754 = vunpack.c.l.b16 %v722
      %v755 = vunpack.c.l.b16 %v723
      %v756 = vunpack.c.l.b16 %v724
      %v757 = vunpack.c.l.b16 %v725
      %v758 = vunpack.c.l.b16 %v726
      %v759 = vunpack.c.l.b16 %v727
      %v760 = vunpack.c.l.b16 %v728
      %v761 = vpack.c.b16 %v746, %v745
      %v762 = vpack.c.b16 %v748, %v747
      %v763 = vpack.c.b16 %v750, %v749
      %v764 = vpack.c.b16 %v752, %v751
      %v765 = vpack.c.b16 %v754, %v753
      %v766 = vpack.c.b16 %v756, %v755
      %v767 = vpack.c.b16 %v758, %v757
      %v768 = vpack.c.b16 %v760, %v759
      %777 = vmatpush.bf16.msra.mxu0 %v768
      %778 = vmatpush.bf16.msra.mxu0 %v767
      %779 = vmatpush.bf16.msra.mxu0 %v766
      %780 = vmatpush.bf16.msra.mxu0 %v765
      %781 = vmatpush.bf16.msra.mxu0 %v764
      %782 = vmatpush.bf16.msra.mxu0 %v763
      %783 = vmatpush.bf16.msra.mxu0 %v762
      %784 = vmatpush.bf16.msra.mxu0 %v761
      %785 = vmatmul.bf16.gmra.mxu0 %v704
      %v786 = vpop.f32.mrf.mxu0
      %v787 = vadd.f32 0.0, %v786
      %v788 = vpop.f32.mrf.mxu0
      %v789 = vadd.f32 0.0, %v788
      %790 = vmatmul.bf16.gmra.mxu0 %v705
      %v791 = vpop.f32.mrf.mxu0
      %v792 = vadd.f32 0.0, %v791
      %v793 = vpop.f32.mrf.mxu0
      %v794 = vadd.f32 0.0, %v793
      %795 = vmatmul.bf16.gmra.mxu0 %v706
      %v796 = vpop.f32.mrf.mxu0
      %v797 = vadd.f32 0.0, %v796
      %v798 = vpop.f32.mrf.mxu0
      %v799 = vadd.f32 0.0, %v798
      %800 = vmatmul.bf16.gmra.mxu0 %v707
      %v801 = vpop.f32.mrf.mxu0
      %v802 = vadd.f32 0.0, %v801
      %v803 = vpop.f32.mrf.mxu0
      %v804 = vadd.f32 0.0, %v803
      %805 = vmatmul.bf16.gmra.mxu0 %v708
      %v806 = vpop.f32.mrf.mxu0
      %v807 = vadd.f32 0.0, %v806
      %v808 = vpop.f32.mrf.mxu0
      %v809 = vadd.f32 0.0, %v808
      %810 = vmatmul.bf16.gmra.mxu0 %v709
      %v811 = vpop.f32.mrf.mxu0
      %v812 = vadd.f32 0.0, %v811
      %v813 = vpop.f32.mrf.mxu0
      %v814 = vadd.f32 0.0, %v813
      %815 = vmatmul.bf16.gmra.mxu0 %v710
      %v816 = vpop.f32.mrf.mxu0
      %v817 = vadd.f32 0.0, %v816
      %v818 = vpop.f32.mrf.mxu0
      %v819 = vadd.f32 0.0, %v818
      %820 = vmatmul.bf16.gmra.mxu0 %v711
      %v821 = vpop.f32.mrf.mxu0
      %v822 = vadd.f32 0.0, %v821
      %v823 = vpop.f32.mrf.mxu0
      %v824 = vadd.f32 0.0, %v823
      %825 = vdwg.mxu0
      %v842 = vunpack.c.l.b16 %v672
      %v843 = vunpack.c.l.b16 %v673
      %v844 = vunpack.c.l.b16 %v674
      %v845 = vunpack.c.l.b16 %v675
      %v846 = vunpack.c.l.b16 %v676
      %v847 = vunpack.c.l.b16 %v677
      %v848 = vunpack.c.l.b16 %v678
      %v849 = vunpack.c.l.b16 %v679
      %v850 = vunpack.c.l.b16 %v680
      %v851 = vunpack.c.l.b16 %v681
      %v852 = vunpack.c.l.b16 %v682
      %v853 = vunpack.c.l.b16 %v683
      %v854 = vunpack.c.l.b16 %v684
      %v855 = vunpack.c.l.b16 %v685
      %v856 = vunpack.c.l.b16 %v686
      %v857 = vunpack.c.l.b16 %v687
      %v858 = vpack.c.b16 %v843, %v842
      %v859 = vpack.c.b16 %v845, %v844
      %v860 = vpack.c.b16 %v847, %v846
      %v861 = vpack.c.b16 %v849, %v848
      %v862 = vpack.c.b16 %v851, %v850
      %v863 = vpack.c.b16 %v853, %v852
      %v864 = vpack.c.b16 %v855, %v854
      %v865 = vpack.c.b16 %v857, %v856
      %874 = vmatpush.bf16.msra.mxu0 %v865
      %875 = vmatpush.bf16.msra.mxu0 %v864
      %876 = vmatpush.bf16.msra.mxu0 %v863
      %877 = vmatpush.bf16.msra.mxu0 %v862
      %878 = vmatpush.bf16.msra.mxu0 %v861
      %879 = vmatpush.bf16.msra.mxu0 %v860
      %880 = vmatpush.bf16.msra.mxu0 %v859
      %881 = vmatpush.bf16.msra.mxu0 %v858
      %882 = vmatmul.bf16.gmra.mxu0 %v664
      %v883 = vpop.f32.mrf.mxu0
      %v884 = vadd.f32 %v787, %v883
      %v885 = vpop.f32.mrf.mxu0
      %v886 = vadd.f32 %v789, %v885
      %887 = vmatmul.bf16.gmra.mxu0 %v665
      %v888 = vpop.f32.mrf.mxu0
      %v889 = vadd.f32 %v792, %v888
      %v890 = vpop.f32.mrf.mxu0
      %v891 = vadd.f32 %v794, %v890
      %892 = vmatmul.bf16.gmra.mxu0 %v666
      %v893 = vpop.f32.mrf.mxu0
      %v894 = vadd.f32 %v797, %v893
      %v895 = vpop.f32.mrf.mxu0
      %v896 = vadd.f32 %v799, %v895
      %897 = vmatmul.bf16.gmra.mxu0 %v667
      %v898 = vpop.f32.mrf.mxu0
      %v899 = vadd.f32 %v802, %v898
      %v900 = vpop.f32.mrf.mxu0
      %v901 = vadd.f32 %v804, %v900
      %902 = vmatmul.bf16.gmra.mxu0 %v668
      %v903 = vpop.f32.mrf.mxu0
      %v904 = vadd.f32 %v807, %v903
      %v905 = vpop.f32.mrf.mxu0
      %v906 = vadd.f32 %v809, %v905
      %907 = vmatmul.bf16.gmra.mxu0 %v669
      %v908 = vpop.f32.mrf.mxu0
      %v909 = vadd.f32 %v812, %v908
      %v910 = vpop.f32.mrf.mxu0
      %v911 = vadd.f32 %v814, %v910
      %912 = vmatmul.bf16.gmra.mxu0 %v670
      %v913 = vpop.f32.mrf.mxu0
      %v914 = vadd.f32 %v817, %v913
      %v915 = vpop.f32.mrf.mxu0
      %v916 = vadd.f32 %v819, %v915
      %917 = vmatmul.bf16.gmra.mxu0 %v671
      %v918 = vpop.f32.mrf.mxu0
      %v919 = vadd.f32 %v822, %v918
      %v920 = vpop.f32.mrf.mxu0
      %v921 = vadd.f32 %v824, %v920
      %922 = vdwg.mxu0
      %v923 = vld [vmem:[#allocation2 + $0x9] sm:$0xff]
      %v924 = vld [vmem:[#allocation2 + $0x11] sm:$0xff]
      %v925 = vld [vmem:[#allocation2 + $0x19] sm:$0xff]
      %v926 = vld [vmem:[#allocation2 + $0x21] sm:$0xff]
      %v927 = vld [vmem:[#allocation2 + $0x29] sm:$0xff]
      %v928 = vld [vmem:[#allocation2 + $0x31] sm:$0xff]
      %v929 = vld [vmem:[#allocation2 + $0x39] sm:$0xff]
      %v930 = vld [vmem:[#allocation2 + $0x41] sm:$0xff]
      %v931 = vld [vmem:[#allocation2 + $0x49] sm:$0xff]
      %v932 = vld [vmem:[#allocation2 + $0x51] sm:$0xff]
      %v933 = vld [vmem:[#allocation2 + $0x59] sm:$0xff]
      %v934 = vld [vmem:[#allocation2 + $0x61] sm:$0xff]
      %v935 = vld [vmem:[#allocation2 + $0x69] sm:$0xff]
      %v936 = vld [vmem:[#allocation2 + $0x71] sm:$0xff]
      %v937 = vld [vmem:[#allocation2 + $0x79] sm:$0xff]
      %v938 = vld [vmem:[#allocation2 + $0x81] sm:$0xff]
      %v939 = vsel %vm616, %v923, 0.0
      %v940 = vsel %vm617, %v924, 0.0
      %v941 = vsel %vm618, %v925, 0.0
      %v942 = vsel %vm619, %v926, 0.0
      %v943 = vsel %vm620, %v927, 0.0
      %v944 = vsel %vm621, %v928, 0.0
      %v945 = vsel %vm622, %v929, 0.0
      %v946 = vsel %vm623, %v930, 0.0
      %v947 = vsel %vm624, %v931, 0.0
      %v948 = vsel %vm625, %v932, 0.0
      %v949 = vsel %vm626, %v933, 0.0
      %v950 = vsel %vm627, %v934, 0.0
      %v951 = vsel %vm628, %v935, 0.0
      %v952 = vsel %vm629, %v936, 0.0
      %v953 = vsel %vm630, %v937, 0.0
      %v954 = vsel %vm631, %v938, 0.0
      %v955 = vpack.c.bf16 %v940, %v939
      %v956 = vpack.c.bf16 %v942, %v941
      %v957 = vpack.c.bf16 %v944, %v943
      %v958 = vpack.c.bf16 %v946, %v945
      %v959 = vpack.c.bf16 %v948, %v947
      %v960 = vpack.c.bf16 %v950, %v949
      %v961 = vpack.c.bf16 %v952, %v951
      %v962 = vpack.c.bf16 %v954, %v953
      %s963 = scalar_lea.vmem %s297, 128
      %v964 = vld [vmem:[%s963] sm:$0xf]
      %v965 = vld [vmem:[%s963 + $0x4] sm:$0xf]
      %v966 = vld [vmem:[%s963 + $0x8] sm:$0xf]
      %v967 = vld [vmem:[%s963 + $0xc] sm:$0xf]
      %v968 = vld [vmem:[%s963 + $0x10] sm:$0xf]
      %v969 = vld [vmem:[%s963 + $0x14] sm:$0xf]
      %v970 = vld [vmem:[%s963 + $0x18] sm:$0xf]
      %v971 = vld [vmem:[%s963 + $0x1c] sm:$0xf]
      %v972 = vld [vmem:[%s963 + $0x20] sm:$0xf]
      %v973 = vld [vmem:[%s963 + $0x24] sm:$0xf]
      %v974 = vld [vmem:[%s963 + $0x28] sm:$0xf]
      %v975 = vld [vmem:[%s963 + $0x2c] sm:$0xf]
      %v976 = vld [vmem:[%s963 + $0x30] sm:$0xf]
      %v977 = vld [vmem:[%s963 + $0x34] sm:$0xf]
      %v978 = vld [vmem:[%s963 + $0x38] sm:$0xf]
      %v979 = vld [vmem:[%s963 + $0x3c] sm:$0xf]
      %v996 = vunpack.c.l.b16 %v964
      %v997 = vunpack.c.l.b16 %v965
      %v998 = vunpack.c.l.b16 %v966
      %v999 = vunpack.c.l.b16 %v967
      %v1000 = vunpack.c.l.b16 %v968
      %v1001 = vunpack.c.l.b16 %v969
      %v1002 = vunpack.c.l.b16 %v970
      %v1003 = vunpack.c.l.b16 %v971
      %v1004 = vunpack.c.l.b16 %v972
      %v1005 = vunpack.c.l.b16 %v973
      %v1006 = vunpack.c.l.b16 %v974
      %v1007 = vunpack.c.l.b16 %v975
      %v1008 = vunpack.c.l.b16 %v976
      %v1009 = vunpack.c.l.b16 %v977
      %v1010 = vunpack.c.l.b16 %v978
      %v1011 = vunpack.c.l.b16 %v979
      %v1012 = vpack.c.b16 %v997, %v996
      %v1013 = vpack.c.b16 %v999, %v998
      %v1014 = vpack.c.b16 %v1001, %v1000
      %v1015 = vpack.c.b16 %v1003, %v1002
      %v1016 = vpack.c.b16 %v1005, %v1004
      %v1017 = vpack.c.b16 %v1007, %v1006
      %v1018 = vpack.c.b16 %v1009, %v1008
      %v1019 = vpack.c.b16 %v1011, %v1010
      %1028 = vmatpush.bf16.msra.mxu0 %v1019
      %1029 = vmatpush.bf16.msra.mxu0 %v1018
      %1030 = vmatpush.bf16.msra.mxu0 %v1017
      %1031 = vmatpush.bf16.msra.mxu0 %v1016
      %1032 = vmatpush.bf16.msra.mxu0 %v1015
      %1033 = vmatpush.bf16.msra.mxu0 %v1014
      %1034 = vmatpush.bf16.msra.mxu0 %v1013
      %1035 = vmatpush.bf16.msra.mxu0 %v1012
      %1036 = vmatmul.bf16.gmra.mxu0 %v955
      %v1037 = vpop.f32.mrf.mxu0
      %v1038 = vadd.f32 0.0, %v1037
      %v1039 = vpop.f32.mrf.mxu0
      %v1040 = vadd.f32 0.0, %v1039
      %1041 = vmatmul.bf16.gmra.mxu0 %v956
      %v1042 = vpop.f32.mrf.mxu0
      %v1043 = vadd.f32 0.0, %v1042
      %v1044 = vpop.f32.mrf.mxu0
      %v1045 = vadd.f32 0.0, %v1044
      %1046 = vmatmul.bf16.gmra.mxu0 %v957
      %v1047 = vpop.f32.mrf.mxu0
      %v1048 = vadd.f32 0.0, %v1047
      %v1049 = vpop.f32.mrf.mxu0
      %v1050 = vadd.f32 0.0, %v1049
      %1051 = vmatmul.bf16.gmra.mxu0 %v958
      %v1052 = vpop.f32.mrf.mxu0
      %v1053 = vadd.f32 0.0, %v1052
      %v1054 = vpop.f32.mrf.mxu0
      %v1055 = vadd.f32 0.0, %v1054
      %1056 = vmatmul.bf16.gmra.mxu0 %v959
      %v1057 = vpop.f32.mrf.mxu0
      %v1058 = vadd.f32 0.0, %v1057
      %v1059 = vpop.f32.mrf.mxu0
      %v1060 = vadd.f32 0.0, %v1059
      %1061 = vmatmul.bf16.gmra.mxu0 %v960
      %v1062 = vpop.f32.mrf.mxu0
      %v1063 = vadd.f32 0.0, %v1062
      %v1064 = vpop.f32.mrf.mxu0
      %v1065 = vadd.f32 0.0, %v1064
      %1066 = vmatmul.bf16.gmra.mxu0 %v961
      %v1067 = vpop.f32.mrf.mxu0
      %v1068 = vadd.f32 0.0, %v1067
      %v1069 = vpop.f32.mrf.mxu0
      %v1070 = vadd.f32 0.0, %v1069
      %1071 = vmatmul.bf16.gmra.mxu0 %v962
      %v1072 = vpop.f32.mrf.mxu0
      %v1073 = vadd.f32 0.0, %v1072
      %v1074 = vpop.f32.mrf.mxu0
      %v1075 = vadd.f32 0.0, %v1074
      %1076 = vdwg.mxu0
      %v1077 = vadd.f32 %v884, %v1038
      %v1078 = vadd.f32 %v886, %v1040
      %v1079 = vadd.f32 %v889, %v1043
      %v1080 = vadd.f32 %v891, %v1045
      %v1081 = vadd.f32 %v894, %v1048
      %v1082 = vadd.f32 %v896, %v1050
      %v1083 = vadd.f32 %v899, %v1053
      %v1084 = vadd.f32 %v901, %v1055
      %v1085 = vadd.f32 %v904, %v1058
      %v1086 = vadd.f32 %v906, %v1060
      %v1087 = vadd.f32 %v909, %v1063
      %v1088 = vadd.f32 %v911, %v1065
      %v1089 = vadd.f32 %v914, %v1068
      %v1090 = vadd.f32 %v916, %v1070
      %v1091 = vadd.f32 %v919, %v1073
      %v1092 = vadd.f32 %v921, %v1075
      %v1093 = vld [vmem:[#allocation2 + $0x17] sm:$0xff]
      %v1094 = vld [vmem:[#allocation2 + $0x1f] sm:$0xff]
      %v1095 = vld [vmem:[#allocation2 + $0x27] sm:$0xff]
      %v1096 = vld [vmem:[#allocation2 + $0x2f] sm:$0xff]
      %v1097 = vld [vmem:[#allocation2 + $0x37] sm:$0xff]
      %v1098 = vld [vmem:[#allocation2 + $0x3f] sm:$0xff]
      %v1099 = vld [vmem:[#allocation2 + $0x47] sm:$0xff]
      %v1100 = vld [vmem:[#allocation2 + $0x4f] sm:$0xff]
      %v1101 = vld [vmem:[#allocation2 + $0x57] sm:$0xff]
      %v1102 = vld [vmem:[#allocation2 + $0x5f] sm:$0xff]
      %v1103 = vld [vmem:[#allocation2 + $0x67] sm:$0xff]
      %v1104 = vld [vmem:[#allocation2 + $0x6f] sm:$0xff]
      %v1105 = vld [vmem:[#allocation2 + $0x77] sm:$0xff]
      %v1106 = vld [vmem:[#allocation2 + $0x7f] sm:$0xff]
      %v1107 = vld [vmem:[#allocation2 + $0x87] sm:$0xff]
      %v1108 = vld [vmem:[#allocation2 + $0x8f] sm:$0xff]
      %v1109 = vsel %vm600, %v1093, 0.0
      %v1110 = vsel %vm601, %v1094, 0.0
      %v1111 = vsel %vm602, %v1095, 0.0
      %v1112 = vsel %vm603, %v1096, 0.0
      %v1113 = vsel %vm604, %v1097, 0.0
      %v1114 = vsel %vm605, %v1098, 0.0
      %v1115 = vsel %vm606, %v1099, 0.0
      %v1116 = vsel %vm607, %v1100, 0.0
      %v1117 = vsel %vm608, %v1101, 0.0
      %v1118 = vsel %vm609, %v1102, 0.0
      %v1119 = vsel %vm610, %v1103, 0.0
      %v1120 = vsel %vm611, %v1104, 0.0
      %v1121 = vsel %vm612, %v1105, 0.0
      %v1122 = vsel %vm613, %v1106, 0.0
      %v1123 = vsel %vm614, %v1107, 0.0
      %v1124 = vsel %vm615, %v1108, 0.0
      %v1125 = vpack.c.bf16 %v1110, %v1109
      %v1126 = vpack.c.bf16 %v1112, %v1111
      %v1127 = vpack.c.bf16 %v1114, %v1113
      %v1128 = vpack.c.bf16 %v1116, %v1115
      %v1129 = vpack.c.bf16 %v1118, %v1117
      %v1130 = vpack.c.bf16 %v1120, %v1119
      %v1131 = vpack.c.bf16 %v1122, %v1121
      %v1132 = vpack.c.bf16 %v1124, %v1123
      %s1133 = scalar_lea.vmem %s297, 192
      %v1134 = vld [vmem:[%s1133] sm:$0xf]
      %v1135 = vld [vmem:[%s1133 + $0x4] sm:$0xf]
      %v1136 = vld [vmem:[%s1133 + $0x8] sm:$0xf]
      %v1137 = vld [vmem:[%s1133 + $0xc] sm:$0xf]
      %v1138 = vld [vmem:[%s1133 + $0x10] sm:$0xf]
      %v1139 = vld [vmem:[%s1133 + $0x14] sm:$0xf]
      %v1140 = vld [vmem:[%s1133 + $0x18] sm:$0xf]
      %v1141 = vld [vmem:[%s1133 + $0x1c] sm:$0xf]
      %v1142 = vld [vmem:[%s1133 + $0x20] sm:$0xf]
      %v1143 = vld [vmem:[%s1133 + $0x24] sm:$0xf]
      %v1144 = vld [vmem:[%s1133 + $0x28] sm:$0xf]
      %v1145 = vld [vmem:[%s1133 + $0x2c] sm:$0xf]
      %v1146 = vld [vmem:[%s1133 + $0x30] sm:$0xf]
      %v1147 = vld [vmem:[%s1133 + $0x34] sm:$0xf]
      %v1148 = vld [vmem:[%s1133 + $0x38] sm:$0xf]
      %v1149 = vld [vmem:[%s1133 + $0x3c] sm:$0xf]
      %v1166 = vunpack.c.l.b16 %v1134
      %v1167 = vunpack.c.l.b16 %v1135
      %v1168 = vunpack.c.l.b16 %v1136
      %v1169 = vunpack.c.l.b16 %v1137
      %v1170 = vunpack.c.l.b16 %v1138
      %v1171 = vunpack.c.l.b16 %v1139
      %v1172 = vunpack.c.l.b16 %v1140
      %v1173 = vunpack.c.l.b16 %v1141
      %v1174 = vunpack.c.l.b16 %v1142
      %v1175 = vunpack.c.l.b16 %v1143
      %v1176 = vunpack.c.l.b16 %v1144
      %v1177 = vunpack.c.l.b16 %v1145
      %v1178 = vunpack.c.l.b16 %v1146
      %v1179 = vunpack.c.l.b16 %v1147
      %v1180 = vunpack.c.l.b16 %v1148
      %v1181 = vunpack.c.l.b16 %v1149
      %v1182 = vpack.c.b16 %v1167, %v1166
      %v1183 = vpack.c.b16 %v1169, %v1168
      %v1184 = vpack.c.b16 %v1171, %v1170
      %v1185 = vpack.c.b16 %v1173, %v1172
      %v1186 = vpack.c.b16 %v1175, %v1174
      %v1187 = vpack.c.b16 %v1177, %v1176
      %v1188 = vpack.c.b16 %v1179, %v1178
      %v1189 = vpack.c.b16 %v1181, %v1180
      %1198 = vmatpush.bf16.msra.mxu0 %v1189
      %1199 = vmatpush.bf16.msra.mxu0 %v1188
      %1200 = vmatpush.bf16.msra.mxu0 %v1187
      %1201 = vmatpush.bf16.msra.mxu0 %v1186
      %1202 = vmatpush.bf16.msra.mxu0 %v1185
      %1203 = vmatpush.bf16.msra.mxu0 %v1184
      %1204 = vmatpush.bf16.msra.mxu0 %v1183
      %1205 = vmatpush.bf16.msra.mxu0 %v1182
      %1206 = vmatmul.bf16.gmra.mxu0 %v1125
      %v1207 = vpop.f32.mrf.mxu0
      %v1208 = vadd.f32 0.0, %v1207
      %v1209 = vpop.f32.mrf.mxu0
      %v1210 = vadd.f32 0.0, %v1209
      %1211 = vmatmul.bf16.gmra.mxu0 %v1126
      %v1212 = vpop.f32.mrf.mxu0
      %v1213 = vadd.f32 0.0, %v1212
      %v1214 = vpop.f32.mrf.mxu0
      %v1215 = vadd.f32 0.0, %v1214
      %1216 = vmatmul.bf16.gmra.mxu0 %v1127
      %v1217 = vpop.f32.mrf.mxu0
      %v1218 = vadd.f32 0.0, %v1217
      %v1219 = vpop.f32.mrf.mxu0
      %v1220 = vadd.f32 0.0, %v1219
      %1221 = vmatmul.bf16.gmra.mxu0 %v1128
      %v1222 = vpop.f32.mrf.mxu0
      %v1223 = vadd.f32 0.0, %v1222
      %v1224 = vpop.f32.mrf.mxu0
      %v1225 = vadd.f32 0.0, %v1224
      %1226 = vmatmul.bf16.gmra.mxu0 %v1129
      %v1227 = vpop.f32.mrf.mxu0
      %v1228 = vadd.f32 0.0, %v1227
      %v1229 = vpop.f32.mrf.mxu0
      %v1230 = vadd.f32 0.0, %v1229
      %1231 = vmatmul.bf16.gmra.mxu0 %v1130
      %v1232 = vpop.f32.mrf.mxu0
      %v1233 = vadd.f32 0.0, %v1232
      %v1234 = vpop.f32.mrf.mxu0
      %v1235 = vadd.f32 0.0, %v1234
      %1236 = vmatmul.bf16.gmra.mxu0 %v1131
      %v1237 = vpop.f32.mrf.mxu0
      %v1238 = vadd.f32 0.0, %v1237
      %v1239 = vpop.f32.mrf.mxu0
      %v1240 = vadd.f32 0.0, %v1239
      %1241 = vmatmul.bf16.gmra.mxu0 %v1132
      %v1242 = vpop.f32.mrf.mxu0
      %v1243 = vadd.f32 0.0, %v1242
      %v1244 = vpop.f32.mrf.mxu0
      %v1245 = vadd.f32 0.0, %v1244
      %1246 = vdwg.mxu0
      %v1247 = vadd.f32 %v1077, %v1208
      %v1248 = vadd.f32 %v1078, %v1210
      %v1249 = vadd.f32 %v1079, %v1213
      %v1250 = vadd.f32 %v1080, %v1215
      %v1251 = vadd.f32 %v1081, %v1218
      %v1252 = vadd.f32 %v1082, %v1220
      %v1253 = vadd.f32 %v1083, %v1223
      %v1254 = vadd.f32 %v1084, %v1225
      %v1255 = vadd.f32 %v1085, %v1228
      %v1256 = vadd.f32 %v1086, %v1230
      %v1257 = vadd.f32 %v1087, %v1233
      %v1258 = vadd.f32 %v1088, %v1235
      %v1259 = vadd.f32 %v1089, %v1238
      %v1260 = vadd.f32 %v1090, %v1240
      %v1261 = vadd.f32 %v1091, %v1243
      %v1262 = vadd.f32 %v1092, %v1245
      %v1263 = vld [vmem:[#allocation2 + $0x18] sm:$0xff]
      %v1264 = vld [vmem:[#allocation2 + $0x20] sm:$0xff]
      %v1265 = vld [vmem:[#allocation2 + $0x28] sm:$0xff]
      %v1266 = vld [vmem:[#allocation2 + $0x30] sm:$0xff]
      %v1267 = vld [vmem:[#allocation2 + $0x38] sm:$0xff]
      %v1268 = vld [vmem:[#allocation2 + $0x40] sm:$0xff]
      %v1269 = vld [vmem:[#allocation2 + $0x48] sm:$0xff]
      %v1270 = vld [vmem:[#allocation2 + $0x50] sm:$0xff]
      %v1271 = vld [vmem:[#allocation2 + $0x58] sm:$0xff]
      %v1272 = vld [vmem:[#allocation2 + $0x60] sm:$0xff]
      %v1273 = vld [vmem:[#allocation2 + $0x68] sm:$0xff]
      %v1274 = vld [vmem:[#allocation2 + $0x70] sm:$0xff]
      %v1275 = vld [vmem:[#allocation2 + $0x78] sm:$0xff]
      %v1276 = vld [vmem:[#allocation2 + $0x80] sm:$0xff]
      %v1277 = vld [vmem:[#allocation2 + $0x88] sm:$0xff]
      %v1278 = vld [vmem:[#allocation2 + $0x90] sm:$0xff]
      %v1279 = vpack.c.bf16 %v1264, %v1263
      %v1280 = vpack.c.bf16 %v1266, %v1265
      %v1281 = vpack.c.bf16 %v1268, %v1267
      %v1282 = vpack.c.bf16 %v1270, %v1269
      %v1283 = vpack.c.bf16 %v1272, %v1271
      %v1284 = vpack.c.bf16 %v1274, %v1273
      %v1285 = vpack.c.bf16 %v1276, %v1275
      %v1286 = vpack.c.bf16 %v1278, %v1277
      %s1287 = scalar_lea.vmem %s297, 256
      %v1288 = vld [vmem:[%s1287] sm:$0xf]
      %v1289 = vld [vmem:[%s1287 + $0x4] sm:$0xf]
      %v1290 = vld [vmem:[%s1287 + $0x8] sm:$0xf]
      %v1291 = vld [vmem:[%s1287 + $0xc] sm:$0xf]
      %v1292 = vld [vmem:[%s1287 + $0x10] sm:$0xf]
      %v1293 = vld [vmem:[%s1287 + $0x14] sm:$0xf]
      %v1294 = vld [vmem:[%s1287 + $0x18] sm:$0xf]
      %v1295 = vld [vmem:[%s1287 + $0x1c] sm:$0xf]
      %v1296 = vld [vmem:[%s1287 + $0x20] sm:$0xf]
      %v1297 = vld [vmem:[%s1287 + $0x24] sm:$0xf]
      %v1298 = vld [vmem:[%s1287 + $0x28] sm:$0xf]
      %v1299 = vld [vmem:[%s1287 + $0x2c] sm:$0xf]
      %v1300 = vld [vmem:[%s1287 + $0x30] sm:$0xf]
      %v1301 = vld [vmem:[%s1287 + $0x34] sm:$0xf]
      %v1302 = vld [vmem:[%s1287 + $0x38] sm:$0xf]
      %v1303 = vld [vmem:[%s1287 + $0x3c] sm:$0xf]
      %v1320 = vunpack.c.l.b16 %v1288
      %v1321 = vunpack.c.l.b16 %v1289
      %v1322 = vunpack.c.l.b16 %v1290
      %v1323 = vunpack.c.l.b16 %v1291
      %v1324 = vunpack.c.l.b16 %v1292
      %v1325 = vunpack.c.l.b16 %v1293
      %v1326 = vunpack.c.l.b16 %v1294
      %v1327 = vunpack.c.l.b16 %v1295
      %v1328 = vunpack.c.l.b16 %v1296
      %v1329 = vunpack.c.l.b16 %v1297
      %v1330 = vunpack.c.l.b16 %v1298
      %v1331 = vunpack.c.l.b16 %v1299
      %v1332 = vunpack.c.l.b16 %v1300
      %v1333 = vunpack.c.l.b16 %v1301
      %v1334 = vunpack.c.l.b16 %v1302
      %v1335 = vunpack.c.l.b16 %v1303
      %v1336 = vpack.c.b16 %v1321, %v1320
      %v1337 = vpack.c.b16 %v1323, %v1322
      %v1338 = vpack.c.b16 %v1325, %v1324
      %v1339 = vpack.c.b16 %v1327, %v1326
      %v1340 = vpack.c.b16 %v1329, %v1328
      %v1341 = vpack.c.b16 %v1331, %v1330
      %v1342 = vpack.c.b16 %v1333, %v1332
      %v1343 = vpack.c.b16 %v1335, %v1334
      %1352 = vmatpush.bf16.msra.mxu0 %v1343
      %1353 = vmatpush.bf16.msra.mxu0 %v1342
      %1354 = vmatpush.bf16.msra.mxu0 %v1341
      %1355 = vmatpush.bf16.msra.mxu0 %v1340
      %1356 = vmatpush.bf16.msra.mxu0 %v1339
      %1357 = vmatpush.bf16.msra.mxu0 %v1338
      %1358 = vmatpush.bf16.msra.mxu0 %v1337
      %1359 = vmatpush.bf16.msra.mxu0 %v1336
      %1360 = vmatmul.bf16.gmra.mxu0 %v1279
      %v1361 = vpop.f32.mrf.mxu0
      %v1362 = vadd.f32 0.0, %v1361
      %v1363 = vpop.f32.mrf.mxu0
      %v1364 = vadd.f32 0.0, %v1363
      %1365 = vmatmul.bf16.gmra.mxu0 %v1280
      %v1366 = vpop.f32.mrf.mxu0
      %v1367 = vadd.f32 0.0, %v1366
      %v1368 = vpop.f32.mrf.mxu0
      %v1369 = vadd.f32 0.0, %v1368
      %1370 = vmatmul.bf16.gmra.mxu0 %v1281
      %v1371 = vpop.f32.mrf.mxu0
      %v1372 = vadd.f32 0.0, %v1371
      %v1373 = vpop.f32.mrf.mxu0
      %v1374 = vadd.f32 0.0, %v1373
      %1375 = vmatmul.bf16.gmra.mxu0 %v1282
      %v1376 = vpop.f32.mrf.mxu0
      %v1377 = vadd.f32 0.0, %v1376
      %v1378 = vpop.f32.mrf.mxu0
      %v1379 = vadd.f32 0.0, %v1378
      %1380 = vmatmul.bf16.gmra.mxu0 %v1283
      %v1381 = vpop.f32.mrf.mxu0
      %v1382 = vadd.f32 0.0, %v1381
      %v1383 = vpop.f32.mrf.mxu0
      %v1384 = vadd.f32 0.0, %v1383
      %1385 = vmatmul.bf16.gmra.mxu0 %v1284
      %v1386 = vpop.f32.mrf.mxu0
      %v1387 = vadd.f32 0.0, %v1386
      %v1388 = vpop.f32.mrf.mxu0
      %v1389 = vadd.f32 0.0, %v1388
      %1390 = vmatmul.bf16.gmra.mxu0 %v1285
      %v1391 = vpop.f32.mrf.mxu0
      %v1392 = vadd.f32 0.0, %v1391
      %v1393 = vpop.f32.mrf.mxu0
      %v1394 = vadd.f32 0.0, %v1393
      %1395 = vmatmul.bf16.gmra.mxu0 %v1286
      %v1396 = vpop.f32.mrf.mxu0
      %v1397 = vadd.f32 0.0, %v1396
      %v1398 = vpop.f32.mrf.mxu0
      %v1399 = vadd.f32 0.0, %v1398
      %1400 = vdwg.mxu0
      %v1401 = vadd.f32 %v1247, %v1362
      %v1402 = vadd.f32 %v1248, %v1364
      %v1403 = vadd.f32 %v1249, %v1367
      %v1404 = vadd.f32 %v1250, %v1369
      %v1405 = vadd.f32 %v1251, %v1372
      %v1406 = vadd.f32 %v1252, %v1374
      %v1407 = vadd.f32 %v1253, %v1377
      %v1408 = vadd.f32 %v1254, %v1379
      %v1409 = vadd.f32 %v1255, %v1382
      %v1410 = vadd.f32 %v1256, %v1384
      %v1411 = vadd.f32 %v1257, %v1387
      %v1412 = vadd.f32 %v1258, %v1389
      %v1413 = vadd.f32 %v1259, %v1392
      %v1414 = vadd.f32 %v1260, %v1394
      %v1415 = vadd.f32 %v1261, %v1397
      %v1416 = vadd.f32 %v1262, %v1399
      %v1417 = vld [vmem:[#allocation2 + $0x19] sm:$0xff]
      %v1418 = vld [vmem:[#allocation2 + $0x21] sm:$0xff]
      %v1419 = vld [vmem:[#allocation2 + $0x29] sm:$0xff]
      %v1420 = vld [vmem:[#allocation2 + $0x31] sm:$0xff]
      %v1421 = vld [vmem:[#allocation2 + $0x39] sm:$0xff]
      %v1422 = vld [vmem:[#allocation2 + $0x41] sm:$0xff]
      %v1423 = vld [vmem:[#allocation2 + $0x49] sm:$0xff]
      %v1424 = vld [vmem:[#allocation2 + $0x51] sm:$0xff]
      %v1425 = vld [vmem:[#allocation2 + $0x59] sm:$0xff]
      %v1426 = vld [vmem:[#allocation2 + $0x61] sm:$0xff]
      %v1427 = vld [vmem:[#allocation2 + $0x69] sm:$0xff]
      %v1428 = vld [vmem:[#allocation2 + $0x71] sm:$0xff]
      %v1429 = vld [vmem:[#allocation2 + $0x79] sm:$0xff]
      %v1430 = vld [vmem:[#allocation2 + $0x81] sm:$0xff]
      %v1431 = vld [vmem:[#allocation2 + $0x89] sm:$0xff]
      %v1432 = vld [vmem:[#allocation2 + $0x91] sm:$0xff]
      %v1433 = vsel %vm616, %v1417, 0.0
      %v1434 = vsel %vm617, %v1418, 0.0
      %v1435 = vsel %vm618, %v1419, 0.0
      %v1436 = vsel %vm619, %v1420, 0.0
      %v1437 = vsel %vm620, %v1421, 0.0
      %v1438 = vsel %vm621, %v1422, 0.0
      %v1439 = vsel %vm622, %v1423, 0.0
      %v1440 = vsel %vm623, %v1424, 0.0
      %v1441 = vsel %vm624, %v1425, 0.0
      %v1442 = vsel %vm625, %v1426, 0.0
      %v1443 = vsel %vm626, %v1427, 0.0
      %v1444 = vsel %vm627, %v1428, 0.0
      %v1445 = vsel %vm628, %v1429, 0.0
      %v1446 = vsel %vm629, %v1430, 0.0
      %v1447 = vsel %vm630, %v1431, 0.0
      %v1448 = vsel %vm631, %v1432, 0.0
      %v1449 = vpack.c.bf16 %v1434, %v1433
      %v1450 = vpack.c.bf16 %v1436, %v1435
      %v1451 = vpack.c.bf16 %v1438, %v1437
      %v1452 = vpack.c.bf16 %v1440, %v1439
      %v1453 = vpack.c.bf16 %v1442, %v1441
      %v1454 = vpack.c.bf16 %v1444, %v1443
      %v1455 = vpack.c.bf16 %v1446, %v1445
      %v1456 = vpack.c.bf16 %v1448, %v1447
      %s1457 = scalar_lea.vmem %s297, 320
      %v1458 = vld [vmem:[%s1457] sm:$0xf]
      %v1459 = vld [vmem:[%s1457 + $0x4] sm:$0xf]
      %v1460 = vld [vmem:[%s1457 + $0x8] sm:$0xf]
      %v1461 = vld [vmem:[%s1457 + $0xc] sm:$0xf]
      %v1462 = vld [vmem:[%s1457 + $0x10] sm:$0xf]
      %v1463 = vld [vmem:[%s1457 + $0x14] sm:$0xf]
      %v1464 = vld [vmem:[%s1457 + $0x18] sm:$0xf]
      %v1465 = vld [vmem:[%s1457 + $0x1c] sm:$0xf]
      %v1466 = vld [vmem:[%s1457 + $0x20] sm:$0xf]
      %v1467 = vld [vmem:[%s1457 + $0x24] sm:$0xf]
      %v1468 = vld [vmem:[%s1457 + $0x28] sm:$0xf]
      %v1469 = vld [vmem:[%s1457 + $0x2c] sm:$0xf]
      %v1470 = vld [vmem:[%s1457 + $0x30] sm:$0xf]
      %v1471 = vld [vmem:[%s1457 + $0x34] sm:$0xf]
      %v1472 = vld [vmem:[%s1457 + $0x38] sm:$0xf]
      %v1473 = vld [vmem:[%s1457 + $0x3c] sm:$0xf]
      %v1490 = vunpack.c.l.b16 %v1458
      %v1491 = vunpack.c.l.b16 %v1459
      %v1492 = vunpack.c.l.b16 %v1460
      %v1493 = vunpack.c.l.b16 %v1461
      %v1494 = vunpack.c.l.b16 %v1462
      %v1495 = vunpack.c.l.b16 %v1463
      %v1496 = vunpack.c.l.b16 %v1464
      %v1497 = vunpack.c.l.b16 %v1465
      %v1498 = vunpack.c.l.b16 %v1466
      %v1499 = vunpack.c.l.b16 %v1467
      %v1500 = vunpack.c.l.b16 %v1468
      %v1501 = vunpack.c.l.b16 %v1469
      %v1502 = vunpack.c.l.b16 %v1470
      %v1503 = vunpack.c.l.b16 %v1471
      %v1504 = vunpack.c.l.b16 %v1472
      %v1505 = vunpack.c.l.b16 %v1473
      %v1506 = vpack.c.b16 %v1491, %v1490
      %v1507 = vpack.c.b16 %v1493, %v1492
      %v1508 = vpack.c.b16 %v1495, %v1494
      %v1509 = vpack.c.b16 %v1497, %v1496
      %v1510 = vpack.c.b16 %v1499, %v1498
      %v1511 = vpack.c.b16 %v1501, %v1500
      %v1512 = vpack.c.b16 %v1503, %v1502
      %v1513 = vpack.c.b16 %v1505, %v1504
      %1522 = vmatpush.bf16.msra.mxu0 %v1513
      %1523 = vmatpush.bf16.msra.mxu0 %v1512
      %1524 = vmatpush.bf16.msra.mxu0 %v1511
      %1525 = vmatpush.bf16.msra.mxu0 %v1510
      %1526 = vmatpush.bf16.msra.mxu0 %v1509
      %1527 = vmatpush.bf16.msra.mxu0 %v1508
      %1528 = vmatpush.bf16.msra.mxu0 %v1507
      %1529 = vmatpush.bf16.msra.mxu0 %v1506
      %1530 = vmatmul.bf16.gmra.mxu0 %v1449
      %v1531 = vpop.f32.mrf.mxu0
      %v1532 = vadd.f32 0.0, %v1531
      %v1533 = vpop.f32.mrf.mxu0
      %v1534 = vadd.f32 0.0, %v1533
      %1535 = vmatmul.bf16.gmra.mxu0 %v1450
      %v1536 = vpop.f32.mrf.mxu0
      %v1537 = vadd.f32 0.0, %v1536
      %v1538 = vpop.f32.mrf.mxu0
      %v1539 = vadd.f32 0.0, %v1538
      %1540 = vmatmul.bf16.gmra.mxu0 %v1451
      %v1541 = vpop.f32.mrf.mxu0
      %v1542 = vadd.f32 0.0, %v1541
      %v1543 = vpop.f32.mrf.mxu0
      %v1544 = vadd.f32 0.0, %v1543
      %1545 = vmatmul.bf16.gmra.mxu0 %v1452
      %v1546 = vpop.f32.mrf.mxu0
      %v1547 = vadd.f32 0.0, %v1546
      %v1548 = vpop.f32.mrf.mxu0
      %v1549 = vadd.f32 0.0, %v1548
      %1550 = vmatmul.bf16.gmra.mxu0 %v1453
      %v1551 = vpop.f32.mrf.mxu0
      %v1552 = vadd.f32 0.0, %v1551
      %v1553 = vpop.f32.mrf.mxu0
      %v1554 = vadd.f32 0.0, %v1553
      %1555 = vmatmul.bf16.gmra.mxu0 %v1454
      %v1556 = vpop.f32.mrf.mxu0
      %v1557 = vadd.f32 0.0, %v1556
      %v1558 = vpop.f32.mrf.mxu0
      %v1559 = vadd.f32 0.0, %v1558
      %1560 = vmatmul.bf16.gmra.mxu0 %v1455
      %v1561 = vpop.f32.mrf.mxu0
      %v1562 = vadd.f32 0.0, %v1561
      %v1563 = vpop.f32.mrf.mxu0
      %v1564 = vadd.f32 0.0, %v1563
      %1565 = vmatmul.bf16.gmra.mxu0 %v1456
      %v1566 = vpop.f32.mrf.mxu0
      %v1567 = vadd.f32 0.0, %v1566
      %v1568 = vpop.f32.mrf.mxu0
      %v1569 = vadd.f32 0.0, %v1568
      %1570 = vdwg.mxu0
      %v1571 = vadd.f32 %v1401, %v1532
      %v1572 = vadd.f32 %v1402, %v1534
      %v1573 = vadd.f32 %v1403, %v1537
      %v1574 = vadd.f32 %v1404, %v1539
      %v1575 = vadd.f32 %v1405, %v1542
      %v1576 = vadd.f32 %v1406, %v1544
      %v1577 = vadd.f32 %v1407, %v1547
      %v1578 = vadd.f32 %v1408, %v1549
      %v1579 = vadd.f32 %v1409, %v1552
      %v1580 = vadd.f32 %v1410, %v1554
      %v1581 = vadd.f32 %v1411, %v1557
      %v1582 = vadd.f32 %v1412, %v1559
      %v1583 = vadd.f32 %v1413, %v1562
      %v1584 = vadd.f32 %v1414, %v1564
      %v1585 = vadd.f32 %v1415, %v1567
      %v1586 = vadd.f32 %v1416, %v1569
      %v1587 = vld [vmem:[#allocation2 + $0x27] sm:$0xff]
      %v1588 = vld [vmem:[#allocation2 + $0x2f] sm:$0xff]
      %v1589 = vld [vmem:[#allocation2 + $0x37] sm:$0xff]
      %v1590 = vld [vmem:[#allocation2 + $0x3f] sm:$0xff]
      %v1591 = vld [vmem:[#allocation2 + $0x47] sm:$0xff]
      %v1592 = vld [vmem:[#allocation2 + $0x4f] sm:$0xff]
      %v1593 = vld [vmem:[#allocation2 + $0x57] sm:$0xff]
      %v1594 = vld [vmem:[#allocation2 + $0x5f] sm:$0xff]
      %v1595 = vld [vmem:[#allocation2 + $0x67] sm:$0xff]
      %v1596 = vld [vmem:[#allocation2 + $0x6f] sm:$0xff]
      %v1597 = vld [vmem:[#allocation2 + $0x77] sm:$0xff]
      %v1598 = vld [vmem:[#allocation2 + $0x7f] sm:$0xff]
      %v1599 = vld [vmem:[#allocation2 + $0x87] sm:$0xff]
      %v1600 = vld [vmem:[#allocation2 + $0x8f] sm:$0xff]
      %v1601 = vld [vmem:[#allocation2 + $0x97] sm:$0xff]
      %v1602 = vld [vmem:[#allocation2 + $0x9f] sm:$0xff]
      %v1603 = vsel %vm600, %v1587, 0.0
      %v1604 = vsel %vm601, %v1588, 0.0
      %v1605 = vsel %vm602, %v1589, 0.0
      %v1606 = vsel %vm603, %v1590, 0.0
      %v1607 = vsel %vm604, %v1591, 0.0
      %v1608 = vsel %vm605, %v1592, 0.0
      %v1609 = vsel %vm606, %v1593, 0.0
      %v1610 = vsel %vm607, %v1594, 0.0
      %v1611 = vsel %vm608, %v1595, 0.0
      %v1612 = vsel %vm609, %v1596, 0.0
      %v1613 = vsel %vm610, %v1597, 0.0
      %v1614 = vsel %vm611, %v1598, 0.0
      %v1615 = vsel %vm612, %v1599, 0.0
      %v1616 = vsel %vm613, %v1600, 0.0
      %v1617 = vsel %vm614, %v1601, 0.0
      %v1618 = vsel %vm615, %v1602, 0.0
      %v1619 = vpack.c.bf16 %v1604, %v1603
      %v1620 = vpack.c.bf16 %v1606, %v1605
      %v1621 = vpack.c.bf16 %v1608, %v1607
      %v1622 = vpack.c.bf16 %v1610, %v1609
      %v1623 = vpack.c.bf16 %v1612, %v1611
      %v1624 = vpack.c.bf16 %v1614, %v1613
      %v1625 = vpack.c.bf16 %v1616, %v1615
      %v1626 = vpack.c.bf16 %v1618, %v1617
      %s1627 = scalar_lea.vmem %s297, 384
      %v1628 = vld [vmem:[%s1627] sm:$0xf]
      %v1629 = vld [vmem:[%s1627 + $0x4] sm:$0xf]
      %v1630 = vld [vmem:[%s1627 + $0x8] sm:$0xf]
      %v1631 = vld [vmem:[%s1627 + $0xc] sm:$0xf]
      %v1632 = vld [vmem:[%s1627 + $0x10] sm:$0xf]
      %v1633 = vld [vmem:[%s1627 + $0x14] sm:$0xf]
      %v1634 = vld [vmem:[%s1627 + $0x18] sm:$0xf]
      %v1635 = vld [vmem:[%s1627 + $0x1c] sm:$0xf]
      %v1636 = vld [vmem:[%s1627 + $0x20] sm:$0xf]
      %v1637 = vld [vmem:[%s1627 + $0x24] sm:$0xf]
      %v1638 = vld [vmem:[%s1627 + $0x28] sm:$0xf]
      %v1639 = vld [vmem:[%s1627 + $0x2c] sm:$0xf]
      %v1640 = vld [vmem:[%s1627 + $0x30] sm:$0xf]
      %v1641 = vld [vmem:[%s1627 + $0x34] sm:$0xf]
      %v1642 = vld [vmem:[%s1627 + $0x38] sm:$0xf]
      %v1643 = vld [vmem:[%s1627 + $0x3c] sm:$0xf]
      %v1660 = vunpack.c.l.b16 %v1628
      %v1661 = vunpack.c.l.b16 %v1629
      %v1662 = vunpack.c.l.b16 %v1630
      %v1663 = vunpack.c.l.b16 %v1631
      %v1664 = vunpack.c.l.b16 %v1632
      %v1665 = vunpack.c.l.b16 %v1633
      %v1666 = vunpack.c.l.b16 %v1634
      %v1667 = vunpack.c.l.b16 %v1635
      %v1668 = vunpack.c.l.b16 %v1636
      %v1669 = vunpack.c.l.b16 %v1637
      %v1670 = vunpack.c.l.b16 %v1638
      %v1671 = vunpack.c.l.b16 %v1639
      %v1672 = vunpack.c.l.b16 %v1640
      %v1673 = vunpack.c.l.b16 %v1641
      %v1674 = vunpack.c.l.b16 %v1642
      %v1675 = vunpack.c.l.b16 %v1643
      %v1676 = vpack.c.b16 %v1661, %v1660
      %v1677 = vpack.c.b16 %v1663, %v1662
      %v1678 = vpack.c.b16 %v1665, %v1664
      %v1679 = vpack.c.b16 %v1667, %v1666
      %v1680 = vpack.c.b16 %v1669, %v1668
      %v1681 = vpack.c.b16 %v1671, %v1670
      %v1682 = vpack.c.b16 %v1673, %v1672
      %v1683 = vpack.c.b16 %v1675, %v1674
      %1692 = vmatpush.bf16.msra.mxu0 %v1683
      %1693 = vmatpush.bf16.msra.mxu0 %v1682
      %1694 = vmatpush.bf16.msra.mxu0 %v1681
      %1695 = vmatpush.bf16.msra.mxu0 %v1680
      %1696 = vmatpush.bf16.msra.mxu0 %v1679
      %1697 = vmatpush.bf16.msra.mxu0 %v1678
      %1698 = vmatpush.bf16.msra.mxu0 %v1677
      %1699 = vmatpush.bf16.msra.mxu0 %v1676
      %1700 = vmatmul.bf16.gmra.mxu0 %v1619
      %v1701 = vpop.f32.mrf.mxu0
      %v1702 = vadd.f32 0.0, %v1701
      %v1703 = vpop.f32.mrf.mxu0
      %v1704 = vadd.f32 0.0, %v1703
      %1705 = vmatmul.bf16.gmra.mxu0 %v1620
      %v1706 = vpop.f32.mrf.mxu0
      %v1707 = vadd.f32 0.0, %v1706
      %v1708 = vpop.f32.mrf.mxu0
      %v1709 = vadd.f32 0.0, %v1708
      %1710 = vmatmul.bf16.gmra.mxu0 %v1621
      %v1711 = vpop.f32.mrf.mxu0
      %v1712 = vadd.f32 0.0, %v1711
      %v1713 = vpop.f32.mrf.mxu0
      %v1714 = vadd.f32 0.0, %v1713
      %1715 = vmatmul.bf16.gmra.mxu0 %v1622
      %v1716 = vpop.f32.mrf.mxu0
      %v1717 = vadd.f32 0.0, %v1716
      %v1718 = vpop.f32.mrf.mxu0
      %v1719 = vadd.f32 0.0, %v1718
      %1720 = vmatmul.bf16.gmra.mxu0 %v1623
      %v1721 = vpop.f32.mrf.mxu0
      %v1722 = vadd.f32 0.0, %v1721
      %v1723 = vpop.f32.mrf.mxu0
      %v1724 = vadd.f32 0.0, %v1723
      %1725 = vmatmul.bf16.gmra.mxu0 %v1624
      %v1726 = vpop.f32.mrf.mxu0
      %v1727 = vadd.f32 0.0, %v1726
      %v1728 = vpop.f32.mrf.mxu0
      %v1729 = vadd.f32 0.0, %v1728
      %1730 = vmatmul.bf16.gmra.mxu0 %v1625
      %v1731 = vpop.f32.mrf.mxu0
      %v1732 = vadd.f32 0.0, %v1731
      %v1733 = vpop.f32.mrf.mxu0
      %v1734 = vadd.f32 0.0, %v1733
      %1735 = vmatmul.bf16.gmra.mxu0 %v1626
      %v1736 = vpop.f32.mrf.mxu0
      %v1737 = vadd.f32 0.0, %v1736
      %v1738 = vpop.f32.mrf.mxu0
      %v1739 = vadd.f32 0.0, %v1738
      %1740 = vdwg.mxu0
      %v1741 = vadd.f32 %v1571, %v1702
      %v1742 = vadd.f32 %v1572, %v1704
      %v1743 = vadd.f32 %v1573, %v1707
      %v1744 = vadd.f32 %v1574, %v1709
      %v1745 = vadd.f32 %v1575, %v1712
      %v1746 = vadd.f32 %v1576, %v1714
      %v1747 = vadd.f32 %v1577, %v1717
      %v1748 = vadd.f32 %v1578, %v1719
      %v1749 = vadd.f32 %v1579, %v1722
      %v1750 = vadd.f32 %v1580, %v1724
      %v1751 = vadd.f32 %v1581, %v1727
      %v1752 = vadd.f32 %v1582, %v1729
      %v1753 = vadd.f32 %v1583, %v1732
      %v1754 = vadd.f32 %v1584, %v1734
      %v1755 = vadd.f32 %v1585, %v1737
      %v1756 = vadd.f32 %v1586, %v1739
      %v1757 = vld [vmem:[#allocation2 + $0x28] sm:$0xff]
      %v1758 = vld [vmem:[#allocation2 + $0x30] sm:$0xff]
      %v1759 = vld [vmem:[#allocation2 + $0x38] sm:$0xff]
      %v1760 = vld [vmem:[#allocation2 + $0x40] sm:$0xff]
      %v1761 = vld [vmem:[#allocation2 + $0x48] sm:$0xff]
      %v1762 = vld [vmem:[#allocation2 + $0x50] sm:$0xff]
      %v1763 = vld [vmem:[#allocation2 + $0x58] sm:$0xff]
      %v1764 = vld [vmem:[#allocation2 + $0x60] sm:$0xff]
      %v1765 = vld [vmem:[#allocation2 + $0x68] sm:$0xff]
      %v1766 = vld [vmem:[#allocation2 + $0x70] sm:$0xff]
      %v1767 = vld [vmem:[#allocation2 + $0x78] sm:$0xff]
      %v1768 = vld [vmem:[#allocation2 + $0x80] sm:$0xff]
      %v1769 = vld [vmem:[#allocation2 + $0x88] sm:$0xff]
      %v1770 = vld [vmem:[#allocation2 + $0x90] sm:$0xff]
      %v1771 = vld [vmem:[#allocation2 + $0x98] sm:$0xff]
      %v1772 = vld [vmem:[#allocation2 + $0xa0] sm:$0xff]
      %v1773 = vpack.c.bf16 %v1758, %v1757
      %v1774 = vpack.c.bf16 %v1760, %v1759
      %v1775 = vpack.c.bf16 %v1762, %v1761
      %v1776 = vpack.c.bf16 %v1764, %v1763
      %v1777 = vpack.c.bf16 %v1766, %v1765
      %v1778 = vpack.c.bf16 %v1768, %v1767
      %v1779 = vpack.c.bf16 %v1770, %v1769
      %v1780 = vpack.c.bf16 %v1772, %v1771
      %s1781 = scalar_lea.vmem %s297, 448
      %v1782 = vld [vmem:[%s1781] sm:$0xf]
      %v1783 = vld [vmem:[%s1781 + $0x4] sm:$0xf]
      %v1784 = vld [vmem:[%s1781 + $0x8] sm:$0xf]
      %v1785 = vld [vmem:[%s1781 + $0xc] sm:$0xf]
      %v1786 = vld [vmem:[%s1781 + $0x10] sm:$0xf]
      %v1787 = vld [vmem:[%s1781 + $0x14] sm:$0xf]
      %v1788 = vld [vmem:[%s1781 + $0x18] sm:$0xf]
      %v1789 = vld [vmem:[%s1781 + $0x1c] sm:$0xf]
      %v1790 = vld [vmem:[%s1781 + $0x20] sm:$0xf]
      %v1791 = vld [vmem:[%s1781 + $0x24] sm:$0xf]
      %v1792 = vld [vmem:[%s1781 + $0x28] sm:$0xf]
      %v1793 = vld [vmem:[%s1781 + $0x2c] sm:$0xf]
      %v1794 = vld [vmem:[%s1781 + $0x30] sm:$0xf]
      %v1795 = vld [vmem:[%s1781 + $0x34] sm:$0xf]
      %v1796 = vld [vmem:[%s1781 + $0x38] sm:$0xf]
      %v1797 = vld [vmem:[%s1781 + $0x3c] sm:$0xf]
      %v1814 = vunpack.c.l.b16 %v1782
      %v1815 = vunpack.c.l.b16 %v1783
      %v1816 = vunpack.c.l.b16 %v1784
      %v1817 = vunpack.c.l.b16 %v1785
      %v1818 = vunpack.c.l.b16 %v1786
      %v1819 = vunpack.c.l.b16 %v1787
      %v1820 = vunpack.c.l.b16 %v1788
      %v1821 = vunpack.c.l.b16 %v1789
      %v1822 = vunpack.c.l.b16 %v1790
      %v1823 = vunpack.c.l.b16 %v1791
      %v1824 = vunpack.c.l.b16 %v1792
      %v1825 = vunpack.c.l.b16 %v1793
      %v1826 = vunpack.c.l.b16 %v1794
      %v1827 = vunpack.c.l.b16 %v1795
      %v1828 = vunpack.c.l.b16 %v1796
      %v1829 = vunpack.c.l.b16 %v1797
      %v1830 = vpack.c.b16 %v1815, %v1814
      %v1831 = vpack.c.b16 %v1817, %v1816
      %v1832 = vpack.c.b16 %v1819, %v1818
      %v1833 = vpack.c.b16 %v1821, %v1820
      %v1834 = vpack.c.b16 %v1823, %v1822
      %v1835 = vpack.c.b16 %v1825, %v1824
      %v1836 = vpack.c.b16 %v1827, %v1826
      %v1837 = vpack.c.b16 %v1829, %v1828
      %1846 = vmatpush.bf16.msra.mxu0 %v1837
      %1847 = vmatpush.bf16.msra.mxu0 %v1836
      %1848 = vmatpush.bf16.msra.mxu0 %v1835
      %1849 = vmatpush.bf16.msra.mxu0 %v1834
      %1850 = vmatpush.bf16.msra.mxu0 %v1833
      %1851 = vmatpush.bf16.msra.mxu0 %v1832
      %1852 = vmatpush.bf16.msra.mxu0 %v1831
      %1853 = vmatpush.bf16.msra.mxu0 %v1830
      %1854 = vmatmul.bf16.gmra.mxu0 %v1773
      %v1855 = vpop.f32.mrf.mxu0
      %v1856 = vadd.f32 0.0, %v1855
      %v1857 = vpop.f32.mrf.mxu0
      %v1858 = vadd.f32 0.0, %v1857
      %1859 = vmatmul.bf16.gmra.mxu0 %v1774
      %v1860 = vpop.f32.mrf.mxu0
      %v1861 = vadd.f32 0.0, %v1860
      %v1862 = vpop.f32.mrf.mxu0
      %v1863 = vadd.f32 0.0, %v1862
      %1864 = vmatmul.bf16.gmra.mxu0 %v1775
      %v1865 = vpop.f32.mrf.mxu0
      %v1866 = vadd.f32 0.0, %v1865
      %v1867 = vpop.f32.mrf.mxu0
      %v1868 = vadd.f32 0.0, %v1867
      %1869 = vmatmul.bf16.gmra.mxu0 %v1776
      %v1870 = vpop.f32.mrf.mxu0
      %v1871 = vadd.f32 0.0, %v1870
      %v1872 = vpop.f32.mrf.mxu0
      %v1873 = vadd.f32 0.0, %v1872
      %1874 = vmatmul.bf16.gmra.mxu0 %v1777
      %v1875 = vpop.f32.mrf.mxu0
      %v1876 = vadd.f32 0.0, %v1875
      %v1877 = vpop.f32.mrf.mxu0
      %v1878 = vadd.f32 0.0, %v1877
      %1879 = vmatmul.bf16.gmra.mxu0 %v1778
      %v1880 = vpop.f32.mrf.mxu0
      %v1881 = vadd.f32 0.0, %v1880
      %v1882 = vpop.f32.mrf.mxu0
      %v1883 = vadd.f32 0.0, %v1882
      %1884 = vmatmul.bf16.gmra.mxu0 %v1779
      %v1885 = vpop.f32.mrf.mxu0
      %v1886 = vadd.f32 0.0, %v1885
      %v1887 = vpop.f32.mrf.mxu0
      %v1888 = vadd.f32 0.0, %v1887
      %1889 = vmatmul.bf16.gmra.mxu0 %v1780
      %v1890 = vpop.f32.mrf.mxu0
      %v1891 = vadd.f32 0.0, %v1890
      %v1892 = vpop.f32.mrf.mxu0
      %v1893 = vadd.f32 0.0, %v1892
      %1894 = vdwg.mxu0
      %v1895 = vadd.f32 %v1741, %v1856
      %v1896 = vadd.f32 %v1742, %v1858
      %v1897 = vadd.f32 %v1743, %v1861
      %v1898 = vadd.f32 %v1744, %v1863
      %v1899 = vadd.f32 %v1745, %v1866
      %v1900 = vadd.f32 %v1746, %v1868
      %v1901 = vadd.f32 %v1747, %v1871
      %v1902 = vadd.f32 %v1748, %v1873
      %v1903 = vadd.f32 %v1749, %v1876
      %v1904 = vadd.f32 %v1750, %v1878
      %v1905 = vadd.f32 %v1751, %v1881
      %v1906 = vadd.f32 %v1752, %v1883
      %v1907 = vadd.f32 %v1753, %v1886
      %v1908 = vadd.f32 %v1754, %v1888
      %v1909 = vadd.f32 %v1755, %v1891
      %v1910 = vadd.f32 %v1756, %v1893
      %v1911 = vld [vmem:[#allocation2 + $0x29] sm:$0xff]
      %v1912 = vld [vmem:[#allocation2 + $0x31] sm:$0xff]
      %v1913 = vld [vmem:[#allocation2 + $0x39] sm:$0xff]
      %v1914 = vld [vmem:[#allocation2 + $0x41] sm:$0xff]
      %v1915 = vld [vmem:[#allocation2 + $0x49] sm:$0xff]
      %v1916 = vld [vmem:[#allocation2 + $0x51] sm:$0xff]
      %v1917 = vld [vmem:[#allocation2 + $0x59] sm:$0xff]
      %v1918 = vld [vmem:[#allocation2 + $0x61] sm:$0xff]
      %v1919 = vld [vmem:[#allocation2 + $0x69] sm:$0xff]
      %v1920 = vld [vmem:[#allocation2 + $0x71] sm:$0xff]
      %v1921 = vld [vmem:[#allocation2 + $0x79] sm:$0xff]
      %v1922 = vld [vmem:[#allocation2 + $0x81] sm:$0xff]
      %v1923 = vld [vmem:[#allocation2 + $0x89] sm:$0xff]
      %v1924 = vld [vmem:[#allocation2 + $0x91] sm:$0xff]
      %v1925 = vld [vmem:[#allocation2 + $0x99] sm:$0xff]
      %v1926 = vld [vmem:[#allocation2 + $0xa1] sm:$0xff]
      %v1927 = vsel %vm616, %v1911, 0.0
      %v1928 = vsel %vm617, %v1912, 0.0
      %v1929 = vsel %vm618, %v1913, 0.0
      %v1930 = vsel %vm619, %v1914, 0.0
      %v1931 = vsel %vm620, %v1915, 0.0
      %v1932 = vsel %vm621, %v1916, 0.0
      %v1933 = vsel %vm622, %v1917, 0.0
      %v1934 = vsel %vm623, %v1918, 0.0
      %v1935 = vsel %vm624, %v1919, 0.0
      %v1936 = vsel %vm625, %v1920, 0.0
      %v1937 = vsel %vm626, %v1921, 0.0
      %v1938 = vsel %vm627, %v1922, 0.0
      %v1939 = vsel %vm628, %v1923, 0.0
      %v1940 = vsel %vm629, %v1924, 0.0
      %v1941 = vsel %vm630, %v1925, 0.0
      %v1942 = vsel %vm631, %v1926, 0.0
      %v1943 = vpack.c.bf16 %v1928, %v1927
      %v1944 = vpack.c.bf16 %v1930, %v1929
      %v1945 = vpack.c.bf16 %v1932, %v1931
      %v1946 = vpack.c.bf16 %v1934, %v1933
      %v1947 = vpack.c.bf16 %v1936, %v1935
      %v1948 = vpack.c.bf16 %v1938, %v1937
      %v1949 = vpack.c.bf16 %v1940, %v1939
      %v1950 = vpack.c.bf16 %v1942, %v1941
      %s1951 = scalar_lea.vmem %s297, 512
      %v1952 = vld [vmem:[%s1951] sm:$0xf]
      %v1953 = vld [vmem:[%s1951 + $0x4] sm:$0xf]
      %v1954 = vld [vmem:[%s1951 + $0x8] sm:$0xf]
      %v1955 = vld [vmem:[%s1951 + $0xc] sm:$0xf]
      %v1956 = vld [vmem:[%s1951 + $0x10] sm:$0xf]
      %v1957 = vld [vmem:[%s1951 + $0x14] sm:$0xf]
      %v1958 = vld [vmem:[%s1951 + $0x18] sm:$0xf]
      %v1959 = vld [vmem:[%s1951 + $0x1c] sm:$0xf]
      %v1960 = vld [vmem:[%s1951 + $0x20] sm:$0xf]
      %v1961 = vld [vmem:[%s1951 + $0x24] sm:$0xf]
      %v1962 = vld [vmem:[%s1951 + $0x28] sm:$0xf]
      %v1963 = vld [vmem:[%s1951 + $0x2c] sm:$0xf]
      %v1964 = vld [vmem:[%s1951 + $0x30] sm:$0xf]
      %v1965 = vld [vmem:[%s1951 + $0x34] sm:$0xf]
      %v1966 = vld [vmem:[%s1951 + $0x38] sm:$0xf]
      %v1967 = vld [vmem:[%s1951 + $0x3c] sm:$0xf]
      %v1984 = vunpack.c.l.b16 %v1952
      %v1985 = vunpack.c.l.b16 %v1953
      %v1986 = vunpack.c.l.b16 %v1954
      %v1987 = vunpack.c.l.b16 %v1955
      %v1988 = vunpack.c.l.b16 %v1956
      %v1989 = vunpack.c.l.b16 %v1957
      %v1990 = vunpack.c.l.b16 %v1958
      %v1991 = vunpack.c.l.b16 %v1959
      %v1992 = vunpack.c.l.b16 %v1960
      %v1993 = vunpack.c.l.b16 %v1961
      %v1994 = vunpack.c.l.b16 %v1962
      %v1995 = vunpack.c.l.b16 %v1963
      %v1996 = vunpack.c.l.b16 %v1964
      %v1997 = vunpack.c.l.b16 %v1965
      %v1998 = vunpack.c.l.b16 %v1966
      %v1999 = vunpack.c.l.b16 %v1967
      %v2000 = vpack.c.b16 %v1985, %v1984
      %v2001 = vpack.c.b16 %v1987, %v1986
      %v2002 = vpack.c.b16 %v1989, %v1988
      %v2003 = vpack.c.b16 %v1991, %v1990
      %v2004 = vpack.c.b16 %v1993, %v1992
      %v2005 = vpack.c.b16 %v1995, %v1994
      %v2006 = vpack.c.b16 %v1997, %v1996
      %v2007 = vpack.c.b16 %v1999, %v1998
      %2016 = vmatpush.bf16.msra.mxu0 %v2007
      %2017 = vmatpush.bf16.msra.mxu0 %v2006
      %2018 = vmatpush.bf16.msra.mxu0 %v2005
      %2019 = vmatpush.bf16.msra.mxu0 %v2004
      %2020 = vmatpush.bf16.msra.mxu0 %v2003
      %2021 = vmatpush.bf16.msra.mxu0 %v2002
      %2022 = vmatpush.bf16.msra.mxu0 %v2001
      %2023 = vmatpush.bf16.msra.mxu0 %v2000
      %2024 = vmatmul.bf16.gmra.mxu0 %v1943
      %v2025 = vpop.f32.mrf.mxu0
      %v2026 = vadd.f32 0.0, %v2025
      %v2027 = vpop.f32.mrf.mxu0
      %v2028 = vadd.f32 0.0, %v2027
      %2029 = vmatmul.bf16.gmra.mxu0 %v1944
      %v2030 = vpop.f32.mrf.mxu0
      %v2031 = vadd.f32 0.0, %v2030
      %v2032 = vpop.f32.mrf.mxu0
      %v2033 = vadd.f32 0.0, %v2032
      %2034 = vmatmul.bf16.gmra.mxu0 %v1945
      %v2035 = vpop.f32.mrf.mxu0
      %v2036 = vadd.f32 0.0, %v2035
      %v2037 = vpop.f32.mrf.mxu0
      %v2038 = vadd.f32 0.0, %v2037
      %2039 = vmatmul.bf16.gmra.mxu0 %v1946
      %v2040 = vpop.f32.mrf.mxu0
      %v2041 = vadd.f32 0.0, %v2040
      %v2042 = vpop.f32.mrf.mxu0
      %v2043 = vadd.f32 0.0, %v2042
      %2044 = vmatmul.bf16.gmra.mxu0 %v1947
      %v2045 = vpop.f32.mrf.mxu0
      %v2046 = vadd.f32 0.0, %v2045
      %v2047 = vpop.f32.mrf.mxu0
      %v2048 = vadd.f32 0.0, %v2047
      %2049 = vmatmul.bf16.gmra.mxu0 %v1948
      %v2050 = vpop.f32.mrf.mxu0
      %v2051 = vadd.f32 0.0, %v2050
      %v2052 = vpop.f32.mrf.mxu0
      %v2053 = vadd.f32 0.0, %v2052
      %2054 = vmatmul.bf16.gmra.mxu0 %v1949
      %v2055 = vpop.f32.mrf.mxu0
      %v2056 = vadd.f32 0.0, %v2055
      %v2057 = vpop.f32.mrf.mxu0
      %v2058 = vadd.f32 0.0, %v2057
      %2059 = vmatmul.bf16.gmra.mxu0 %v1950
      %v2060 = vpop.f32.mrf.mxu0
      %v2061 = vadd.f32 0.0, %v2060
      %v2062 = vpop.f32.mrf.mxu0
      %v2063 = vadd.f32 0.0, %v2062
      %2064 = vdwg.mxu0
      %v2065 = vadd.f32 %v1895, %v2026
      %v2066 = vadd.f32 %v1896, %v2028
      %v2067 = vadd.f32 %v1897, %v2031
      %v2068 = vadd.f32 %v1898, %v2033
      %v2069 = vadd.f32 %v1899, %v2036
      %v2070 = vadd.f32 %v1900, %v2038
      %v2071 = vadd.f32 %v1901, %v2041
      %v2072 = vadd.f32 %v1902, %v2043
      %v2073 = vadd.f32 %v1903, %v2046
      %v2074 = vadd.f32 %v1904, %v2048
      %v2075 = vadd.f32 %v1905, %v2051
      %v2076 = vadd.f32 %v1906, %v2053
      %v2077 = vadd.f32 %v1907, %v2056
      %v2078 = vadd.f32 %v1908, %v2058
      %v2079 = vadd.f32 %v1909, %v2061
      %v2080 = vadd.f32 %v1910, %v2063
      %v2081 = vld [vmem:[%s300] sm:$0x1]
      %v2083 = vperm.slane %v2081, 0
      %v2085 = vadd.f32 %v2065, %v2083
      %v2086 = vadd.f32 %v2066, %v2083
      %v2087 = vadd.f32 %v2067, %v2083
      %v2088 = vadd.f32 %v2068, %v2083
      %v2089 = vadd.f32 %v2069, %v2083
      %v2090 = vadd.f32 %v2070, %v2083
      %v2091 = vadd.f32 %v2071, %v2083
      %v2092 = vadd.f32 %v2072, %v2083
      %v2093 = vadd.f32 %v2073, %v2083
      %v2094 = vadd.f32 %v2074, %v2083
      %v2095 = vadd.f32 %v2075, %v2083
      %v2096 = vadd.f32 %v2076, %v2083
      %v2097 = vadd.f32 %v2077, %v2083
      %v2098 = vadd.f32 %v2078, %v2083
      %v2099 = vadd.f32 %v2079, %v2083
      %v2100 = vadd.f32 %v2080, %v2083
      %v2101 = vld [vmem:[%s312] sm:$0xff]
      %v2102 = vld [vmem:[%s312 + $0x8] sm:$0xff]
      %v2103 = vld [vmem:[%s312 + $0x10] sm:$0xff]
      %v2104 = vld [vmem:[%s312 + $0x18] sm:$0xff]
      %v2105 = vld [vmem:[%s312 + $0x20] sm:$0xff]
      %v2106 = vld [vmem:[%s312 + $0x28] sm:$0xff]
      %v2107 = vld [vmem:[%s312 + $0x30] sm:$0xff]
      %v2108 = vld [vmem:[%s312 + $0x38] sm:$0xff]
      %v2109 = vld [vmem:[%s312 + $0x40] sm:$0xff]
      %v2110 = vld [vmem:[%s312 + $0x48] sm:$0xff]
      %v2111 = vld [vmem:[%s312 + $0x50] sm:$0xff]
      %v2112 = vld [vmem:[%s312 + $0x58] sm:$0xff]
      %v2113 = vld [vmem:[%s312 + $0x60] sm:$0xff]
      %v2114 = vld [vmem:[%s312 + $0x68] sm:$0xff]
      %v2115 = vld [vmem:[%s312 + $0x70] sm:$0xff]
      %v2116 = vld [vmem:[%s312 + $0x78] sm:$0xff]
      %v2117 = vadd.f32 %v2085, %v2101
      %v2118 = vadd.f32 %v2086, %v2102
      %v2119 = vadd.f32 %v2087, %v2103
      %v2120 = vadd.f32 %v2088, %v2104
      %v2121 = vadd.f32 %v2089, %v2105
      %v2122 = vadd.f32 %v2090, %v2106
      %v2123 = vadd.f32 %v2091, %v2107
      %v2124 = vadd.f32 %v2092, %v2108
      %v2125 = vadd.f32 %v2093, %v2109
      %v2126 = vadd.f32 %v2094, %v2110
      %v2127 = vadd.f32 %v2095, %v2111
      %v2128 = vadd.f32 %v2096, %v2112
      %v2129 = vadd.f32 %v2097, %v2113
      %v2130 = vadd.f32 %v2098, %v2114
      %v2131 = vadd.f32 %v2099, %v2115
      %v2132 = vadd.f32 %v2100, %v2116
      %2133 = vst [vmem:[%s324] sm:$0xff] %v2117
      %2134 = vst [vmem:[%s324 + $0x8] sm:$0xff] %v2118
      %2135 = vst [vmem:[%s324 + $0x10] sm:$0xff] %v2119
      %2136 = vst [vmem:[%s324 + $0x18] sm:$0xff] %v2120
      %2137 = vst [vmem:[%s324 + $0x20] sm:$0xff] %v2121
      %2138 = vst [vmem:[%s324 + $0x28] sm:$0xff] %v2122
      %2139 = vst [vmem:[%s324 + $0x30] sm:$0xff] %v2123
      %2140 = vst [vmem:[%s324 + $0x38] sm:$0xff] %v2124
      %2141 = vst [vmem:[%s324 + $0x40] sm:$0xff] %v2125
      %2142 = vst [vmem:[%s324 + $0x48] sm:$0xff] %v2126
      %2143 = vst [vmem:[%s324 + $0x50] sm:$0xff] %v2127
      %2144 = vst [vmem:[%s324 + $0x58] sm:$0xff] %v2128
      %2145 = vst [vmem:[%s324 + $0x60] sm:$0xff] %v2129
      %2146 = vst [vmem:[%s324 + $0x68] sm:$0xff] %v2130
      %2147 = vst [vmem:[%s324 + $0x70] sm:$0xff] %v2131
      %2148 = vst [vmem:[%s324 + $0x78] sm:$0xff] %v2132
      %p2149 = scmp.lt.s32.totalorder %s20, 1
      %s2150 = scalar_select %p2149, %s20, 1
      %p2151 = scmp.lt.s32.totalorder %s21, 1
      %s2152 = scalar_select %p2151, %s21, 1
      %p2153 = scmp.lt.s32.totalorder %s22, 0
      %s2154 = scalar_select %p2153, %s22, 0
      %s2155 = smul.addr %s2152, 16
      %s2156 = sadd.s32 %s2154, %s2155
      %s2157 = smul.addr %s2150, 32
      %s2158 = sadd.s32 %s2156, %s2157
      %s2159 = smul.addr %s2158, 8
      %s2160 = scalar_lea.vmem %s4, %s2159
      // Predicated region
      $region37: #{resnet_forward.19} parent=35 // pred_check
        %p2161 = pneg %p166
      $region38: #{resnet_forward.19} parent=35 // pred_check_branch
        %2163 = sbr.rel (%p2161) target = $region40
      $region39: #{resnet_forward.19} parent=35 // pred_region
        _
      $region40: #{resnet_forward.19} parent=35 // pred_fallthru
        _
    $region36: #{resnet_forward.19} parent=5 // pred_fallthru
      _
    %p2164 = scmp.le.s32.totalorder 2, %s10
    // Predicated region
    $region41: #{resnet_forward.19} parent=5 // pred_check
      %p2165 = pneg %p2164
    $region42: #{resnet_forward.19} parent=5 // pred_check_branch
      %2167 = sbr.rel (%p2165) target = $region44
    $region43: #{resnet_forward.19} parent=5 // pred_region
      %s2168 = ssub.s32 %s10, 2
      // Predicated region
      $region45: #{resnet_forward.19} parent=43 // pred_check
        %p2169 = pneg %p172
      $region46: #{resnet_forward.19} parent=43 // pred_check_branch
        %2171 = sbr.rel (%p2169) target = $region48
      $region47: #{resnet_forward.19} parent=43 // pred_region
        %p2172 = scmp.lt.s32.totalorder %s23, 1
        %s2173 = scalar_select %p2172, %s23, 1
        %p2174 = scmp.lt.s32.totalorder %s24, 1
        %s2175 = scalar_select %p2174, %s24, 1
        %p2176 = scmp.lt.s32.totalorder %s25, 0
        %s2177 = scalar_select %p2176, %s25, 0
        %s2178 = smul.addr %s2175, 16
        %s2179 = sadd.s32 %s2177, %s2178
        %s2180 = smul.addr %s2173, 32
        %s2181 = sadd.s32 %s2179, %s2180
        %s2182 = smul.addr %s2181, 8
        %s2183 = scalar_lea.vmem %s4, %s2182
      $region48: #{resnet_forward.19} parent=43 // pred_fallthru
        _
    $region44: #{resnet_forward.19} parent=5 // pred_fallthru
      _
  $region6: #{resnet_forward.19} parent=0 // loop_footer
    %s14 = sadd.s32 1, %s10
  $region7: #{resnet_forward.19} parent=0 // loop_footer_branch
    %9 = sbr.rel target = $region3
  $region8: #{resnet_forward.19} parent=0 // loop_exit
    _

</llo_original>
